<compile_context>
chip_gen: v7x
topology: tpu7x:2x2x1
jax: 0.10.0
libtpu: 0.0.40
codegen_flags: <defaults>
</compile_context>

<pallas_src>
import functools

import jax
import jax.numpy as jnp
from jax.experimental import pallas as pl
from jax.experimental.pallas import tpu as pltpu

VMEM_LIMIT = 32 * 1024 * 1024  # explicit scoped-VMEM budget (safe on v5e/v6e/v7x)


def _round_up(v, m):
    return (v + m - 1) // m * m


# ----------------------------- Pallas kernels ------------------------------

def _mm_bias_kernel(x_ref, w_ref, b_ref, o_ref, *, activation):
    acc = jnp.dot(x_ref[...], w_ref[...], preferred_element_type=jnp.float32)
    acc = acc + b_ref[...]
    if activation == "relu":
        acc = jnp.maximum(acc, 0.0)
    elif activation == "gelu":
        # TODO(synk): PyTorch nn.GELU default is the exact erf GELU.
        acc = jax.nn.gelu(acc, approximate=True)
    o_ref[...] = acc.astype(o_ref.dtype)


def matmul_bias(x, w, b, activation=None, out_dtype=jnp.bfloat16, tm=512):
    """(M,K) @ (K,N) + b, M-tiled, bf16 MXU operands, f32 accumulation."""
    M, K = x.shape
    K2, N = w.shape
    assert K == K2, (K, K2)
    x = x.astype(jnp.bfloat16)
    w = w.astype(jnp.bfloat16)
    b2 = b.reshape(1, N).astype(jnp.float32)
    TM = min(tm, _round_up(M, 8))
    Mp = _round_up(M, TM)
    if Mp != M:
        x = jnp.pad(x, ((0, Mp - M), (0, 0)))
    out = pl.pallas_call(
        functools.partial(_mm_bias_kernel, activation=activation),
        out_shape=jax.ShapeDtypeStruct((Mp, N), out_dtype),
        grid=(Mp // TM,),
        in_specs=[
            pl.BlockSpec((TM, K), lambda i: (i, 0)),
            pl.BlockSpec((K, N), lambda i: (0, 0)),
            pl.BlockSpec((1, N), lambda i: (0, 0)),
        ],
        out_specs=pl.BlockSpec((TM, N), lambda i: (i, 0)),
        compiler_params=pltpu.CompilerParams(
            dimension_semantics=("parallel",),
            vmem_limit_bytes=VMEM_LIMIT),
    )(x, w, b2)
    return out[:M] if Mp != M else out


def _conv_s1_kernel(x_ref, w_ref, b_ref, o_ref, *, kh, kw, activation):
    """Stride-1 kxk conv for one image: kh*kw-tap accumulation, no HBM im2col."""
    Ho, Wo, Cout = o_ref.shape[1], o_ref.shape[2], o_ref.shape[3]
    Cin = x_ref.shape[3]
    x = x_ref[0]                                       # (Hp, Wp, Cin) f32
    acc = jnp.zeros((Ho * Wo, Cout), jnp.float32)
    t = 0
    for i in range(kh):
        for j in range(kw):
            patch = x[i:i + Ho, j:j + Wo, :].reshape(Ho * Wo, Cin)
            acc = acc + jnp.dot(patch.astype(jnp.bfloat16), w_ref[t],
                                preferred_element_type=jnp.float32)
            t += 1
    acc = acc + b_ref[...]
    if activation == "relu":
        acc = jnp.maximum(acc, 0.0)
    o_ref[0] = acc.reshape(Ho, Wo, Cout).astype(o_ref.dtype)


def conv2d_s1(x, w, b, activation=None, out_dtype=jnp.bfloat16):
    """Stride-1 'same' conv: per-image in-kernel tap accumulation."""
    N, H, W, Cin = x.shape
    kh, kw, _, Cout = w.shape
    ph, pw = kh // 2, kw // 2
    xp = jnp.pad(x.astype(jnp.float32), ((0, 0), (ph, ph), (pw, pw), (0, 0)))
    Hp, Wp = H + 2 * ph, W + 2 * pw
    wt = w.reshape(kh * kw, Cin, Cout).astype(jnp.bfloat16)
    bt = b.reshape(1, Cout).astype(jnp.float32)
    return pl.pallas_call(
        functools.partial(_conv_s1_kernel, kh=kh, kw=kw, activation=activation),
        out_shape=jax.ShapeDtypeStruct((N, H, W, Cout), out_dtype),
        grid=(N,),
        in_specs=[
            pl.BlockSpec((1, Hp, Wp, Cin), lambda n: (n, 0, 0, 0)),
            pl.BlockSpec((kh * kw, Cin, Cout), lambda n: (0, 0, 0)),
            pl.BlockSpec((1, Cout), lambda n: (0, 0)),
        ],
        out_specs=pl.BlockSpec((1, H, W, Cout), lambda n: (n, 0, 0, 0)),
        compiler_params=pltpu.CompilerParams(
            dimension_semantics=("parallel",),
            vmem_limit_bytes=VMEM_LIMIT),
    )(xp, wt, bt)


def _swin_block_kernel(x_ref, y_ref, lnp_ref, wq_ref, bq_ref, wkv_ref, bkv_ref,
                       wo_ref, bo_ref, w1_ref, b1_ref, w2_ref, b2_ref, o_ref,
                       *, heads, eps):
    """Fully fused cross-transformer block for one batch element."""
    L, C = x_ref.shape[1], x_ref.shape[2]
    dh = C // heads
    scale = 1.0 / float(dh) ** 0.5
    f32, bf16 = jnp.float32, jnp.bfloat16

    x = x_ref[0].astype(f32)                           # (L, C)
    y = y_ref[0].astype(f32)
    lnp = lnp_ref[...]                                 # (6, C) f32

    def ln(t, g, b):
        mu = jnp.mean(t, axis=-1, keepdims=True)
        var = jnp.mean(jnp.square(t - mu), axis=-1, keepdims=True)
        return (t - mu) * jax.lax.rsqrt(var + eps) * g + b

    xn = ln(x, lnp[0:1, :], lnp[1:2, :])
    yn = ln(y, lnp[2:3, :], lnp[3:4, :])

    q = jnp.dot(xn.astype(bf16), wq_ref[...], preferred_element_type=f32) + bq_ref[...]
    kv = jnp.dot(yn.astype(bf16), wkv_ref[...], preferred_element_type=f32) + bkv_ref[...]
    k, v = kv[:, :C], kv[:, C:]

    # all heads in one kernel invocation; O-projection folded into the head loop
    attn = jnp.zeros((L, C), f32)
    for h in range(heads):
        lo, hi = h * dh, (h + 1) * dh
        qh = q[:, lo:hi].astype(bf16)
        kh = k[:, lo:hi].astype(bf16)
        vh = v[:, lo:hi].astype(bf16)
        s = jax.lax.dot_general(qh, kh, (((1,), (1,)), ((), ())),
                                preferred_element_type=f32) * scale
        m = jnp.max(s, axis=-1, keepdims=True)
        p = jnp.exp(s - m)
        r = pl.reciprocal(jnp.sum(p, axis=-1, keepdims=True), approx=True)
        oh = jnp.dot((p * r).astype(bf16), vh, preferred_element_type=f32)
        attn = attn + jnp.dot(oh.astype(bf16), wo_ref[lo:hi, :],
                              preferred_element_type=f32)
    x = x + attn + bo_ref[...]

    xn2 = ln(x, lnp[4:5, :], lnp[5:6, :])
    # TODO(synk): PyTorch nn.GELU default is the exact erf GELU; tanh approx used here.
    h1 = jax.nn.gelu(jnp.dot(xn2.astype(bf16), w1_ref[...],
                             preferred_element_type=f32) + b1_ref[...],
                     approximate=True)
    h2 = jnp.dot(h1.astype(bf16), w2_ref[...], preferred_element_type=f32) + b2_ref[...]
    o_ref[0] = (x + h2).astype(o_ref.dtype)


def swin_cross_batched(x, y, p, heads, eps=1e-5):
    """One pallas_call for the whole cross-transformer block, grid over batch."""
    Bx, L, C = x.shape
    mlp = p["w1"].shape[1]
    lnp = jnp.stack([p["ln1x_g"], p["ln1x_b"], p["ln1y_g"], p["ln1y_b"],
                     p["ln2_g"], p["ln2_b"]], axis=0).astype(jnp.float32)

    def full(shape):
        n = len(shape)
        return pl.BlockSpec(shape, lambda b, _n=n: (0,) * _n)

    return pl.pallas_call(
        functools.partial(_swin_block_kernel, heads=heads, eps=eps),
        out_shape=jax.ShapeDtypeStruct((Bx, L, C), jnp.bfloat16),
        grid=(Bx,),
        in_specs=[
            pl.BlockSpec((1, L, C), lambda b: (b, 0, 0)),
            pl.BlockSpec((1, L, C), lambda b: (b, 0, 0)),
            full((6, C)),
            full((C, C)), full((1, C)),
            full((C, 2 * C)), full((1, 2 * C)),
            full((C, C)), full((1, C)),
            full((C, mlp)), full((1, mlp)),
            full((mlp, C)), full((1, C)),
        ],
        out_specs=pl.BlockSpec((1, L, C), lambda b: (b, 0, 0)),
        compiler_params=pltpu.CompilerParams(
            dimension_semantics=("parallel",),
            vmem_limit_bytes=VMEM_LIMIT),
    )(x.astype(jnp.bfloat16), y.astype(jnp.bfloat16), lnp,
      p["wq"], p["bq"].reshape(1, C).astype(jnp.float32),
      p["wkv"], p["bkv"].reshape(1, 2 * C).astype(jnp.float32),
      p["wo"], p["bo"].reshape(1, C).astype(jnp.float32),
      p["w1"], p["b1"].reshape(1, mlp).astype(jnp.float32),
      p["w2"], p["b2"].reshape(1, C).astype(jnp.float32))


# ------------------------------- conv glue ----------------------------------

def conv2d_im2col(x, w, b, stride, padding, activation=None):
    # TODO(synk): stride-2 convs still build im2col patches in XLA; an in-kernel
    # halo / phase-split variant would avoid the kh*kw HBM expansion at scale.
    N, H, W, Cin = x.shape
    kh, kw, _, Cout = w.shape
    xp = jnp.pad(x, ((0, 0), (padding, padding), (padding, padding), (0, 0)))
    Ho = (H + 2 * padding - kh) // stride + 1
    Wo = (W + 2 * padding - kw) // stride + 1
    cols = []
    for i in range(kh):
        for j in range(kw):
            cols.append(xp[:, i:i + (Ho - 1) * stride + 1:stride,
                           j:j + (Wo - 1) * stride + 1:stride, :])
    patches = jnp.concatenate(cols, axis=-1)           # (N, Ho, Wo, kh*kw*Cin)
    y = matmul_bias(patches.reshape(N * Ho * Wo, kh * kw * Cin),
                    w.reshape(kh * kw * Cin, Cout), b, activation)
    return y.reshape(N, Ho, Wo, Cout)


def upconv2x(x, w, b, activation=None):
    """ConvTranspose2d(k=2, s=2): per-pixel Pallas matmul to (2,2,Cout) then depth-to-space.
    Weight layout (Cin, 2*2*Cout) with (p, q, cout) column order (self-consistent with init)."""
    N, H, W, Cin = x.shape
    Cout = b.shape[0]
    y = matmul_bias(x.reshape(N * H * W, Cin), w, jnp.tile(b, 4), activation)
    # TODO(synk): the depth-to-space relayout still runs in XLA between kernels.
    y = y.reshape(N, H, W, 2, 2, Cout).transpose(0, 1, 3, 2, 4, 5)
    return y.reshape(N, 2 * H, 2 * W, Cout)


# ------------------------------- parameters ---------------------------------

def init_params(key, in_channels=3, out_channels=3, n_feat=32, n_sequence=3,
                mlp_ratio=2):
    keys = jax.random.split(key, 16)
    it = iter(keys)
    s = 0.05

    def w(shape):
        return (jax.random.normal(next(it), shape, jnp.float32) * s).astype(jnp.bfloat16)

    C4 = 4 * n_feat
    mlp = mlp_ratio * C4
    p = {}
    # TODO(synk): real RECONS_VIDEO inBlock/encoders use 5x5 convs + ResBlocks (source not given).
    p["in_w"] = w((3, 3, in_channels, n_feat)); p["in_b"] = jnp.zeros((n_feat,), jnp.float32)
    p["e1_w"] = w((3, 3, n_feat, 2 * n_feat));  p["e1_b"] = jnp.zeros((2 * n_feat,), jnp.float32)
    p["e2_w"] = w((3, 3, 2 * n_feat, C4));      p["e2_b"] = jnp.zeros((C4,), jnp.float32)
    # TODO(synk): full SwinIR (window partition, rel-pos bias, RSTB stack) replaced by one
    # cross-attention transformer block over the 4x4 feature window.
    p["ln1x_g"] = jnp.ones((C4,), jnp.float32); p["ln1x_b"] = jnp.zeros((C4,), jnp.float32)
    p["ln1y_g"] = jnp.ones((C4,), jnp.float32); p["ln1y_b"] = jnp.zeros((C4,), jnp.float32)
    p["ln2_g"] = jnp.ones((C4,), jnp.float32);  p["ln2_b"] = jnp.zeros((C4,), jnp.float32)
    p["wq"] = w((C4, C4));       p["bq"] = jnp.zeros((C4,), jnp.float32)
    p["wkv"] = w((C4, 2 * C4));  p["bkv"] = jnp.zeros((2 * C4,), jnp.float32)
    p["wo"] = w((C4, C4));       p["bo"] = jnp.zeros((C4,), jnp.float32)
    p["w1"] = w((C4, mlp));      p["b1"] = jnp.zeros((mlp,), jnp.float32)
    p["w2"] = w((mlp, C4));      p["b2"] = jnp.zeros((C4,), jnp.float32)
    # exact SPEINet layer: nn.Conv2d(n_feat*4*n_sequence, n_feat*4, kernel_size=1)
    p["fuse_w"] = w((C4 * n_sequence, C4)); p["fuse_b"] = jnp.zeros((C4,), jnp.float32)
    # TODO(synk): real decoders use ConvTranspose2d 3x3 stride-2 + ResBlocks (source not given).
    p["d2_w"] = w((C4, 4 * 2 * n_feat));     p["d2_b"] = jnp.zeros((2 * n_feat,), jnp.float32)
    p["d1_w"] = w((2 * n_feat, 4 * n_feat)); p["d1_b"] = jnp.zeros((n_feat,), jnp.float32)
    p["out_w"] = w((3, 3, n_feat, out_channels)); p["out_b"] = jnp.zeros((out_channels,), jnp.float32)
    return p


# -------------------------------- forward -----------------------------------

def encode(frames_nhwc, p):
    f = conv2d_s1(frames_nhwc, p["in_w"], p["in_b"], activation="relu")
    f = conv2d_im2col(f, p["e1_w"], p["e1_b"], stride=2, padding=1, activation="relu")
    f = conv2d_im2col(f, p["e2_w"], p["e2_b"], stride=2, padding=1, activation="relu")
    return f  # (N, H/4, W/4, 4*n_feat) bf16


def speinet_forward(x_btchw, params, n_sequence=3, heads=4):
    B, T, Cin, H, W = x_btchw.shape
    assert T == n_sequence
    mid = n_sequence // 2
    # batched encode of ALL frames at once (one conv chain instead of T)
    frames = jnp.transpose(x_btchw, (0, 1, 3, 4, 2)).reshape(B * T, H, W, Cin)
    feats = encode(frames, params)
    _, Hq, Wq, C4 = feats.shape
    L = Hq * Wq
    feats = feats.reshape(B, T, Hq, Wq, C4)
    f_mid = feats[:, mid]                                  # (B, Hq, Wq, C4)
    f_mid_flat = f_mid.reshape(B, L, C4)

    others = [i for i in range(n_sequence) if i != mid]
    fusion = [f_mid]
    if others:
        # every non-mid frame goes through the fused swin block in ONE pallas_call
        y_stack = jnp.stack([feats[:, i].reshape(B, L, C4) for i in others],
                            axis=0).reshape(len(others) * B, L, C4)
        x_stack = jnp.broadcast_to(
            f_mid_flat[None], (len(others), B, L, C4)).reshape(len(others) * B, L, C4)
        f_trans = swin_cross_batched(x_stack, y_stack, params, heads=heads)
        f_trans = f_trans.reshape(len(others), B, Hq, Wq, C4)
        fusion += [f_trans[j] for j in range(len(others))]
    f_fusion = jnp.concatenate(fusion, axis=-1)            # torch channel concat (dim=1)
    if n_sequence == 1:
        f_trans = swin_cross_batched(f_mid_flat, f_mid_flat, params, heads=heads)
        f_fusion = f_fusion + f_trans.reshape(B, Hq, Wq, C4)
    # self.conv: 1x1 Conv2d(n_feat*4*n_sequence -> n_feat*4) as a Pallas matmul
    Bm, Hm, Wm, Cm = f_fusion.shape
    f_fusion = matmul_bias(f_fusion.reshape(Bm * Hm * Wm, Cm),
                           params["fuse_w"], params["fuse_b"]).reshape(Bm, Hm, Wm, -1)
    d = upconv2x(f_fusion, params["d2_w"], params["d2_b"], activation="relu")
    d = upconv2x(d, params["d1_w"], params["d1_b"], activation="relu")
    out = conv2d_s1(d, params["out_w"], params["out_b"], activation=None,
                    out_dtype=jnp.float32)
    return jnp.transpose(out, (0, 3, 1, 2))                # back to NCHW, f32


# --------------------------------- driver ------------------------------------

if __name__ == "__main__":
    key = jax.random.PRNGKey(0)
    pkey, xkey = jax.random.split(key)

    B, T, C, H, W = 2, 3, 3, 16, 16        # batch, n_sequence, in_channels, spatial
    n_feat = 32                            # PyTorch default -> C4 = 128 (lane-dense)

    params = init_params(pkey, in_channels=C, out_channels=3, n_feat=n_feat,
                         n_sequence=T)
    x = jax.random.normal(xkey, (B, T, C, H, W), jnp.float32)

    fwd = jax.jit(functools.partial(speinet_forward, n_sequence=T, heads=4))
    out = fwd(x, params)
    jax.block_until_ready(out)
    assert out.shape == (B, 3, H, W), out.shape
    assert out.dtype == jnp.float32
    print("KERNEL_OK")
</pallas_src>

<mosaic_0001>
module attributes {stable_mosaic.version = 11 : i64} {
  func.func @_conv_s1_kernel(%arg0: i32, %arg1: memref<1x18x18x3xf32, #tpu.memory_space<vmem>>, %arg2: memref<9x3x32xbf16, #tpu.memory_space<vmem>>, %arg3: memref<1x32xf32, #tpu.memory_space<vmem>>, %arg4: memref<1x16x16x32xbf16, #tpu.memory_space<vmem>>) attributes {dimension_semantics = [#tpu.dimension_semantics<parallel>], iteration_bounds = array<i64: 6>, scalar_prefetch = 0 : i64, scratch_operands = 0 : i64, tpu.core_type = #tpu.core_type<tc>, window_params = [{transform_indices = @transform_0, window_bounds = array<i64: 1, 18, 18, 3>}, {pipeline_mode = #tpu.pipeline_mode<synchronous>, transform_indices = @transform_1, window_bounds = array<i64: 9, 3, 32>}, {pipeline_mode = #tpu.pipeline_mode<synchronous>, transform_indices = @transform_2, window_bounds = array<i64: 1, 32>}, {transform_indices = @transform_3, window_bounds = array<i64: 1, 16, 16, 32>}]} {
    %c0 = arith.constant 0 : index
    %c0_0 = arith.constant 0 : index
    %c0_1 = arith.constant 0 : index
    %c0_2 = arith.constant 0 : index
    %0 = vector.load %arg1[%c0, %c0_0, %c0_1, %c0_2] : memref<1x18x18x3xf32, #tpu.memory_space<vmem>>, vector<1x18x18x3xf32>
    %1 = vector.shape_cast %0 : vector<1x18x18x3xf32> to vector<18x18x3xf32>
    %cst = arith.constant 0.000000e+00 : f32
    %2 = vector.broadcast %cst : f32 to vector<256x32xf32>
    %3 = vector.extract_strided_slice %1 {offsets = [0, 0, 0], sizes = [16, 16, 3], strides = [1, 1, 1]} : vector<18x18x3xf32> to vector<16x16x3xf32>
    %4 = vector.shape_cast %3 : vector<16x16x3xf32> to vector<256x3xf32>
    %5 = arith.truncf %4 : vector<256x3xf32> to vector<256x3xbf16>
    %c0_3 = arith.constant 0 : index
    %c0_4 = arith.constant 0 : index
    %c0_5 = arith.constant 0 : index
    %6 = vector.load %arg2[%c0_3, %c0_4, %c0_5] : memref<9x3x32xbf16, #tpu.memory_space<vmem>>, vector<1x3x32xbf16>
    %7 = vector.shape_cast %6 : vector<1x3x32xbf16> to vector<3x32xbf16>
    %cst_6 = arith.constant dense<0.000000e+00> : vector<256x32xf32>
    %8 = tpu.matmul %5, %7, %cst_6 {dimension_numbers = #tpu.dot_dimension_numbers<[1], [0], [0], [1], [0, 0, 1, 1], [], []>} : vector<256x3xbf16>, vector<3x32xbf16>, vector<256x32xf32> -> vector<256x32xf32>
    %9 = arith.addf %2, %8 : vector<256x32xf32>
    %10 = vector.extract_strided_slice %1 {offsets = [0, 1, 0], sizes = [16, 16, 3], strides = [1, 1, 1]} : vector<18x18x3xf32> to vector<16x16x3xf32>
    %11 = vector.shape_cast %10 : vector<16x16x3xf32> to vector<256x3xf32>
    %12 = arith.truncf %11 : vector<256x3xf32> to vector<256x3xbf16>
    %c1 = arith.constant 1 : index
    %c0_7 = arith.constant 0 : index
    %c0_8 = arith.constant 0 : index
    %13 = vector.load %arg2[%c1, %c0_7, %c0_8] : memref<9x3x32xbf16, #tpu.memory_space<vmem>>, vector<1x3x32xbf16>
    %14 = vector.shape_cast %13 : vector<1x3x32xbf16> to vector<3x32xbf16>
    %cst_9 = arith.constant dense<0.000000e+00> : vector<256x32xf32>
    %15 = tpu.matmul %12, %14, %cst_9 {dimension_numbers = #tpu.dot_dimension_numbers<[1], [0], [0], [1], [0, 0, 1, 1], [], []>} : vector<256x3xbf16>, vector<3x32xbf16>, vector<256x32xf32> -> vector<256x32xf32>
    %16 = arith.addf %9, %15 : vector<256x32xf32>
    %17 = vector.extract_strided_slice %1 {offsets = [0, 2, 0], sizes = [16, 16, 3], strides = [1, 1, 1]} : vector<18x18x3xf32> to vector<16x16x3xf32>
    %18 = vector.shape_cast %17 : vector<16x16x3xf32> to vector<256x3xf32>
    %19 = arith.truncf %18 : vector<256x3xf32> to vector<256x3xbf16>
    %c2 = arith.constant 2 : index
    %c0_10 = arith.constant 0 : index
    %c0_11 = arith.constant 0 : index
    %20 = vector.load %arg2[%c2, %c0_10, %c0_11] : memref<9x3x32xbf16, #tpu.memory_space<vmem>>, vector<1x3x32xbf16>
    %21 = vector.shape_cast %20 : vector<1x3x32xbf16> to vector<3x32xbf16>
    %cst_12 = arith.constant dense<0.000000e+00> : vector<256x32xf32>
    %22 = tpu.matmul %19, %21, %cst_12 {dimension_numbers = #tpu.dot_dimension_numbers<[1], [0], [0], [1], [0, 0, 1, 1], [], []>} : vector<256x3xbf16>, vector<3x32xbf16>, vector<256x32xf32> -> vector<256x32xf32>
    %23 = arith.addf %16, %22 : vector<256x32xf32>
    %24 = vector.extract_strided_slice %1 {offsets = [1, 0, 0], sizes = [16, 16, 3], strides = [1, 1, 1]} : vector<18x18x3xf32> to vector<16x16x3xf32>
    %25 = vector.shape_cast %24 : vector<16x16x3xf32> to vector<256x3xf32>
    %26 = arith.truncf %25 : vector<256x3xf32> to vector<256x3xbf16>
    %c3 = arith.constant 3 : index
    %c0_13 = arith.constant 0 : index
    %c0_14 = arith.constant 0 : index
    %27 = vector.load %arg2[%c3, %c0_13, %c0_14] : memref<9x3x32xbf16, #tpu.memory_space<vmem>>, vector<1x3x32xbf16>
    %28 = vector.shape_cast %27 : vector<1x3x32xbf16> to vector<3x32xbf16>
    %cst_15 = arith.constant dense<0.000000e+00> : vector<256x32xf32>
    %29 = tpu.matmul %26, %28, %cst_15 {dimension_numbers = #tpu.dot_dimension_numbers<[1], [0], [0], [1], [0, 0, 1, 1], [], []>} : vector<256x3xbf16>, vector<3x32xbf16>, vector<256x32xf32> -> vector<256x32xf32>
    %30 = arith.addf %23, %29 : vector<256x32xf32>
    %31 = vector.extract_strided_slice %1 {offsets = [1, 1, 0], sizes = [16, 16, 3], strides = [1, 1, 1]} : vector<18x18x3xf32> to vector<16x16x3xf32>
    %32 = vector.shape_cast %31 : vector<16x16x3xf32> to vector<256x3xf32>
    %33 = arith.truncf %32 : vector<256x3xf32> to vector<256x3xbf16>
    %c4 = arith.constant 4 : index
    %c0_16 = arith.constant 0 : index
    %c0_17 = arith.constant 0 : index
    %34 = vector.load %arg2[%c4, %c0_16, %c0_17] : memref<9x3x32xbf16, #tpu.memory_space<vmem>>, vector<1x3x32xbf16>
    %35 = vector.shape_cast %34 : vector<1x3x32xbf16> to vector<3x32xbf16>
    %cst_18 = arith.constant dense<0.000000e+00> : vector<256x32xf32>
    %36 = tpu.matmul %33, %35, %cst_18 {dimension_numbers = #tpu.dot_dimension_numbers<[1], [0], [0], [1], [0, 0, 1, 1], [], []>} : vector<256x3xbf16>, vector<3x32xbf16>, vector<256x32xf32> -> vector<256x32xf32>
    %37 = arith.addf %30, %36 : vector<256x32xf32>
    %38 = vector.extract_strided_slice %1 {offsets = [1, 2, 0], sizes = [16, 16, 3], strides = [1, 1, 1]} : vector<18x18x3xf32> to vector<16x16x3xf32>
    %39 = vector.shape_cast %38 : vector<16x16x3xf32> to vector<256x3xf32>
    %40 = arith.truncf %39 : vector<256x3xf32> to vector<256x3xbf16>
    %c5 = arith.constant 5 : index
    %c0_19 = arith.constant 0 : index
    %c0_20 = arith.constant 0 : index
    %41 = vector.load %arg2[%c5, %c0_19, %c0_20] : memref<9x3x32xbf16, #tpu.memory_space<vmem>>, vector<1x3x32xbf16>
    %42 = vector.shape_cast %41 : vector<1x3x32xbf16> to vector<3x32xbf16>
    %cst_21 = arith.constant dense<0.000000e+00> : vector<256x32xf32>
    %43 = tpu.matmul %40, %42, %cst_21 {dimension_numbers = #tpu.dot_dimension_numbers<[1], [0], [0], [1], [0, 0, 1, 1], [], []>} : vector<256x3xbf16>, vector<3x32xbf16>, vector<256x32xf32> -> vector<256x32xf32>
    %44 = arith.addf %37, %43 : vector<256x32xf32>
    %45 = vector.extract_strided_slice %1 {offsets = [2, 0, 0], sizes = [16, 16, 3], strides = [1, 1, 1]} : vector<18x18x3xf32> to vector<16x16x3xf32>
    %46 = vector.shape_cast %45 : vector<16x16x3xf32> to vector<256x3xf32>
    %47 = arith.truncf %46 : vector<256x3xf32> to vector<256x3xbf16>
    %c6 = arith.constant 6 : index
    %c0_22 = arith.constant 0 : index
    %c0_23 = arith.constant 0 : index
    %48 = vector.load %arg2[%c6, %c0_22, %c0_23] : memref<9x3x32xbf16, #tpu.memory_space<vmem>>, vector<1x3x32xbf16>
    %49 = vector.shape_cast %48 : vector<1x3x32xbf16> to vector<3x32xbf16>
    %cst_24 = arith.constant dense<0.000000e+00> : vector<256x32xf32>
    %50 = tpu.matmul %47, %49, %cst_24 {dimension_numbers = #tpu.dot_dimension_numbers<[1], [0], [0], [1], [0, 0, 1, 1], [], []>} : vector<256x3xbf16>, vector<3x32xbf16>, vector<256x32xf32> -> vector<256x32xf32>
    %51 = arith.addf %44, %50 : vector<256x32xf32>
    %52 = vector.extract_strided_slice %1 {offsets = [2, 1, 0], sizes = [16, 16, 3], strides = [1, 1, 1]} : vector<18x18x3xf32> to vector<16x16x3xf32>
    %53 = vector.shape_cast %52 : vector<16x16x3xf32> to vector<256x3xf32>
    %54 = arith.truncf %53 : vector<256x3xf32> to vector<256x3xbf16>
    %c7 = arith.constant 7 : index
    %c0_25 = arith.constant 0 : index
    %c0_26 = arith.constant 0 : index
    %55 = vector.load %arg2[%c7, %c0_25, %c0_26] : memref<9x3x32xbf16, #tpu.memory_space<vmem>>, vector<1x3x32xbf16>
    %56 = vector.shape_cast %55 : vector<1x3x32xbf16> to vector<3x32xbf16>
    %cst_27 = arith.constant dense<0.000000e+00> : vector<256x32xf32>
    %57 = tpu.matmul %54, %56, %cst_27 {dimension_numbers = #tpu.dot_dimension_numbers<[1], [0], [0], [1], [0, 0, 1, 1], [], []>} : vector<256x3xbf16>, vector<3x32xbf16>, vector<256x32xf32> -> vector<256x32xf32>
    %58 = arith.addf %51, %57 : vector<256x32xf32>
    %59 = vector.extract_strided_slice %1 {offsets = [2, 2, 0], sizes = [16, 16, 3], strides = [1, 1, 1]} : vector<18x18x3xf32> to vector<16x16x3xf32>
    %60 = vector.shape_cast %59 : vector<16x16x3xf32> to vector<256x3xf32>
    %61 = arith.truncf %60 : vector<256x3xf32> to vector<256x3xbf16>
    %c8 = arith.constant 8 : index
    %c0_28 = arith.constant 0 : index
    %c0_29 = arith.constant 0 : index
    %62 = vector.load %arg2[%c8, %c0_28, %c0_29] : memref<9x3x32xbf16, #tpu.memory_space<vmem>>, vector<1x3x32xbf16>
    %63 = vector.shape_cast %62 : vector<1x3x32xbf16> to vector<3x32xbf16>
    %cst_30 = arith.constant dense<0.000000e+00> : vector<256x32xf32>
    %64 = tpu.matmul %61, %63, %cst_30 {dimension_numbers = #tpu.dot_dimension_numbers<[1], [0], [0], [1], [0, 0, 1, 1], [], []>} : vector<256x3xbf16>, vector<3x32xbf16>, vector<256x32xf32> -> vector<256x32xf32>
    %65 = arith.addf %58, %64 : vector<256x32xf32>
    %c0_31 = arith.constant 0 : index
    %c0_32 = arith.constant 0 : index
    %66 = vector.load %arg3[%c0_31, %c0_32] : memref<1x32xf32, #tpu.memory_space<vmem>>, vector<1x32xf32>
    %67 = vector.broadcast %66 : vector<1x32xf32> to vector<256x32xf32>
    %68 = arith.addf %65, %67 : vector<256x32xf32>
    %cst_33 = arith.constant 0.000000e+00 : f32
    %69 = vector.broadcast %cst_33 : f32 to vector<256x32xf32>
    %70 = arith.maximumf %68, %69 : vector<256x32xf32>
    %71 = vector.shape_cast %70 : vector<256x32xf32> to vector<16x16x32xf32>
    %72 = arith.truncf %71 : vector<16x16x32xf32> to vector<16x16x32xbf16>
    %c0_34 = arith.constant 0 : index
    %c0_35 = arith.constant 0 : index
    %c0_36 = arith.constant 0 : index
    %c0_37 = arith.constant 0 : index
    %73 = vector.load %arg4[%c0_34, %c0_35, %c0_36, %c0_37] : memref<1x16x16x32xbf16, #tpu.memory_space<vmem>>, vector<1x16x16x32xbf16>
    %74 = vector.shape_cast %73 : vector<1x16x16x32xbf16> to vector<16x16x32xbf16>
    %75 = vector.shape_cast %72 : vector<16x16x32xbf16> to vector<1x16x16x32xbf16>
    tpu.vector_store %arg4[%c0_34, %c0_35, %c0_36, %c0_37], %75 {strides = array<i32>} : memref<1x16x16x32xbf16, #tpu.memory_space<vmem>>, vector<1x16x16x32xbf16>,
    return
  }
  func.func @transform_0(%arg0: i32) -> (i32, i32, i32, i32) {
    %c0_i32 = arith.constant 0 : i32
    %c0_i32_0 = arith.constant 0 : i32
    %c0_i32_1 = arith.constant 0 : i32
    %c0_i32_2 = arith.constant 0 : i32
    return %arg0, %c0_i32, %c0_i32_0, %c0_i32_1 : i32, i32, i32, i32
  }
  func.func @transform_1(%arg0: i32) -> (i32, i32, i32) {
    %c0_i32 = arith.constant 0 : i32
    %c0_i32_0 = arith.constant 0 : i32
    %c0_i32_1 = arith.constant 0 : i32
    %c0_i32_2 = arith.constant 0 : i32
    return %c0_i32, %c0_i32_0, %c0_i32_1 : i32, i32, i32
  }
  func.func @transform_2(%arg0: i32) -> (i32, i32) {
    %c0_i32 = arith.constant 0 : i32
    %c0_i32_0 = arith.constant 0 : i32
    %c0_i32_1 = arith.constant 0 : i32
    return %c0_i32, %c0_i32_0 : i32, i32
  }
  func.func @transform_3(%arg0: i32) -> (i32, i32, i32, i32) {
    %c0_i32 = arith.constant 0 : i32
    %c0_i32_0 = arith.constant 0 : i32
    %c0_i32_1 = arith.constant 0 : i32
    %c0_i32_2 = arith.constant 0 : i32
    return %arg0, %c0_i32, %c0_i32_0, %c0_i32_1 : i32, i32, i32, i32
  }
}

module attributes {stable_mosaic.version = 11 : i64} {
  func.func @_mm_bias_kernel(%arg0: i32, %arg1: memref<384x288xbf16, #tpu.memory_space<vmem>>, %arg2: memref<288x64xbf16, #tpu.memory_space<vmem>>, %arg3: memref<1x64xf32, #tpu.memory_space<vmem>>, %arg4: memref<384x64xbf16, #tpu.memory_space<vmem>>) attributes {dimension_semantics = [#tpu.dimension_semantics<parallel>], iteration_bounds = array<i64: 1>, scalar_prefetch = 0 : i64, scratch_operands = 0 : i64, tpu.core_type = #tpu.core_type<tc>, window_params = [{transform_indices = @transform_0, window_bounds = array<i64: 384, 288>}, {pipeline_mode = #tpu.pipeline_mode<synchronous>, transform_indices = @transform_1, window_bounds = array<i64: 288, 64>}, {pipeline_mode = #tpu.pipeline_mode<synchronous>, transform_indices = @transform_2, window_bounds = array<i64: 1, 64>}, {transform_indices = @transform_3, window_bounds = array<i64: 384, 64>}]} {
    %c0 = arith.constant 0 : index
    %c0_0 = arith.constant 0 : index
    %0 = vector.load %arg1[%c0, %c0_0] : memref<384x288xbf16, #tpu.memory_space<vmem>>, vector<384x288xbf16>
    %c0_1 = arith.constant 0 : index
    %c0_2 = arith.constant 0 : index
    %1 = vector.load %arg2[%c0_1, %c0_2] : memref<288x64xbf16, #tpu.memory_space<vmem>>, vector<288x64xbf16>
    %cst = arith.constant dense<0.000000e+00> : vector<384x64xf32>
    %2 = tpu.matmul %0, %1, %cst {dimension_numbers = #tpu.dot_dimension_numbers<[1], [0], [0], [1], [0, 0, 1, 1], [], []>} : vector<384x288xbf16>, vector<288x64xbf16>, vector<384x64xf32> -> vector<384x64xf32>
    %c0_3 = arith.constant 0 : index
    %c0_4 = arith.constant 0 : index
    %3 = vector.load %arg3[%c0_3, %c0_4] : memref<1x64xf32, #tpu.memory_space<vmem>>, vector<1x64xf32>
    %4 = vector.broadcast %3 : vector<1x64xf32> to vector<384x64xf32>
    %5 = arith.addf %2, %4 : vector<384x64xf32>
    %cst_5 = arith.constant 0.000000e+00 : f32
    %6 = vector.broadcast %cst_5 : f32 to vector<384x64xf32>
    %7 = arith.maximumf %5, %6 : vector<384x64xf32>
    %8 = arith.truncf %7 : vector<384x64xf32> to vector<384x64xbf16>
    %c0_6 = arith.constant 0 : index
    %c0_7 = arith.constant 0 : index
    %9 = vector.load %arg4[%c0_6, %c0_7] : memref<384x64xbf16, #tpu.memory_space<vmem>>, vector<384x64xbf16>
    tpu.vector_store %arg4[%c0_6, %c0_7], %8 {strides = array<i32>} : memref<384x64xbf16, #tpu.memory_space<vmem>>, vector<384x64xbf16>,
    return
  }
  func.func @transform_0(%arg0: i32) -> (i32, i32) {
    %c0_i32 = arith.constant 0 : i32
    %c0_i32_0 = arith.constant 0 : i32
    return %arg0, %c0_i32 : i32, i32
  }
  func.func @transform_1(%arg0: i32) -> (i32, i32) {
    %c0_i32 = arith.constant 0 : i32
    %c0_i32_0 = arith.constant 0 : i32
    %c0_i32_1 = arith.constant 0 : i32
    return %c0_i32, %c0_i32_0 : i32, i32
  }
  func.func @transform_2(%arg0: i32) -> (i32, i32) {
    %c0_i32 = arith.constant 0 : i32
    %c0_i32_0 = arith.constant 0 : i32
    %c0_i32_1 = arith.constant 0 : i32
    return %c0_i32, %c0_i32_0 : i32, i32
  }
  func.func @transform_3(%arg0: i32) -> (i32, i32) {
    %c0_i32 = arith.constant 0 : i32
    %c0_i32_0 = arith.constant 0 : i32
    return %arg0, %c0_i32 : i32, i32
  }
}

module attributes {stable_mosaic.version = 11 : i64} {
  func.func @_mm_bias_kernel(%arg0: i32, %arg1: memref<96x576xbf16, #tpu.memory_space<vmem>>, %arg2: memref<576x128xbf16, #tpu.memory_space<vmem>>, %arg3: memref<1x128xf32, #tpu.memory_space<vmem>>, %arg4: memref<96x128xbf16, #tpu.memory_space<vmem>>) attributes {dimension_semantics = [#tpu.dimension_semantics<parallel>], iteration_bounds = array<i64: 1>, scalar_prefetch = 0 : i64, scratch_operands = 0 : i64, tpu.core_type = #tpu.core_type<tc>, window_params = [{transform_indices = @transform_0, window_bounds = array<i64: 96, 576>}, {pipeline_mode = #tpu.pipeline_mode<synchronous>, transform_indices = @transform_1, window_bounds = array<i64: 576, 128>}, {pipeline_mode = #tpu.pipeline_mode<synchronous>, transform_indices = @transform_2, window_bounds = array<i64: 1, 128>}, {transform_indices = @transform_3, window_bounds = array<i64: 96, 128>}]} {
    %c0 = arith.constant 0 : index
    %c0_0 = arith.constant 0 : index
    %0 = vector.load %arg1[%c0, %c0_0] : memref<96x576xbf16, #tpu.memory_space<vmem>>, vector<96x576xbf16>
    %c0_1 = arith.constant 0 : index
    %c0_2 = arith.constant 0 : index
    %1 = vector.load %arg2[%c0_1, %c0_2] : memref<576x128xbf16, #tpu.memory_space<vmem>>, vector<576x128xbf16>
    %cst = arith.constant dense<0.000000e+00> : vector<96x128xf32>
    %2 = tpu.matmul %0, %1, %cst {dimension_numbers = #tpu.dot_dimension_numbers<[1], [0], [0], [1], [0, 0, 1, 1], [], []>} : vector<96x576xbf16>, vector<576x128xbf16>, vector<96x128xf32> -> vector<96x128xf32>
    %c0_3 = arith.constant 0 : index
    %c0_4 = arith.constant 0 : index
    %3 = vector.load %arg3[%c0_3, %c0_4] : memref<1x128xf32, #tpu.memory_space<vmem>>, vector<1x128xf32>
    %4 = vector.broadcast %3 : vector<1x128xf32> to vector<96x128xf32>
    %5 = arith.addf %2, %4 : vector<96x128xf32>
    %cst_5 = arith.constant 0.000000e+00 : f32
    %6 = vector.broadcast %cst_5 : f32 to vector<96x128xf32>
    %7 = arith.maximumf %5, %6 : vector<96x128xf32>
    %8 = arith.truncf %7 : vector<96x128xf32> to vector<96x128xbf16>
    %c0_6 = arith.constant 0 : index
    %c0_7 = arith.constant 0 : index
    %9 = vector.load %arg4[%c0_6, %c0_7] : memref<96x128xbf16, #tpu.memory_space<vmem>>, vector<96x128xbf16>
    tpu.vector_store %arg4[%c0_6, %c0_7], %8 {strides = array<i32>} : memref<96x128xbf16, #tpu.memory_space<vmem>>, vector<96x128xbf16>,
    return
  }
  func.func @transform_0(%arg0: i32) -> (i32, i32) {
    %c0_i32 = arith.constant 0 : i32
    %c0_i32_0 = arith.constant 0 : i32
    return %arg0, %c0_i32 : i32, i32
  }
  func.func @transform_1(%arg0: i32) -> (i32, i32) {
    %c0_i32 = arith.constant 0 : i32
    %c0_i32_0 = arith.constant 0 : i32
    %c0_i32_1 = arith.constant 0 : i32
    return %c0_i32, %c0_i32_0 : i32, i32
  }
  func.func @transform_2(%arg0: i32) -> (i32, i32) {
    %c0_i32 = arith.constant 0 : i32
    %c0_i32_0 = arith.constant 0 : i32
    %c0_i32_1 = arith.constant 0 : i32
    return %c0_i32, %c0_i32_0 : i32, i32
  }
  func.func @transform_3(%arg0: i32) -> (i32, i32) {
    %c0_i32 = arith.constant 0 : i32
    %c0_i32_0 = arith.constant 0 : i32
    return %arg0, %c0_i32 : i32, i32
  }
}

module attributes {stable_mosaic.version = 11 : i64} {
  func.func @_swin_block_kernel(%arg0: i32, %arg1: memref<1x16x128xbf16, #tpu.memory_space<vmem>>, %arg2: memref<1x16x128xbf16, #tpu.memory_space<vmem>>, %arg3: memref<6x128xf32, #tpu.memory_space<vmem>>, %arg4: memref<128x128xbf16, #tpu.memory_space<vmem>>, %arg5: memref<1x128xf32, #tpu.memory_space<vmem>>, %arg6: memref<128x256xbf16, #tpu.memory_space<vmem>>, %arg7: memref<1x256xf32, #tpu.memory_space<vmem>>, %arg8: memref<128x128xbf16, #tpu.memory_space<vmem>>, %arg9: memref<1x128xf32, #tpu.memory_space<vmem>>, %arg10: memref<128x256xbf16, #tpu.memory_space<vmem>>, %arg11: memref<1x256xf32, #tpu.memory_space<vmem>>, %arg12: memref<256x128xbf16, #tpu.memory_space<vmem>>, %arg13: memref<1x128xf32, #tpu.memory_space<vmem>>, %arg14: memref<1x16x128xbf16, #tpu.memory_space<vmem>>) attributes {dimension_semantics = [#tpu.dimension_semantics<parallel>], iteration_bounds = array<i64: 4>, scalar_prefetch = 0 : i64, scratch_operands = 0 : i64, tpu.core_type = #tpu.core_type<tc>, window_params = [{transform_indices = @transform_0, window_bounds = array<i64: 1, 16, 128>}, {transform_indices = @transform_1, window_bounds = array<i64: 1, 16, 128>}, {pipeline_mode = #tpu.pipeline_mode<synchronous>, transform_indices = @transform_2, window_bounds = array<i64: 6, 128>}, {pipeline_mode = #tpu.pipeline_mode<synchronous>, transform_indices = @transform_3, window_bounds = array<i64: 128, 128>}, {pipeline_mode = #tpu.pipeline_mode<synchronous>, transform_indices = @transform_4, window_bounds = array<i64: 1, 128>}, {pipeline_mode = #tpu.pipeline_mode<synchronous>, transform_indices = @transform_5, window_bounds = array<i64: 128, 256>}, {pipeline_mode = #tpu.pipeline_mode<synchronous>, transform_indices = @transform_6, window_bounds = array<i64: 1, 256>}, {pipeline_mode = #tpu.pipeline_mode<synchronous>, transform_indices = @transform_7, window_bounds = array<i64: 128, 128>}, {pipeline_mode = #tpu.pipeline_mode<synchronous>, transform_indices = @transform_8, window_bounds = array<i64: 1, 128>}, {pipeline_mode = #tpu.pipeline_mode<synchronous>, transform_indices = @transform_9, window_bounds = array<i64: 128, 256>}, {pipeline_mode = #tpu.pipeline_mode<synchronous>, transform_indices = @transform_10, window_bounds = array<i64: 1, 256>}, {pipeline_mode = #tpu.pipeline_mode<synchronous>, transform_indices = @transform_11, window_bounds = array<i64: 256, 128>}, {pipeline_mode = #tpu.pipeline_mode<synchronous>, transform_indices = @transform_12, window_bounds = array<i64: 1, 128>}, {transform_indices = @transform_13, window_bounds = array<i64: 1, 16, 128>}]} {
    %c0 = arith.constant 0 : index
    %c0_0 = arith.constant 0 : index
    %c0_1 = arith.constant 0 : index
    %0 = vector.load %arg1[%c0, %c0_0, %c0_1] : memref<1x16x128xbf16, #tpu.memory_space<vmem>>, vector<1x16x128xbf16>
    %1 = vector.shape_cast %0 : vector<1x16x128xbf16> to vector<16x128xbf16>
    %2 = arith.extf %1 : vector<16x128xbf16> to vector<16x128xf32>
    %c0_2 = arith.constant 0 : index
    %c0_3 = arith.constant 0 : index
    %c0_4 = arith.constant 0 : index
    %3 = vector.load %arg2[%c0_2, %c0_3, %c0_4] : memref<1x16x128xbf16, #tpu.memory_space<vmem>>, vector<1x16x128xbf16>
    %4 = vector.shape_cast %3 : vector<1x16x128xbf16> to vector<16x128xbf16>
    %5 = arith.extf %4 : vector<16x128xbf16> to vector<16x128xf32>
    %c0_5 = arith.constant 0 : index
    %c0_6 = arith.constant 0 : index
    %6 = vector.load %arg3[%c0_5, %c0_6] : memref<6x128xf32, #tpu.memory_space<vmem>>, vector<6x128xf32>
    %7 = vector.extract_strided_slice %6 {offsets = [0, 0], sizes = [1, 128], strides = [1, 1]} : vector<6x128xf32> to vector<1x128xf32>
    %8 = vector.extract_strided_slice %6 {offsets = [1, 0], sizes = [1, 128], strides = [1, 1]} : vector<6x128xf32> to vector<1x128xf32>
    %cst = arith.constant dense<0.000000e+00> : vector<16xf32>
    %9 = vector.multi_reduction <add>, %2, %cst [1] : vector<16x128xf32> to vector<16xf32>
    %10 = vector.shape_cast %9 : vector<16xf32> to vector<16x1xf32>
    %cst_7 = arith.constant 1.280000e+02 : f32
    %11 = vector.broadcast %cst_7 : f32 to vector<16x1xf32>
    %12 = arith.divf %10, %11 : vector<16x1xf32>
    %13 = vector.broadcast %12 : vector<16x1xf32> to vector<16x128xf32>
    %14 = arith.subf %2, %13 : vector<16x128xf32>
    %15 = arith.mulf %14, %14 : vector<16x128xf32>
    %cst_8 = arith.constant dense<0.000000e+00> : vector<16xf32>
    %16 = vector.multi_reduction <add>, %15, %cst_8 [1] : vector<16x128xf32> to vector<16xf32>
    %17 = vector.shape_cast %16 : vector<16xf32> to vector<16x1xf32>
    %cst_9 = arith.constant 1.280000e+02 : f32
    %18 = vector.broadcast %cst_9 : f32 to vector<16x1xf32>
    %19 = arith.divf %17, %18 : vector<16x1xf32>
    %20 = vector.broadcast %12 : vector<16x1xf32> to vector<16x128xf32>
    %21 = arith.subf %2, %20 : vector<16x128xf32>
    %cst_10 = arith.constant 9.99999974E-6 : f32
    %22 = vector.broadcast %cst_10 : f32 to vector<16x1xf32>
    %23 = arith.addf %19, %22 : vector<16x1xf32>
    %24 = math.rsqrt %23 : vector<16x1xf32>
    %25 = vector.broadcast %24 : vector<16x1xf32> to vector<16x128xf32>
    %26 = arith.mulf %21, %25 : vector<16x128xf32>
    %27 = vector.broadcast %7 : vector<1x128xf32> to vector<16x128xf32>
    %28 = arith.mulf %26, %27 : vector<16x128xf32>
    %29 = vector.broadcast %8 : vector<1x128xf32> to vector<16x128xf32>
    %30 = arith.addf %28, %29 : vector<16x128xf32>
    %31 = vector.extract_strided_slice %6 {offsets = [2, 0], sizes = [1, 128], strides = [1, 1]} : vector<6x128xf32> to vector<1x128xf32>
    %32 = vector.extract_strided_slice %6 {offsets = [3, 0], sizes = [1, 128], strides = [1, 1]} : vector<6x128xf32> to vector<1x128xf32>
    %cst_11 = arith.constant dense<0.000000e+00> : vector<16xf32>
    %33 = vector.multi_reduction <add>, %5, %cst_11 [1] : vector<16x128xf32> to vector<16xf32>
    %34 = vector.shape_cast %33 : vector<16xf32> to vector<16x1xf32>
    %cst_12 = arith.constant 1.280000e+02 : f32
    %35 = vector.broadcast %cst_12 : f32 to vector<16x1xf32>
    %36 = arith.divf %34, %35 : vector<16x1xf32>
    %37 = vector.broadcast %36 : vector<16x1xf32> to vector<16x128xf32>
    %38 = arith.subf %5, %37 : vector<16x128xf32>
    %39 = arith.mulf %38, %38 : vector<16x128xf32>
    %cst_13 = arith.constant dense<0.000000e+00> : vector<16xf32>
    %40 = vector.multi_reduction <add>, %39, %cst_13 [1] : vector<16x128xf32> to vector<16xf32>
    %41 = vector.shape_cast %40 : vector<16xf32> to vector<16x1xf32>
    %cst_14 = arith.constant 1.280000e+02 : f32
    %42 = vector.broadcast %cst_14 : f32 to vector<16x1xf32>
    %43 = arith.divf %41, %42 : vector<16x1xf32>
    %44 = vector.broadcast %36 : vector<16x1xf32> to vector<16x128xf32>
    %45 = arith.subf %5, %44 : vector<16x128xf32>
    %cst_15 = arith.constant 9.99999974E-6 : f32
    %46 = vector.broadcast %cst_15 : f32 to vector<16x1xf32>
    %47 = arith.addf %43, %46 : vector<16x1xf32>
    %48 = math.rsqrt %47 : vector<16x1xf32>
    %49 = vector.broadcast %48 : vector<16x1xf32> to vector<16x128xf32>
    %50 = arith.mulf %45, %49 : vector<16x128xf32>
    %51 = vector.broadcast %31 : vector<1x128xf32> to vector<16x128xf32>
    %52 = arith.mulf %50, %51 : vector<16x128xf32>
    %53 = vector.broadcast %32 : vector<1x128xf32> to vector<16x128xf32>
    %54 = arith.addf %52, %53 : vector<16x128xf32>
    %55 = arith.truncf %30 : vector<16x128xf32> to vector<16x128xbf16>
    %c0_16 = arith.constant 0 : index
    %c0_17 = arith.constant 0 : index
    %56 = vector.load %arg4[%c0_16, %c0_17] : memref<128x128xbf16, #tpu.memory_space<vmem>>, vector<128x128xbf16>
    %cst_18 = arith.constant dense<0.000000e+00> : vector<16x128xf32>
    %57 = tpu.matmul %55, %56, %cst_18 {dimension_numbers = #tpu.dot_dimension_numbers<[1], [0], [0], [1], [0, 0, 1, 1], [], []>} : vector<16x128xbf16>, vector<128x128xbf16>, vector<16x128xf32> -> vector<16x128xf32>
    %c0_19 = arith.constant 0 : index
    %c0_20 = arith.constant 0 : index
    %58 = vector.load %arg5[%c0_19, %c0_20] : memref<1x128xf32, #tpu.memory_space<vmem>>, vector<1x128xf32>
    %59 = vector.broadcast %58 : vector<1x128xf32> to vector<16x128xf32>
    %60 = arith.addf %57, %59 : vector<16x128xf32>
    %61 = arith.truncf %54 : vector<16x128xf32> to vector<16x128xbf16>
    %c0_21 = arith.constant 0 : index
    %c0_22 = arith.constant 0 : index
    %62 = vector.load %arg6[%c0_21, %c0_22] : memref<128x256xbf16, #tpu.memory_space<vmem>>, vector<128x256xbf16>
    %cst_23 = arith.constant dense<0.000000e+00> : vector<16x256xf32>
    %63 = tpu.matmul %61, %62, %cst_23 {dimension_numbers = #tpu.dot_dimension_numbers<[1], [0], [0], [1], [0, 0, 1, 1], [], []>} : vector<16x128xbf16>, vector<128x256xbf16>, vector<16x256xf32> -> vector<16x256xf32>
    %c0_24 = arith.constant 0 : index
    %c0_25 = arith.constant 0 : index
    %64 = vector.load %arg7[%c0_24, %c0_25] : memref<1x256xf32, #tpu.memory_space<vmem>>, vector<1x256xf32>
    %65 = vector.broadcast %64 : vector<1x256xf32> to vector<16x256xf32>
    %66 = arith.addf %63, %65 : vector<16x256xf32>
    %67 = vector.extract_strided_slice %66 {offsets = [0, 0], sizes = [16, 128], strides = [1, 1]} : vector<16x256xf32> to vector<16x128xf32>
    %68 = vector.extract_strided_slice %66 {offsets = [0, 128], sizes = [16, 128], strides = [1, 1]} : vector<16x256xf32> to vector<16x128xf32>
    %cst_26 = arith.constant 0.000000e+00 : f32
    %69 = vector.broadcast %cst_26 : f32 to vector<16x128xf32>
    %70 = vector.extract_strided_slice %60 {offsets = [0, 0], sizes = [16, 32], strides = [1, 1]} : vector<16x128xf32> to vector<16x32xf32>
    %71 = arith.truncf %70 : vector<16x32xf32> to vector<16x32xbf16>
    %72 = vector.extract_strided_slice %67 {offsets = [0, 0], sizes = [16, 32], strides = [1, 1]} : vector<16x128xf32> to vector<16x32xf32>
    %73 = arith.truncf %72 : vector<16x32xf32> to vector<16x32xbf16>
    %74 = vector.extract_strided_slice %68 {offsets = [0, 0], sizes = [16, 32], strides = [1, 1]} : vector<16x128xf32> to vector<16x32xf32>
    %75 = arith.truncf %74 : vector<16x32xf32> to vector<16x32xbf16>
    %cst_27 = arith.constant dense<0.000000e+00> : vector<16x16xf32>
    %76 = tpu.matmul %71, %73, %cst_27 {dimension_numbers = #tpu.dot_dimension_numbers<[1], [1], [0], [0], [0, 0, 1, 0], [], []>} : vector<16x32xbf16>, vector<16x32xbf16>, vector<16x16xf32> -> vector<16x16xf32>
    %cst_28 = arith.constant 0.176776692 : f32
    %77 = vector.broadcast %cst_28 : f32 to vector<16x16xf32>
    %78 = arith.mulf %76, %77 : vector<16x16xf32>
    %cst_29 = arith.constant dense<0xFF800000> : vector<16xf32>
    %79 = vector.multi_reduction <maximumf>, %78, %cst_29 [1] : vector<16x16xf32> to vector<16xf32>
    %80 = vector.shape_cast %79 : vector<16xf32> to vector<16x1xf32>
    %81 = vector.broadcast %80 : vector<16x1xf32> to vector<16x16xf32>
    %82 = arith.subf %78, %81 : vector<16x16xf32>
    %83 = math.exp %82 : vector<16x16xf32>
    %cst_30 = arith.constant dense<0.000000e+00> : vector<16xf32>
    %84 = vector.multi_reduction <add>, %83, %cst_30 [1] : vector<16x16xf32> to vector<16xf32>
    %85 = vector.shape_cast %84 : vector<16xf32> to vector<16x1xf32>
    %86 = tpu.reciprocal %85 {approx = true} : vector<16x1xf32> -> vector<16x1xf32>
    %87 = vector.broadcast %86 : vector<16x1xf32> to vector<16x16xf32>
    %88 = arith.mulf %83, %87 : vector<16x16xf32>
    %89 = arith.truncf %88 : vector<16x16xf32> to vector<16x16xbf16>
    %cst_31 = arith.constant dense<0.000000e+00> : vector<16x32xf32>
    %90 = tpu.matmul %89, %75, %cst_31 {dimension_numbers = #tpu.dot_dimension_numbers<[1], [0], [0], [1], [0, 0, 1, 1], [], []>} : vector<16x16xbf16>, vector<16x32xbf16>, vector<16x32xf32> -> vector<16x32xf32>
    %91 = arith.truncf %90 : vector<16x32xf32> to vector<16x32xbf16>
    %c0_32 = arith.constant 0 : index
    %c0_33 = arith.constant 0 : index
    %92 = vector.load %arg8[%c0_32, %c0_33] : memref<128x128xbf16, #tpu.memory_space<vmem>>, vector<32x128xbf16>
    %cst_34 = arith.constant dense<0.000000e+00> : vector<16x128xf32>
    %93 = tpu.matmul %91, %92, %cst_34 {dimension_numbers = #tpu.dot_dimension_numbers<[1], [0], [0], [1], [0, 0, 1, 1], [], []>} : vector<16x32xbf16>, vector<32x128xbf16>, vector<16x128xf32> -> vector<16x128xf32>
    %94 = arith.addf %69, %93 : vector<16x128xf32>
    %95 = vector.extract_strided_slice %60 {offsets = [0, 32], sizes = [16, 32], strides = [1, 1]} : vector<16x128xf32> to vector<16x32xf32>
    %96 = arith.truncf %95 : vector<16x32xf32> to vector<16x32xbf16>
    %97 = vector.extract_strided_slice %67 {offsets = [0, 32], sizes = [16, 32], strides = [1, 1]} : vector<16x128xf32> to vector<16x32xf32>
    %98 = arith.truncf %97 : vector<16x32xf32> to vector<16x32xbf16>
    %99 = vector.extract_strided_slice %68 {offsets = [0, 32], sizes = [16, 32], strides = [1, 1]} : vector<16x128xf32> to vector<16x32xf32>
    %100 = arith.truncf %99 : vector<16x32xf32> to vector<16x32xbf16>
    %cst_35 = arith.constant dense<0.000000e+00> : vector<16x16xf32>
    %101 = tpu.matmul %96, %98, %cst_35 {dimension_numbers = #tpu.dot_dimension_numbers<[1], [1], [0], [0], [0, 0, 1, 0], [], []>} : vector<16x32xbf16>, vector<16x32xbf16>, vector<16x16xf32> -> vector<16x16xf32>
    %cst_36 = arith.constant 0.176776692 : f32
    %102 = vector.broadcast %cst_36 : f32 to vector<16x16xf32>
    %103 = arith.mulf %101, %102 : vector<16x16xf32>
    %cst_37 = arith.constant dense<0xFF800000> : vector<16xf32>
    %104 = vector.multi_reduction <maximumf>, %103, %cst_37 [1] : vector<16x16xf32> to vector<16xf32>
    %105 = vector.shape_cast %104 : vector<16xf32> to vector<16x1xf32>
    %106 = vector.broadcast %105 : vector<16x1xf32> to vector<16x16xf32>
    %107 = arith.subf %103, %106 : vector<16x16xf32>
    %108 = math.exp %107 : vector<16x16xf32>
    %cst_38 = arith.constant dense<0.000000e+00> : vector<16xf32>
    %109 = vector.multi_reduction <add>, %108, %cst_38 [1] : vector<16x16xf32> to vector<16xf32>
    %110 = vector.shape_cast %109 : vector<16xf32> to vector<16x1xf32>
    %111 = tpu.reciprocal %110 {approx = true} : vector<16x1xf32> -> vector<16x1xf32>
    %112 = vector.broadcast %111 : vector<16x1xf32> to vector<16x16xf32>
    %113 = arith.mulf %108, %112 : vector<16x16xf32>
    %114 = arith.truncf %113 : vector<16x16xf32> to vector<16x16xbf16>
    %cst_39 = arith.constant dense<0.000000e+00> : vector<16x32xf32>
    %115 = tpu.matmul %114, %100, %cst_39 {dimension_numbers = #tpu.dot_dimension_numbers<[1], [0], [0], [1], [0, 0, 1, 1], [], []>} : vector<16x16xbf16>, vector<16x32xbf16>, vector<16x32xf32> -> vector<16x32xf32>
    %116 = arith.truncf %115 : vector<16x32xf32> to vector<16x32xbf16>
    %c32 = arith.constant 32 : index
    %c0_40 = arith.constant 0 : index
    %117 = vector.load %arg8[%c32, %c0_40] : memref<128x128xbf16, #tpu.memory_space<vmem>>, vector<32x128xbf16>
    %cst_41 = arith.constant dense<0.000000e+00> : vector<16x128xf32>
    %118 = tpu.matmul %116, %117, %cst_41 {dimension_numbers = #tpu.dot_dimension_numbers<[1], [0], [0], [1], [0, 0, 1, 1], [], []>} : vector<16x32xbf16>, vector<32x128xbf16>, vector<16x128xf32> -> vector<16x128xf32>
    %119 = arith.addf %94, %118 : vector<16x128xf32>
    %120 = vector.extract_strided_slice %60 {offsets = [0, 64], sizes = [16, 32], strides = [1, 1]} : vector<16x128xf32> to vector<16x32xf32>
    %121 = arith.truncf %120 : vector<16x32xf32> to vector<16x32xbf16>
    %122 = vector.extract_strided_slice %67 {offsets = [0, 64], sizes = [16, 32], strides = [1, 1]} : vector<16x128xf32> to vector<16x32xf32>
    %123 = arith.truncf %122 : vector<16x32xf32> to vector<16x32xbf16>
    %124 = vector.extract_strided_slice %68 {offsets = [0, 64], sizes = [16, 32], strides = [1, 1]} : vector<16x128xf32> to vector<16x32xf32>
    %125 = arith.truncf %124 : vector<16x32xf32> to vector<16x32xbf16>
    %cst_42 = arith.constant dense<0.000000e+00> : vector<16x16xf32>
    %126 = tpu.matmul %121, %123, %cst_42 {dimension_numbers = #tpu.dot_dimension_numbers<[1], [1], [0], [0], [0, 0, 1, 0], [], []>} : vector<16x32xbf16>, vector<16x32xbf16>, vector<16x16xf32> -> vector<16x16xf32>
    %cst_43 = arith.constant 0.176776692 : f32
    %127 = vector.broadcast %cst_43 : f32 to vector<16x16xf32>
    %128 = arith.mulf %126, %127 : vector<16x16xf32>
    %cst_44 = arith.constant dense<0xFF800000> : vector<16xf32>
    %129 = vector.multi_reduction <maximumf>, %128, %cst_44 [1] : vector<16x16xf32> to vector<16xf32>
    %130 = vector.shape_cast %129 : vector<16xf32> to vector<16x1xf32>
    %131 = vector.broadcast %130 : vector<16x1xf32> to vector<16x16xf32>
    %132 = arith.subf %128, %131 : vector<16x16xf32>
    %133 = math.exp %132 : vector<16x16xf32>
    %cst_45 = arith.constant dense<0.000000e+00> : vector<16xf32>
    %134 = vector.multi_reduction <add>, %133, %cst_45 [1] : vector<16x16xf32> to vector<16xf32>
    %135 = vector.shape_cast %134 : vector<16xf32> to vector<16x1xf32>
    %136 = tpu.reciprocal %135 {approx = true} : vector<16x1xf32> -> vector<16x1xf32>
    %137 = vector.broadcast %136 : vector<16x1xf32> to vector<16x16xf32>
    %138 = arith.mulf %133, %137 : vector<16x16xf32>
    %139 = arith.truncf %138 : vector<16x16xf32> to vector<16x16xbf16>
    %cst_46 = arith.constant dense<0.000000e+00> : vector<16x32xf32>
    %140 = tpu.matmul %139, %125, %cst_46 {dimension_numbers = #tpu.dot_dimension_numbers<[1], [0], [0], [1], [0, 0, 1, 1], [], []>} : vector<16x16xbf16>, vector<16x32xbf16>, vector<16x32xf32> -> vector<16x32xf32>
    %141 = arith.truncf %140 : vector<16x32xf32> to vector<16x32xbf16>
    %c64 = arith.constant 64 : index
    %c0_47 = arith.constant 0 : index
    %142 = vector.load %arg8[%c64, %c0_47] : memref<128x128xbf16, #tpu.memory_space<vmem>>, vector<32x128xbf16>
    %cst_48 = arith.constant dense<0.000000e+00> : vector<16x128xf32>
    %143 = tpu.matmul %141, %142, %cst_48 {dimension_numbers = #tpu.dot_dimension_numbers<[1], [0], [0], [1], [0, 0, 1, 1], [], []>} : vector<16x32xbf16>, vector<32x128xbf16>, vector<16x128xf32> -> vector<16x128xf32>
    %144 = arith.addf %119, %143 : vector<16x128xf32>
    %145 = vector.extract_strided_slice %60 {offsets = [0, 96], sizes = [16, 32], strides = [1, 1]} : vector<16x128xf32> to vector<16x32xf32>
    %146 = arith.truncf %145 : vector<16x32xf32> to vector<16x32xbf16>
    %147 = vector.extract_strided_slice %67 {offsets = [0, 96], sizes = [16, 32], strides = [1, 1]} : vector<16x128xf32> to vector<16x32xf32>
    %148 = arith.truncf %147 : vector<16x32xf32> to vector<16x32xbf16>
    %149 = vector.extract_strided_slice %68 {offsets = [0, 96], sizes = [16, 32], strides = [1, 1]} : vector<16x128xf32> to vector<16x32xf32>
    %150 = arith.truncf %149 : vector<16x32xf32> to vector<16x32xbf16>
    %cst_49 = arith.constant dense<0.000000e+00> : vector<16x16xf32>
    %151 = tpu.matmul %146, %148, %cst_49 {dimension_numbers = #tpu.dot_dimension_numbers<[1], [1], [0], [0], [0, 0, 1, 0], [], []>} : vector<16x32xbf16>, vector<16x32xbf16>, vector<16x16xf32> -> vector<16x16xf32>
    %cst_50 = arith.constant 0.176776692 : f32
    %152 = vector.broadcast %cst_50 : f32 to vector<16x16xf32>
    %153 = arith.mulf %151, %152 : vector<16x16xf32>
    %cst_51 = arith.constant dense<0xFF800000> : vector<16xf32>
    %154 = vector.multi_reduction <maximumf>, %153, %cst_51 [1] : vector<16x16xf32> to vector<16xf32>
    %155 = vector.shape_cast %154 : vector<16xf32> to vector<16x1xf32>
    %156 = vector.broadcast %155 : vector<16x1xf32> to vector<16x16xf32>
    %157 = arith.subf %153, %156 : vector<16x16xf32>
    %158 = math.exp %157 : vector<16x16xf32>
    %cst_52 = arith.constant dense<0.000000e+00> : vector<16xf32>
    %159 = vector.multi_reduction <add>, %158, %cst_52 [1] : vector<16x16xf32> to vector<16xf32>
    %160 = vector.shape_cast %159 : vector<16xf32> to vector<16x1xf32>
    %161 = tpu.reciprocal %160 {approx = true} : vector<16x1xf32> -> vector<16x1xf32>
    %162 = vector.broadcast %161 : vector<16x1xf32> to vector<16x16xf32>
    %163 = arith.mulf %158, %162 : vector<16x16xf32>
    %164 = arith.truncf %163 : vector<16x16xf32> to vector<16x16xbf16>
    %cst_53 = arith.constant dense<0.000000e+00> : vector<16x32xf32>
    %165 = tpu.matmul %164, %150, %cst_53 {dimension_numbers = #tpu.dot_dimension_numbers<[1], [0], [0], [1], [0, 0, 1, 1], [], []>} : vector<16x16xbf16>, vector<16x32xbf16>, vector<16x32xf32> -> vector<16x32xf32>
    %166 = arith.truncf %165 : vector<16x32xf32> to vector<16x32xbf16>
    %c96 = arith.constant 96 : index
    %c0_54 = arith.constant 0 : index
    %167 = vector.load %arg8[%c96, %c0_54] : memref<128x128xbf16, #tpu.memory_space<vmem>>, vector<32x128xbf16>
    %cst_55 = arith.constant dense<0.000000e+00> : vector<16x128xf32>
    %168 = tpu.matmul %166, %167, %cst_55 {dimension_numbers = #tpu.dot_dimension_numbers<[1], [0], [0], [1], [0, 0, 1, 1], [], []>} : vector<16x32xbf16>, vector<32x128xbf16>, vector<16x128xf32> -> vector<16x128xf32>
    %169 = arith.addf %144, %168 : vector<16x128xf32>
    %170 = arith.addf %2, %169 : vector<16x128xf32>
    %c0_56 = arith.constant 0 : index
    %c0_57 = arith.constant 0 : index
    %171 = vector.load %arg9[%c0_56, %c0_57] : memref<1x128xf32, #tpu.memory_space<vmem>>, vector<1x128xf32>
    %172 = vector.broadcast %171 : vector<1x128xf32> to vector<16x128xf32>
    %173 = arith.addf %170, %172 : vector<16x128xf32>
    %174 = vector.extract_strided_slice %6 {offsets = [4, 0], sizes = [1, 128], strides = [1, 1]} : vector<6x128xf32> to vector<1x128xf32>
    %175 = vector.extract_strided_slice %6 {offsets = [5, 0], sizes = [1, 128], strides = [1, 1]} : vector<6x128xf32> to vector<1x128xf32>
    %cst_58 = arith.constant dense<0.000000e+00> : vector<16xf32>
    %176 = vector.multi_reduction <add>, %173, %cst_58 [1] : vector<16x128xf32> to vector<16xf32>
    %177 = vector.shape_cast %176 : vector<16xf32> to vector<16x1xf32>
    %cst_59 = arith.constant 1.280000e+02 : f32
    %178 = vector.broadcast %cst_59 : f32 to vector<16x1xf32>
    %179 = arith.divf %177, %178 : vector<16x1xf32>
    %180 = vector.broadcast %179 : vector<16x1xf32> to vector<16x128xf32>
    %181 = arith.subf %173, %180 : vector<16x128xf32>
    %182 = arith.mulf %181, %181 : vector<16x128xf32>
    %cst_60 = arith.constant dense<0.000000e+00> : vector<16xf32>
    %183 = vector.multi_reduction <add>, %182, %cst_60 [1] : vector<16x128xf32> to vector<16xf32>
    %184 = vector.shape_cast %183 : vector<16xf32> to vector<16x1xf32>
    %cst_61 = arith.constant 1.280000e+02 : f32
    %185 = vector.broadcast %cst_61 : f32 to vector<16x1xf32>
    %186 = arith.divf %184, %185 : vector<16x1xf32>
    %187 = vector.broadcast %179 : vector<16x1xf32> to vector<16x128xf32>
    %188 = arith.subf %173, %187 : vector<16x128xf32>
    %cst_62 = arith.constant 9.99999974E-6 : f32
    %189 = vector.broadcast %cst_62 : f32 to vector<16x1xf32>
    %190 = arith.addf %186, %189 : vector<16x1xf32>
    %191 = math.rsqrt %190 : vector<16x1xf32>
    %192 = vector.broadcast %191 : vector<16x1xf32> to vector<16x128xf32>
    %193 = arith.mulf %188, %192 : vector<16x128xf32>
    %194 = vector.broadcast %174 : vector<1x128xf32> to vector<16x128xf32>
    %195 = arith.mulf %193, %194 : vector<16x128xf32>
    %196 = vector.broadcast %175 : vector<1x128xf32> to vector<16x128xf32>
    %197 = arith.addf %195, %196 : vector<16x128xf32>
    %198 = arith.truncf %197 : vector<16x128xf32> to vector<16x128xbf16>
    %c0_63 = arith.constant 0 : index
    %c0_64 = arith.constant 0 : index
    %199 = vector.load %arg10[%c0_63, %c0_64] : memref<128x256xbf16, #tpu.memory_space<vmem>>, vector<128x256xbf16>
    %cst_65 = arith.constant dense<0.000000e+00> : vector<16x256xf32>
    %200 = tpu.matmul %198, %199, %cst_65 {dimension_numbers = #tpu.dot_dimension_numbers<[1], [0], [0], [1], [0, 0, 1, 1], [], []>} : vector<16x128xbf16>, vector<128x256xbf16>, vector<16x256xf32> -> vector<16x256xf32>
    %c0_66 = arith.constant 0 : index
    %c0_67 = arith.constant 0 : index
    %201 = vector.load %arg11[%c0_66, %c0_67] : memref<1x256xf32, #tpu.memory_space<vmem>>, vector<1x256xf32>
    %202 = vector.broadcast %201 : vector<1x256xf32> to vector<16x256xf32>
    %203 = arith.addf %200, %202 : vector<16x256xf32>
    %204 = arith.mulf %203, %203 : vector<16x256xf32>
    %205 = arith.mulf %203, %204 : vector<16x256xf32>
    %cst_68 = arith.constant 4.471500e-02 : f32
    %206 = vector.broadcast %cst_68 : f32 to vector<16x256xf32>
    %207 = arith.mulf %206, %205 : vector<16x256xf32>
    %208 = arith.addf %203, %207 : vector<16x256xf32>
    %cst_69 = arith.constant 0.797884583 : f32
    %209 = vector.broadcast %cst_69 : f32 to vector<16x256xf32>
    %210 = arith.mulf %209, %208 : vector<16x256xf32>
    %211 = math.tanh %210 : vector<16x256xf32>
    %cst_70 = arith.constant 1.000000e+00 : f32
    %212 = vector.broadcast %cst_70 : f32 to vector<16x256xf32>
    %213 = arith.addf %212, %211 : vector<16x256xf32>
    %cst_71 = arith.constant 5.000000e-01 : f32
    %214 = vector.broadcast %cst_71 : f32 to vector<16x256xf32>
    %215 = arith.mulf %214, %213 : vector<16x256xf32>
    %216 = arith.mulf %203, %215 : vector<16x256xf32>
    %217 = arith.truncf %216 : vector<16x256xf32> to vector<16x256xbf16>
    %c0_72 = arith.constant 0 : index
    %c0_73 = arith.constant 0 : index
    %218 = vector.load %arg12[%c0_72, %c0_73] : memref<256x128xbf16, #tpu.memory_space<vmem>>, vector<256x128xbf16>
    %cst_74 = arith.constant dense<0.000000e+00> : vector<16x128xf32>
    %219 = tpu.matmul %217, %218, %cst_74 {dimension_numbers = #tpu.dot_dimension_numbers<[1], [0], [0], [1], [0, 0, 1, 1], [], []>} : vector<16x256xbf16>, vector<256x128xbf16>, vector<16x128xf32> -> vector<16x128xf32>
    %c0_75 = arith.constant 0 : index
    %c0_76 = arith.constant 0 : index
    %220 = vector.load %arg13[%c0_75, %c0_76] : memref<1x128xf32, #tpu.memory_space<vmem>>, vector<1x128xf32>
    %221 = vector.broadcast %220 : vector<1x128xf32> to vector<16x128xf32>
    %222 = arith.addf %219, %221 : vector<16x128xf32>
    %223 = arith.addf %173, %222 : vector<16x128xf32>
    %224 = arith.truncf %223 : vector<16x128xf32> to vector<16x128xbf16>
    %c0_77 = arith.constant 0 : index
    %c0_78 = arith.constant 0 : index
    %c0_79 = arith.constant 0 : index
    %225 = vector.load %arg14[%c0_77, %c0_78, %c0_79] : memref<1x16x128xbf16, #tpu.memory_space<vmem>>, vector<1x16x128xbf16>
    %226 = vector.shape_cast %225 : vector<1x16x128xbf16> to vector<16x128xbf16>
    %227 = vector.shape_cast %224 : vector<16x128xbf16> to vector<1x16x128xbf16>
    tpu.vector_store %arg14[%c0_77, %c0_78, %c0_79], %227 {strides = array<i32>} : memref<1x16x128xbf16, #tpu.memory_space<vmem>>, vector<1x16x128xbf16>,
    return
  }
  func.func @transform_0(%arg0: i32) -> (i32, i32, i32) {
    %c0_i32 = arith.constant 0 : i32
    %c0_i32_0 = arith.constant 0 : i32
    %c0_i32_1 = arith.constant 0 : i32
    return %arg0, %c0_i32, %c0_i32_0 : i32, i32, i32
  }
  func.func @transform_1(%arg0: i32) -> (i32, i32, i32) {
    %c0_i32 = arith.constant 0 : i32
    %c0_i32_0 = arith.constant 0 : i32
    %c0_i32_1 = arith.constant 0 : i32
    return %arg0, %c0_i32, %c0_i32_0 : i32, i32, i32
  }
  func.func @transform_2(%arg0: i32) -> (i32, i32) {
    %c0_i32 = arith.constant 0 : i32
    %c0_i32_0 = arith.constant 0 : i32
    %c0_i32_1 = arith.constant 0 : i32
    return %c0_i32, %c0_i32_0 : i32, i32
  }
  func.func @transform_3(%arg0: i32) -> (i32, i32) {
    %c0_i32 = arith.constant 0 : i32
    %c0_i32_0 = arith.constant 0 : i32
    %c0_i32_1 = arith.constant 0 : i32
    return %c0_i32, %c0_i32_0 : i32, i32
  }
  func.func @transform_4(%arg0: i32) -> (i32, i32) {
    %c0_i32 = arith.constant 0 : i32
    %c0_i32_0 = arith.constant 0 : i32
    %c0_i32_1 = arith.constant 0 : i32
    return %c0_i32, %c0_i32_0 : i32, i32
  }
  func.func @transform_5(%arg0: i32) -> (i32, i32) {
    %c0_i32 = arith.constant 0 : i32
    %c0_i32_0 = arith.constant 0 : i32
    %c0_i32_1 = arith.constant 0 : i32
    return %c0_i32, %c0_i32_0 : i32, i32
  }
  func.func @transform_6(%arg0: i32) -> (i32, i32) {
    %c0_i32 = arith.constant 0 : i32
    %c0_i32_0 = arith.constant 0 : i32
    %c0_i32_1 = arith.constant 0 : i32
    return %c0_i32, %c0_i32_0 : i32, i32
  }
  func.func @transform_7(%arg0: i32) -> (i32, i32) {
    %c0_i32 = arith.constant 0 : i32
    %c0_i32_0 = arith.constant 0 : i32
    %c0_i32_1 = arith.constant 0 : i32
    return %c0_i32, %c0_i32_0 : i32, i32
  }
  func.func @transform_8(%arg0: i32) -> (i32, i32) {
    %c0_i32 = arith.constant 0 : i32
    %c0_i32_0 = arith.constant 0 : i32
    %c0_i32_1 = arith.constant 0 : i32
    return %c0_i32, %c0_i32_0 : i32, i32
  }
  func.func @transform_9(%arg0: i32) -> (i32, i32) {
    %c0_i32 = arith.constant 0 : i32
    %c0_i32_0 = arith.constant 0 : i32
    %c0_i32_1 = arith.constant 0 : i32
    return %c0_i32, %c0_i32_0 : i32, i32
  }
  func.func @transform_10(%arg0: i32) -> (i32, i32) {
    %c0_i32 = arith.constant 0 : i32
    %c0_i32_0 = arith.constant 0 : i32
    %c0_i32_1 = arith.constant 0 : i32
    return %c0_i32, %c0_i32_0 : i32, i32
  }
  func.func @transform_11(%arg0: i32) -> (i32, i32) {
    %c0_i32 = arith.constant 0 : i32
    %c0_i32_0 = arith.constant 0 : i32
    %c0_i32_1 = arith.constant 0 : i32
    return %c0_i32, %c0_i32_0 : i32, i32
  }
  func.func @transform_12(%arg0: i32) -> (i32, i32) {
    %c0_i32 = arith.constant 0 : i32
    %c0_i32_0 = arith.constant 0 : i32
    %c0_i32_1 = arith.constant 0 : i32
    return %c0_i32, %c0_i32_0 : i32, i32
  }
  func.func @transform_13(%arg0: i32) -> (i32, i32, i32) {
    %c0_i32 = arith.constant 0 : i32
    %c0_i32_0 = arith.constant 0 : i32
    %c0_i32_1 = arith.constant 0 : i32
    return %arg0, %c0_i32, %c0_i32_0 : i32, i32, i32
  }
}

module attributes {stable_mosaic.version = 11 : i64} {
  func.func @_mm_bias_kernel(%arg0: i32, %arg1: memref<32x384xbf16, #tpu.memory_space<vmem>>, %arg2: memref<384x128xbf16, #tpu.memory_space<vmem>>, %arg3: memref<1x128xf32, #tpu.memory_space<vmem>>, %arg4: memref<32x128xbf16, #tpu.memory_space<vmem>>) attributes {dimension_semantics = [#tpu.dimension_semantics<parallel>], iteration_bounds = array<i64: 1>, scalar_prefetch = 0 : i64, scratch_operands = 0 : i64, tpu.core_type = #tpu.core_type<tc>, window_params = [{transform_indices = @transform_0, window_bounds = array<i64: 32, 384>}, {pipeline_mode = #tpu.pipeline_mode<synchronous>, transform_indices = @transform_1, window_bounds = array<i64: 384, 128>}, {pipeline_mode = #tpu.pipeline_mode<synchronous>, transform_indices = @transform_2, window_bounds = array<i64: 1, 128>}, {transform_indices = @transform_3, window_bounds = array<i64: 32, 128>}]} {
    %c0 = arith.constant 0 : index
    %c0_0 = arith.constant 0 : index
    %0 = vector.load %arg1[%c0, %c0_0] : memref<32x384xbf16, #tpu.memory_space<vmem>>, vector<32x384xbf16>
    %c0_1 = arith.constant 0 : index
    %c0_2 = arith.constant 0 : index
    %1 = vector.load %arg2[%c0_1, %c0_2] : memref<384x128xbf16, #tpu.memory_space<vmem>>, vector<384x128xbf16>
    %cst = arith.constant dense<0.000000e+00> : vector<32x128xf32>
    %2 = tpu.matmul %0, %1, %cst {dimension_numbers = #tpu.dot_dimension_numbers<[1], [0], [0], [1], [0, 0, 1, 1], [], []>} : vector<32x384xbf16>, vector<384x128xbf16>, vector<32x128xf32> -> vector<32x128xf32>
    %c0_3 = arith.constant 0 : index
    %c0_4 = arith.constant 0 : index
    %3 = vector.load %arg3[%c0_3, %c0_4] : memref<1x128xf32, #tpu.memory_space<vmem>>, vector<1x128xf32>
    %4 = vector.broadcast %3 : vector<1x128xf32> to vector<32x128xf32>
    %5 = arith.addf %2, %4 : vector<32x128xf32>
    %6 = arith.truncf %5 : vector<32x128xf32> to vector<32x128xbf16>
    %c0_5 = arith.constant 0 : index
    %c0_6 = arith.constant 0 : index
    %7 = vector.load %arg4[%c0_5, %c0_6] : memref<32x128xbf16, #tpu.memory_space<vmem>>, vector<32x128xbf16>
    tpu.vector_store %arg4[%c0_5, %c0_6], %6 {strides = array<i32>} : memref<32x128xbf16, #tpu.memory_space<vmem>>, vector<32x128xbf16>,
    return
  }
  func.func @transform_0(%arg0: i32) -> (i32, i32) {
    %c0_i32 = arith.constant 0 : i32
    %c0_i32_0 = arith.constant 0 : i32
    return %arg0, %c0_i32 : i32, i32
  }
  func.func @transform_1(%arg0: i32) -> (i32, i32) {
    %c0_i32 = arith.constant 0 : i32
    %c0_i32_0 = arith.constant 0 : i32
    %c0_i32_1 = arith.constant 0 : i32
    return %c0_i32, %c0_i32_0 : i32, i32
  }
  func.func @transform_2(%arg0: i32) -> (i32, i32) {
    %c0_i32 = arith.constant 0 : i32
    %c0_i32_0 = arith.constant 0 : i32
    %c0_i32_1 = arith.constant 0 : i32
    return %c0_i32, %c0_i32_0 : i32, i32
  }
  func.func @transform_3(%arg0: i32) -> (i32, i32) {
    %c0_i32 = arith.constant 0 : i32
    %c0_i32_0 = arith.constant 0 : i32
    return %arg0, %c0_i32 : i32, i32
  }
}

module attributes {stable_mosaic.version = 11 : i64} {
  func.func @_mm_bias_kernel(%arg0: i32, %arg1: memref<32x128xbf16, #tpu.memory_space<vmem>>, %arg2: memref<128x256xbf16, #tpu.memory_space<vmem>>, %arg3: memref<1x256xf32, #tpu.memory_space<vmem>>, %arg4: memref<32x256xbf16, #tpu.memory_space<vmem>>) attributes {dimension_semantics = [#tpu.dimension_semantics<parallel>], iteration_bounds = array<i64: 1>, scalar_prefetch = 0 : i64, scratch_operands = 0 : i64, tpu.core_type = #tpu.core_type<tc>, window_params = [{transform_indices = @transform_0, window_bounds = array<i64: 32, 128>}, {pipeline_mode = #tpu.pipeline_mode<synchronous>, transform_indices = @transform_1, window_bounds = array<i64: 128, 256>}, {pipeline_mode = #tpu.pipeline_mode<synchronous>, transform_indices = @transform_2, window_bounds = array<i64: 1, 256>}, {transform_indices = @transform_3, window_bounds = array<i64: 32, 256>}]} {
    %c0 = arith.constant 0 : index
    %c0_0 = arith.constant 0 : index
    %0 = vector.load %arg1[%c0, %c0_0] : memref<32x128xbf16, #tpu.memory_space<vmem>>, vector<32x128xbf16>
    %c0_1 = arith.constant 0 : index
    %c0_2 = arith.constant 0 : index
    %1 = vector.load %arg2[%c0_1, %c0_2] : memref<128x256xbf16, #tpu.memory_space<vmem>>, vector<128x256xbf16>
    %cst = arith.constant dense<0.000000e+00> : vector<32x256xf32>
    %2 = tpu.matmul %0, %1, %cst {dimension_numbers = #tpu.dot_dimension_numbers<[1], [0], [0], [1], [0, 0, 1, 1], [], []>} : vector<32x128xbf16>, vector<128x256xbf16>, vector<32x256xf32> -> vector<32x256xf32>
    %c0_3 = arith.constant 0 : index
    %c0_4 = arith.constant 0 : index
    %3 = vector.load %arg3[%c0_3, %c0_4] : memref<1x256xf32, #tpu.memory_space<vmem>>, vector<1x256xf32>
    %4 = vector.broadcast %3 : vector<1x256xf32> to vector<32x256xf32>
    %5 = arith.addf %2, %4 : vector<32x256xf32>
    %cst_5 = arith.constant 0.000000e+00 : f32
    %6 = vector.broadcast %cst_5 : f32 to vector<32x256xf32>
    %7 = arith.maximumf %5, %6 : vector<32x256xf32>
    %8 = arith.truncf %7 : vector<32x256xf32> to vector<32x256xbf16>
    %c0_6 = arith.constant 0 : index
    %c0_7 = arith.constant 0 : index
    %9 = vector.load %arg4[%c0_6, %c0_7] : memref<32x256xbf16, #tpu.memory_space<vmem>>, vector<32x256xbf16>
    tpu.vector_store %arg4[%c0_6, %c0_7], %8 {strides = array<i32>} : memref<32x256xbf16, #tpu.memory_space<vmem>>, vector<32x256xbf16>,
    return
  }
  func.func @transform_0(%arg0: i32) -> (i32, i32) {
    %c0_i32 = arith.constant 0 : i32
    %c0_i32_0 = arith.constant 0 : i32
    return %arg0, %c0_i32 : i32, i32
  }
  func.func @transform_1(%arg0: i32) -> (i32, i32) {
    %c0_i32 = arith.constant 0 : i32
    %c0_i32_0 = arith.constant 0 : i32
    %c0_i32_1 = arith.constant 0 : i32
    return %c0_i32, %c0_i32_0 : i32, i32
  }
  func.func @transform_2(%arg0: i32) -> (i32, i32) {
    %c0_i32 = arith.constant 0 : i32
    %c0_i32_0 = arith.constant 0 : i32
    %c0_i32_1 = arith.constant 0 : i32
    return %c0_i32, %c0_i32_0 : i32, i32
  }
  func.func @transform_3(%arg0: i32) -> (i32, i32) {
    %c0_i32 = arith.constant 0 : i32
    %c0_i32_0 = arith.constant 0 : i32
    return %arg0, %c0_i32 : i32, i32
  }
}

module attributes {stable_mosaic.version = 11 : i64} {
  func.func @_mm_bias_kernel(%arg0: i32, %arg1: memref<128x64xbf16, #tpu.memory_space<vmem>>, %arg2: memref<64x128xbf16, #tpu.memory_space<vmem>>, %arg3: memref<1x128xf32, #tpu.memory_space<vmem>>, %arg4: memref<128x128xbf16, #tpu.memory_space<vmem>>) attributes {dimension_semantics = [#tpu.dimension_semantics<parallel>], iteration_bounds = array<i64: 1>, scalar_prefetch = 0 : i64, scratch_operands = 0 : i64, tpu.core_type = #tpu.core_type<tc>, window_params = [{transform_indices = @transform_0, window_bounds = array<i64: 128, 64>}, {pipeline_mode = #tpu.pipeline_mode<synchronous>, transform_indices = @transform_1, window_bounds = array<i64: 64, 128>}, {pipeline_mode = #tpu.pipeline_mode<synchronous>, transform_indices = @transform_2, window_bounds = array<i64: 1, 128>}, {transform_indices = @transform_3, window_bounds = array<i64: 128, 128>}]} {
    %c0 = arith.constant 0 : index
    %c0_0 = arith.constant 0 : index
    %0 = vector.load %arg1[%c0, %c0_0] : memref<128x64xbf16, #tpu.memory_space<vmem>>, vector<128x64xbf16>
    %c0_1 = arith.constant 0 : index
    %c0_2 = arith.constant 0 : index
    %1 = vector.load %arg2[%c0_1, %c0_2] : memref<64x128xbf16, #tpu.memory_space<vmem>>, vector<64x128xbf16>
    %cst = arith.constant dense<0.000000e+00> : vector<128x128xf32>
    %2 = tpu.matmul %0, %1, %cst {dimension_numbers = #tpu.dot_dimension_numbers<[1], [0], [0], [1], [0, 0, 1, 1], [], []>} : vector<128x64xbf16>, vector<64x128xbf16>, vector<128x128xf32> -> vector<128x128xf32>
    %c0_3 = arith.constant 0 : index
    %c0_4 = arith.constant 0 : index
    %3 = vector.load %arg3[%c0_3, %c0_4] : memref<1x128xf32, #tpu.memory_space<vmem>>, vector<1x128xf32>
    %4 = vector.broadcast %3 : vector<1x128xf32> to vector<128x128xf32>
    %5 = arith.addf %2, %4 : vector<128x128xf32>
    %cst_5 = arith.constant 0.000000e+00 : f32
    %6 = vector.broadcast %cst_5 : f32 to vector<128x128xf32>
    %7 = arith.maximumf %5, %6 : vector<128x128xf32>
    %8 = arith.truncf %7 : vector<128x128xf32> to vector<128x128xbf16>
    %c0_6 = arith.constant 0 : index
    %c0_7 = arith.constant 0 : index
    %9 = vector.load %arg4[%c0_6, %c0_7] : memref<128x128xbf16, #tpu.memory_space<vmem>>, vector<128x128xbf16>
    tpu.vector_store %arg4[%c0_6, %c0_7], %8 {strides = array<i32>} : memref<128x128xbf16, #tpu.memory_space<vmem>>, vector<128x128xbf16>,
    return
  }
  func.func @transform_0(%arg0: i32) -> (i32, i32) {
    %c0_i32 = arith.constant 0 : i32
    %c0_i32_0 = arith.constant 0 : i32
    return %arg0, %c0_i32 : i32, i32
  }
  func.func @transform_1(%arg0: i32) -> (i32, i32) {
    %c0_i32 = arith.constant 0 : i32
    %c0_i32_0 = arith.constant 0 : i32
    %c0_i32_1 = arith.constant 0 : i32
    return %c0_i32, %c0_i32_0 : i32, i32
  }
  func.func @transform_2(%arg0: i32) -> (i32, i32) {
    %c0_i32 = arith.constant 0 : i32
    %c0_i32_0 = arith.constant 0 : i32
    %c0_i32_1 = arith.constant 0 : i32
    return %c0_i32, %c0_i32_0 : i32, i32
  }
  func.func @transform_3(%arg0: i32) -> (i32, i32) {
    %c0_i32 = arith.constant 0 : i32
    %c0_i32_0 = arith.constant 0 : i32
    return %arg0, %c0_i32 : i32, i32
  }
}

module attributes {stable_mosaic.version = 11 : i64} {
  func.func @_conv_s1_kernel(%arg0: i32, %arg1: memref<1x18x18x32xf32, #tpu.memory_space<vmem>>, %arg2: memref<9x32x3xbf16, #tpu.memory_space<vmem>>, %arg3: memref<1x3xf32, #tpu.memory_space<vmem>>, %arg4: memref<1x16x16x3xf32, #tpu.memory_space<vmem>>) attributes {dimension_semantics = [#tpu.dimension_semantics<parallel>], iteration_bounds = array<i64: 2>, scalar_prefetch = 0 : i64, scratch_operands = 0 : i64, tpu.core_type = #tpu.core_type<tc>, window_params = [{transform_indices = @transform_0, window_bounds = array<i64: 1, 18, 18, 32>}, {pipeline_mode = #tpu.pipeline_mode<synchronous>, transform_indices = @transform_1, window_bounds = array<i64: 9, 32, 3>}, {pipeline_mode = #tpu.pipeline_mode<synchronous>, transform_indices = @transform_2, window_bounds = array<i64: 1, 3>}, {transform_indices = @transform_3, window_bounds = array<i64: 1, 16, 16, 3>}]} {
    %c0 = arith.constant 0 : index
    %c0_0 = arith.constant 0 : index
    %c0_1 = arith.constant 0 : index
    %c0_2 = arith.constant 0 : index
    %0 = vector.load %arg1[%c0, %c0_0, %c0_1, %c0_2] : memref<1x18x18x32xf32, #tpu.memory_space<vmem>>, vector<1x18x18x32xf32>
    %1 = vector.shape_cast %0 : vector<1x18x18x32xf32> to vector<18x18x32xf32>
    %cst = arith.constant 0.000000e+00 : f32
    %2 = vector.broadcast %cst : f32 to vector<256x3xf32>
    %3 = vector.extract_strided_slice %1 {offsets = [0, 0, 0], sizes = [16, 16, 32], strides = [1, 1, 1]} : vector<18x18x32xf32> to vector<16x16x32xf32>
    %4 = vector.shape_cast %3 : vector<16x16x32xf32> to vector<256x32xf32>
    %5 = arith.truncf %4 : vector<256x32xf32> to vector<256x32xbf16>
    %c0_3 = arith.constant 0 : index
    %c0_4 = arith.constant 0 : index
    %c0_5 = arith.constant 0 : index
    %6 = vector.load %arg2[%c0_3, %c0_4, %c0_5] : memref<9x32x3xbf16, #tpu.memory_space<vmem>>, vector<1x32x3xbf16>
    %7 = vector.shape_cast %6 : vector<1x32x3xbf16> to vector<32x3xbf16>
    %cst_6 = arith.constant dense<0.000000e+00> : vector<256x3xf32>
    %8 = tpu.matmul %5, %7, %cst_6 {dimension_numbers = #tpu.dot_dimension_numbers<[1], [0], [0], [1], [0, 0, 1, 1], [], []>} : vector<256x32xbf16>, vector<32x3xbf16>, vector<256x3xf32> -> vector<256x3xf32>
    %9 = arith.addf %2, %8 : vector<256x3xf32>
    %10 = vector.extract_strided_slice %1 {offsets = [0, 1, 0], sizes = [16, 16, 32], strides = [1, 1, 1]} : vector<18x18x32xf32> to vector<16x16x32xf32>
    %11 = vector.shape_cast %10 : vector<16x16x32xf32> to vector<256x32xf32>
    %12 = arith.truncf %11 : vector<256x32xf32> to vector<256x32xbf16>
    %c1 = arith.constant 1 : index
    %c0_7 = arith.constant 0 : index
    %c0_8 = arith.constant 0 : index
    %13 = vector.load %arg2[%c1, %c0_7, %c0_8] : memref<9x32x3xbf16, #tpu.memory_space<vmem>>, vector<1x32x3xbf16>
    %14 = vector.shape_cast %13 : vector<1x32x3xbf16> to vector<32x3xbf16>
    %cst_9 = arith.constant dense<0.000000e+00> : vector<256x3xf32>
    %15 = tpu.matmul %12, %14, %cst_9 {dimension_numbers = #tpu.dot_dimension_numbers<[1], [0], [0], [1], [0, 0, 1, 1], [], []>} : vector<256x32xbf16>, vector<32x3xbf16>, vector<256x3xf32> -> vector<256x3xf32>
    %16 = arith.addf %9, %15 : vector<256x3xf32>
    %17 = vector.extract_strided_slice %1 {offsets = [0, 2, 0], sizes = [16, 16, 32], strides = [1, 1, 1]} : vector<18x18x32xf32> to vector<16x16x32xf32>
    %18 = vector.shape_cast %17 : vector<16x16x32xf32> to vector<256x32xf32>
    %19 = arith.truncf %18 : vector<256x32xf32> to vector<256x32xbf16>
    %c2 = arith.constant 2 : index
    %c0_10 = arith.constant 0 : index
    %c0_11 = arith.constant 0 : index
    %20 = vector.load %arg2[%c2, %c0_10, %c0_11] : memref<9x32x3xbf16, #tpu.memory_space<vmem>>, vector<1x32x3xbf16>
    %21 = vector.shape_cast %20 : vector<1x32x3xbf16> to vector<32x3xbf16>
    %cst_12 = arith.constant dense<0.000000e+00> : vector<256x3xf32>
    %22 = tpu.matmul %19, %21, %cst_12 {dimension_numbers = #tpu.dot_dimension_numbers<[1], [0], [0], [1], [0, 0, 1, 1], [], []>} : vector<256x32xbf16>, vector<32x3xbf16>, vector<256x3xf32> -> vector<256x3xf32>
    %23 = arith.addf %16, %22 : vector<256x3xf32>
    %24 = vector.extract_strided_slice %1 {offsets = [1, 0, 0], sizes = [16, 16, 32], strides = [1, 1, 1]} : vector<18x18x32xf32> to vector<16x16x32xf32>
    %25 = vector.shape_cast %24 : vector<16x16x32xf32> to vector<256x32xf32>
    %26 = arith.truncf %25 : vector<256x32xf32> to vector<256x32xbf16>
    %c3 = arith.constant 3 : index
    %c0_13 = arith.constant 0 : index
    %c0_14 = arith.constant 0 : index
    %27 = vector.load %arg2[%c3, %c0_13, %c0_14] : memref<9x32x3xbf16, #tpu.memory_space<vmem>>, vector<1x32x3xbf16>
    %28 = vector.shape_cast %27 : vector<1x32x3xbf16> to vector<32x3xbf16>
    %cst_15 = arith.constant dense<0.000000e+00> : vector<256x3xf32>
    %29 = tpu.matmul %26, %28, %cst_15 {dimension_numbers = #tpu.dot_dimension_numbers<[1], [0], [0], [1], [0, 0, 1, 1], [], []>} : vector<256x32xbf16>, vector<32x3xbf16>, vector<256x3xf32> -> vector<256x3xf32>
    %30 = arith.addf %23, %29 : vector<256x3xf32>
    %31 = vector.extract_strided_slice %1 {offsets = [1, 1, 0], sizes = [16, 16, 32], strides = [1, 1, 1]} : vector<18x18x32xf32> to vector<16x16x32xf32>
    %32 = vector.shape_cast %31 : vector<16x16x32xf32> to vector<256x32xf32>
    %33 = arith.truncf %32 : vector<256x32xf32> to vector<256x32xbf16>
    %c4 = arith.constant 4 : index
    %c0_16 = arith.constant 0 : index
    %c0_17 = arith.constant 0 : index
    %34 = vector.load %arg2[%c4, %c0_16, %c0_17] : memref<9x32x3xbf16, #tpu.memory_space<vmem>>, vector<1x32x3xbf16>
    %35 = vector.shape_cast %34 : vector<1x32x3xbf16> to vector<32x3xbf16>
    %cst_18 = arith.constant dense<0.000000e+00> : vector<256x3xf32>
    %36 = tpu.matmul %33, %35, %cst_18 {dimension_numbers = #tpu.dot_dimension_numbers<[1], [0], [0], [1], [0, 0, 1, 1], [], []>} : vector<256x32xbf16>, vector<32x3xbf16>, vector<256x3xf32> -> vector<256x3xf32>
    %37 = arith.addf %30, %36 : vector<256x3xf32>
    %38 = vector.extract_strided_slice %1 {offsets = [1, 2, 0], sizes = [16, 16, 32], strides = [1, 1, 1]} : vector<18x18x32xf32> to vector<16x16x32xf32>
    %39 = vector.shape_cast %38 : vector<16x16x32xf32> to vector<256x32xf32>
    %40 = arith.truncf %39 : vector<256x32xf32> to vector<256x32xbf16>
    %c5 = arith.constant 5 : index
    %c0_19 = arith.constant 0 : index
    %c0_20 = arith.constant 0 : index
    %41 = vector.load %arg2[%c5, %c0_19, %c0_20] : memref<9x32x3xbf16, #tpu.memory_space<vmem>>, vector<1x32x3xbf16>
    %42 = vector.shape_cast %41 : vector<1x32x3xbf16> to vector<32x3xbf16>
    %cst_21 = arith.constant dense<0.000000e+00> : vector<256x3xf32>
    %43 = tpu.matmul %40, %42, %cst_21 {dimension_numbers = #tpu.dot_dimension_numbers<[1], [0], [0], [1], [0, 0, 1, 1], [], []>} : vector<256x32xbf16>, vector<32x3xbf16>, vector<256x3xf32> -> vector<256x3xf32>
    %44 = arith.addf %37, %43 : vector<256x3xf32>
    %45 = vector.extract_strided_slice %1 {offsets = [2, 0, 0], sizes = [16, 16, 32], strides = [1, 1, 1]} : vector<18x18x32xf32> to vector<16x16x32xf32>
    %46 = vector.shape_cast %45 : vector<16x16x32xf32> to vector<256x32xf32>
    %47 = arith.truncf %46 : vector<256x32xf32> to vector<256x32xbf16>
    %c6 = arith.constant 6 : index
    %c0_22 = arith.constant 0 : index
    %c0_23 = arith.constant 0 : index
    %48 = vector.load %arg2[%c6, %c0_22, %c0_23] : memref<9x32x3xbf16, #tpu.memory_space<vmem>>, vector<1x32x3xbf16>
    %49 = vector.shape_cast %48 : vector<1x32x3xbf16> to vector<32x3xbf16>
    %cst_24 = arith.constant dense<0.000000e+00> : vector<256x3xf32>
    %50 = tpu.matmul %47, %49, %cst_24 {dimension_numbers = #tpu.dot_dimension_numbers<[1], [0], [0], [1], [0, 0, 1, 1], [], []>} : vector<256x32xbf16>, vector<32x3xbf16>, vector<256x3xf32> -> vector<256x3xf32>
    %51 = arith.addf %44, %50 : vector<256x3xf32>
    %52 = vector.extract_strided_slice %1 {offsets = [2, 1, 0], sizes = [16, 16, 32], strides = [1, 1, 1]} : vector<18x18x32xf32> to vector<16x16x32xf32>
    %53 = vector.shape_cast %52 : vector<16x16x32xf32> to vector<256x32xf32>
    %54 = arith.truncf %53 : vector<256x32xf32> to vector<256x32xbf16>
    %c7 = arith.constant 7 : index
    %c0_25 = arith.constant 0 : index
    %c0_26 = arith.constant 0 : index
    %55 = vector.load %arg2[%c7, %c0_25, %c0_26] : memref<9x32x3xbf16, #tpu.memory_space<vmem>>, vector<1x32x3xbf16>
    %56 = vector.shape_cast %55 : vector<1x32x3xbf16> to vector<32x3xbf16>
    %cst_27 = arith.constant dense<0.000000e+00> : vector<256x3xf32>
    %57 = tpu.matmul %54, %56, %cst_27 {dimension_numbers = #tpu.dot_dimension_numbers<[1], [0], [0], [1], [0, 0, 1, 1], [], []>} : vector<256x32xbf16>, vector<32x3xbf16>, vector<256x3xf32> -> vector<256x3xf32>
    %58 = arith.addf %51, %57 : vector<256x3xf32>
    %59 = vector.extract_strided_slice %1 {offsets = [2, 2, 0], sizes = [16, 16, 32], strides = [1, 1, 1]} : vector<18x18x32xf32> to vector<16x16x32xf32>
    %60 = vector.shape_cast %59 : vector<16x16x32xf32> to vector<256x32xf32>
    %61 = arith.truncf %60 : vector<256x32xf32> to vector<256x32xbf16>
    %c8 = arith.constant 8 : index
    %c0_28 = arith.constant 0 : index
    %c0_29 = arith.constant 0 : index
    %62 = vector.load %arg2[%c8, %c0_28, %c0_29] : memref<9x32x3xbf16, #tpu.memory_space<vmem>>, vector<1x32x3xbf16>
    %63 = vector.shape_cast %62 : vector<1x32x3xbf16> to vector<32x3xbf16>
    %cst_30 = arith.constant dense<0.000000e+00> : vector<256x3xf32>
    %64 = tpu.matmul %61, %63, %cst_30 {dimension_numbers = #tpu.dot_dimension_numbers<[1], [0], [0], [1], [0, 0, 1, 1], [], []>} : vector<256x32xbf16>, vector<32x3xbf16>, vector<256x3xf32> -> vector<256x3xf32>
    %65 = arith.addf %58, %64 : vector<256x3xf32>
    %c0_31 = arith.constant 0 : index
    %c0_32 = arith.constant 0 : index
    %66 = vector.load %arg3[%c0_31, %c0_32] : memref<1x3xf32, #tpu.memory_space<vmem>>, vector<1x3xf32>
    %67 = vector.broadcast %66 : vector<1x3xf32> to vector<256x3xf32>
    %68 = arith.addf %65, %67 : vector<256x3xf32>
    %69 = vector.shape_cast %68 : vector<256x3xf32> to vector<16x16x3xf32>
    %c0_33 = arith.constant 0 : index
    %c0_34 = arith.constant 0 : index
    %c0_35 = arith.constant 0 : index
    %c0_36 = arith.constant 0 : index
    %70 = vector.load %arg4[%c0_33, %c0_34, %c0_35, %c0_36] : memref<1x16x16x3xf32, #tpu.memory_space<vmem>>, vector<1x16x16x3xf32>
    %71 = vector.shape_cast %70 : vector<1x16x16x3xf32> to vector<16x16x3xf32>
    %72 = vector.shape_cast %69 : vector<16x16x3xf32> to vector<1x16x16x3xf32>
    tpu.vector_store %arg4[%c0_33, %c0_34, %c0_35, %c0_36], %72 {strides = array<i32>} : memref<1x16x16x3xf32, #tpu.memory_space<vmem>>, vector<1x16x16x3xf32>,
    return
  }
  func.func @transform_0(%arg0: i32) -> (i32, i32, i32, i32) {
    %c0_i32 = arith.constant 0 : i32
    %c0_i32_0 = arith.constant 0 : i32
    %c0_i32_1 = arith.constant 0 : i32
    %c0_i32_2 = arith.constant 0 : i32
    return %arg0, %c0_i32, %c0_i32_0, %c0_i32_1 : i32, i32, i32, i32
  }
  func.func @transform_1(%arg0: i32) -> (i32, i32, i32) {
    %c0_i32 = arith.constant 0 : i32
    %c0_i32_0 = arith.constant 0 : i32
    %c0_i32_1 = arith.constant 0 : i32
    %c0_i32_2 = arith.constant 0 : i32
    return %c0_i32, %c0_i32_0, %c0_i32_1 : i32, i32, i32
  }
  func.func @transform_2(%arg0: i32) -> (i32, i32) {
    %c0_i32 = arith.constant 0 : i32
    %c0_i32_0 = arith.constant 0 : i32
    %c0_i32_1 = arith.constant 0 : i32
    return %c0_i32, %c0_i32_0 : i32, i32
  }
  func.func @transform_3(%arg0: i32) -> (i32, i32, i32, i32) {
    %c0_i32 = arith.constant 0 : i32
    %c0_i32_0 = arith.constant 0 : i32
    %c0_i32_1 = arith.constant 0 : i32
    %c0_i32_2 = arith.constant 0 : i32
    return %arg0, %c0_i32, %c0_i32_0, %c0_i32_1 : i32, i32, i32, i32
  }
}

</mosaic_0001>

<llo_original>
// kernel: speinet_forward.8
$region0: #{speinet_forward.8}
  #allocation0 [shape = 'u32[]', space=smem, size = 0x4, offset = 0x4, fixed_abs, tag = 'smem constant byte address 0x4 - core index']
  #allocation1 [shape = 'u32[144,128]{1,0:T(1,128)}', space=vmem, size = 0x12000, scoped, tag = 'internal scratch']
  %s0 = inlined_call_operand.vmem [shape: f32[6,18,18,3], index: 0, kind: input, shape index: {}]
  %s1 = inlined_call_operand.vmem [shape: bf16[9,3,32], index: 1, kind: input, shape index: {}]
  %s2 = inlined_call_operand.vmem [shape: f32[1,32], index: 2, kind: input, shape index: {}]
  %s3 = inlined_call_operand.vmem [shape: bf16[6,16,16,32], index: 3, kind: output, shape index: {}]
  %s4 = sld [smem:[#allocation0]]
  $region45: #{speinet_forward.8} parent=0
    _
  %s6 = ssub.s32 1, %s4
  %s7 = scalar_select 0, %s6, %s4
  loop: start=0, step=1, limit=8
  $region2: #{speinet_forward.8} parent=0 // loop_pre_header
    _
  $region3: #{speinet_forward.8} parent=0 // loop_header
    %s9 = sphi 0, %s13
    %p10 = scmp.ge.s32.totalorder %s9, 8
    %s19 = sphi 0, %s21
    %s22 = sphi 0, %s19
    %s23 = sphi 0, %s22
    %s39 = sphi 0, %s23
    %s43 = sphi 0, %s43
    %s45 = sphi 0, %s43
    %s46 = sphi 0, %s45
    %s60 = sphi 0, %s46
    %s64 = sphi 0, %s64
    %s66 = sphi 0, %s64
    %s67 = sphi 0, %s66
    %s81 = sphi 0, %s67
    %s87 = sphi 0, %s89
    %s90 = sphi 0, %s87
    %s91 = sphi 0, %s90
    %s107 = sphi 0, %s91
  $region4: #{speinet_forward.8} parent=0 // loop_header_branch
    %12 = sbr.rel (%p10) target = $region8
  $region5: #{speinet_forward.8} parent=0 // loop_body
    %s14 = ssub.s32 %s9, 1
    %s15 = ssub.s32 %s9, 2
    %s16 = sadd.s32 %s9, 1
    %s17 = ssub.s32 %s9, %s16
    %p18 = scmp.eq.s32.totalorder %s17, 0
    %s20 = sadd.s32 %s19, 1
    %s21 = scalar_select %p18, %s19, %s20
    %p24 = pneg %p18
    %p25 = scmp.eq.s32.totalorder %s9, 5
    %p26 = por %p24, %p25
    %p27 = scmp.ne.s32.totalorder %s19, %s22
    %p28 = scmp.eq.s32.totalorder %s9, 0
    %p29 = por %p27, %p28
    %p30 = scmp.ne.s32.totalorder %s19, %s22
    %p31 = scmp.eq.s32.totalorder %s14, 5
    %p32 = por %p30, %p31
    %p33 = scmp.ne.s32.totalorder %s22, %s23
    %p34 = scmp.eq.s32.totalorder %s14, 0
    %p35 = por %p33, %p34
    %p36 = scmp.ne.s32.totalorder %s22, %s23
    %p37 = scmp.eq.s32.totalorder %s15, 5
    %p38 = por %p36, %p37
    %p40 = scmp.ne.s32.totalorder %s23, %s39
    %p41 = scmp.eq.s32.totalorder %s15, 0
    %p42 = por %p40, %p41
    %s44 = sadd.s32 %s43, 1
    %p47 = scmp.eq.s32.totalorder %s9, 5
    %p48 = scmp.ne.s32.totalorder %s43, %s45
    %p49 = scmp.eq.s32.totalorder %s9, 0
    %p50 = por %p48, %p49
    %p51 = scmp.ne.s32.totalorder %s43, %s45
    %p52 = scmp.eq.s32.totalorder %s14, 5
    %p53 = por %p51, %p52
    %p54 = scmp.ne.s32.totalorder %s45, %s46
    %p55 = scmp.eq.s32.totalorder %s14, 0
    %p56 = por %p54, %p55
    %p57 = scmp.ne.s32.totalorder %s45, %s46
    %p58 = scmp.eq.s32.totalorder %s15, 5
    %p59 = por %p57, %p58
    %p61 = scmp.ne.s32.totalorder %s46, %s60
    %p62 = scmp.eq.s32.totalorder %s15, 0
    %p63 = por %p61, %p62
    %s65 = sadd.s32 %s64, 1
    %p68 = scmp.eq.s32.totalorder %s9, 5
    %p69 = scmp.ne.s32.totalorder %s64, %s66
    %p70 = scmp.eq.s32.totalorder %s9, 0
    %p71 = por %p69, %p70
    %p72 = scmp.ne.s32.totalorder %s64, %s66
    %p73 = scmp.eq.s32.totalorder %s14, 5
    %p74 = por %p72, %p73
    %p75 = scmp.ne.s32.totalorder %s66, %s67
    %p76 = scmp.eq.s32.totalorder %s14, 0
    %p77 = por %p75, %p76
    %p78 = scmp.ne.s32.totalorder %s66, %s67
    %p79 = scmp.eq.s32.totalorder %s15, 5
    %p80 = por %p78, %p79
    %p82 = scmp.ne.s32.totalorder %s67, %s81
    %p83 = scmp.eq.s32.totalorder %s15, 0
    %p84 = por %p82, %p83
    %s85 = ssub.s32 %s9, %s16
    %p86 = scmp.eq.s32.totalorder %s85, 0
    %s88 = sadd.s32 %s87, 1
    %s89 = scalar_select %p86, %s87, %s88
    %p92 = pneg %p86
    %p93 = scmp.eq.s32.totalorder %s9, 5
    %p94 = por %p92, %p93
    %p95 = scmp.ne.s32.totalorder %s87, %s90
    %p96 = scmp.eq.s32.totalorder %s9, 0
    %p97 = por %p95, %p96
    %p98 = scmp.ne.s32.totalorder %s87, %s90
    %p99 = scmp.eq.s32.totalorder %s14, 5
    %p100 = por %p98, %p99
    %p101 = scmp.ne.s32.totalorder %s90, %s91
    %p102 = scmp.eq.s32.totalorder %s14, 0
    %p103 = por %p101, %p102
    %p104 = scmp.ne.s32.totalorder %s90, %s91
    %p105 = scmp.eq.s32.totalorder %s15, 5
    %p106 = por %p104, %p105
    %p108 = scmp.ne.s32.totalorder %s91, %s107
    %p109 = scmp.eq.s32.totalorder %s15, 0
    %p110 = por %p108, %p109
    %p111 = scmp.le.s32.totalorder 1, %s9
    %p112 = scmp.lt.s32.totalorder %s9, 7
    %p113 = pnand %p111, %p112
    %p114 = pneg %p113
    // Predicated region
    $region9: #{speinet_forward.8} parent=5 // pred_check
      _
    $region10: #{speinet_forward.8} parent=5 // pred_check_branch
      %116 = sbr.rel (%p113) target = $region12
    $region11: #{speinet_forward.8} parent=5 // pred_region
      %s117 = ssub.s32 %s9, 1
      // Predicated region
      $region13: #{speinet_forward.8} parent=11 // pred_check
        %p118 = pneg %p56
      $region14: #{speinet_forward.8} parent=11 // pred_check_branch
        %120 = sbr.rel (%p118) target = $region16
      $region15: #{speinet_forward.8} parent=11 // pred_region
        _
      $region16: #{speinet_forward.8} parent=11 // pred_fallthru
        _
      // Predicated region
      $region17: #{speinet_forward.8} parent=11 // pred_check
        %p121 = pneg %p77
      $region18: #{speinet_forward.8} parent=11 // pred_check_branch
        %123 = sbr.rel (%p121) target = $region20
      $region19: #{speinet_forward.8} parent=11 // pred_region
        _
      $region20: #{speinet_forward.8} parent=11 // pred_fallthru
        _
    $region12: #{speinet_forward.8} parent=5 // pred_fallthru
      _
    %p124 = scmp.lt.s32.totalorder %s9, 6
    // Predicated region
    $region21: #{speinet_forward.8} parent=5 // pred_check
      %p125 = pneg %p124
    $region22: #{speinet_forward.8} parent=5 // pred_check_branch
      %127 = sbr.rel (%p125) target = $region24
    $region23: #{speinet_forward.8} parent=5 // pred_region
      // Predicated region
      $region25: #{speinet_forward.8} parent=23 // pred_check
        %p128 = pneg %p29
      $region26: #{speinet_forward.8} parent=23 // pred_check_branch
        %130 = sbr.rel (%p128) target = $region28
      $region27: #{speinet_forward.8} parent=23 // pred_region
        %p131 = scmp.lt.s32.totalorder %s9, 5
        %s132 = scalar_select %p131, %s9, 5
        %s133 = smul.addr %s132, 54
        %s134 = smul.addr %s133, 8
        %s135 = scalar_lea.vmem %s0, %s134
      $region28: #{speinet_forward.8} parent=23 // pred_fallthru
        _
    $region24: #{speinet_forward.8} parent=5 // pred_fallthru
      _
    %p136 = scmp.le.s32.totalorder 1, %s9
    %p137 = scmp.lt.s32.totalorder %s9, 7
    %p138 = pnand %p136, %p137
    %p139 = pneg %p138
    // Predicated region
    $region29: #{speinet_forward.8} parent=5 // pred_check
      _
    $region30: #{speinet_forward.8} parent=5 // pred_check_branch
      %141 = sbr.rel (%p138) target = $region32
    $region31: #{speinet_forward.8} parent=5 // pred_region
      %s142 = ssub.s32 %s9, 1
      %p143 = scmp.lt.s32.totalorder %s14, 5
      %s144 = scalar_select %p143, %s14, 5
      %s145 = smul.addr %s144, 54
      %s146 = smul.addr %s145, 8
      %s147 = scalar_lea.vmem %s0, %s146
      %p148 = pneg %p35
      %p149 = pneg %p32
      %p150 = pneg %p56
      %p151 = pneg %p53
      %p152 = pneg %p77
      %p153 = pneg %p74
      %p154 = pneg %p103
      %p155 = pneg %p100
      %p156 = scmp.lt.s32.totalorder %s14, 5
      %s157 = scalar_select %p156, %s14, 5
      %s158 = smul.addr %s157, 32
      %s159 = smul.addr %s158, 4
      %s160 = scalar_lea.vmem %s3, %s159
      %p161 = scmp.lt.s32.totalorder %s14, 5
      %s162 = scalar_select %p161, %s14, 5
      %s163 = smul.addr %s162, 54
      %s164 = smul.addr %s163, 8
      %s165 = scalar_lea.vmem %s0, %s164
      %p166 = scmp.lt.s32.totalorder %s14, 5
      %s167 = scalar_select %p166, %s14, 5
      %s168 = smul.addr %s167, 32
      %s169 = smul.addr %s168, 4
      %s170 = scalar_lea.vmem %s3, %s169
      %v172 = vld [vmem:[%s165] sm:$0xff]
      %v173 = vld [vmem:[%s165 + $0x8] sm:$0xff]
      %v174 = vld [vmem:[%s165 + $0x10] sm:$0x3]
      %v175 = vld [vmem:[%s165 + $0x18] sm:$0xff]
      %v176 = vld [vmem:[%s165 + $0x20] sm:$0xff]
      %v177 = vld [vmem:[%s165 + $0x28] sm:$0x3]
      %v178 = vld [vmem:[%s165 + $0x30] sm:$0xff]
      %v179 = vld [vmem:[%s165 + $0x38] sm:$0xff]
      %v180 = vld [vmem:[%s165 + $0x40] sm:$0x3]
      %v181 = vld [vmem:[%s165 + $0x48] sm:$0xff]
      %v182 = vld [vmem:[%s165 + $0x50] sm:$0xff]
      %v183 = vld [vmem:[%s165 + $0x58] sm:$0x3]
      %v184 = vld [vmem:[%s165 + $0x60] sm:$0xff]
      %v185 = vld [vmem:[%s165 + $0x68] sm:$0xff]
      %v186 = vld [vmem:[%s165 + $0x70] sm:$0x3]
      %v187 = vld [vmem:[%s165 + $0x78] sm:$0xff]
      %v188 = vld [vmem:[%s165 + $0x80] sm:$0xff]
      %v189 = vld [vmem:[%s165 + $0x88] sm:$0x3]
      %v190 = vld [vmem:[%s165 + $0x90] sm:$0xff]
      %v191 = vld [vmem:[%s165 + $0x98] sm:$0xff]
      %v192 = vld [vmem:[%s165 + $0xa0] sm:$0x3]
      %v193 = vld [vmem:[%s165 + $0xa8] sm:$0xff]
      %v194 = vld [vmem:[%s165 + $0xb0] sm:$0xff]
      %v195 = vld [vmem:[%s165 + $0xb8] sm:$0x3]
      %v196 = vld [vmem:[%s165 + $0xc0] sm:$0xff]
      %v197 = vld [vmem:[%s165 + $0xc8] sm:$0xff]
      %v198 = vld [vmem:[%s165 + $0xd0] sm:$0x3]
      %v199 = vld [vmem:[%s165 + $0xd8] sm:$0xff]
      %v200 = vld [vmem:[%s165 + $0xe0] sm:$0xff]
      %v201 = vld [vmem:[%s165 + $0xe8] sm:$0x3]
      %v202 = vld [vmem:[%s165 + $0xf0] sm:$0xff]
      %v203 = vld [vmem:[%s165 + $0xf8] sm:$0xff]
      %v204 = vld [vmem:[%s165 + $0x100] sm:$0x3]
      %v205 = vld [vmem:[%s165 + $0x108] sm:$0xff]
      %v206 = vld [vmem:[%s165 + $0x110] sm:$0xff]
      %v207 = vld [vmem:[%s165 + $0x118] sm:$0x3]
      %v208 = vld [vmem:[%s165 + $0x120] sm:$0xff]
      %v209 = vld [vmem:[%s165 + $0x128] sm:$0xff]
      %v210 = vld [vmem:[%s165 + $0x130] sm:$0x3]
      %v211 = vld [vmem:[%s165 + $0x138] sm:$0xff]
      %v212 = vld [vmem:[%s165 + $0x140] sm:$0xff]
      %v213 = vld [vmem:[%s165 + $0x148] sm:$0x3]
      %v214 = vld [vmem:[%s165 + $0x150] sm:$0xff]
      %v215 = vld [vmem:[%s165 + $0x158] sm:$0xff]
      %v216 = vld [vmem:[%s165 + $0x160] sm:$0x3]
      %v217 = vld [vmem:[%s165 + $0x168] sm:$0xff]
      %v218 = vld [vmem:[%s165 + $0x170] sm:$0xff]
      %v219 = vld [vmem:[%s165 + $0x178] sm:$0x3]
      %v220 = vld [vmem:[%s165 + $0x180] sm:$0xff]
      %v221 = vld [vmem:[%s165 + $0x188] sm:$0xff]
      %v222 = vld [vmem:[%s165 + $0x190] sm:$0x3]
      %v223 = vld [vmem:[%s165 + $0x198] sm:$0xff]
      %v224 = vld [vmem:[%s165 + $0x1a0] sm:$0xff]
      %v225 = vld [vmem:[%s165 + $0x1a8] sm:$0x3]
      %v226 = vpack.c.bf16 %v173, %v172
      %v227 = vpack.c.bf16 %v176, %v175
      %v228 = vpack.c.bf16 %v179, %v178
      %v229 = vpack.c.bf16 %v182, %v181
      %v230 = vpack.c.bf16 %v185, %v184
      %v231 = vpack.c.bf16 %v188, %v187
      %v232 = vpack.c.bf16 %v191, %v190
      %v233 = vpack.c.bf16 %v194, %v193
      %v234 = vpack.c.bf16 %v197, %v196
      %v235 = vpack.c.bf16 %v200, %v199
      %v236 = vpack.c.bf16 %v203, %v202
      %v237 = vpack.c.bf16 %v206, %v205
      %v238 = vpack.c.bf16 %v209, %v208
      %v239 = vpack.c.bf16 %v212, %v211
      %v240 = vpack.c.bf16 %v215, %v214
      %v241 = vpack.c.bf16 %v218, %v217
      %v242 = vld [vmem:[%s1] sm:$0x3]
      %vm291 = vcmask 1046528
      %v292 = vrot.slane %v172, 1
      %v293 = vrot.slane %v173, 1
      %v294 = vsel %vm291, %v292, %v293
      %v295 = vrot.slane %v174, 1
      %v296 = vsel %vm291, %v293, %v295
      %v297 = vrot.slane %v175, 1
      %v298 = vrot.slane %v176, 1
      %v299 = vsel %vm291, %v297, %v298
      %v300 = vrot.slane %v177, 1
      %v301 = vsel %vm291, %v298, %v300
      %v302 = vrot.slane %v178, 1
      %v303 = vrot.slane %v179, 1
      %v304 = vsel %vm291, %v302, %v303
      %v305 = vrot.slane %v180, 1
      %v306 = vsel %vm291, %v303, %v305
      %v307 = vrot.slane %v181, 1
      %v308 = vrot.slane %v182, 1
      %v309 = vsel %vm291, %v307, %v308
      %v310 = vrot.slane %v183, 1
      %v311 = vsel %vm291, %v308, %v310
      %v312 = vrot.slane %v184, 1
      %v313 = vrot.slane %v185, 1
      %v314 = vsel %vm291, %v312, %v313
      %v315 = vrot.slane %v186, 1
      %v316 = vsel %vm291, %v313, %v315
      %v317 = vrot.slane %v187, 1
      %v318 = vrot.slane %v188, 1
      %v319 = vsel %vm291, %v317, %v318
      %v320 = vrot.slane %v189, 1
      %v321 = vsel %vm291, %v318, %v320
      %v322 = vrot.slane %v190, 1
      %v323 = vrot.slane %v191, 1
      %v324 = vsel %vm291, %v322, %v323
      %v325 = vrot.slane %v192, 1
      %v326 = vsel %vm291, %v323, %v325
      %v327 = vrot.slane %v193, 1
      %v328 = vrot.slane %v194, 1
      %v329 = vsel %vm291, %v327, %v328
      %v330 = vrot.slane %v195, 1
      %v331 = vsel %vm291, %v328, %v330
      %v332 = vrot.slane %v196, 1
      %v333 = vrot.slane %v197, 1
      %v334 = vsel %vm291, %v332, %v333
      %v335 = vrot.slane %v198, 1
      %v336 = vsel %vm291, %v333, %v335
      %v337 = vrot.slane %v199, 1
      %v338 = vrot.slane %v200, 1
      %v339 = vsel %vm291, %v337, %v338
      %v340 = vrot.slane %v201, 1
      %v341 = vsel %vm291, %v338, %v340
      %v342 = vrot.slane %v202, 1
      %v343 = vrot.slane %v203, 1
      %v344 = vsel %vm291, %v342, %v343
      %v345 = vrot.slane %v204, 1
      %v346 = vsel %vm291, %v343, %v345
      %v347 = vrot.slane %v205, 1
      %v348 = vrot.slane %v206, 1
      %v349 = vsel %vm291, %v347, %v348
      %v350 = vrot.slane %v207, 1
      %v351 = vsel %vm291, %v348, %v350
      %v352 = vrot.slane %v208, 1
      %v353 = vrot.slane %v209, 1
      %v354 = vsel %vm291, %v352, %v353
      %v355 = vrot.slane %v210, 1
      %v356 = vsel %vm291, %v353, %v355
      %v357 = vrot.slane %v211, 1
      %v358 = vrot.slane %v212, 1
      %v359 = vsel %vm291, %v357, %v358
      %v360 = vrot.slane %v213, 1
      %v361 = vsel %vm291, %v358, %v360
      %v362 = vrot.slane %v214, 1
      %v363 = vrot.slane %v215, 1
      %v364 = vsel %vm291, %v362, %v363
      %v365 = vrot.slane %v216, 1
      %v366 = vsel %vm291, %v363, %v365
      %v367 = vrot.slane %v217, 1
      %v368 = vrot.slane %v218, 1
      %v369 = vsel %vm291, %v367, %v368
      %v370 = vrot.slane %v219, 1
      %v371 = vsel %vm291, %v368, %v370
      %v404 = vpack.c.bf16 %v296, %v294
      %v405 = vpack.c.bf16 %v301, %v299
      %v406 = vpack.c.bf16 %v306, %v304
      %v407 = vpack.c.bf16 %v311, %v309
      %v408 = vpack.c.bf16 %v316, %v314
      %v409 = vpack.c.bf16 %v321, %v319
      %v410 = vpack.c.bf16 %v326, %v324
      %v411 = vpack.c.bf16 %v331, %v329
      %v412 = vpack.c.bf16 %v336, %v334
      %v413 = vpack.c.bf16 %v341, %v339
      %v414 = vpack.c.bf16 %v346, %v344
      %v415 = vpack.c.bf16 %v351, %v349
      %v416 = vpack.c.bf16 %v356, %v354
      %v417 = vpack.c.bf16 %v361, %v359
      %v418 = vpack.c.bf16 %v366, %v364
      %v419 = vpack.c.bf16 %v371, %v369
      %s420 = scalar_lea.vmem %s1, 2
      %v421 = vld [vmem:[%s420] sm:$0x3]
      %vm422 = vcmask 23552
      %v424 = vsel %vm422, %v404, 0
      %v427 = vsel %vm422, %v405, 0
      %v430 = vsel %vm422, %v406, 0
      %v433 = vsel %vm422, %v407, 0
      %v436 = vsel %vm422, %v408, 0
      %v439 = vsel %vm422, %v409, 0
      %v442 = vsel %vm422, %v410, 0
      %v445 = vsel %vm422, %v411, 0
      %v448 = vsel %vm422, %v412, 0
      %v451 = vsel %vm422, %v413, 0
      %v454 = vsel %vm422, %v414, 0
      %v457 = vsel %vm422, %v415, 0
      %v460 = vsel %vm422, %v416, 0
      %v463 = vsel %vm422, %v417, 0
      %v466 = vsel %vm422, %v418, 0
      %v469 = vsel %vm422, %v419, 0
      %vm471 = vcmask 1040384
      %vm472 = vcmask 1041408
      %v473 = vsel %vm471, 4294967295, 65535
      %v474 = vsel %vm472, %v473, 0
      %v476 = vand.u32 %v421, %v474
      %478 = vmatprep.subr.bf16.mxu0 0
      %479 = vmatpush1.bf16.msra.mxu0 %v476
      %480 = vmatprep.subr.bf16.mxu0 0
      %481 = vmatpush1.bf16.msra.mxu0 0
      %482 = vmatprep.subr.bf16.mxu0 0
      %483 = vmatpush1.bf16.msra.mxu0 0
      %484 = vmatprep.subr.bf16.mxu0 0
      %485 = vmatpush1.bf16.msra.mxu0 0
      %486 = vmatprep.subr.bf16.mxu0 0
      %487 = vmatpush1.bf16.msra.mxu0 0
      %488 = vmatprep.subr.bf16.mxu0 0
      %489 = vmatpush1.bf16.msra.mxu0 0
      %490 = vmatprep.subr.bf16.mxu0 0
      %491 = vmatpush1.bf16.msra.mxu0 0
      %492 = vmatprep.subr.bf16.mxu0 0
      %493 = vmatpush1.bf16.msra.mxu0 0
      %494 = vmatprep.subr.bf16.mxu0 0
      %495 = vmatpush1.bf16.msra.mxu0 0
      %496 = vmatprep.subr.bf16.mxu0 0
      %497 = vmatpush1.bf16.msra.mxu0 0
      %498 = vmatprep.subr.bf16.mxu0 0
      %499 = vmatpush1.bf16.msra.mxu0 0
      %500 = vmatprep.subr.bf16.mxu0 0
      %501 = vmatpush1.bf16.msra.mxu0 0
      %502 = vmatprep.subr.bf16.mxu0 0
      %503 = vmatpush1.bf16.msra.mxu0 0
      %504 = vmatprep.subr.bf16.mxu0 0
      %505 = vmatpush1.bf16.msra.mxu0 0
      %506 = vmatprep.subr.bf16.mxu0 0
      %507 = vmatpush1.bf16.msra.mxu0 0
      %508 = vmatprep.subr.bf16.mxu0 0
      %509 = vmatpush1.bf16.msra.mxu0 0
      %510 = vmatprep.mubr.bf16.mxu0 0
      %511 = vmatmul.mubr.bf16.gmra.mrb[0].mxu0 %v424
      %v512 = vpop.f32.mrb[0].mxu0
      %v513 = vadd.f32 0.0, %v512
      %v514 = vpop.f32.mrb[0].mxu0
      %v515 = vpop.f32.mrb[0].mxu0
      %v516 = vadd.f32 0.0, %v515
      %v517 = vpop.f32.mrb[0].mxu0
      %518 = vmatprep.mubr.bf16.mxu0 0
      %519 = vmatmul.mubr.bf16.gmra.mrb[0].mxu0 %v427
      %v520 = vpop.f32.mrb[0].mxu0
      %v521 = vadd.f32 0.0, %v520
      %v522 = vpop.f32.mrb[0].mxu0
      %v523 = vpop.f32.mrb[0].mxu0
      %v524 = vadd.f32 0.0, %v523
      %v525 = vpop.f32.mrb[0].mxu0
      %526 = vmatprep.mubr.bf16.mxu0 0
      %527 = vmatmul.mubr.bf16.gmra.mrb[0].mxu0 %v430
      %v528 = vpop.f32.mrb[0].mxu0
      %v529 = vadd.f32 0.0, %v528
      %v530 = vpop.f32.mrb[0].mxu0
      %v531 = vpop.f32.mrb[0].mxu0
      %v532 = vadd.f32 0.0, %v531
      %v533 = vpop.f32.mrb[0].mxu0
      %534 = vmatprep.mubr.bf16.mxu0 0
      %535 = vmatmul.mubr.bf16.gmra.mrb[0].mxu0 %v433
      %v536 = vpop.f32.mrb[0].mxu0
      %v537 = vadd.f32 0.0, %v536
      %v538 = vpop.f32.mrb[0].mxu0
      %v539 = vpop.f32.mrb[0].mxu0
      %v540 = vadd.f32 0.0, %v539
      %v541 = vpop.f32.mrb[0].mxu0
      %542 = vmatprep.mubr.bf16.mxu0 0
      %543 = vmatmul.mubr.bf16.gmra.mrb[0].mxu0 %v436
      %v544 = vpop.f32.mrb[0].mxu0
      %v545 = vadd.f32 0.0, %v544
      %v546 = vpop.f32.mrb[0].mxu0
      %v547 = vpop.f32.mrb[0].mxu0
      %v548 = vadd.f32 0.0, %v547
      %v549 = vpop.f32.mrb[0].mxu0
      %550 = vmatprep.mubr.bf16.mxu0 0
      %551 = vmatmul.mubr.bf16.gmra.mrb[0].mxu0 %v439
      %v552 = vpop.f32.mrb[0].mxu0
      %v553 = vadd.f32 0.0, %v552
      %v554 = vpop.f32.mrb[0].mxu0
      %v555 = vpop.f32.mrb[0].mxu0
      %v556 = vadd.f32 0.0, %v555
      %v557 = vpop.f32.mrb[0].mxu0
      %558 = vmatprep.mubr.bf16.mxu0 0
      %559 = vmatmul.mubr.bf16.gmra.mrb[0].mxu0 %v442
      %v560 = vpop.f32.mrb[0].mxu0
      %v561 = vadd.f32 0.0, %v560
      %v562 = vpop.f32.mrb[0].mxu0
      %v563 = vpop.f32.mrb[0].mxu0
      %v564 = vadd.f32 0.0, %v563
      %v565 = vpop.f32.mrb[0].mxu0
      %566 = vmatprep.mubr.bf16.mxu0 0
      %567 = vmatmul.mubr.bf16.gmra.mrb[0].mxu0 %v445
      %v568 = vpop.f32.mrb[0].mxu0
      %v569 = vadd.f32 0.0, %v568
      %v570 = vpop.f32.mrb[0].mxu0
      %v571 = vpop.f32.mrb[0].mxu0
      %v572 = vadd.f32 0.0, %v571
      %v573 = vpop.f32.mrb[0].mxu0
      %574 = vmatprep.mubr.bf16.mxu0 0
      %575 = vmatmul.mubr.bf16.gmra.mrb[0].mxu0 %v448
      %v576 = vpop.f32.mrb[0].mxu0
      %v577 = vadd.f32 0.0, %v576
      %v578 = vpop.f32.mrb[0].mxu0
      %v579 = vpop.f32.mrb[0].mxu0
      %v580 = vadd.f32 0.0, %v579
      %v581 = vpop.f32.mrb[0].mxu0
      %582 = vmatprep.mubr.bf16.mxu0 0
      %583 = vmatmul.mubr.bf16.gmra.mrb[0].mxu0 %v451
      %v584 = vpop.f32.mrb[0].mxu0
      %v585 = vadd.f32 0.0, %v584
      %v586 = vpop.f32.mrb[0].mxu0
      %v587 = vpop.f32.mrb[0].mxu0
      %v588 = vadd.f32 0.0, %v587
      %v589 = vpop.f32.mrb[0].mxu0
      %590 = vmatprep.mubr.bf16.mxu0 0
      %591 = vmatmul.mubr.bf16.gmra.mrb[0].mxu0 %v454
      %v592 = vpop.f32.mrb[0].mxu0
      %v593 = vadd.f32 0.0, %v592
      %v594 = vpop.f32.mrb[0].mxu0
      %v595 = vpop.f32.mrb[0].mxu0
      %v596 = vadd.f32 0.0, %v595
      %v597 = vpop.f32.mrb[0].mxu0
      %598 = vmatprep.mubr.bf16.mxu0 0
      %599 = vmatmul.mubr.bf16.gmra.mrb[0].mxu0 %v457
      %v600 = vpop.f32.mrb[0].mxu0
      %v601 = vadd.f32 0.0, %v600
      %v602 = vpop.f32.mrb[0].mxu0
      %v603 = vpop.f32.mrb[0].mxu0
      %v604 = vadd.f32 0.0, %v603
      %v605 = vpop.f32.mrb[0].mxu0
      %606 = vmatprep.mubr.bf16.mxu0 0
      %607 = vmatmul.mubr.bf16.gmra.mrb[0].mxu0 %v460
      %v608 = vpop.f32.mrb[0].mxu0
      %v609 = vadd.f32 0.0, %v608
      %v610 = vpop.f32.mrb[0].mxu0
      %v611 = vpop.f32.mrb[0].mxu0
      %v612 = vadd.f32 0.0, %v611
      %v613 = vpop.f32.mrb[0].mxu0
      %614 = vmatprep.mubr.bf16.mxu0 0
      %615 = vmatmul.mubr.bf16.gmra.mrb[0].mxu0 %v463
      %v616 = vpop.f32.mrb[0].mxu0
      %v617 = vadd.f32 0.0, %v616
      %v618 = vpop.f32.mrb[0].mxu0
      %v619 = vpop.f32.mrb[0].mxu0
      %v620 = vadd.f32 0.0, %v619
      %v621 = vpop.f32.mrb[0].mxu0
      %622 = vmatprep.mubr.bf16.mxu0 0
      %623 = vmatmul.mubr.bf16.gmra.mrb[0].mxu0 %v466
      %v624 = vpop.f32.mrb[0].mxu0
      %v625 = vadd.f32 0.0, %v624
      %v626 = vpop.f32.mrb[0].mxu0
      %v627 = vpop.f32.mrb[0].mxu0
      %v628 = vadd.f32 0.0, %v627
      %v629 = vpop.f32.mrb[0].mxu0
      %630 = vmatprep.mubr.bf16.mxu0 0
      %631 = vmatmul.mubr.bf16.gmra.mrb[0].mxu0 %v469
      %v632 = vpop.f32.mrb[0].mxu0
      %v633 = vadd.f32 0.0, %v632
      %v634 = vpop.f32.mrb[0].mxu0
      %v635 = vpop.f32.mrb[0].mxu0
      %v636 = vadd.f32 0.0, %v635
      %v637 = vpop.f32.mrb[0].mxu0
      %638 = vdwg.mxu0
      %v640 = vsel %vm422, %v226, 0
      %v643 = vsel %vm422, %v227, 0
      %v646 = vsel %vm422, %v228, 0
      %v649 = vsel %vm422, %v229, 0
      %v652 = vsel %vm422, %v230, 0
      %v655 = vsel %vm422, %v231, 0
      %v658 = vsel %vm422, %v232, 0
      %v661 = vsel %vm422, %v233, 0
      %v664 = vsel %vm422, %v234, 0
      %v667 = vsel %vm422, %v235, 0
      %v670 = vsel %vm422, %v236, 0
      %v673 = vsel %vm422, %v237, 0
      %v676 = vsel %vm422, %v238, 0
      %v679 = vsel %vm422, %v239, 0
      %v682 = vsel %vm422, %v240, 0
      %v685 = vsel %vm422, %v241, 0
      %v688 = vand.u32 %v242, %v474
      %690 = vmatprep.subr.bf16.mxu0 0
      %691 = vmatpush1.bf16.msra.mxu0 %v688
      %692 = vmatprep.subr.bf16.mxu0 0
      %693 = vmatpush1.bf16.msra.mxu0 0
      %694 = vmatprep.subr.bf16.mxu0 0
      %695 = vmatpush1.bf16.msra.mxu0 0
      %696 = vmatprep.subr.bf16.mxu0 0
      %697 = vmatpush1.bf16.msra.mxu0 0
      %698 = vmatprep.subr.bf16.mxu0 0
      %699 = vmatpush1.bf16.msra.mxu0 0
      %700 = vmatprep.subr.bf16.mxu0 0
      %701 = vmatpush1.bf16.msra.mxu0 0
      %702 = vmatprep.subr.bf16.mxu0 0
      %703 = vmatpush1.bf16.msra.mxu0 0
      %704 = vmatprep.subr.bf16.mxu0 0
      %705 = vmatpush1.bf16.msra.mxu0 0
      %706 = vmatprep.subr.bf16.mxu0 0
      %707 = vmatpush1.bf16.msra.mxu0 0
      %708 = vmatprep.subr.bf16.mxu0 0
      %709 = vmatpush1.bf16.msra.mxu0 0
      %710 = vmatprep.subr.bf16.mxu0 0
      %711 = vmatpush1.bf16.msra.mxu0 0
      %712 = vmatprep.subr.bf16.mxu0 0
      %713 = vmatpush1.bf16.msra.mxu0 0
      %714 = vmatprep.subr.bf16.mxu0 0
      %715 = vmatpush1.bf16.msra.mxu0 0
      %716 = vmatprep.subr.bf16.mxu0 0
      %717 = vmatpush1.bf16.msra.mxu0 0
      %718 = vmatprep.subr.bf16.mxu0 0
      %719 = vmatpush1.bf16.msra.mxu0 0
      %720 = vmatprep.subr.bf16.mxu0 0
      %721 = vmatpush1.bf16.msra.mxu0 0
      %722 = vmatprep.mubr.bf16.mxu0 0
      %723 = vmatmul.mubr.bf16.gmra.mrb[0].mxu0 %v640
      %v724 = vpop.f32.mrb[0].mxu0
      %v725 = vadd.f32 %v513, %v724
      %v726 = vpop.f32.mrb[0].mxu0
      %v727 = vpop.f32.mrb[0].mxu0
      %v728 = vadd.f32 %v516, %v727
      %v729 = vpop.f32.mrb[0].mxu0
      %730 = vmatprep.mubr.bf16.mxu0 0
      %731 = vmatmul.mubr.bf16.gmra.mrb[0].mxu0 %v643
      %v732 = vpop.f32.mrb[0].mxu0
      %v733 = vadd.f32 %v521, %v732
      %v734 = vpop.f32.mrb[0].mxu0
      %v735 = vpop.f32.mrb[0].mxu0
      %v736 = vadd.f32 %v524, %v735
      %v737 = vpop.f32.mrb[0].mxu0
      %738 = vmatprep.mubr.bf16.mxu0 0
      %739 = vmatmul.mubr.bf16.gmra.mrb[0].mxu0 %v646
      %v740 = vpop.f32.mrb[0].mxu0
      %v741 = vadd.f32 %v529, %v740
      %v742 = vpop.f32.mrb[0].mxu0
      %v743 = vpop.f32.mrb[0].mxu0
      %v744 = vadd.f32 %v532, %v743
      %v745 = vpop.f32.mrb[0].mxu0
      %746 = vmatprep.mubr.bf16.mxu0 0
      %747 = vmatmul.mubr.bf16.gmra.mrb[0].mxu0 %v649
      %v748 = vpop.f32.mrb[0].mxu0
      %v749 = vadd.f32 %v537, %v748
      %v750 = vpop.f32.mrb[0].mxu0
      %v751 = vpop.f32.mrb[0].mxu0
      %v752 = vadd.f32 %v540, %v751
      %v753 = vpop.f32.mrb[0].mxu0
      %754 = vmatprep.mubr.bf16.mxu0 0
      %755 = vmatmul.mubr.bf16.gmra.mrb[0].mxu0 %v652
      %v756 = vpop.f32.mrb[0].mxu0
      %v757 = vadd.f32 %v545, %v756
      %v758 = vpop.f32.mrb[0].mxu0
      %v759 = vpop.f32.mrb[0].mxu0
      %v760 = vadd.f32 %v548, %v759
      %v761 = vpop.f32.mrb[0].mxu0
      %762 = vmatprep.mubr.bf16.mxu0 0
      %763 = vmatmul.mubr.bf16.gmra.mrb[0].mxu0 %v655
      %v764 = vpop.f32.mrb[0].mxu0
      %v765 = vadd.f32 %v553, %v764
      %v766 = vpop.f32.mrb[0].mxu0
      %v767 = vpop.f32.mrb[0].mxu0
      %v768 = vadd.f32 %v556, %v767
      %v769 = vpop.f32.mrb[0].mxu0
      %770 = vmatprep.mubr.bf16.mxu0 0
      %771 = vmatmul.mubr.bf16.gmra.mrb[0].mxu0 %v658
      %v772 = vpop.f32.mrb[0].mxu0
      %v773 = vadd.f32 %v561, %v772
      %v774 = vpop.f32.mrb[0].mxu0
      %v775 = vpop.f32.mrb[0].mxu0
      %v776 = vadd.f32 %v564, %v775
      %v777 = vpop.f32.mrb[0].mxu0
      %778 = vmatprep.mubr.bf16.mxu0 0
      %779 = vmatmul.mubr.bf16.gmra.mrb[0].mxu0 %v661
      %v780 = vpop.f32.mrb[0].mxu0
      %v781 = vadd.f32 %v569, %v780
      %v782 = vpop.f32.mrb[0].mxu0
      %v783 = vpop.f32.mrb[0].mxu0
      %v784 = vadd.f32 %v572, %v783
      %v785 = vpop.f32.mrb[0].mxu0
      %786 = vmatprep.mubr.bf16.mxu0 0
      %787 = vmatmul.mubr.bf16.gmra.mrb[0].mxu0 %v664
      %v788 = vpop.f32.mrb[0].mxu0
      %v789 = vadd.f32 %v577, %v788
      %v790 = vpop.f32.mrb[0].mxu0
      %v791 = vpop.f32.mrb[0].mxu0
      %v792 = vadd.f32 %v580, %v791
      %v793 = vpop.f32.mrb[0].mxu0
      %794 = vmatprep.mubr.bf16.mxu0 0
      %795 = vmatmul.mubr.bf16.gmra.mrb[0].mxu0 %v667
      %v796 = vpop.f32.mrb[0].mxu0
      %v797 = vadd.f32 %v585, %v796
      %v798 = vpop.f32.mrb[0].mxu0
      %v799 = vpop.f32.mrb[0].mxu0
      %v800 = vadd.f32 %v588, %v799
      %v801 = vpop.f32.mrb[0].mxu0
      %802 = vmatprep.mubr.bf16.mxu0 0
      %803 = vmatmul.mubr.bf16.gmra.mrb[0].mxu0 %v670
      %v804 = vpop.f32.mrb[0].mxu0
      %v805 = vadd.f32 %v593, %v804
      %v806 = vpop.f32.mrb[0].mxu0
      %v807 = vpop.f32.mrb[0].mxu0
      %v808 = vadd.f32 %v596, %v807
      %v809 = vpop.f32.mrb[0].mxu0
      %810 = vmatprep.mubr.bf16.mxu0 0
      %811 = vmatmul.mubr.bf16.gmra.mrb[0].mxu0 %v673
      %v812 = vpop.f32.mrb[0].mxu0
      %v813 = vadd.f32 %v601, %v812
      %v814 = vpop.f32.mrb[0].mxu0
      %v815 = vpop.f32.mrb[0].mxu0
      %v816 = vadd.f32 %v604, %v815
      %v817 = vpop.f32.mrb[0].mxu0
      %818 = vmatprep.mubr.bf16.mxu0 0
      %819 = vmatmul.mubr.bf16.gmra.mrb[0].mxu0 %v676
      %v820 = vpop.f32.mrb[0].mxu0
      %v821 = vadd.f32 %v609, %v820
      %v822 = vpop.f32.mrb[0].mxu0
      %v823 = vpop.f32.mrb[0].mxu0
      %v824 = vadd.f32 %v612, %v823
      %v825 = vpop.f32.mrb[0].mxu0
      %826 = vmatprep.mubr.bf16.mxu0 0
      %827 = vmatmul.mubr.bf16.gmra.mrb[0].mxu0 %v679
      %v828 = vpop.f32.mrb[0].mxu0
      %v829 = vadd.f32 %v617, %v828
      %v830 = vpop.f32.mrb[0].mxu0
      %v831 = vpop.f32.mrb[0].mxu0
      %v832 = vadd.f32 %v620, %v831
      %v833 = vpop.f32.mrb[0].mxu0
      %834 = vmatprep.mubr.bf16.mxu0 0
      %835 = vmatmul.mubr.bf16.gmra.mrb[0].mxu0 %v682
      %v836 = vpop.f32.mrb[0].mxu0
      %v837 = vadd.f32 %v625, %v836
      %v838 = vpop.f32.mrb[0].mxu0
      %v839 = vpop.f32.mrb[0].mxu0
      %v840 = vadd.f32 %v628, %v839
      %v841 = vpop.f32.mrb[0].mxu0
      %842 = vmatprep.mubr.bf16.mxu0 0
      %843 = vmatmul.mubr.bf16.gmra.mrb[0].mxu0 %v685
      %v844 = vpop.f32.mrb[0].mxu0
      %v845 = vadd.f32 %v633, %v844
      %v846 = vpop.f32.mrb[0].mxu0
      %v847 = vpop.f32.mrb[0].mxu0
      %v848 = vadd.f32 %v636, %v847
      %v849 = vpop.f32.mrb[0].mxu0
      %850 = vdwg.mxu0
      %vm851 = vcmask 1045504
      %v852 = vrot.slane %v172, 2
      %v853 = vrot.slane %v173, 2
      %v854 = vsel %vm851, %v852, %v853
      %v855 = vrot.slane %v174, 2
      %v856 = vsel %vm851, %v853, %v855
      %v857 = vrot.slane %v175, 2
      %v858 = vrot.slane %v176, 2
      %v859 = vsel %vm851, %v857, %v858
      %v860 = vrot.slane %v177, 2
      %v861 = vsel %vm851, %v858, %v860
      %v862 = vrot.slane %v178, 2
      %v863 = vrot.slane %v179, 2
      %v864 = vsel %vm851, %v862, %v863
      %v865 = vrot.slane %v180, 2
      %v866 = vsel %vm851, %v863, %v865
      %v867 = vrot.slane %v181, 2
      %v868 = vrot.slane %v182, 2
      %v869 = vsel %vm851, %v867, %v868
      %v870 = vrot.slane %v183, 2
      %v871 = vsel %vm851, %v868, %v870
      %v872 = vrot.slane %v184, 2
      %v873 = vrot.slane %v185, 2
      %v874 = vsel %vm851, %v872, %v873
      %v875 = vrot.slane %v186, 2
      %v876 = vsel %vm851, %v873, %v875
      %v877 = vrot.slane %v187, 2
      %v878 = vrot.slane %v188, 2
      %v879 = vsel %vm851, %v877, %v878
      %v880 = vrot.slane %v189, 2
      %v881 = vsel %vm851, %v878, %v880
      %v882 = vrot.slane %v190, 2
      %v883 = vrot.slane %v191, 2
      %v884 = vsel %vm851, %v882, %v883
      %v885 = vrot.slane %v192, 2
      %v886 = vsel %vm851, %v883, %v885
      %v887 = vrot.slane %v193, 2
      %v888 = vrot.slane %v194, 2
      %v889 = vsel %vm851, %v887, %v888
      %v890 = vrot.slane %v195, 2
      %v891 = vsel %vm851, %v888, %v890
      %v892 = vrot.slane %v196, 2
      %v893 = vrot.slane %v197, 2
      %v894 = vsel %vm851, %v892, %v893
      %v895 = vrot.slane %v198, 2
      %v896 = vsel %vm851, %v893, %v895
      %v897 = vrot.slane %v199, 2
      %v898 = vrot.slane %v200, 2
      %v899 = vsel %vm851, %v897, %v898
      %v900 = vrot.slane %v201, 2
      %v901 = vsel %vm851, %v898, %v900
      %v902 = vrot.slane %v202, 2
      %v903 = vrot.slane %v203, 2
      %v904 = vsel %vm851, %v902, %v903
      %v905 = vrot.slane %v204, 2
      %v906 = vsel %vm851, %v903, %v905
      %v907 = vrot.slane %v205, 2
      %v908 = vrot.slane %v206, 2
      %v909 = vsel %vm851, %v907, %v908
      %v910 = vrot.slane %v207, 2
      %v911 = vsel %vm851, %v908, %v910
      %v912 = vrot.slane %v208, 2
      %v913 = vrot.slane %v209, 2
      %v914 = vsel %vm851, %v912, %v913
      %v915 = vrot.slane %v210, 2
      %v916 = vsel %vm851, %v913, %v915
      %v917 = vrot.slane %v211, 2
      %v918 = vrot.slane %v212, 2
      %v919 = vsel %vm851, %v917, %v918
      %v920 = vrot.slane %v213, 2
      %v921 = vsel %vm851, %v918, %v920
      %v922 = vrot.slane %v214, 2
      %v923 = vrot.slane %v215, 2
      %v924 = vsel %vm851, %v922, %v923
      %v925 = vrot.slane %v216, 2
      %v926 = vsel %vm851, %v923, %v925
      %v927 = vrot.slane %v217, 2
      %v928 = vrot.slane %v218, 2
      %v929 = vsel %vm851, %v927, %v928
      %v930 = vrot.slane %v219, 2
      %v931 = vsel %vm851, %v928, %v930
      %v964 = vpack.c.bf16 %v856, %v854
      %v965 = vpack.c.bf16 %v861, %v859
      %v966 = vpack.c.bf16 %v866, %v864
      %v967 = vpack.c.bf16 %v871, %v869
      %v968 = vpack.c.bf16 %v876, %v874
      %v969 = vpack.c.bf16 %v881, %v879
      %v970 = vpack.c.bf16 %v886, %v884
      %v971 = vpack.c.bf16 %v891, %v889
      %v972 = vpack.c.bf16 %v896, %v894
      %v973 = vpack.c.bf16 %v901, %v899
      %v974 = vpack.c.bf16 %v906, %v904
      %v975 = vpack.c.bf16 %v911, %v909
      %v976 = vpack.c.bf16 %v916, %v914
      %v977 = vpack.c.bf16 %v921, %v919
      %v978 = vpack.c.bf16 %v926, %v924
      %v979 = vpack.c.bf16 %v931, %v929
      %s980 = scalar_lea.vmem %s1, 4
      %v981 = vld [vmem:[%s980] sm:$0x3]
      %v983 = vsel %vm422, %v964, 0
      %v986 = vsel %vm422, %v965, 0
      %v989 = vsel %vm422, %v966, 0
      %v992 = vsel %vm422, %v967, 0
      %v995 = vsel %vm422, %v968, 0
      %v998 = vsel %vm422, %v969, 0
      %v1001 = vsel %vm422, %v970, 0
      %v1004 = vsel %vm422, %v971, 0
      %v1007 = vsel %vm422, %v972, 0
      %v1010 = vsel %vm422, %v973, 0
      %v1013 = vsel %vm422, %v974, 0
      %v1016 = vsel %vm422, %v975, 0
      %v1019 = vsel %vm422, %v976, 0
      %v1022 = vsel %vm422, %v977, 0
      %v1025 = vsel %vm422, %v978, 0
      %v1028 = vsel %vm422, %v979, 0
      %v1031 = vand.u32 %v981, %v474
      %1033 = vmatprep.subr.bf16.mxu0 0
      %1034 = vmatpush1.bf16.msra.mxu0 %v1031
      %1035 = vmatprep.subr.bf16.mxu0 0
      %1036 = vmatpush1.bf16.msra.mxu0 0
      %1037 = vmatprep.subr.bf16.mxu0 0
      %1038 = vmatpush1.bf16.msra.mxu0 0
      %1039 = vmatprep.subr.bf16.mxu0 0
      %1040 = vmatpush1.bf16.msra.mxu0 0
      %1041 = vmatprep.subr.bf16.mxu0 0
      %1042 = vmatpush1.bf16.msra.mxu0 0
      %1043 = vmatprep.subr.bf16.mxu0 0
      %1044 = vmatpush1.bf16.msra.mxu0 0
      %1045 = vmatprep.subr.bf16.mxu0 0
      %1046 = vmatpush1.bf16.msra.mxu0 0
      %1047 = vmatprep.subr.bf16.mxu0 0
      %1048 = vmatpush1.bf16.msra.mxu0 0
      %1049 = vmatprep.subr.bf16.mxu0 0
      %1050 = vmatpush1.bf16.msra.mxu0 0
      %1051 = vmatprep.subr.bf16.mxu0 0
      %1052 = vmatpush1.bf16.msra.mxu0 0
      %1053 = vmatprep.subr.bf16.mxu0 0
      %1054 = vmatpush1.bf16.msra.mxu0 0
      %1055 = vmatprep.subr.bf16.mxu0 0
      %1056 = vmatpush1.bf16.msra.mxu0 0
      %1057 = vmatprep.subr.bf16.mxu0 0
      %1058 = vmatpush1.bf16.msra.mxu0 0
      %1059 = vmatprep.subr.bf16.mxu0 0
      %1060 = vmatpush1.bf16.msra.mxu0 0
      %1061 = vmatprep.subr.bf16.mxu0 0
      %1062 = vmatpush1.bf16.msra.mxu0 0
      %1063 = vmatprep.subr.bf16.mxu0 0
      %1064 = vmatpush1.bf16.msra.mxu0 0
      %1065 = vmatprep.mubr.bf16.mxu0 0
      %1066 = vmatmul.mubr.bf16.gmra.mrb[0].mxu0 %v983
      %v1067 = vpop.f32.mrb[0].mxu0
      %v1068 = vadd.f32 0.0, %v1067
      %v1069 = vpop.f32.mrb[0].mxu0
      %v1070 = vpop.f32.mrb[0].mxu0
      %v1071 = vadd.f32 0.0, %v1070
      %v1072 = vpop.f32.mrb[0].mxu0
      %1073 = vmatprep.mubr.bf16.mxu0 0
      %1074 = vmatmul.mubr.bf16.gmra.mrb[0].mxu0 %v986
      %v1075 = vpop.f32.mrb[0].mxu0
      %v1076 = vadd.f32 0.0, %v1075
      %v1077 = vpop.f32.mrb[0].mxu0
      %v1078 = vpop.f32.mrb[0].mxu0
      %v1079 = vadd.f32 0.0, %v1078
      %v1080 = vpop.f32.mrb[0].mxu0
      %1081 = vmatprep.mubr.bf16.mxu0 0
      %1082 = vmatmul.mubr.bf16.gmra.mrb[0].mxu0 %v989
      %v1083 = vpop.f32.mrb[0].mxu0
      %v1084 = vadd.f32 0.0, %v1083
      %v1085 = vpop.f32.mrb[0].mxu0
      %v1086 = vpop.f32.mrb[0].mxu0
      %v1087 = vadd.f32 0.0, %v1086
      %v1088 = vpop.f32.mrb[0].mxu0
      %1089 = vmatprep.mubr.bf16.mxu0 0
      %1090 = vmatmul.mubr.bf16.gmra.mrb[0].mxu0 %v992
      %v1091 = vpop.f32.mrb[0].mxu0
      %v1092 = vadd.f32 0.0, %v1091
      %v1093 = vpop.f32.mrb[0].mxu0
      %v1094 = vpop.f32.mrb[0].mxu0
      %v1095 = vadd.f32 0.0, %v1094
      %v1096 = vpop.f32.mrb[0].mxu0
      %1097 = vmatprep.mubr.bf16.mxu0 0
      %1098 = vmatmul.mubr.bf16.gmra.mrb[0].mxu0 %v995
      %v1099 = vpop.f32.mrb[0].mxu0
      %v1100 = vadd.f32 0.0, %v1099
      %v1101 = vpop.f32.mrb[0].mxu0
      %v1102 = vpop.f32.mrb[0].mxu0
      %v1103 = vadd.f32 0.0, %v1102
      %v1104 = vpop.f32.mrb[0].mxu0
      %1105 = vmatprep.mubr.bf16.mxu0 0
      %1106 = vmatmul.mubr.bf16.gmra.mrb[0].mxu0 %v998
      %v1107 = vpop.f32.mrb[0].mxu0
      %v1108 = vadd.f32 0.0, %v1107
      %v1109 = vpop.f32.mrb[0].mxu0
      %v1110 = vpop.f32.mrb[0].mxu0
      %v1111 = vadd.f32 0.0, %v1110
      %v1112 = vpop.f32.mrb[0].mxu0
      %1113 = vmatprep.mubr.bf16.mxu0 0
      %1114 = vmatmul.mubr.bf16.gmra.mrb[0].mxu0 %v1001
      %v1115 = vpop.f32.mrb[0].mxu0
      %v1116 = vadd.f32 0.0, %v1115
      %v1117 = vpop.f32.mrb[0].mxu0
      %v1118 = vpop.f32.mrb[0].mxu0
      %v1119 = vadd.f32 0.0, %v1118
      %v1120 = vpop.f32.mrb[0].mxu0
      %1121 = vmatprep.mubr.bf16.mxu0 0
      %1122 = vmatmul.mubr.bf16.gmra.mrb[0].mxu0 %v1004
      %v1123 = vpop.f32.mrb[0].mxu0
      %v1124 = vadd.f32 0.0, %v1123
      %v1125 = vpop.f32.mrb[0].mxu0
      %v1126 = vpop.f32.mrb[0].mxu0
      %v1127 = vadd.f32 0.0, %v1126
      %v1128 = vpop.f32.mrb[0].mxu0
      %1129 = vmatprep.mubr.bf16.mxu0 0
      %1130 = vmatmul.mubr.bf16.gmra.mrb[0].mxu0 %v1007
      %v1131 = vpop.f32.mrb[0].mxu0
      %v1132 = vadd.f32 0.0, %v1131
      %v1133 = vpop.f32.mrb[0].mxu0
      %v1134 = vpop.f32.mrb[0].mxu0
      %v1135 = vadd.f32 0.0, %v1134
      %v1136 = vpop.f32.mrb[0].mxu0
      %1137 = vmatprep.mubr.bf16.mxu0 0
      %1138 = vmatmul.mubr.bf16.gmra.mrb[0].mxu0 %v1010
      %v1139 = vpop.f32.mrb[0].mxu0
      %v1140 = vadd.f32 0.0, %v1139
      %v1141 = vpop.f32.mrb[0].mxu0
      %v1142 = vpop.f32.mrb[0].mxu0
      %v1143 = vadd.f32 0.0, %v1142
      %v1144 = vpop.f32.mrb[0].mxu0
      %1145 = vmatprep.mubr.bf16.mxu0 0
      %1146 = vmatmul.mubr.bf16.gmra.mrb[0].mxu0 %v1013
      %v1147 = vpop.f32.mrb[0].mxu0
      %v1148 = vadd.f32 0.0, %v1147
      %v1149 = vpop.f32.mrb[0].mxu0
      %v1150 = vpop.f32.mrb[0].mxu0
      %v1151 = vadd.f32 0.0, %v1150
      %v1152 = vpop.f32.mrb[0].mxu0
      %1153 = vmatprep.mubr.bf16.mxu0 0
      %1154 = vmatmul.mubr.bf16.gmra.mrb[0].mxu0 %v1016
      %v1155 = vpop.f32.mrb[0].mxu0
      %v1156 = vadd.f32 0.0, %v1155
      %v1157 = vpop.f32.mrb[0].mxu0
      %v1158 = vpop.f32.mrb[0].mxu0
      %v1159 = vadd.f32 0.0, %v1158
      %v1160 = vpop.f32.mrb[0].mxu0
      %1161 = vmatprep.mubr.bf16.mxu0 0
      %1162 = vmatmul.mubr.bf16.gmra.mrb[0].mxu0 %v1019
      %v1163 = vpop.f32.mrb[0].mxu0
      %v1164 = vadd.f32 0.0, %v1163
      %v1165 = vpop.f32.mrb[0].mxu0
      %v1166 = vpop.f32.mrb[0].mxu0
      %v1167 = vadd.f32 0.0, %v1166
      %v1168 = vpop.f32.mrb[0].mxu0
      %1169 = vmatprep.mubr.bf16.mxu0 0
      %1170 = vmatmul.mubr.bf16.gmra.mrb[0].mxu0 %v1022
      %v1171 = vpop.f32.mrb[0].mxu0
      %v1172 = vadd.f32 0.0, %v1171
      %v1173 = vpop.f32.mrb[0].mxu0
      %v1174 = vpop.f32.mrb[0].mxu0
      %v1175 = vadd.f32 0.0, %v1174
      %v1176 = vpop.f32.mrb[0].mxu0
      %1177 = vmatprep.mubr.bf16.mxu0 0
      %1178 = vmatmul.mubr.bf16.gmra.mrb[0].mxu0 %v1025
      %v1179 = vpop.f32.mrb[0].mxu0
      %v1180 = vadd.f32 0.0, %v1179
      %v1181 = vpop.f32.mrb[0].mxu0
      %v1182 = vpop.f32.mrb[0].mxu0
      %v1183 = vadd.f32 0.0, %v1182
      %v1184 = vpop.f32.mrb[0].mxu0
      %1185 = vmatprep.mubr.bf16.mxu0 0
      %1186 = vmatmul.mubr.bf16.gmra.mrb[0].mxu0 %v1028
      %v1187 = vpop.f32.mrb[0].mxu0
      %v1188 = vadd.f32 0.0, %v1187
      %v1189 = vpop.f32.mrb[0].mxu0
      %v1190 = vpop.f32.mrb[0].mxu0
      %v1191 = vadd.f32 0.0, %v1190
      %v1192 = vpop.f32.mrb[0].mxu0
      %1193 = vdwg.mxu0
      %v1194 = vadd.f32 %v725, %v1068
      %v1195 = vadd.f32 %v728, %v1071
      %v1196 = vadd.f32 %v733, %v1076
      %v1197 = vadd.f32 %v736, %v1079
      %v1198 = vadd.f32 %v741, %v1084
      %v1199 = vadd.f32 %v744, %v1087
      %v1200 = vadd.f32 %v749, %v1092
      %v1201 = vadd.f32 %v752, %v1095
      %v1202 = vadd.f32 %v757, %v1100
      %v1203 = vadd.f32 %v760, %v1103
      %v1204 = vadd.f32 %v765, %v1108
      %v1205 = vadd.f32 %v768, %v1111
      %v1206 = vadd.f32 %v773, %v1116
      %v1207 = vadd.f32 %v776, %v1119
      %v1208 = vadd.f32 %v781, %v1124
      %v1209 = vadd.f32 %v784, %v1127
      %v1210 = vadd.f32 %v789, %v1132
      %v1211 = vadd.f32 %v792, %v1135
      %v1212 = vadd.f32 %v797, %v1140
      %v1213 = vadd.f32 %v800, %v1143
      %v1214 = vadd.f32 %v805, %v1148
      %v1215 = vadd.f32 %v808, %v1151
      %v1216 = vadd.f32 %v813, %v1156
      %v1217 = vadd.f32 %v816, %v1159
      %v1218 = vadd.f32 %v821, %v1164
      %v1219 = vadd.f32 %v824, %v1167
      %v1220 = vadd.f32 %v829, %v1172
      %v1221 = vadd.f32 %v832, %v1175
      %v1222 = vadd.f32 %v837, %v1180
      %v1223 = vadd.f32 %v840, %v1183
      %v1224 = vadd.f32 %v845, %v1188
      %v1225 = vadd.f32 %v848, %v1191
      %v1226 = vpack.c.bf16 %v221, %v220
      %s1227 = scalar_lea.vmem %s1, 6
      %v1228 = vld [vmem:[%s1227] sm:$0x3]
      %v1230 = vsel %vm422, %v1226, 0
      %v1233 = vand.u32 %v1228, %v474
      %1235 = vmatprep.subr.bf16.mxu0 0
      %1236 = vmatpush1.bf16.msra.mxu0 %v1233
      %1237 = vmatprep.subr.bf16.mxu0 0
      %1238 = vmatpush1.bf16.msra.mxu0 0
      %1239 = vmatprep.subr.bf16.mxu0 0
      %1240 = vmatpush1.bf16.msra.mxu0 0
      %1241 = vmatprep.subr.bf16.mxu0 0
      %1242 = vmatpush1.bf16.msra.mxu0 0
      %1243 = vmatprep.subr.bf16.mxu0 0
      %1244 = vmatpush1.bf16.msra.mxu0 0
      %1245 = vmatprep.subr.bf16.mxu0 0
      %1246 = vmatpush1.bf16.msra.mxu0 0
      %1247 = vmatprep.subr.bf16.mxu0 0
      %1248 = vmatpush1.bf16.msra.mxu0 0
      %1249 = vmatprep.subr.bf16.mxu0 0
      %1250 = vmatpush1.bf16.msra.mxu0 0
      %1251 = vmatprep.subr.bf16.mxu0 0
      %1252 = vmatpush1.bf16.msra.mxu0 0
      %1253 = vmatprep.subr.bf16.mxu0 0
      %1254 = vmatpush1.bf16.msra.mxu0 0
      %1255 = vmatprep.subr.bf16.mxu0 0
      %1256 = vmatpush1.bf16.msra.mxu0 0
      %1257 = vmatprep.subr.bf16.mxu0 0
      %1258 = vmatpush1.bf16.msra.mxu0 0
      %1259 = vmatprep.subr.bf16.mxu0 0
      %1260 = vmatpush1.bf16.msra.mxu0 0
      %1261 = vmatprep.subr.bf16.mxu0 0
      %1262 = vmatpush1.bf16.msra.mxu0 0
      %1263 = vmatprep.subr.bf16.mxu0 0
      %1264 = vmatpush1.bf16.msra.mxu0 0
      %1265 = vmatprep.subr.bf16.mxu0 0
      %1266 = vmatpush1.bf16.msra.mxu0 0
      %1267 = vmatprep.mubr.bf16.mxu0 0
      %1268 = vmatmul.mubr.bf16.gmra.mrb[0].mxu0 %v643
      %v1269 = vpop.f32.mrb[0].mxu0
      %v1270 = vadd.f32 0.0, %v1269
      %v1271 = vpop.f32.mrb[0].mxu0
      %v1272 = vpop.f32.mrb[0].mxu0
      %v1273 = vadd.f32 0.0, %v1272
      %v1274 = vpop.f32.mrb[0].mxu0
      %1275 = vmatprep.mubr.bf16.mxu0 0
      %1276 = vmatmul.mubr.bf16.gmra.mrb[0].mxu0 %v646
      %v1277 = vpop.f32.mrb[0].mxu0
      %v1278 = vadd.f32 0.0, %v1277
      %v1279 = vpop.f32.mrb[0].mxu0
      %v1280 = vpop.f32.mrb[0].mxu0
      %v1281 = vadd.f32 0.0, %v1280
      %v1282 = vpop.f32.mrb[0].mxu0
      %1283 = vmatprep.mubr.bf16.mxu0 0
      %1284 = vmatmul.mubr.bf16.gmra.mrb[0].mxu0 %v649
      %v1285 = vpop.f32.mrb[0].mxu0
      %v1286 = vadd.f32 0.0, %v1285
      %v1287 = vpop.f32.mrb[0].mxu0
      %v1288 = vpop.f32.mrb[0].mxu0
      %v1289 = vadd.f32 0.0, %v1288
      %v1290 = vpop.f32.mrb[0].mxu0
      %1291 = vmatprep.mubr.bf16.mxu0 0
      %1292 = vmatmul.mubr.bf16.gmra.mrb[0].mxu0 %v652
      %v1293 = vpop.f32.mrb[0].mxu0
      %v1294 = vadd.f32 0.0, %v1293
      %v1295 = vpop.f32.mrb[0].mxu0
      %v1296 = vpop.f32.mrb[0].mxu0
      %v1297 = vadd.f32 0.0, %v1296
      %v1298 = vpop.f32.mrb[0].mxu0
      %1299 = vmatprep.mubr.bf16.mxu0 0
      %1300 = vmatmul.mubr.bf16.gmra.mrb[0].mxu0 %v655
      %v1301 = vpop.f32.mrb[0].mxu0
      %v1302 = vadd.f32 0.0, %v1301
      %v1303 = vpop.f32.mrb[0].mxu0
      %v1304 = vpop.f32.mrb[0].mxu0
      %v1305 = vadd.f32 0.0, %v1304
      %v1306 = vpop.f32.mrb[0].mxu0
      %1307 = vmatprep.mubr.bf16.mxu0 0
      %1308 = vmatmul.mubr.bf16.gmra.mrb[0].mxu0 %v658
      %v1309 = vpop.f32.mrb[0].mxu0
      %v1310 = vadd.f32 0.0, %v1309
      %v1311 = vpop.f32.mrb[0].mxu0
      %v1312 = vpop.f32.mrb[0].mxu0
      %v1313 = vadd.f32 0.0, %v1312
      %v1314 = vpop.f32.mrb[0].mxu0
      %1315 = vmatprep.mubr.bf16.mxu0 0
      %1316 = vmatmul.mubr.bf16.gmra.mrb[0].mxu0 %v661
      %v1317 = vpop.f32.mrb[0].mxu0
      %v1318 = vadd.f32 0.0, %v1317
      %v1319 = vpop.f32.mrb[0].mxu0
      %v1320 = vpop.f32.mrb[0].mxu0
      %v1321 = vadd.f32 0.0, %v1320
      %v1322 = vpop.f32.mrb[0].mxu0
      %1323 = vmatprep.mubr.bf16.mxu0 0
      %1324 = vmatmul.mubr.bf16.gmra.mrb[0].mxu0 %v664
      %v1325 = vpop.f32.mrb[0].mxu0
      %v1326 = vadd.f32 0.0, %v1325
      %v1327 = vpop.f32.mrb[0].mxu0
      %v1328 = vpop.f32.mrb[0].mxu0
      %v1329 = vadd.f32 0.0, %v1328
      %v1330 = vpop.f32.mrb[0].mxu0
      %1331 = vmatprep.mubr.bf16.mxu0 0
      %1332 = vmatmul.mubr.bf16.gmra.mrb[0].mxu0 %v667
      %v1333 = vpop.f32.mrb[0].mxu0
      %v1334 = vadd.f32 0.0, %v1333
      %v1335 = vpop.f32.mrb[0].mxu0
      %v1336 = vpop.f32.mrb[0].mxu0
      %v1337 = vadd.f32 0.0, %v1336
      %v1338 = vpop.f32.mrb[0].mxu0
      %1339 = vmatprep.mubr.bf16.mxu0 0
      %1340 = vmatmul.mubr.bf16.gmra.mrb[0].mxu0 %v670
      %v1341 = vpop.f32.mrb[0].mxu0
      %v1342 = vadd.f32 0.0, %v1341
      %v1343 = vpop.f32.mrb[0].mxu0
      %v1344 = vpop.f32.mrb[0].mxu0
      %v1345 = vadd.f32 0.0, %v1344
      %v1346 = vpop.f32.mrb[0].mxu0
      %1347 = vmatprep.mubr.bf16.mxu0 0
      %1348 = vmatmul.mubr.bf16.gmra.mrb[0].mxu0 %v673
      %v1349 = vpop.f32.mrb[0].mxu0
      %v1350 = vadd.f32 0.0, %v1349
      %v1351 = vpop.f32.mrb[0].mxu0
      %v1352 = vpop.f32.mrb[0].mxu0
      %v1353 = vadd.f32 0.0, %v1352
      %v1354 = vpop.f32.mrb[0].mxu0
      %1355 = vmatprep.mubr.bf16.mxu0 0
      %1356 = vmatmul.mubr.bf16.gmra.mrb[0].mxu0 %v676
      %v1357 = vpop.f32.mrb[0].mxu0
      %v1358 = vadd.f32 0.0, %v1357
      %v1359 = vpop.f32.mrb[0].mxu0
      %v1360 = vpop.f32.mrb[0].mxu0
      %v1361 = vadd.f32 0.0, %v1360
      %v1362 = vpop.f32.mrb[0].mxu0
      %1363 = vmatprep.mubr.bf16.mxu0 0
      %1364 = vmatmul.mubr.bf16.gmra.mrb[0].mxu0 %v679
      %v1365 = vpop.f32.mrb[0].mxu0
      %v1366 = vadd.f32 0.0, %v1365
      %v1367 = vpop.f32.mrb[0].mxu0
      %v1368 = vpop.f32.mrb[0].mxu0
      %v1369 = vadd.f32 0.0, %v1368
      %v1370 = vpop.f32.mrb[0].mxu0
      %1371 = vmatprep.mubr.bf16.mxu0 0
      %1372 = vmatmul.mubr.bf16.gmra.mrb[0].mxu0 %v682
      %v1373 = vpop.f32.mrb[0].mxu0
      %v1374 = vadd.f32 0.0, %v1373
      %v1375 = vpop.f32.mrb[0].mxu0
      %v1376 = vpop.f32.mrb[0].mxu0
      %v1377 = vadd.f32 0.0, %v1376
      %v1378 = vpop.f32.mrb[0].mxu0
      %1379 = vmatprep.mubr.bf16.mxu0 0
      %1380 = vmatmul.mubr.bf16.gmra.mrb[0].mxu0 %v685
      %v1381 = vpop.f32.mrb[0].mxu0
      %v1382 = vadd.f32 0.0, %v1381
      %v1383 = vpop.f32.mrb[0].mxu0
      %v1384 = vpop.f32.mrb[0].mxu0
      %v1385 = vadd.f32 0.0, %v1384
      %v1386 = vpop.f32.mrb[0].mxu0
      %1387 = vmatprep.mubr.bf16.mxu0 0
      %1388 = vmatmul.mubr.bf16.gmra.mrb[0].mxu0 %v1230
      %v1389 = vpop.f32.mrb[0].mxu0
      %v1390 = vadd.f32 0.0, %v1389
      %v1391 = vpop.f32.mrb[0].mxu0
      %v1392 = vpop.f32.mrb[0].mxu0
      %v1393 = vadd.f32 0.0, %v1392
      %v1394 = vpop.f32.mrb[0].mxu0
      %1395 = vdwg.mxu0
      %v1396 = vadd.f32 %v1194, %v1270
      %v1397 = vadd.f32 %v1195, %v1273
      %v1398 = vadd.f32 %v1196, %v1278
      %v1399 = vadd.f32 %v1197, %v1281
      %v1400 = vadd.f32 %v1198, %v1286
      %v1401 = vadd.f32 %v1199, %v1289
      %v1402 = vadd.f32 %v1200, %v1294
      %v1403 = vadd.f32 %v1201, %v1297
      %v1404 = vadd.f32 %v1202, %v1302
      %v1405 = vadd.f32 %v1203, %v1305
      %v1406 = vadd.f32 %v1204, %v1310
      %v1407 = vadd.f32 %v1205, %v1313
      %v1408 = vadd.f32 %v1206, %v1318
      %v1409 = vadd.f32 %v1207, %v1321
      %v1410 = vadd.f32 %v1208, %v1326
      %v1411 = vadd.f32 %v1209, %v1329
      %v1412 = vadd.f32 %v1210, %v1334
      %v1413 = vadd.f32 %v1211, %v1337
      %v1414 = vadd.f32 %v1212, %v1342
      %v1415 = vadd.f32 %v1213, %v1345
      %v1416 = vadd.f32 %v1214, %v1350
      %v1417 = vadd.f32 %v1215, %v1353
      %v1418 = vadd.f32 %v1216, %v1358
      %v1419 = vadd.f32 %v1217, %v1361
      %v1420 = vadd.f32 %v1218, %v1366
      %v1421 = vadd.f32 %v1219, %v1369
      %v1422 = vadd.f32 %v1220, %v1374
      %v1423 = vadd.f32 %v1221, %v1377
      %v1424 = vadd.f32 %v1222, %v1382
      %v1425 = vadd.f32 %v1223, %v1385
      %v1426 = vadd.f32 %v1224, %v1390
      %v1427 = vadd.f32 %v1225, %v1393
      %v1431 = vrot.slane %v220, 1
      %v1432 = vrot.slane %v221, 1
      %v1433 = vsel %vm291, %v1431, %v1432
      %v1434 = vrot.slane %v222, 1
      %v1435 = vsel %vm291, %v1432, %v1434
      %v1438 = vpack.c.bf16 %v1435, %v1433
      %s1439 = scalar_lea.vmem %s1, 8
      %v1440 = vld [vmem:[%s1439] sm:$0x3]
      %v1442 = vsel %vm422, %v1438, 0
      %v1445 = vand.u32 %v1440, %v474
      %1447 = vmatprep.subr.bf16.mxu0 0
      %1448 = vmatpush1.bf16.msra.mxu0 %v1445
      %1449 = vmatprep.subr.bf16.mxu0 0
      %1450 = vmatpush1.bf16.msra.mxu0 0
      %1451 = vmatprep.subr.bf16.mxu0 0
      %1452 = vmatpush1.bf16.msra.mxu0 0
      %1453 = vmatprep.subr.bf16.mxu0 0
      %1454 = vmatpush1.bf16.msra.mxu0 0
      %1455 = vmatprep.subr.bf16.mxu0 0
      %1456 = vmatpush1.bf16.msra.mxu0 0
      %1457 = vmatprep.subr.bf16.mxu0 0
      %1458 = vmatpush1.bf16.msra.mxu0 0
      %1459 = vmatprep.subr.bf16.mxu0 0
      %1460 = vmatpush1.bf16.msra.mxu0 0
      %1461 = vmatprep.subr.bf16.mxu0 0
      %1462 = vmatpush1.bf16.msra.mxu0 0
      %1463 = vmatprep.subr.bf16.mxu0 0
      %1464 = vmatpush1.bf16.msra.mxu0 0
      %1465 = vmatprep.subr.bf16.mxu0 0
      %1466 = vmatpush1.bf16.msra.mxu0 0
      %1467 = vmatprep.subr.bf16.mxu0 0
      %1468 = vmatpush1.bf16.msra.mxu0 0
      %1469 = vmatprep.subr.bf16.mxu0 0
      %1470 = vmatpush1.bf16.msra.mxu0 0
      %1471 = vmatprep.subr.bf16.mxu0 0
      %1472 = vmatpush1.bf16.msra.mxu0 0
      %1473 = vmatprep.subr.bf16.mxu0 0
      %1474 = vmatpush1.bf16.msra.mxu0 0
      %1475 = vmatprep.subr.bf16.mxu0 0
      %1476 = vmatpush1.bf16.msra.mxu0 0
      %1477 = vmatprep.subr.bf16.mxu0 0
      %1478 = vmatpush1.bf16.msra.mxu0 0
      %1479 = vmatprep.mubr.bf16.mxu0 0
      %1480 = vmatmul.mubr.bf16.gmra.mrb[0].mxu0 %v427
      %v1481 = vpop.f32.mrb[0].mxu0
      %v1482 = vadd.f32 0.0, %v1481
      %v1483 = vpop.f32.mrb[0].mxu0
      %v1484 = vpop.f32.mrb[0].mxu0
      %v1485 = vadd.f32 0.0, %v1484
      %v1486 = vpop.f32.mrb[0].mxu0
      %1487 = vmatprep.mubr.bf16.mxu0 0
      %1488 = vmatmul.mubr.bf16.gmra.mrb[0].mxu0 %v430
      %v1489 = vpop.f32.mrb[0].mxu0
      %v1490 = vadd.f32 0.0, %v1489
      %v1491 = vpop.f32.mrb[0].mxu0
      %v1492 = vpop.f32.mrb[0].mxu0
      %v1493 = vadd.f32 0.0, %v1492
      %v1494 = vpop.f32.mrb[0].mxu0
      %1495 = vmatprep.mubr.bf16.mxu0 0
      %1496 = vmatmul.mubr.bf16.gmra.mrb[0].mxu0 %v433
      %v1497 = vpop.f32.mrb[0].mxu0
      %v1498 = vadd.f32 0.0, %v1497
      %v1499 = vpop.f32.mrb[0].mxu0
      %v1500 = vpop.f32.mrb[0].mxu0
      %v1501 = vadd.f32 0.0, %v1500
      %v1502 = vpop.f32.mrb[0].mxu0
      %1503 = vmatprep.mubr.bf16.mxu0 0
      %1504 = vmatmul.mubr.bf16.gmra.mrb[0].mxu0 %v436
      %v1505 = vpop.f32.mrb[0].mxu0
      %v1506 = vadd.f32 0.0, %v1505
      %v1507 = vpop.f32.mrb[0].mxu0
      %v1508 = vpop.f32.mrb[0].mxu0
      %v1509 = vadd.f32 0.0, %v1508
      %v1510 = vpop.f32.mrb[0].mxu0
      %1511 = vmatprep.mubr.bf16.mxu0 0
      %1512 = vmatmul.mubr.bf16.gmra.mrb[0].mxu0 %v439
      %v1513 = vpop.f32.mrb[0].mxu0
      %v1514 = vadd.f32 0.0, %v1513
      %v1515 = vpop.f32.mrb[0].mxu0
      %v1516 = vpop.f32.mrb[0].mxu0
      %v1517 = vadd.f32 0.0, %v1516
      %v1518 = vpop.f32.mrb[0].mxu0
      %1519 = vmatprep.mubr.bf16.mxu0 0
      %1520 = vmatmul.mubr.bf16.gmra.mrb[0].mxu0 %v442
      %v1521 = vpop.f32.mrb[0].mxu0
      %v1522 = vadd.f32 0.0, %v1521
      %v1523 = vpop.f32.mrb[0].mxu0
      %v1524 = vpop.f32.mrb[0].mxu0
      %v1525 = vadd.f32 0.0, %v1524
      %v1526 = vpop.f32.mrb[0].mxu0
      %1527 = vmatprep.mubr.bf16.mxu0 0
      %1528 = vmatmul.mubr.bf16.gmra.mrb[0].mxu0 %v445
      %v1529 = vpop.f32.mrb[0].mxu0
      %v1530 = vadd.f32 0.0, %v1529
      %v1531 = vpop.f32.mrb[0].mxu0
      %v1532 = vpop.f32.mrb[0].mxu0
      %v1533 = vadd.f32 0.0, %v1532
      %v1534 = vpop.f32.mrb[0].mxu0
      %1535 = vmatprep.mubr.bf16.mxu0 0
      %1536 = vmatmul.mubr.bf16.gmra.mrb[0].mxu0 %v448
      %v1537 = vpop.f32.mrb[0].mxu0
      %v1538 = vadd.f32 0.0, %v1537
      %v1539 = vpop.f32.mrb[0].mxu0
      %v1540 = vpop.f32.mrb[0].mxu0
      %v1541 = vadd.f32 0.0, %v1540
      %v1542 = vpop.f32.mrb[0].mxu0
      %1543 = vmatprep.mubr.bf16.mxu0 0
      %1544 = vmatmul.mubr.bf16.gmra.mrb[0].mxu0 %v451
      %v1545 = vpop.f32.mrb[0].mxu0
      %v1546 = vadd.f32 0.0, %v1545
      %v1547 = vpop.f32.mrb[0].mxu0
      %v1548 = vpop.f32.mrb[0].mxu0
      %v1549 = vadd.f32 0.0, %v1548
      %v1550 = vpop.f32.mrb[0].mxu0
      %1551 = vmatprep.mubr.bf16.mxu0 0
      %1552 = vmatmul.mubr.bf16.gmra.mrb[0].mxu0 %v454
      %v1553 = vpop.f32.mrb[0].mxu0
      %v1554 = vadd.f32 0.0, %v1553
      %v1555 = vpop.f32.mrb[0].mxu0
      %v1556 = vpop.f32.mrb[0].mxu0
      %v1557 = vadd.f32 0.0, %v1556
      %v1558 = vpop.f32.mrb[0].mxu0
      %1559 = vmatprep.mubr.bf16.mxu0 0
      %1560 = vmatmul.mubr.bf16.gmra.mrb[0].mxu0 %v457
      %v1561 = vpop.f32.mrb[0].mxu0
      %v1562 = vadd.f32 0.0, %v1561
      %v1563 = vpop.f32.mrb[0].mxu0
      %v1564 = vpop.f32.mrb[0].mxu0
      %v1565 = vadd.f32 0.0, %v1564
      %v1566 = vpop.f32.mrb[0].mxu0
      %1567 = vmatprep.mubr.bf16.mxu0 0
      %1568 = vmatmul.mubr.bf16.gmra.mrb[0].mxu0 %v460
      %v1569 = vpop.f32.mrb[0].mxu0
      %v1570 = vadd.f32 0.0, %v1569
      %v1571 = vpop.f32.mrb[0].mxu0
      %v1572 = vpop.f32.mrb[0].mxu0
      %v1573 = vadd.f32 0.0, %v1572
      %v1574 = vpop.f32.mrb[0].mxu0
      %1575 = vmatprep.mubr.bf16.mxu0 0
      %1576 = vmatmul.mubr.bf16.gmra.mrb[0].mxu0 %v463
      %v1577 = vpop.f32.mrb[0].mxu0
      %v1578 = vadd.f32 0.0, %v1577
      %v1579 = vpop.f32.mrb[0].mxu0
      %v1580 = vpop.f32.mrb[0].mxu0
      %v1581 = vadd.f32 0.0, %v1580
      %v1582 = vpop.f32.mrb[0].mxu0
      %1583 = vmatprep.mubr.bf16.mxu0 0
      %1584 = vmatmul.mubr.bf16.gmra.mrb[0].mxu0 %v466
      %v1585 = vpop.f32.mrb[0].mxu0
      %v1586 = vadd.f32 0.0, %v1585
      %v1587 = vpop.f32.mrb[0].mxu0
      %v1588 = vpop.f32.mrb[0].mxu0
      %v1589 = vadd.f32 0.0, %v1588
      %v1590 = vpop.f32.mrb[0].mxu0
      %1591 = vmatprep.mubr.bf16.mxu0 0
      %1592 = vmatmul.mubr.bf16.gmra.mrb[0].mxu0 %v469
      %v1593 = vpop.f32.mrb[0].mxu0
      %v1594 = vadd.f32 0.0, %v1593
      %v1595 = vpop.f32.mrb[0].mxu0
      %v1596 = vpop.f32.mrb[0].mxu0
      %v1597 = vadd.f32 0.0, %v1596
      %v1598 = vpop.f32.mrb[0].mxu0
      %1599 = vmatprep.mubr.bf16.mxu0 0
      %1600 = vmatmul.mubr.bf16.gmra.mrb[0].mxu0 %v1442
      %v1601 = vpop.f32.mrb[0].mxu0
      %v1602 = vadd.f32 0.0, %v1601
      %v1603 = vpop.f32.mrb[0].mxu0
      %v1604 = vpop.f32.mrb[0].mxu0
      %v1605 = vadd.f32 0.0, %v1604
      %v1606 = vpop.f32.mrb[0].mxu0
      %1607 = vdwg.mxu0
      %v1608 = vadd.f32 %v1396, %v1482
      %v1609 = vadd.f32 %v1397, %v1485
      %v1610 = vadd.f32 %v1398, %v1490
      %v1611 = vadd.f32 %v1399, %v1493
      %v1612 = vadd.f32 %v1400, %v1498
      %v1613 = vadd.f32 %v1401, %v1501
      %v1614 = vadd.f32 %v1402, %v1506
      %v1615 = vadd.f32 %v1403, %v1509
      %v1616 = vadd.f32 %v1404, %v1514
      %v1617 = vadd.f32 %v1405, %v1517
      %v1618 = vadd.f32 %v1406, %v1522
      %v1619 = vadd.f32 %v1407, %v1525
      %v1620 = vadd.f32 %v1408, %v1530
      %v1621 = vadd.f32 %v1409, %v1533
      %v1622 = vadd.f32 %v1410, %v1538
      %v1623 = vadd.f32 %v1411, %v1541
      %v1624 = vadd.f32 %v1412, %v1546
      %v1625 = vadd.f32 %v1413, %v1549
      %v1626 = vadd.f32 %v1414, %v1554
      %v1627 = vadd.f32 %v1415, %v1557
      %v1628 = vadd.f32 %v1416, %v1562
      %v1629 = vadd.f32 %v1417, %v1565
      %v1630 = vadd.f32 %v1418, %v1570
      %v1631 = vadd.f32 %v1419, %v1573
      %v1632 = vadd.f32 %v1420, %v1578
      %v1633 = vadd.f32 %v1421, %v1581
      %v1634 = vadd.f32 %v1422, %v1586
      %v1635 = vadd.f32 %v1423, %v1589
      %v1636 = vadd.f32 %v1424, %v1594
      %v1637 = vadd.f32 %v1425, %v1597
      %v1638 = vadd.f32 %v1426, %v1602
      %v1639 = vadd.f32 %v1427, %v1605
      %v1640 = vrot.slane %v220, 2
      %v1641 = vrot.slane %v221, 2
      %v1642 = vsel %vm851, %v1640, %v1641
      %v1643 = vrot.slane %v222, 2
      %v1644 = vsel %vm851, %v1641, %v1643
      %v1647 = vpack.c.bf16 %v1644, %v1642
      %s1648 = scalar_lea.vmem %s1, 10
      %v1649 = vld [vmem:[%s1648] sm:$0x3]
      %v1651 = vsel %vm422, %v1647, 0
      %v1654 = vand.u32 %v1649, %v474
      %1656 = vmatprep.subr.bf16.mxu0 0
      %1657 = vmatpush1.bf16.msra.mxu0 %v1654
      %1658 = vmatprep.subr.bf16.mxu0 0
      %1659 = vmatpush1.bf16.msra.mxu0 0
      %1660 = vmatprep.subr.bf16.mxu0 0
      %1661 = vmatpush1.bf16.msra.mxu0 0
      %1662 = vmatprep.subr.bf16.mxu0 0
      %1663 = vmatpush1.bf16.msra.mxu0 0
      %1664 = vmatprep.subr.bf16.mxu0 0
      %1665 = vmatpush1.bf16.msra.mxu0 0
      %1666 = vmatprep.subr.bf16.mxu0 0
      %1667 = vmatpush1.bf16.msra.mxu0 0
      %1668 = vmatprep.subr.bf16.mxu0 0
      %1669 = vmatpush1.bf16.msra.mxu0 0
      %1670 = vmatprep.subr.bf16.mxu0 0
      %1671 = vmatpush1.bf16.msra.mxu0 0
      %1672 = vmatprep.subr.bf16.mxu0 0
      %1673 = vmatpush1.bf16.msra.mxu0 0
      %1674 = vmatprep.subr.bf16.mxu0 0
      %1675 = vmatpush1.bf16.msra.mxu0 0
      %1676 = vmatprep.subr.bf16.mxu0 0
      %1677 = vmatpush1.bf16.msra.mxu0 0
      %1678 = vmatprep.subr.bf16.mxu0 0
      %1679 = vmatpush1.bf16.msra.mxu0 0
      %1680 = vmatprep.subr.bf16.mxu0 0
      %1681 = vmatpush1.bf16.msra.mxu0 0
      %1682 = vmatprep.subr.bf16.mxu0 0
      %1683 = vmatpush1.bf16.msra.mxu0 0
      %1684 = vmatprep.subr.bf16.mxu0 0
      %1685 = vmatpush1.bf16.msra.mxu0 0
      %1686 = vmatprep.subr.bf16.mxu0 0
      %1687 = vmatpush1.bf16.msra.mxu0 0
      %1688 = vmatprep.mubr.bf16.mxu0 0
      %1689 = vmatmul.mubr.bf16.gmra.mrb[0].mxu0 %v986
      %v1690 = vpop.f32.mrb[0].mxu0
      %v1691 = vadd.f32 0.0, %v1690
      %v1692 = vpop.f32.mrb[0].mxu0
      %v1693 = vpop.f32.mrb[0].mxu0
      %v1694 = vadd.f32 0.0, %v1693
      %v1695 = vpop.f32.mrb[0].mxu0
      %1696 = vmatprep.mubr.bf16.mxu0 0
      %1697 = vmatmul.mubr.bf16.gmra.mrb[0].mxu0 %v989
      %v1698 = vpop.f32.mrb[0].mxu0
      %v1699 = vadd.f32 0.0, %v1698
      %v1700 = vpop.f32.mrb[0].mxu0
      %v1701 = vpop.f32.mrb[0].mxu0
      %v1702 = vadd.f32 0.0, %v1701
      %v1703 = vpop.f32.mrb[0].mxu0
      %1704 = vmatprep.mubr.bf16.mxu0 0
      %1705 = vmatmul.mubr.bf16.gmra.mrb[0].mxu0 %v992
      %v1706 = vpop.f32.mrb[0].mxu0
      %v1707 = vadd.f32 0.0, %v1706
      %v1708 = vpop.f32.mrb[0].mxu0
      %v1709 = vpop.f32.mrb[0].mxu0
      %v1710 = vadd.f32 0.0, %v1709
      %v1711 = vpop.f32.mrb[0].mxu0
      %1712 = vmatprep.mubr.bf16.mxu0 0
      %1713 = vmatmul.mubr.bf16.gmra.mrb[0].mxu0 %v995
      %v1714 = vpop.f32.mrb[0].mxu0
      %v1715 = vadd.f32 0.0, %v1714
      %v1716 = vpop.f32.mrb[0].mxu0
      %v1717 = vpop.f32.mrb[0].mxu0
      %v1718 = vadd.f32 0.0, %v1717
      %v1719 = vpop.f32.mrb[0].mxu0
      %1720 = vmatprep.mubr.bf16.mxu0 0
      %1721 = vmatmul.mubr.bf16.gmra.mrb[0].mxu0 %v998
      %v1722 = vpop.f32.mrb[0].mxu0
      %v1723 = vadd.f32 0.0, %v1722
      %v1724 = vpop.f32.mrb[0].mxu0
      %v1725 = vpop.f32.mrb[0].mxu0
      %v1726 = vadd.f32 0.0, %v1725
      %v1727 = vpop.f32.mrb[0].mxu0
      %1728 = vmatprep.mubr.bf16.mxu0 0
      %1729 = vmatmul.mubr.bf16.gmra.mrb[0].mxu0 %v1001
      %v1730 = vpop.f32.mrb[0].mxu0
      %v1731 = vadd.f32 0.0, %v1730
      %v1732 = vpop.f32.mrb[0].mxu0
      %v1733 = vpop.f32.mrb[0].mxu0
      %v1734 = vadd.f32 0.0, %v1733
      %v1735 = vpop.f32.mrb[0].mxu0
      %1736 = vmatprep.mubr.bf16.mxu0 0
      %1737 = vmatmul.mubr.bf16.gmra.mrb[0].mxu0 %v1004
      %v1738 = vpop.f32.mrb[0].mxu0
      %v1739 = vadd.f32 0.0, %v1738
      %v1740 = vpop.f32.mrb[0].mxu0
      %v1741 = vpop.f32.mrb[0].mxu0
      %v1742 = vadd.f32 0.0, %v1741
      %v1743 = vpop.f32.mrb[0].mxu0
      %1744 = vmatprep.mubr.bf16.mxu0 0
      %1745 = vmatmul.mubr.bf16.gmra.mrb[0].mxu0 %v1007
      %v1746 = vpop.f32.mrb[0].mxu0
      %v1747 = vadd.f32 0.0, %v1746
      %v1748 = vpop.f32.mrb[0].mxu0
      %v1749 = vpop.f32.mrb[0].mxu0
      %v1750 = vadd.f32 0.0, %v1749
      %v1751 = vpop.f32.mrb[0].mxu0
      %1752 = vmatprep.mubr.bf16.mxu0 0
      %1753 = vmatmul.mubr.bf16.gmra.mrb[0].mxu0 %v1010
      %v1754 = vpop.f32.mrb[0].mxu0
      %v1755 = vadd.f32 0.0, %v1754
      %v1756 = vpop.f32.mrb[0].mxu0
      %v1757 = vpop.f32.mrb[0].mxu0
      %v1758 = vadd.f32 0.0, %v1757
      %v1759 = vpop.f32.mrb[0].mxu0
      %1760 = vmatprep.mubr.bf16.mxu0 0
      %1761 = vmatmul.mubr.bf16.gmra.mrb[0].mxu0 %v1013
      %v1762 = vpop.f32.mrb[0].mxu0
      %v1763 = vadd.f32 0.0, %v1762
      %v1764 = vpop.f32.mrb[0].mxu0
      %v1765 = vpop.f32.mrb[0].mxu0
      %v1766 = vadd.f32 0.0, %v1765
      %v1767 = vpop.f32.mrb[0].mxu0
      %1768 = vmatprep.mubr.bf16.mxu0 0
      %1769 = vmatmul.mubr.bf16.gmra.mrb[0].mxu0 %v1016
      %v1770 = vpop.f32.mrb[0].mxu0
      %v1771 = vadd.f32 0.0, %v1770
      %v1772 = vpop.f32.mrb[0].mxu0
      %v1773 = vpop.f32.mrb[0].mxu0
      %v1774 = vadd.f32 0.0, %v1773
      %v1775 = vpop.f32.mrb[0].mxu0
      %1776 = vmatprep.mubr.bf16.mxu0 0
      %1777 = vmatmul.mubr.bf16.gmra.mrb[0].mxu0 %v1019
      %v1778 = vpop.f32.mrb[0].mxu0
      %v1779 = vadd.f32 0.0, %v1778
      %v1780 = vpop.f32.mrb[0].mxu0
      %v1781 = vpop.f32.mrb[0].mxu0
      %v1782 = vadd.f32 0.0, %v1781
      %v1783 = vpop.f32.mrb[0].mxu0
      %1784 = vmatprep.mubr.bf16.mxu0 0
      %1785 = vmatmul.mubr.bf16.gmra.mrb[0].mxu0 %v1022
      %v1786 = vpop.f32.mrb[0].mxu0
      %v1787 = vadd.f32 0.0, %v1786
      %v1788 = vpop.f32.mrb[0].mxu0
      %v1789 = vpop.f32.mrb[0].mxu0
      %v1790 = vadd.f32 0.0, %v1789
      %v1791 = vpop.f32.mrb[0].mxu0
      %1792 = vmatprep.mubr.bf16.mxu0 0
      %1793 = vmatmul.mubr.bf16.gmra.mrb[0].mxu0 %v1025
      %v1794 = vpop.f32.mrb[0].mxu0
      %v1795 = vadd.f32 0.0, %v1794
      %v1796 = vpop.f32.mrb[0].mxu0
      %v1797 = vpop.f32.mrb[0].mxu0
      %v1798 = vadd.f32 0.0, %v1797
      %v1799 = vpop.f32.mrb[0].mxu0
      %1800 = vmatprep.mubr.bf16.mxu0 0
      %1801 = vmatmul.mubr.bf16.gmra.mrb[0].mxu0 %v1028
      %v1802 = vpop.f32.mrb[0].mxu0
      %v1803 = vadd.f32 0.0, %v1802
      %v1804 = vpop.f32.mrb[0].mxu0
      %v1805 = vpop.f32.mrb[0].mxu0
      %v1806 = vadd.f32 0.0, %v1805
      %v1807 = vpop.f32.mrb[0].mxu0
      %1808 = vmatprep.mubr.bf16.mxu0 0
      %1809 = vmatmul.mubr.bf16.gmra.mrb[0].mxu0 %v1651
      %v1810 = vpop.f32.mrb[0].mxu0
      %v1811 = vadd.f32 0.0, %v1810
      %v1812 = vpop.f32.mrb[0].mxu0
      %v1813 = vpop.f32.mrb[0].mxu0
      %v1814 = vadd.f32 0.0, %v1813
      %v1815 = vpop.f32.mrb[0].mxu0
      %1816 = vdwg.mxu0
      %v1817 = vadd.f32 %v1608, %v1691
      %v1818 = vadd.f32 %v1609, %v1694
      %v1819 = vadd.f32 %v1610, %v1699
      %v1820 = vadd.f32 %v1611, %v1702
      %v1821 = vadd.f32 %v1612, %v1707
      %v1822 = vadd.f32 %v1613, %v1710
      %v1823 = vadd.f32 %v1614, %v1715
      %v1824 = vadd.f32 %v1615, %v1718
      %v1825 = vadd.f32 %v1616, %v1723
      %v1826 = vadd.f32 %v1617, %v1726
      %v1827 = vadd.f32 %v1618, %v1731
      %v1828 = vadd.f32 %v1619, %v1734
      %v1829 = vadd.f32 %v1620, %v1739
      %v1830 = vadd.f32 %v1621, %v1742
      %v1831 = vadd.f32 %v1622, %v1747
      %v1832 = vadd.f32 %v1623, %v1750
      %v1833 = vadd.f32 %v1624, %v1755
      %v1834 = vadd.f32 %v1625, %v1758
      %v1835 = vadd.f32 %v1626, %v1763
      %v1836 = vadd.f32 %v1627, %v1766
      %v1837 = vadd.f32 %v1628, %v1771
      %v1838 = vadd.f32 %v1629, %v1774
      %v1839 = vadd.f32 %v1630, %v1779
      %v1840 = vadd.f32 %v1631, %v1782
      %v1841 = vadd.f32 %v1632, %v1787
      %v1842 = vadd.f32 %v1633, %v1790
      %v1843 = vadd.f32 %v1634, %v1795
      %v1844 = vadd.f32 %v1635, %v1798
      %v1845 = vadd.f32 %v1636, %v1803
      %v1846 = vadd.f32 %v1637, %v1806
      %v1847 = vadd.f32 %v1638, %v1811
      %v1848 = vadd.f32 %v1639, %v1814
      %v1849 = vpack.c.bf16 %v224, %v223
      %s1850 = scalar_lea.vmem %s1, 12
      %v1851 = vld [vmem:[%s1850] sm:$0x3]
      %v1853 = vsel %vm422, %v1849, 0
      %v1856 = vand.u32 %v1851, %v474
      %1858 = vmatprep.subr.bf16.mxu0 0
      %1859 = vmatpush1.bf16.msra.mxu0 %v1856
      %1860 = vmatprep.subr.bf16.mxu0 0
      %1861 = vmatpush1.bf16.msra.mxu0 0
      %1862 = vmatprep.subr.bf16.mxu0 0
      %1863 = vmatpush1.bf16.msra.mxu0 0
      %1864 = vmatprep.subr.bf16.mxu0 0
      %1865 = vmatpush1.bf16.msra.mxu0 0
      %1866 = vmatprep.subr.bf16.mxu0 0
      %1867 = vmatpush1.bf16.msra.mxu0 0
      %1868 = vmatprep.subr.bf16.mxu0 0
      %1869 = vmatpush1.bf16.msra.mxu0 0
      %1870 = vmatprep.subr.bf16.mxu0 0
      %1871 = vmatpush1.bf16.msra.mxu0 0
      %1872 = vmatprep.subr.bf16.mxu0 0
      %1873 = vmatpush1.bf16.msra.mxu0 0
      %1874 = vmatprep.subr.bf16.mxu0 0
      %1875 = vmatpush1.bf16.msra.mxu0 0
      %1876 = vmatprep.subr.bf16.mxu0 0
      %1877 = vmatpush1.bf16.msra.mxu0 0
      %1878 = vmatprep.subr.bf16.mxu0 0
      %1879 = vmatpush1.bf16.msra.mxu0 0
      %1880 = vmatprep.subr.bf16.mxu0 0
      %1881 = vmatpush1.bf16.msra.mxu0 0
      %1882 = vmatprep.subr.bf16.mxu0 0
      %1883 = vmatpush1.bf16.msra.mxu0 0
      %1884 = vmatprep.subr.bf16.mxu0 0
      %1885 = vmatpush1.bf16.msra.mxu0 0
      %1886 = vmatprep.subr.bf16.mxu0 0
      %1887 = vmatpush1.bf16.msra.mxu0 0
      %1888 = vmatprep.subr.bf16.mxu0 0
      %1889 = vmatpush1.bf16.msra.mxu0 0
      %1890 = vmatprep.mubr.bf16.mxu0 0
      %1891 = vmatmul.mubr.bf16.gmra.mrb[0].mxu0 %v646
      %v1892 = vpop.f32.mrb[0].mxu0
      %v1893 = vadd.f32 0.0, %v1892
      %v1894 = vpop.f32.mrb[0].mxu0
      %v1895 = vpop.f32.mrb[0].mxu0
      %v1896 = vadd.f32 0.0, %v1895
      %v1897 = vpop.f32.mrb[0].mxu0
      %1898 = vmatprep.mubr.bf16.mxu0 0
      %1899 = vmatmul.mubr.bf16.gmra.mrb[0].mxu0 %v649
      %v1900 = vpop.f32.mrb[0].mxu0
      %v1901 = vadd.f32 0.0, %v1900
      %v1902 = vpop.f32.mrb[0].mxu0
      %v1903 = vpop.f32.mrb[0].mxu0
      %v1904 = vadd.f32 0.0, %v1903
      %v1905 = vpop.f32.mrb[0].mxu0
      %1906 = vmatprep.mubr.bf16.mxu0 0
      %1907 = vmatmul.mubr.bf16.gmra.mrb[0].mxu0 %v652
      %v1908 = vpop.f32.mrb[0].mxu0
      %v1909 = vadd.f32 0.0, %v1908
      %v1910 = vpop.f32.mrb[0].mxu0
      %v1911 = vpop.f32.mrb[0].mxu0
      %v1912 = vadd.f32 0.0, %v1911
      %v1913 = vpop.f32.mrb[0].mxu0
      %1914 = vmatprep.mubr.bf16.mxu0 0
      %1915 = vmatmul.mubr.bf16.gmra.mrb[0].mxu0 %v655
      %v1916 = vpop.f32.mrb[0].mxu0
      %v1917 = vadd.f32 0.0, %v1916
      %v1918 = vpop.f32.mrb[0].mxu0
      %v1919 = vpop.f32.mrb[0].mxu0
      %v1920 = vadd.f32 0.0, %v1919
      %v1921 = vpop.f32.mrb[0].mxu0
      %1922 = vmatprep.mubr.bf16.mxu0 0
      %1923 = vmatmul.mubr.bf16.gmra.mrb[0].mxu0 %v658
      %v1924 = vpop.f32.mrb[0].mxu0
      %v1925 = vadd.f32 0.0, %v1924
      %v1926 = vpop.f32.mrb[0].mxu0
      %v1927 = vpop.f32.mrb[0].mxu0
      %v1928 = vadd.f32 0.0, %v1927
      %v1929 = vpop.f32.mrb[0].mxu0
      %1930 = vmatprep.mubr.bf16.mxu0 0
      %1931 = vmatmul.mubr.bf16.gmra.mrb[0].mxu0 %v661
      %v1932 = vpop.f32.mrb[0].mxu0
      %v1933 = vadd.f32 0.0, %v1932
      %v1934 = vpop.f32.mrb[0].mxu0
      %v1935 = vpop.f32.mrb[0].mxu0
      %v1936 = vadd.f32 0.0, %v1935
      %v1937 = vpop.f32.mrb[0].mxu0
      %1938 = vmatprep.mubr.bf16.mxu0 0
      %1939 = vmatmul.mubr.bf16.gmra.mrb[0].mxu0 %v664
      %v1940 = vpop.f32.mrb[0].mxu0
      %v1941 = vadd.f32 0.0, %v1940
      %v1942 = vpop.f32.mrb[0].mxu0
      %v1943 = vpop.f32.mrb[0].mxu0
      %v1944 = vadd.f32 0.0, %v1943
      %v1945 = vpop.f32.mrb[0].mxu0
      %1946 = vmatprep.mubr.bf16.mxu0 0
      %1947 = vmatmul.mubr.bf16.gmra.mrb[0].mxu0 %v667
      %v1948 = vpop.f32.mrb[0].mxu0
      %v1949 = vadd.f32 0.0, %v1948
      %v1950 = vpop.f32.mrb[0].mxu0
      %v1951 = vpop.f32.mrb[0].mxu0
      %v1952 = vadd.f32 0.0, %v1951
      %v1953 = vpop.f32.mrb[0].mxu0
      %1954 = vmatprep.mubr.bf16.mxu0 0
      %1955 = vmatmul.mubr.bf16.gmra.mrb[0].mxu0 %v670
      %v1956 = vpop.f32.mrb[0].mxu0
      %v1957 = vadd.f32 0.0, %v1956
      %v1958 = vpop.f32.mrb[0].mxu0
      %v1959 = vpop.f32.mrb[0].mxu0
      %v1960 = vadd.f32 0.0, %v1959
      %v1961 = vpop.f32.mrb[0].mxu0
      %1962 = vmatprep.mubr.bf16.mxu0 0
      %1963 = vmatmul.mubr.bf16.gmra.mrb[0].mxu0 %v673
      %v1964 = vpop.f32.mrb[0].mxu0
      %v1965 = vadd.f32 0.0, %v1964
      %v1966 = vpop.f32.mrb[0].mxu0
      %v1967 = vpop.f32.mrb[0].mxu0
      %v1968 = vadd.f32 0.0, %v1967
      %v1969 = vpop.f32.mrb[0].mxu0
      %1970 = vmatprep.mubr.bf16.mxu0 0
      %1971 = vmatmul.mubr.bf16.gmra.mrb[0].mxu0 %v676
      %v1972 = vpop.f32.mrb[0].mxu0
      %v1973 = vadd.f32 0.0, %v1972
      %v1974 = vpop.f32.mrb[0].mxu0
      %v1975 = vpop.f32.mrb[0].mxu0
      %v1976 = vadd.f32 0.0, %v1975
      %v1977 = vpop.f32.mrb[0].mxu0
      %1978 = vmatprep.mubr.bf16.mxu0 0
      %1979 = vmatmul.mubr.bf16.gmra.mrb[0].mxu0 %v679
      %v1980 = vpop.f32.mrb[0].mxu0
      %v1981 = vadd.f32 0.0, %v1980
      %v1982 = vpop.f32.mrb[0].mxu0
      %v1983 = vpop.f32.mrb[0].mxu0
      %v1984 = vadd.f32 0.0, %v1983
      %v1985 = vpop.f32.mrb[0].mxu0
      %1986 = vmatprep.mubr.bf16.mxu0 0
      %1987 = vmatmul.mubr.bf16.gmra.mrb[0].mxu0 %v682
      %v1988 = vpop.f32.mrb[0].mxu0
      %v1989 = vadd.f32 0.0, %v1988
      %v1990 = vpop.f32.mrb[0].mxu0
      %v1991 = vpop.f32.mrb[0].mxu0
      %v1992 = vadd.f32 0.0, %v1991
      %v1993 = vpop.f32.mrb[0].mxu0
      %1994 = vmatprep.mubr.bf16.mxu0 0
      %1995 = vmatmul.mubr.bf16.gmra.mrb[0].mxu0 %v685
      %v1996 = vpop.f32.mrb[0].mxu0
      %v1997 = vadd.f32 0.0, %v1996
      %v1998 = vpop.f32.mrb[0].mxu0
      %v1999 = vpop.f32.mrb[0].mxu0
      %v2000 = vadd.f32 0.0, %v1999
      %v2001 = vpop.f32.mrb[0].mxu0
      %2002 = vmatprep.mubr.bf16.mxu0 0
      %2003 = vmatmul.mubr.bf16.gmra.mrb[0].mxu0 %v1230
      %v2004 = vpop.f32.mrb[0].mxu0
      %v2005 = vadd.f32 0.0, %v2004
      %v2006 = vpop.f32.mrb[0].mxu0
      %v2007 = vpop.f32.mrb[0].mxu0
      %v2008 = vadd.f32 0.0, %v2007
      %v2009 = vpop.f32.mrb[0].mxu0
      %2010 = vmatprep.mubr.bf16.mxu0 0
      %2011 = vmatmul.mubr.bf16.gmra.mrb[0].mxu0 %v1853
      %v2012 = vpop.f32.mrb[0].mxu0
      %v2013 = vadd.f32 0.0, %v2012
      %v2014 = vpop.f32.mrb[0].mxu0
      %v2015 = vpop.f32.mrb[0].mxu0
      %v2016 = vadd.f32 0.0, %v2015
      %v2017 = vpop.f32.mrb[0].mxu0
      %2018 = vdwg.mxu0
      %v2019 = vadd.f32 %v1817, %v1893
      %v2020 = vadd.f32 %v1818, %v1896
      %v2021 = vadd.f32 %v1819, %v1901
      %v2022 = vadd.f32 %v1820, %v1904
      %v2023 = vadd.f32 %v1821, %v1909
      %v2024 = vadd.f32 %v1822, %v1912
      %v2025 = vadd.f32 %v1823, %v1917
      %v2026 = vadd.f32 %v1824, %v1920
      %v2027 = vadd.f32 %v1825, %v1925
      %v2028 = vadd.f32 %v1826, %v1928
      %v2029 = vadd.f32 %v1827, %v1933
      %v2030 = vadd.f32 %v1828, %v1936
      %v2031 = vadd.f32 %v1829, %v1941
      %v2032 = vadd.f32 %v1830, %v1944
      %v2033 = vadd.f32 %v1831, %v1949
      %v2034 = vadd.f32 %v1832, %v1952
      %v2035 = vadd.f32 %v1833, %v1957
      %v2036 = vadd.f32 %v1834, %v1960
      %v2037 = vadd.f32 %v1835, %v1965
      %v2038 = vadd.f32 %v1836, %v1968
      %v2039 = vadd.f32 %v1837, %v1973
      %v2040 = vadd.f32 %v1838, %v1976
      %v2041 = vadd.f32 %v1839, %v1981
      %v2042 = vadd.f32 %v1840, %v1984
      %v2043 = vadd.f32 %v1841, %v1989
      %v2044 = vadd.f32 %v1842, %v1992
      %v2045 = vadd.f32 %v1843, %v1997
      %v2046 = vadd.f32 %v1844, %v2000
      %v2047 = vadd.f32 %v1845, %v2005
      %v2048 = vadd.f32 %v1846, %v2008
      %v2049 = vadd.f32 %v1847, %v2013
      %v2050 = vadd.f32 %v1848, %v2016
      %v2054 = vrot.slane %v223, 1
      %v2055 = vrot.slane %v224, 1
      %v2056 = vsel %vm291, %v2054, %v2055
      %v2057 = vrot.slane %v225, 1
      %v2058 = vsel %vm291, %v2055, %v2057
      %v2061 = vpack.c.bf16 %v2058, %v2056
      %s2062 = scalar_lea.vmem %s1, 14
      %v2063 = vld [vmem:[%s2062] sm:$0x3]
      %v2065 = vsel %vm422, %v2061, 0
      %v2068 = vand.u32 %v2063, %v474
      %2070 = vmatprep.subr.bf16.mxu0 0
      %2071 = vmatpush1.bf16.msra.mxu0 %v2068
      %2072 = vmatprep.subr.bf16.mxu0 0
      %2073 = vmatpush1.bf16.msra.mxu0 0
      %2074 = vmatprep.subr.bf16.mxu0 0
      %2075 = vmatpush1.bf16.msra.mxu0 0
      %2076 = vmatprep.subr.bf16.mxu0 0
      %2077 = vmatpush1.bf16.msra.mxu0 0
      %2078 = vmatprep.subr.bf16.mxu0 0
      %2079 = vmatpush1.bf16.msra.mxu0 0
      %2080 = vmatprep.subr.bf16.mxu0 0
      %2081 = vmatpush1.bf16.msra.mxu0 0
      %2082 = vmatprep.subr.bf16.mxu0 0
      %2083 = vmatpush1.bf16.msra.mxu0 0
      %2084 = vmatprep.subr.bf16.mxu0 0
      %2085 = vmatpush1.bf16.msra.mxu0 0
      %2086 = vmatprep.subr.bf16.mxu0 0
      %2087 = vmatpush1.bf16.msra.mxu0 0
      %2088 = vmatprep.subr.bf16.mxu0 0
      %2089 = vmatpush1.bf16.msra.mxu0 0
      %2090 = vmatprep.subr.bf16.mxu0 0
      %2091 = vmatpush1.bf16.msra.mxu0 0
      %2092 = vmatprep.subr.bf16.mxu0 0
      %2093 = vmatpush1.bf16.msra.mxu0 0
      %2094 = vmatprep.subr.bf16.mxu0 0
      %2095 = vmatpush1.bf16.msra.mxu0 0
      %2096 = vmatprep.subr.bf16.mxu0 0
      %2097 = vmatpush1.bf16.msra.mxu0 0
      %2098 = vmatprep.subr.bf16.mxu0 0
      %2099 = vmatpush1.bf16.msra.mxu0 0
      %2100 = vmatprep.subr.bf16.mxu0 0
      %2101 = vmatpush1.bf16.msra.mxu0 0
      %2102 = vmatprep.mubr.bf16.mxu0 0
      %2103 = vmatmul.mubr.bf16.gmra.mrb[0].mxu0 %v430
      %v2104 = vpop.f32.mrb[0].mxu0
      %v2105 = vadd.f32 0.0, %v2104
      %v2106 = vpop.f32.mrb[0].mxu0
      %v2107 = vpop.f32.mrb[0].mxu0
      %v2108 = vadd.f32 0.0, %v2107
      %v2109 = vpop.f32.mrb[0].mxu0
      %2110 = vmatprep.mubr.bf16.mxu0 0
      %2111 = vmatmul.mubr.bf16.gmra.mrb[0].mxu0 %v433
      %v2112 = vpop.f32.mrb[0].mxu0
      %v2113 = vadd.f32 0.0, %v2112
      %v2114 = vpop.f32.mrb[0].mxu0
      %v2115 = vpop.f32.mrb[0].mxu0
      %v2116 = vadd.f32 0.0, %v2115
      %v2117 = vpop.f32.mrb[0].mxu0
      %2118 = vmatprep.mubr.bf16.mxu0 0
      %2119 = vmatmul.mubr.bf16.gmra.mrb[0].mxu0 %v436
      %v2120 = vpop.f32.mrb[0].mxu0
      %v2121 = vadd.f32 0.0, %v2120
      %v2122 = vpop.f32.mrb[0].mxu0
      %v2123 = vpop.f32.mrb[0].mxu0
      %v2124 = vadd.f32 0.0, %v2123
      %v2125 = vpop.f32.mrb[0].mxu0
      %2126 = vmatprep.mubr.bf16.mxu0 0
      %2127 = vmatmul.mubr.bf16.gmra.mrb[0].mxu0 %v439
      %v2128 = vpop.f32.mrb[0].mxu0
      %v2129 = vadd.f32 0.0, %v2128
      %v2130 = vpop.f32.mrb[0].mxu0
      %v2131 = vpop.f32.mrb[0].mxu0
      %v2132 = vadd.f32 0.0, %v2131
      %v2133 = vpop.f32.mrb[0].mxu0
      %2134 = vmatprep.mubr.bf16.mxu0 0
      %2135 = vmatmul.mubr.bf16.gmra.mrb[0].mxu0 %v442
      %v2136 = vpop.f32.mrb[0].mxu0
      %v2137 = vadd.f32 0.0, %v2136
      %v2138 = vpop.f32.mrb[0].mxu0
      %v2139 = vpop.f32.mrb[0].mxu0
      %v2140 = vadd.f32 0.0, %v2139
      %v2141 = vpop.f32.mrb[0].mxu0
      %2142 = vmatprep.mubr.bf16.mxu0 0
      %2143 = vmatmul.mubr.bf16.gmra.mrb[0].mxu0 %v445
      %v2144 = vpop.f32.mrb[0].mxu0
      %v2145 = vadd.f32 0.0, %v2144
      %v2146 = vpop.f32.mrb[0].mxu0
      %v2147 = vpop.f32.mrb[0].mxu0
      %v2148 = vadd.f32 0.0, %v2147
      %v2149 = vpop.f32.mrb[0].mxu0
      %2150 = vmatprep.mubr.bf16.mxu0 0
      %2151 = vmatmul.mubr.bf16.gmra.mrb[0].mxu0 %v448
      %v2152 = vpop.f32.mrb[0].mxu0
      %v2153 = vadd.f32 0.0, %v2152
      %v2154 = vpop.f32.mrb[0].mxu0
      %v2155 = vpop.f32.mrb[0].mxu0
      %v2156 = vadd.f32 0.0, %v2155
      %v2157 = vpop.f32.mrb[0].mxu0
      %2158 = vmatprep.mubr.bf16.mxu0 0
      %2159 = vmatmul.mubr.bf16.gmra.mrb[0].mxu0 %v451
      %v2160 = vpop.f32.mrb[0].mxu0
      %v2161 = vadd.f32 0.0, %v2160
      %v2162 = vpop.f32.mrb[0].mxu0
      %v2163 = vpop.f32.mrb[0].mxu0
      %v2164 = vadd.f32 0.0, %v2163
      %v2165 = vpop.f32.mrb[0].mxu0
      %2166 = vmatprep.mubr.bf16.mxu0 0
      %2167 = vmatmul.mubr.bf16.gmra.mrb[0].mxu0 %v454
      %v2168 = vpop.f32.mrb[0].mxu0
      %v2169 = vadd.f32 0.0, %v2168
      %v2170 = vpop.f32.mrb[0].mxu0
      %v2171 = vpop.f32.mrb[0].mxu0
      %v2172 = vadd.f32 0.0, %v2171
      %v2173 = vpop.f32.mrb[0].mxu0
      %2174 = vmatprep.mubr.bf16.mxu0 0
      %2175 = vmatmul.mubr.bf16.gmra.mrb[0].mxu0 %v457
      %v2176 = vpop.f32.mrb[0].mxu0
      %v2177 = vadd.f32 0.0, %v2176
      %v2178 = vpop.f32.mrb[0].mxu0
      %v2179 = vpop.f32.mrb[0].mxu0
      %v2180 = vadd.f32 0.0, %v2179
      %v2181 = vpop.f32.mrb[0].mxu0
      %2182 = vmatprep.mubr.bf16.mxu0 0
      %2183 = vmatmul.mubr.bf16.gmra.mrb[0].mxu0 %v460
      %v2184 = vpop.f32.mrb[0].mxu0
      %v2185 = vadd.f32 0.0, %v2184
      %v2186 = vpop.f32.mrb[0].mxu0
      %v2187 = vpop.f32.mrb[0].mxu0
      %v2188 = vadd.f32 0.0, %v2187
      %v2189 = vpop.f32.mrb[0].mxu0
      %2190 = vmatprep.mubr.bf16.mxu0 0
      %2191 = vmatmul.mubr.bf16.gmra.mrb[0].mxu0 %v463
      %v2192 = vpop.f32.mrb[0].mxu0
      %v2193 = vadd.f32 0.0, %v2192
      %v2194 = vpop.f32.mrb[0].mxu0
      %v2195 = vpop.f32.mrb[0].mxu0
      %v2196 = vadd.f32 0.0, %v2195
      %v2197 = vpop.f32.mrb[0].mxu0
      %2198 = vmatprep.mubr.bf16.mxu0 0
      %2199 = vmatmul.mubr.bf16.gmra.mrb[0].mxu0 %v466
      %v2200 = vpop.f32.mrb[0].mxu0
      %v2201 = vadd.f32 0.0, %v2200
      %v2202 = vpop.f32.mrb[0].mxu0
      %v2203 = vpop.f32.mrb[0].mxu0
      %v2204 = vadd.f32 0.0, %v2203
      %v2205 = vpop.f32.mrb[0].mxu0
      %2206 = vmatprep.mubr.bf16.mxu0 0
      %2207 = vmatmul.mubr.bf16.gmra.mrb[0].mxu0 %v469
      %v2208 = vpop.f32.mrb[0].mxu0
      %v2209 = vadd.f32 0.0, %v2208
      %v2210 = vpop.f32.mrb[0].mxu0
      %v2211 = vpop.f32.mrb[0].mxu0
      %v2212 = vadd.f32 0.0, %v2211
      %v2213 = vpop.f32.mrb[0].mxu0
      %2214 = vmatprep.mubr.bf16.mxu0 0
      %2215 = vmatmul.mubr.bf16.gmra.mrb[0].mxu0 %v1442
      %v2216 = vpop.f32.mrb[0].mxu0
      %v2217 = vadd.f32 0.0, %v2216
      %v2218 = vpop.f32.mrb[0].mxu0
      %v2219 = vpop.f32.mrb[0].mxu0
      %v2220 = vadd.f32 0.0, %v2219
      %v2221 = vpop.f32.mrb[0].mxu0
      %2222 = vmatprep.mubr.bf16.mxu0 0
      %2223 = vmatmul.mubr.bf16.gmra.mrb[0].mxu0 %v2065
      %v2224 = vpop.f32.mrb[0].mxu0
      %v2225 = vadd.f32 0.0, %v2224
      %v2226 = vpop.f32.mrb[0].mxu0
      %v2227 = vpop.f32.mrb[0].mxu0
      %v2228 = vadd.f32 0.0, %v2227
      %v2229 = vpop.f32.mrb[0].mxu0
      %2230 = vdwg.mxu0
      %v2231 = vadd.f32 %v2019, %v2105
      %v2232 = vadd.f32 %v2020, %v2108
      %v2233 = vadd.f32 %v2021, %v2113
      %v2234 = vadd.f32 %v2022, %v2116
      %v2235 = vadd.f32 %v2023, %v2121
      %v2236 = vadd.f32 %v2024, %v2124
      %v2237 = vadd.f32 %v2025, %v2129
      %v2238 = vadd.f32 %v2026, %v2132
      %v2239 = vadd.f32 %v2027, %v2137
      %v2240 = vadd.f32 %v2028, %v2140
      %v2241 = vadd.f32 %v2029, %v2145
      %v2242 = vadd.f32 %v2030, %v2148
      %v2243 = vadd.f32 %v2031, %v2153
      %v2244 = vadd.f32 %v2032, %v2156
      %v2245 = vadd.f32 %v2033, %v2161
      %v2246 = vadd.f32 %v2034, %v2164
      %v2247 = vadd.f32 %v2035, %v2169
      %v2248 = vadd.f32 %v2036, %v2172
      %v2249 = vadd.f32 %v2037, %v2177
      %v2250 = vadd.f32 %v2038, %v2180
      %v2251 = vadd.f32 %v2039, %v2185
      %v2252 = vadd.f32 %v2040, %v2188
      %v2253 = vadd.f32 %v2041, %v2193
      %v2254 = vadd.f32 %v2042, %v2196
      %v2255 = vadd.f32 %v2043, %v2201
      %v2256 = vadd.f32 %v2044, %v2204
      %v2257 = vadd.f32 %v2045, %v2209
      %v2258 = vadd.f32 %v2046, %v2212
      %v2259 = vadd.f32 %v2047, %v2217
      %v2260 = vadd.f32 %v2048, %v2220
      %v2261 = vadd.f32 %v2049, %v2225
      %v2262 = vadd.f32 %v2050, %v2228
      %v2263 = vrot.slane %v223, 2
      %v2264 = vrot.slane %v224, 2
      %v2265 = vsel %vm851, %v2263, %v2264
      %v2266 = vrot.slane %v225, 2
      %v2267 = vsel %vm851, %v2264, %v2266
      %v2270 = vpack.c.bf16 %v2267, %v2265
      %s2271 = scalar_lea.vmem %s1, 16
      %v2272 = vld [vmem:[%s2271] sm:$0x3]
      %v2274 = vsel %vm422, %v2270, 0
      %v2277 = vand.u32 %v2272, %v474
      %2279 = vmatprep.subr.bf16.mxu0 0
      %2280 = vmatpush1.bf16.msra.mxu0 %v2277
      %2281 = vmatprep.subr.bf16.mxu0 0
      %2282 = vmatpush1.bf16.msra.mxu0 0
      %2283 = vmatprep.subr.bf16.mxu0 0
      %2284 = vmatpush1.bf16.msra.mxu0 0
      %2285 = vmatprep.subr.bf16.mxu0 0
      %2286 = vmatpush1.bf16.msra.mxu0 0
      %2287 = vmatprep.subr.bf16.mxu0 0
      %2288 = vmatpush1.bf16.msra.mxu0 0
      %2289 = vmatprep.subr.bf16.mxu0 0
      %2290 = vmatpush1.bf16.msra.mxu0 0
      %2291 = vmatprep.subr.bf16.mxu0 0
      %2292 = vmatpush1.bf16.msra.mxu0 0
      %2293 = vmatprep.subr.bf16.mxu0 0
      %2294 = vmatpush1.bf16.msra.mxu0 0
      %2295 = vmatprep.subr.bf16.mxu0 0
      %2296 = vmatpush1.bf16.msra.mxu0 0
      %2297 = vmatprep.subr.bf16.mxu0 0
      %2298 = vmatpush1.bf16.msra.mxu0 0
      %2299 = vmatprep.subr.bf16.mxu0 0
      %2300 = vmatpush1.bf16.msra.mxu0 0
      %2301 = vmatprep.subr.bf16.mxu0 0
      %2302 = vmatpush1.bf16.msra.mxu0 0
      %2303 = vmatprep.subr.bf16.mxu0 0
      %2304 = vmatpush1.bf16.msra.mxu0 0
      %2305 = vmatprep.subr.bf16.mxu0 0
      %2306 = vmatpush1.bf16.msra.mxu0 0
      %2307 = vmatprep.subr.bf16.mxu0 0
      %2308 = vmatpush1.bf16.msra.mxu0 0
      %2309 = vmatprep.subr.bf16.mxu0 0
      %2310 = vmatpush1.bf16.msra.mxu0 0
      %2311 = vmatprep.mubr.bf16.mxu0 0
      %2312 = vmatmul.mubr.bf16.gmra.mrb[0].mxu0 %v989
      %v2313 = vpop.f32.mrb[0].mxu0
      %v2314 = vadd.f32 0.0, %v2313
      %v2315 = vpop.f32.mrb[0].mxu0
      %v2316 = vpop.f32.mrb[0].mxu0
      %v2317 = vadd.f32 0.0, %v2316
      %v2318 = vpop.f32.mrb[0].mxu0
      %2319 = vmatprep.mubr.bf16.mxu0 0
      %2320 = vmatmul.mubr.bf16.gmra.mrb[0].mxu0 %v992
      %v2321 = vpop.f32.mrb[0].mxu0
      %v2322 = vadd.f32 0.0, %v2321
      %v2323 = vpop.f32.mrb[0].mxu0
      %v2324 = vpop.f32.mrb[0].mxu0
      %v2325 = vadd.f32 0.0, %v2324
      %v2326 = vpop.f32.mrb[0].mxu0
      %2327 = vmatprep.mubr.bf16.mxu0 0
      %2328 = vmatmul.mubr.bf16.gmra.mrb[0].mxu0 %v995
      %v2329 = vpop.f32.mrb[0].mxu0
      %v2330 = vadd.f32 0.0, %v2329
      %v2331 = vpop.f32.mrb[0].mxu0
      %v2332 = vpop.f32.mrb[0].mxu0
      %v2333 = vadd.f32 0.0, %v2332
      %v2334 = vpop.f32.mrb[0].mxu0
      %2335 = vmatprep.mubr.bf16.mxu0 0
      %2336 = vmatmul.mubr.bf16.gmra.mrb[0].mxu0 %v998
      %v2337 = vpop.f32.mrb[0].mxu0
      %v2338 = vadd.f32 0.0, %v2337
      %v2339 = vpop.f32.mrb[0].mxu0
      %v2340 = vpop.f32.mrb[0].mxu0
      %v2341 = vadd.f32 0.0, %v2340
      %v2342 = vpop.f32.mrb[0].mxu0
      %2343 = vmatprep.mubr.bf16.mxu0 0
      %2344 = vmatmul.mubr.bf16.gmra.mrb[0].mxu0 %v1001
      %v2345 = vpop.f32.mrb[0].mxu0
      %v2346 = vadd.f32 0.0, %v2345
      %v2347 = vpop.f32.mrb[0].mxu0
      %v2348 = vpop.f32.mrb[0].mxu0
      %v2349 = vadd.f32 0.0, %v2348
      %v2350 = vpop.f32.mrb[0].mxu0
      %2351 = vmatprep.mubr.bf16.mxu0 0
      %2352 = vmatmul.mubr.bf16.gmra.mrb[0].mxu0 %v1004
      %v2353 = vpop.f32.mrb[0].mxu0
      %v2354 = vadd.f32 0.0, %v2353
      %v2355 = vpop.f32.mrb[0].mxu0
      %v2356 = vpop.f32.mrb[0].mxu0
      %v2357 = vadd.f32 0.0, %v2356
      %v2358 = vpop.f32.mrb[0].mxu0
      %2359 = vmatprep.mubr.bf16.mxu0 0
      %2360 = vmatmul.mubr.bf16.gmra.mrb[0].mxu0 %v1007
      %v2361 = vpop.f32.mrb[0].mxu0
      %v2362 = vadd.f32 0.0, %v2361
      %v2363 = vpop.f32.mrb[0].mxu0
      %v2364 = vpop.f32.mrb[0].mxu0
      %v2365 = vadd.f32 0.0, %v2364
      %v2366 = vpop.f32.mrb[0].mxu0
      %2367 = vmatprep.mubr.bf16.mxu0 0
      %2368 = vmatmul.mubr.bf16.gmra.mrb[0].mxu0 %v1010
      %v2369 = vpop.f32.mrb[0].mxu0
      %v2370 = vadd.f32 0.0, %v2369
      %v2371 = vpop.f32.mrb[0].mxu0
      %v2372 = vpop.f32.mrb[0].mxu0
      %v2373 = vadd.f32 0.0, %v2372
      %v2374 = vpop.f32.mrb[0].mxu0
      %2375 = vmatprep.mubr.bf16.mxu0 0
      %2376 = vmatmul.mubr.bf16.gmra.mrb[0].mxu0 %v1013
      %v2377 = vpop.f32.mrb[0].mxu0
      %v2378 = vadd.f32 0.0, %v2377
      %v2379 = vpop.f32.mrb[0].mxu0
      %v2380 = vpop.f32.mrb[0].mxu0
      %v2381 = vadd.f32 0.0, %v2380
      %v2382 = vpop.f32.mrb[0].mxu0
      %2383 = vmatprep.mubr.bf16.mxu0 0
      %2384 = vmatmul.mubr.bf16.gmra.mrb[0].mxu0 %v1016
      %v2385 = vpop.f32.mrb[0].mxu0
      %v2386 = vadd.f32 0.0, %v2385
      %v2387 = vpop.f32.mrb[0].mxu0
      %v2388 = vpop.f32.mrb[0].mxu0
      %v2389 = vadd.f32 0.0, %v2388
      %v2390 = vpop.f32.mrb[0].mxu0
      %2391 = vmatprep.mubr.bf16.mxu0 0
      %2392 = vmatmul.mubr.bf16.gmra.mrb[0].mxu0 %v1019
      %v2393 = vpop.f32.mrb[0].mxu0
      %v2394 = vadd.f32 0.0, %v2393
      %v2395 = vpop.f32.mrb[0].mxu0
      %v2396 = vpop.f32.mrb[0].mxu0
      %v2397 = vadd.f32 0.0, %v2396
      %v2398 = vpop.f32.mrb[0].mxu0
      %2399 = vmatprep.mubr.bf16.mxu0 0
      %2400 = vmatmul.mubr.bf16.gmra.mrb[0].mxu0 %v1022
      %v2401 = vpop.f32.mrb[0].mxu0
      %v2402 = vadd.f32 0.0, %v2401
      %v2403 = vpop.f32.mrb[0].mxu0
      %v2404 = vpop.f32.mrb[0].mxu0
      %v2405 = vadd.f32 0.0, %v2404
      %v2406 = vpop.f32.mrb[0].mxu0
      %2407 = vmatprep.mubr.bf16.mxu0 0
      %2408 = vmatmul.mubr.bf16.gmra.mrb[0].mxu0 %v1025
      %v2409 = vpop.f32.mrb[0].mxu0
      %v2410 = vadd.f32 0.0, %v2409
      %v2411 = vpop.f32.mrb[0].mxu0
      %v2412 = vpop.f32.mrb[0].mxu0
      %v2413 = vadd.f32 0.0, %v2412
      %v2414 = vpop.f32.mrb[0].mxu0
      %2415 = vmatprep.mubr.bf16.mxu0 0
      %2416 = vmatmul.mubr.bf16.gmra.mrb[0].mxu0 %v1028
      %v2417 = vpop.f32.mrb[0].mxu0
      %v2418 = vadd.f32 0.0, %v2417
      %v2419 = vpop.f32.mrb[0].mxu0
      %v2420 = vpop.f32.mrb[0].mxu0
      %v2421 = vadd.f32 0.0, %v2420
      %v2422 = vpop.f32.mrb[0].mxu0
      %2423 = vmatprep.mubr.bf16.mxu0 0
      %2424 = vmatmul.mubr.bf16.gmra.mrb[0].mxu0 %v1651
      %v2425 = vpop.f32.mrb[0].mxu0
      %v2426 = vadd.f32 0.0, %v2425
      %v2427 = vpop.f32.mrb[0].mxu0
      %v2428 = vpop.f32.mrb[0].mxu0
      %v2429 = vadd.f32 0.0, %v2428
      %v2430 = vpop.f32.mrb[0].mxu0
      %2431 = vmatprep.mubr.bf16.mxu0 0
      %2432 = vmatmul.mubr.bf16.gmra.mrb[0].mxu0 %v2274
      %v2433 = vpop.f32.mrb[0].mxu0
      %v2434 = vadd.f32 0.0, %v2433
      %v2435 = vpop.f32.mrb[0].mxu0
      %v2436 = vpop.f32.mrb[0].mxu0
      %v2437 = vadd.f32 0.0, %v2436
      %v2438 = vpop.f32.mrb[0].mxu0
      %2439 = vdwg.mxu0
      %v2440 = vadd.f32 %v2231, %v2314
      %v2441 = vadd.f32 %v2232, %v2317
      %v2442 = vadd.f32 %v2233, %v2322
      %v2443 = vadd.f32 %v2234, %v2325
      %v2444 = vadd.f32 %v2235, %v2330
      %v2445 = vadd.f32 %v2236, %v2333
      %v2446 = vadd.f32 %v2237, %v2338
      %v2447 = vadd.f32 %v2238, %v2341
      %v2448 = vadd.f32 %v2239, %v2346
      %v2449 = vadd.f32 %v2240, %v2349
      %v2450 = vadd.f32 %v2241, %v2354
      %v2451 = vadd.f32 %v2242, %v2357
      %v2452 = vadd.f32 %v2243, %v2362
      %v2453 = vadd.f32 %v2244, %v2365
      %v2454 = vadd.f32 %v2245, %v2370
      %v2455 = vadd.f32 %v2246, %v2373
      %v2456 = vadd.f32 %v2247, %v2378
      %v2457 = vadd.f32 %v2248, %v2381
      %v2458 = vadd.f32 %v2249, %v2386
      %v2459 = vadd.f32 %v2250, %v2389
      %v2460 = vadd.f32 %v2251, %v2394
      %v2461 = vadd.f32 %v2252, %v2397
      %v2462 = vadd.f32 %v2253, %v2402
      %v2463 = vadd.f32 %v2254, %v2405
      %v2464 = vadd.f32 %v2255, %v2410
      %v2465 = vadd.f32 %v2256, %v2413
      %v2466 = vadd.f32 %v2257, %v2418
      %v2467 = vadd.f32 %v2258, %v2421
      %v2468 = vadd.f32 %v2259, %v2426
      %v2469 = vadd.f32 %v2260, %v2429
      %v2470 = vadd.f32 %v2261, %v2434
      %v2471 = vadd.f32 %v2262, %v2437
      %v2472 = vld [vmem:[%s2] sm:$0x1]
      %v2474 = vlaneseq
      %v2475 = vshrl.u32 %v2474, 7
      %v2476 = vsub.s32 0, %v2475
      %v2477 = vrot.slane %v2472, %v2476
      %v2479 = vadd.f32 %v2440, %v2477
      %v2480 = vadd.f32 %v2441, %v2477
      %v2481 = vadd.f32 %v2442, %v2477
      %v2482 = vadd.f32 %v2443, %v2477
      %v2483 = vadd.f32 %v2444, %v2477
      %v2484 = vadd.f32 %v2445, %v2477
      %v2485 = vadd.f32 %v2446, %v2477
      %v2486 = vadd.f32 %v2447, %v2477
      %v2487 = vadd.f32 %v2448, %v2477
      %v2488 = vadd.f32 %v2449, %v2477
      %v2489 = vadd.f32 %v2450, %v2477
      %v2490 = vadd.f32 %v2451, %v2477
      %v2491 = vadd.f32 %v2452, %v2477
      %v2492 = vadd.f32 %v2453, %v2477
      %v2493 = vadd.f32 %v2454, %v2477
      %v2494 = vadd.f32 %v2455, %v2477
      %v2495 = vadd.f32 %v2456, %v2477
      %v2496 = vadd.f32 %v2457, %v2477
      %v2497 = vadd.f32 %v2458, %v2477
      %v2498 = vadd.f32 %v2459, %v2477
      %v2499 = vadd.f32 %v2460, %v2477
      %v2500 = vadd.f32 %v2461, %v2477
      %v2501 = vadd.f32 %v2462, %v2477
      %v2502 = vadd.f32 %v2463, %v2477
      %v2503 = vadd.f32 %v2464, %v2477
      %v2504 = vadd.f32 %v2465, %v2477
      %v2505 = vadd.f32 %v2466, %v2477
      %v2506 = vadd.f32 %v2467, %v2477
      %v2507 = vadd.f32 %v2468, %v2477
      %v2508 = vadd.f32 %v2469, %v2477
      %v2509 = vadd.f32 %v2470, %v2477
      %v2510 = vadd.f32 %v2471, %v2477
      %v2511 = vmax.f32 %v2479, 0.0
      %v2512 = vmax.f32 %v2480, 0.0
      %v2513 = vmax.f32 %v2481, 0.0
      %v2514 = vmax.f32 %v2482, 0.0
      %v2515 = vmax.f32 %v2483, 0.0
      %v2516 = vmax.f32 %v2484, 0.0
      %v2517 = vmax.f32 %v2485, 0.0
      %v2518 = vmax.f32 %v2486, 0.0
      %v2519 = vmax.f32 %v2487, 0.0
      %v2520 = vmax.f32 %v2488, 0.0
      %v2521 = vmax.f32 %v2489, 0.0
      %v2522 = vmax.f32 %v2490, 0.0
      %v2523 = vmax.f32 %v2491, 0.0
      %v2524 = vmax.f32 %v2492, 0.0
      %v2525 = vmax.f32 %v2493, 0.0
      %v2526 = vmax.f32 %v2494, 0.0
      %v2527 = vmax.f32 %v2495, 0.0
      %v2528 = vmax.f32 %v2496, 0.0
      %v2529 = vmax.f32 %v2497, 0.0
      %v2530 = vmax.f32 %v2498, 0.0
      %v2531 = vmax.f32 %v2499, 0.0
      %v2532 = vmax.f32 %v2500, 0.0
      %v2533 = vmax.f32 %v2501, 0.0
      %v2534 = vmax.f32 %v2502, 0.0
      %v2535 = vmax.f32 %v2503, 0.0
      %v2536 = vmax.f32 %v2504, 0.0
      %v2537 = vmax.f32 %v2505, 0.0
      %v2538 = vmax.f32 %v2506, 0.0
      %v2539 = vmax.f32 %v2507, 0.0
      %v2540 = vmax.f32 %v2508, 0.0
      %v2541 = vmax.f32 %v2509, 0.0
      %v2542 = vmax.f32 %v2510, 0.0
      %v2543 = vpack.c.bf16 %v2512, %v2511
      %v2544 = vpack.c.bf16 %v2514, %v2513
      %v2545 = vpack.c.bf16 %v2516, %v2515
      %v2546 = vpack.c.bf16 %v2518, %v2517
      %v2547 = vpack.c.bf16 %v2520, %v2519
      %v2548 = vpack.c.bf16 %v2522, %v2521
      %v2549 = vpack.c.bf16 %v2524, %v2523
      %v2550 = vpack.c.bf16 %v2526, %v2525
      %v2551 = vpack.c.bf16 %v2528, %v2527
      %v2552 = vpack.c.bf16 %v2530, %v2529
      %v2553 = vpack.c.bf16 %v2532, %v2531
      %v2554 = vpack.c.bf16 %v2534, %v2533
      %v2555 = vpack.c.bf16 %v2536, %v2535
      %v2556 = vpack.c.bf16 %v2538, %v2537
      %v2557 = vpack.c.bf16 %v2540, %v2539
      %v2558 = vpack.c.bf16 %v2542, %v2541
      %v2575 = vunpack.c.l.b16 %v2543
      %v2576 = vunpack.c.h.b16 %v2543
      %v2577 = vunpack.c.l.b16 %v2544
      %v2578 = vunpack.c.h.b16 %v2544
      %v2579 = vunpack.c.l.b16 %v2545
      %v2580 = vunpack.c.h.b16 %v2545
      %v2581 = vunpack.c.l.b16 %v2546
      %v2582 = vunpack.c.h.b16 %v2546
      %v2583 = vunpack.c.l.b16 %v2547
      %v2584 = vunpack.c.h.b16 %v2547
      %v2585 = vunpack.c.l.b16 %v2548
      %v2586 = vunpack.c.h.b16 %v2548
      %v2587 = vunpack.c.l.b16 %v2549
      %v2588 = vunpack.c.h.b16 %v2549
      %v2589 = vunpack.c.l.b16 %v2550
      %v2590 = vunpack.c.h.b16 %v2550
      %v2591 = vunpack.c.l.b16 %v2551
      %v2592 = vunpack.c.h.b16 %v2551
      %v2593 = vunpack.c.l.b16 %v2552
      %v2594 = vunpack.c.h.b16 %v2552
      %v2595 = vunpack.c.l.b16 %v2553
      %v2596 = vunpack.c.h.b16 %v2553
      %v2597 = vunpack.c.l.b16 %v2554
      %v2598 = vunpack.c.h.b16 %v2554
      %v2599 = vunpack.c.l.b16 %v2555
      %v2600 = vunpack.c.h.b16 %v2555
      %v2601 = vunpack.c.l.b16 %v2556
      %v2602 = vunpack.c.h.b16 %v2556
      %v2603 = vunpack.c.l.b16 %v2557
      %v2604 = vunpack.c.h.b16 %v2557
      %v2605 = vunpack.c.l.b16 %v2558
      %v2606 = vunpack.c.h.b16 %v2558
      %v2607 = vpack.c.b16 %v2575, %v2575
      %v2608 = vpack.c.b16 %v2576, %v2576
      %v2609 = vpack.c.b16 %v2577, %v2577
      %v2610 = vpack.c.b16 %v2578, %v2578
      %v2611 = vpack.c.b16 %v2579, %v2579
      %v2612 = vpack.c.b16 %v2580, %v2580
      %v2613 = vpack.c.b16 %v2581, %v2581
      %v2614 = vpack.c.b16 %v2582, %v2582
      %v2615 = vpack.c.b16 %v2583, %v2583
      %v2616 = vpack.c.b16 %v2584, %v2584
      %v2617 = vpack.c.b16 %v2585, %v2585
      %v2618 = vpack.c.b16 %v2586, %v2586
      %v2619 = vpack.c.b16 %v2587, %v2587
      %v2620 = vpack.c.b16 %v2588, %v2588
      %v2621 = vpack.c.b16 %v2589, %v2589
      %v2622 = vpack.c.b16 %v2590, %v2590
      %v2623 = vpack.c.b16 %v2591, %v2591
      %v2624 = vpack.c.b16 %v2592, %v2592
      %v2625 = vpack.c.b16 %v2593, %v2593
      %v2626 = vpack.c.b16 %v2594, %v2594
      %v2627 = vpack.c.b16 %v2595, %v2595
      %v2628 = vpack.c.b16 %v2596, %v2596
      %v2629 = vpack.c.b16 %v2597, %v2597
      %v2630 = vpack.c.b16 %v2598, %v2598
      %v2631 = vpack.c.b16 %v2599, %v2599
      %v2632 = vpack.c.b16 %v2600, %v2600
      %v2633 = vpack.c.b16 %v2601, %v2601
      %v2634 = vpack.c.b16 %v2602, %v2602
      %v2635 = vpack.c.b16 %v2603, %v2603
      %v2636 = vpack.c.b16 %v2604, %v2604
      %v2637 = vpack.c.b16 %v2605, %v2605
      %v2638 = vpack.c.b16 %v2606, %v2606
      %vm2671 = vcmask 257024
      %2672 = vst.msk [vmem:[%s170] sm:$0xf] %vm2671, %v2607
      %2673 = vst.msk [vmem:[%s170 + $0x4] sm:$0xf] %vm2671, %v2608
      %2674 = vst.msk [vmem:[%s170 + $0x8] sm:$0xf] %vm2671, %v2609
      %2675 = vst.msk [vmem:[%s170 + $0xc] sm:$0xf] %vm2671, %v2610
      %2676 = vst.msk [vmem:[%s170 + $0x10] sm:$0xf] %vm2671, %v2611
      %2677 = vst.msk [vmem:[%s170 + $0x14] sm:$0xf] %vm2671, %v2612
      %2678 = vst.msk [vmem:[%s170 + $0x18] sm:$0xf] %vm2671, %v2613
      %2679 = vst.msk [vmem:[%s170 + $0x1c] sm:$0xf] %vm2671, %v2614
      %2680 = vst.msk [vmem:[%s170 + $0x20] sm:$0xf] %vm2671, %v2615
      %2681 = vst.msk [vmem:[%s170 + $0x24] sm:$0xf] %vm2671, %v2616
      %2682 = vst.msk [vmem:[%s170 + $0x28] sm:$0xf] %vm2671, %v2617
      %2683 = vst.msk [vmem:[%s170 + $0x2c] sm:$0xf] %vm2671, %v2618
      %2684 = vst.msk [vmem:[%s170 + $0x30] sm:$0xf] %vm2671, %v2619
      %2685 = vst.msk [vmem:[%s170 + $0x34] sm:$0xf] %vm2671, %v2620
      %2686 = vst.msk [vmem:[%s170 + $0x38] sm:$0xf] %vm2671, %v2621
      %2687 = vst.msk [vmem:[%s170 + $0x3c] sm:$0xf] %vm2671, %v2622
      %2688 = vst.msk [vmem:[%s170 + $0x40] sm:$0xf] %vm2671, %v2623
      %2689 = vst.msk [vmem:[%s170 + $0x44] sm:$0xf] %vm2671, %v2624
      %2690 = vst.msk [vmem:[%s170 + $0x48] sm:$0xf] %vm2671, %v2625
      %2691 = vst.msk [vmem:[%s170 + $0x4c] sm:$0xf] %vm2671, %v2626
      %2692 = vst.msk [vmem:[%s170 + $0x50] sm:$0xf] %vm2671, %v2627
      %2693 = vst.msk [vmem:[%s170 + $0x54] sm:$0xf] %vm2671, %v2628
      %2694 = vst.msk [vmem:[%s170 + $0x58] sm:$0xf] %vm2671, %v2629
      %2695 = vst.msk [vmem:[%s170 + $0x5c] sm:$0xf] %vm2671, %v2630
      %2696 = vst.msk [vmem:[%s170 + $0x60] sm:$0xf] %vm2671, %v2631
      %2697 = vst.msk [vmem:[%s170 + $0x64] sm:$0xf] %vm2671, %v2632
      %2698 = vst.msk [vmem:[%s170 + $0x68] sm:$0xf] %vm2671, %v2633
      %2699 = vst.msk [vmem:[%s170 + $0x6c] sm:$0xf] %vm2671, %v2634
      %2700 = vst.msk [vmem:[%s170 + $0x70] sm:$0xf] %vm2671, %v2635
      %2701 = vst.msk [vmem:[%s170 + $0x74] sm:$0xf] %vm2671, %v2636
      %2702 = vst.msk [vmem:[%s170 + $0x78] sm:$0xf] %vm2671, %v2637
      %2703 = vst.msk [vmem:[%s170 + $0x7c] sm:$0xf] %vm2671, %v2638
      %p2704 = scmp.lt.s32.totalorder %s14, 5
      %s2705 = scalar_select %p2704, %s14, 5
      %s2706 = smul.addr %s2705, 32
      %s2707 = smul.addr %s2706, 4
      %s2708 = scalar_lea.vmem %s3, %s2707
      // Predicated region
      $region33: #{speinet_forward.8} parent=31 // pred_check
        %p2709 = pneg %p100
      $region34: #{speinet_forward.8} parent=31 // pred_check_branch
        %2711 = sbr.rel (%p2709) target = $region36
      $region35: #{speinet_forward.8} parent=31 // pred_region
        _
      $region36: #{speinet_forward.8} parent=31 // pred_fallthru
        _
    $region32: #{speinet_forward.8} parent=5 // pred_fallthru
      _
    %p2712 = scmp.le.s32.totalorder 2, %s9
    // Predicated region
    $region37: #{speinet_forward.8} parent=5 // pred_check
      %p2713 = pneg %p2712
    $region38: #{speinet_forward.8} parent=5 // pred_check_branch
      %2715 = sbr.rel (%p2713) target = $region40
    $region39: #{speinet_forward.8} parent=5 // pred_region
      %s2716 = ssub.s32 %s9, 2
      // Predicated region
      $region41: #{speinet_forward.8} parent=39 // pred_check
        %p2717 = pneg %p106
      $region42: #{speinet_forward.8} parent=39 // pred_check_branch
        %2719 = sbr.rel (%p2717) target = $region44
      $region43: #{speinet_forward.8} parent=39 // pred_region
        %p2720 = scmp.lt.s32.totalorder %s15, 5
        %s2721 = scalar_select %p2720, %s15, 5
        %s2722 = smul.addr %s2721, 32
        %s2723 = smul.addr %s2722, 4
        %s2724 = scalar_lea.vmem %s3, %s2723
      $region44: #{speinet_forward.8} parent=39 // pred_fallthru
        _
    $region40: #{speinet_forward.8} parent=5 // pred_fallthru
      _
  $region6: #{speinet_forward.8} parent=0 // loop_footer
    %s13 = sadd.s32 1, %s9
  $region7: #{speinet_forward.8} parent=0 // loop_footer_branch
    %8 = sbr.rel target = $region3
  $region8: #{speinet_forward.8} parent=0 // loop_exit
    _

// kernel: speinet_forward.9
$region0: #{speinet_forward.9}
  #allocation0 [shape = 'u32[]', space=smem, size = 0x4, offset = 0x4, fixed_abs, tag = 'smem constant byte address 0x4 - core index']
  #allocation1 [shape = 'u32[144,128]{1,0:T(1,128)}', space=vmem, size = 0x12000, scoped, tag = 'internal scratch']
  %s0 = inlined_call_operand.vmem [shape: bf16[384,288], index: 0, kind: input, shape index: {}]
  %s1 = inlined_call_operand.vmem [shape: bf16[288,64], index: 1, kind: input, shape index: {}]
  %s2 = inlined_call_operand.vmem [shape: f32[1,64], index: 2, kind: input, shape index: {}]
  %s3 = inlined_call_operand.vmem [shape: bf16[384,64], index: 3, kind: output, shape index: {}]
  %s4 = sld [smem:[#allocation0]]
  $region22: #{speinet_forward.9} parent=0
    _
  %s6 = ssub.s32 1, %s4
  %s7 = scalar_select 0, %s6, %s4
  // Predicated region
  $region2: #{speinet_forward.9} parent=0 // pred_check
    _
  $region3: #{speinet_forward.9} parent=0 // pred_check_branch
    %9 = sbr.rel (0) target = $region5
  $region4: #{speinet_forward.9} parent=0 // pred_region
    _
  $region5: #{speinet_forward.9} parent=0 // pred_fallthru
    _
  // Predicated region
  $region6: #{speinet_forward.9} parent=0 // pred_check
    _
  $region7: #{speinet_forward.9} parent=0 // pred_check_branch
    %11 = sbr.rel (0) target = $region9
  $region8: #{speinet_forward.9} parent=0 // pred_region
    _
  $region9: #{speinet_forward.9} parent=0 // pred_fallthru
    _
  // Predicated region
  $region10: #{speinet_forward.9} parent=0 // pred_check
    _
  $region11: #{speinet_forward.9} parent=0 // pred_check_branch
    %13 = sbr.rel (0) target = $region13
  $region12: #{speinet_forward.9} parent=0 // pred_region
    _
  $region13: #{speinet_forward.9} parent=0 // pred_fallthru
    _
  %v15 = vld [vmem:[%s0] sm:$0xff]
  %v16 = vld [vmem:[%s0 + $0x8] sm:$0xf]
  %v17 = vld [vmem:[%s0 + $0xc] sm:$0xff]
  %v18 = vld [vmem:[%s0 + $0x14] sm:$0xf]
  %v19 = vld [vmem:[%s0 + $0x18] sm:$0xff]
  %v20 = vld [vmem:[%s0 + $0x20] sm:$0xf]
  %v21 = vld [vmem:[%s0 + $0x24] sm:$0xff]
  %v22 = vld [vmem:[%s0 + $0x2c] sm:$0xf]
  %v23 = vld [vmem:[%s0 + $0x30] sm:$0xff]
  %v24 = vld [vmem:[%s0 + $0x38] sm:$0xf]
  %v25 = vld [vmem:[%s0 + $0x3c] sm:$0xff]
  %v26 = vld [vmem:[%s0 + $0x44] sm:$0xf]
  %v27 = vld [vmem:[%s0 + $0x48] sm:$0xff]
  %v28 = vld [vmem:[%s0 + $0x50] sm:$0xf]
  %v29 = vld [vmem:[%s0 + $0x54] sm:$0xff]
  %v30 = vld [vmem:[%s0 + $0x5c] sm:$0xf]
  %v31 = vld [vmem:[%s0 + $0x60] sm:$0xff]
  %v32 = vld [vmem:[%s0 + $0x68] sm:$0xf]
  %v33 = vld [vmem:[%s0 + $0x6c] sm:$0xff]
  %v34 = vld [vmem:[%s0 + $0x74] sm:$0xf]
  %v35 = vld [vmem:[%s0 + $0x78] sm:$0xff]
  %v36 = vld [vmem:[%s0 + $0x80] sm:$0xf]
  %v37 = vld [vmem:[%s0 + $0x84] sm:$0xff]
  %v38 = vld [vmem:[%s0 + $0x8c] sm:$0xf]
  %v39 = vld [vmem:[%s0 + $0x90] sm:$0xff]
  %v40 = vld [vmem:[%s0 + $0x98] sm:$0xf]
  %v41 = vld [vmem:[%s0 + $0x9c] sm:$0xff]
  %v42 = vld [vmem:[%s0 + $0xa4] sm:$0xf]
  %v43 = vld [vmem:[%s0 + $0xa8] sm:$0xff]
  %v44 = vld [vmem:[%s0 + $0xb0] sm:$0xf]
  %v45 = vld [vmem:[%s0 + $0xb4] sm:$0xff]
  %v46 = vld [vmem:[%s0 + $0xbc] sm:$0xf]
  %v47 = vld [vmem:[%s0 + $0xc0] sm:$0xff]
  %v48 = vld [vmem:[%s0 + $0xc8] sm:$0xf]
  %v49 = vld [vmem:[%s0 + $0xcc] sm:$0xff]
  %v50 = vld [vmem:[%s0 + $0xd4] sm:$0xf]
  %v51 = vld [vmem:[%s0 + $0xd8] sm:$0xff]
  %v52 = vld [vmem:[%s0 + $0xe0] sm:$0xf]
  %v53 = vld [vmem:[%s0 + $0xe4] sm:$0xff]
  %v54 = vld [vmem:[%s0 + $0xec] sm:$0xf]
  %v55 = vld [vmem:[%s0 + $0xf0] sm:$0xff]
  %v56 = vld [vmem:[%s0 + $0xf8] sm:$0xf]
  %v57 = vld [vmem:[%s0 + $0xfc] sm:$0xff]
  %v58 = vld [vmem:[%s0 + $0x104] sm:$0xf]
  %v59 = vld [vmem:[%s0 + $0x108] sm:$0xff]
  %v60 = vld [vmem:[%s0 + $0x110] sm:$0xf]
  %v61 = vld [vmem:[%s0 + $0x114] sm:$0xff]
  %v62 = vld [vmem:[%s0 + $0x11c] sm:$0xf]
  %v63 = vld [vmem:[%s0 + $0x120] sm:$0xff]
  %v64 = vld [vmem:[%s0 + $0x128] sm:$0xf]
  %v65 = vld [vmem:[%s0 + $0x12c] sm:$0xff]
  %v66 = vld [vmem:[%s0 + $0x134] sm:$0xf]
  %v67 = vld [vmem:[%s0 + $0x138] sm:$0xff]
  %v68 = vld [vmem:[%s0 + $0x140] sm:$0xf]
  %v69 = vld [vmem:[%s0 + $0x144] sm:$0xff]
  %v70 = vld [vmem:[%s0 + $0x14c] sm:$0xf]
  %v71 = vld [vmem:[%s0 + $0x150] sm:$0xff]
  %v72 = vld [vmem:[%s0 + $0x158] sm:$0xf]
  %v73 = vld [vmem:[%s0 + $0x15c] sm:$0xff]
  %v74 = vld [vmem:[%s0 + $0x164] sm:$0xf]
  %v75 = vld [vmem:[%s0 + $0x168] sm:$0xff]
  %v76 = vld [vmem:[%s0 + $0x170] sm:$0xf]
  %v77 = vld [vmem:[%s0 + $0x174] sm:$0xff]
  %v78 = vld [vmem:[%s0 + $0x17c] sm:$0xf]
  %v79 = vld [vmem:[%s0 + $0x180] sm:$0xff]
  %v80 = vld [vmem:[%s0 + $0x188] sm:$0xf]
  %v81 = vld [vmem:[%s0 + $0x18c] sm:$0xff]
  %v82 = vld [vmem:[%s0 + $0x194] sm:$0xf]
  %v83 = vld [vmem:[%s0 + $0x198] sm:$0xff]
  %v84 = vld [vmem:[%s0 + $0x1a0] sm:$0xf]
  %v85 = vld [vmem:[%s0 + $0x1a4] sm:$0xff]
  %v86 = vld [vmem:[%s0 + $0x1ac] sm:$0xf]
  %v87 = vld [vmem:[%s0 + $0x1b0] sm:$0xff]
  %v88 = vld [vmem:[%s0 + $0x1b8] sm:$0xf]
  %v89 = vld [vmem:[%s0 + $0x1bc] sm:$0xff]
  %v90 = vld [vmem:[%s0 + $0x1c4] sm:$0xf]
  %v91 = vld [vmem:[%s0 + $0x1c8] sm:$0xff]
  %v92 = vld [vmem:[%s0 + $0x1d0] sm:$0xf]
  %v93 = vld [vmem:[%s0 + $0x1d4] sm:$0xff]
  %v94 = vld [vmem:[%s0 + $0x1dc] sm:$0xf]
  %v95 = vld [vmem:[%s0 + $0x1e0] sm:$0xff]
  %v96 = vld [vmem:[%s0 + $0x1e8] sm:$0xf]
  %v97 = vld [vmem:[%s0 + $0x1ec] sm:$0xff]
  %v98 = vld [vmem:[%s0 + $0x1f4] sm:$0xf]
  %v99 = vld [vmem:[%s0 + $0x1f8] sm:$0xff]
  %v100 = vld [vmem:[%s0 + $0x200] sm:$0xf]
  %v101 = vld [vmem:[%s0 + $0x204] sm:$0xff]
  %v102 = vld [vmem:[%s0 + $0x20c] sm:$0xf]
  %v103 = vld [vmem:[%s0 + $0x210] sm:$0xff]
  %v104 = vld [vmem:[%s0 + $0x218] sm:$0xf]
  %v105 = vld [vmem:[%s0 + $0x21c] sm:$0xff]
  %v106 = vld [vmem:[%s0 + $0x224] sm:$0xf]
  %v107 = vld [vmem:[%s0 + $0x228] sm:$0xff]
  %v108 = vld [vmem:[%s0 + $0x230] sm:$0xf]
  %v109 = vld [vmem:[%s0 + $0x234] sm:$0xff]
  %v110 = vld [vmem:[%s0 + $0x23c] sm:$0xf]
  %v111 = vld [vmem:[%s1] sm:$0xf]
  %v112 = vld [vmem:[%s1 + $0x4] sm:$0xf]
  %v113 = vld [vmem:[%s1 + $0x8] sm:$0xf]
  %v114 = vld [vmem:[%s1 + $0xc] sm:$0xf]
  %v115 = vld [vmem:[%s1 + $0x10] sm:$0xf]
  %v116 = vld [vmem:[%s1 + $0x14] sm:$0xf]
  %v117 = vld [vmem:[%s1 + $0x18] sm:$0xf]
  %v118 = vld [vmem:[%s1 + $0x1c] sm:$0xf]
  %v119 = vld [vmem:[%s1 + $0x20] sm:$0xf]
  %v120 = vld [vmem:[%s1 + $0x24] sm:$0xf]
  %v121 = vld [vmem:[%s1 + $0x28] sm:$0xf]
  %v122 = vld [vmem:[%s1 + $0x2c] sm:$0xf]
  %v123 = vld [vmem:[%s1 + $0x30] sm:$0xf]
  %v124 = vld [vmem:[%s1 + $0x34] sm:$0xf]
  %v125 = vld [vmem:[%s1 + $0x38] sm:$0xf]
  %v126 = vld [vmem:[%s1 + $0x3c] sm:$0xf]
  %v127 = vld [vmem:[%s1 + $0x40] sm:$0xf]
  %v128 = vld [vmem:[%s1 + $0x44] sm:$0xf]
  %v129 = vld [vmem:[%s1 + $0x48] sm:$0xf]
  %v130 = vld [vmem:[%s1 + $0x4c] sm:$0xf]
  %v131 = vld [vmem:[%s1 + $0x50] sm:$0xf]
  %v132 = vld [vmem:[%s1 + $0x54] sm:$0xf]
  %v133 = vld [vmem:[%s1 + $0x58] sm:$0xf]
  %v134 = vld [vmem:[%s1 + $0x5c] sm:$0xf]
  %v135 = vld [vmem:[%s1 + $0x60] sm:$0xf]
  %v136 = vld [vmem:[%s1 + $0x64] sm:$0xf]
  %v137 = vld [vmem:[%s1 + $0x68] sm:$0xf]
  %v138 = vld [vmem:[%s1 + $0x6c] sm:$0xf]
  %v139 = vld [vmem:[%s1 + $0x70] sm:$0xf]
  %v140 = vld [vmem:[%s1 + $0x74] sm:$0xf]
  %v141 = vld [vmem:[%s1 + $0x78] sm:$0xf]
  %v142 = vld [vmem:[%s1 + $0x7c] sm:$0xf]
  %v143 = vld [vmem:[%s1 + $0x80] sm:$0xf]
  %v144 = vld [vmem:[%s1 + $0x84] sm:$0xf]
  %v145 = vld [vmem:[%s1 + $0x88] sm:$0xf]
  %v146 = vld [vmem:[%s1 + $0x8c] sm:$0xf]
  %v147 = vld [vmem:[%s2] sm:$0x1]
  %v149 = vlaneseq
  %v150 = vshrl.u32 %v149, 7
  %v151 = vsub.s32 0, %v150
  %v152 = vrot.slane %v147, %v151
  %v250 = vunpack.c.l.b16 %v15
  %v251 = vunpack.c.h.b16 %v15
  %v252 = vunpack.c.l.b16 %v16
  %v253 = vunpack.c.l.b16 %v17
  %v254 = vunpack.c.h.b16 %v17
  %v255 = vunpack.c.l.b16 %v18
  %v256 = vunpack.c.l.b16 %v19
  %v257 = vunpack.c.h.b16 %v19
  %v258 = vunpack.c.l.b16 %v20
  %v259 = vunpack.c.l.b16 %v21
  %v260 = vunpack.c.h.b16 %v21
  %v261 = vunpack.c.l.b16 %v22
  %v262 = vunpack.c.l.b16 %v23
  %v263 = vunpack.c.h.b16 %v23
  %v264 = vunpack.c.l.b16 %v24
  %v265 = vunpack.c.l.b16 %v25
  %v266 = vunpack.c.h.b16 %v25
  %v267 = vunpack.c.l.b16 %v26
  %v268 = vunpack.c.l.b16 %v27
  %v269 = vunpack.c.h.b16 %v27
  %v270 = vunpack.c.l.b16 %v28
  %v271 = vunpack.c.l.b16 %v29
  %v272 = vunpack.c.h.b16 %v29
  %v273 = vunpack.c.l.b16 %v30
  %v274 = vunpack.c.l.b16 %v31
  %v275 = vunpack.c.h.b16 %v31
  %v276 = vunpack.c.l.b16 %v32
  %v277 = vunpack.c.l.b16 %v33
  %v278 = vunpack.c.h.b16 %v33
  %v279 = vunpack.c.l.b16 %v34
  %v280 = vunpack.c.l.b16 %v35
  %v281 = vunpack.c.h.b16 %v35
  %v282 = vunpack.c.l.b16 %v36
  %v283 = vunpack.c.l.b16 %v37
  %v284 = vunpack.c.h.b16 %v37
  %v285 = vunpack.c.l.b16 %v38
  %v286 = vunpack.c.l.b16 %v39
  %v287 = vunpack.c.h.b16 %v39
  %v288 = vunpack.c.l.b16 %v40
  %v289 = vunpack.c.l.b16 %v41
  %v290 = vunpack.c.h.b16 %v41
  %v291 = vunpack.c.l.b16 %v42
  %v292 = vunpack.c.l.b16 %v43
  %v293 = vunpack.c.h.b16 %v43
  %v294 = vunpack.c.l.b16 %v44
  %v295 = vunpack.c.l.b16 %v45
  %v296 = vunpack.c.h.b16 %v45
  %v297 = vunpack.c.l.b16 %v46
  %v298 = vunpack.c.l.b16 %v47
  %v299 = vunpack.c.h.b16 %v47
  %v300 = vunpack.c.l.b16 %v48
  %v301 = vunpack.c.l.b16 %v49
  %v302 = vunpack.c.h.b16 %v49
  %v303 = vunpack.c.l.b16 %v50
  %v304 = vunpack.c.l.b16 %v51
  %v305 = vunpack.c.h.b16 %v51
  %v306 = vunpack.c.l.b16 %v52
  %v307 = vunpack.c.l.b16 %v53
  %v308 = vunpack.c.h.b16 %v53
  %v309 = vunpack.c.l.b16 %v54
  %v310 = vunpack.c.l.b16 %v55
  %v311 = vunpack.c.h.b16 %v55
  %v312 = vunpack.c.l.b16 %v56
  %v313 = vunpack.c.l.b16 %v57
  %v314 = vunpack.c.h.b16 %v57
  %v315 = vunpack.c.l.b16 %v58
  %v316 = vunpack.c.l.b16 %v59
  %v317 = vunpack.c.h.b16 %v59
  %v318 = vunpack.c.l.b16 %v60
  %v319 = vunpack.c.l.b16 %v61
  %v320 = vunpack.c.h.b16 %v61
  %v321 = vunpack.c.l.b16 %v62
  %v322 = vunpack.c.l.b16 %v63
  %v323 = vunpack.c.h.b16 %v63
  %v324 = vunpack.c.l.b16 %v64
  %v325 = vunpack.c.l.b16 %v65
  %v326 = vunpack.c.h.b16 %v65
  %v327 = vunpack.c.l.b16 %v66
  %v328 = vunpack.c.l.b16 %v67
  %v329 = vunpack.c.h.b16 %v67
  %v330 = vunpack.c.l.b16 %v68
  %v331 = vunpack.c.l.b16 %v69
  %v332 = vunpack.c.h.b16 %v69
  %v333 = vunpack.c.l.b16 %v70
  %v334 = vunpack.c.l.b16 %v71
  %v335 = vunpack.c.h.b16 %v71
  %v336 = vunpack.c.l.b16 %v72
  %v337 = vunpack.c.l.b16 %v73
  %v338 = vunpack.c.h.b16 %v73
  %v339 = vunpack.c.l.b16 %v74
  %v340 = vunpack.c.l.b16 %v75
  %v341 = vunpack.c.h.b16 %v75
  %v342 = vunpack.c.l.b16 %v76
  %v343 = vunpack.c.l.b16 %v77
  %v344 = vunpack.c.h.b16 %v77
  %v345 = vunpack.c.l.b16 %v78
  %v346 = vunpack.c.l.b16 %v79
  %v347 = vunpack.c.h.b16 %v79
  %v348 = vunpack.c.l.b16 %v80
  %v349 = vunpack.c.l.b16 %v81
  %v350 = vunpack.c.h.b16 %v81
  %v351 = vunpack.c.l.b16 %v82
  %v352 = vunpack.c.l.b16 %v83
  %v353 = vunpack.c.h.b16 %v83
  %v354 = vunpack.c.l.b16 %v84
  %v355 = vunpack.c.l.b16 %v85
  %v356 = vunpack.c.h.b16 %v85
  %v357 = vunpack.c.l.b16 %v86
  %v358 = vunpack.c.l.b16 %v87
  %v359 = vunpack.c.h.b16 %v87
  %v360 = vunpack.c.l.b16 %v88
  %v361 = vunpack.c.l.b16 %v89
  %v362 = vunpack.c.h.b16 %v89
  %v363 = vunpack.c.l.b16 %v90
  %v364 = vunpack.c.l.b16 %v91
  %v365 = vunpack.c.h.b16 %v91
  %v366 = vunpack.c.l.b16 %v92
  %v367 = vunpack.c.l.b16 %v93
  %v368 = vunpack.c.h.b16 %v93
  %v369 = vunpack.c.l.b16 %v94
  %v370 = vunpack.c.l.b16 %v95
  %v371 = vunpack.c.h.b16 %v95
  %v372 = vunpack.c.l.b16 %v96
  %v373 = vunpack.c.l.b16 %v97
  %v374 = vunpack.c.h.b16 %v97
  %v375 = vunpack.c.l.b16 %v98
  %v376 = vunpack.c.l.b16 %v99
  %v377 = vunpack.c.h.b16 %v99
  %v378 = vunpack.c.l.b16 %v100
  %v379 = vunpack.c.l.b16 %v101
  %v380 = vunpack.c.h.b16 %v101
  %v381 = vunpack.c.l.b16 %v102
  %v382 = vunpack.c.l.b16 %v103
  %v383 = vunpack.c.h.b16 %v103
  %v384 = vunpack.c.l.b16 %v104
  %v385 = vunpack.c.l.b16 %v105
  %v386 = vunpack.c.h.b16 %v105
  %v387 = vunpack.c.l.b16 %v106
  %v388 = vunpack.c.l.b16 %v107
  %v389 = vunpack.c.h.b16 %v107
  %v390 = vunpack.c.l.b16 %v108
  %v391 = vunpack.c.l.b16 %v109
  %v392 = vunpack.c.h.b16 %v109
  %v393 = vunpack.c.l.b16 %v110
  %v394 = vpack.c.b16 %v253, %v250
  %v395 = vpack.c.b16 %v254, %v251
  %v396 = vpack.c.b16 %v255, %v252
  %v397 = vpack.c.b16 %v259, %v256
  %v398 = vpack.c.b16 %v260, %v257
  %v399 = vpack.c.b16 %v261, %v258
  %v400 = vpack.c.b16 %v265, %v262
  %v401 = vpack.c.b16 %v266, %v263
  %v402 = vpack.c.b16 %v267, %v264
  %v403 = vpack.c.b16 %v271, %v268
  %v404 = vpack.c.b16 %v272, %v269
  %v405 = vpack.c.b16 %v273, %v270
  %v406 = vpack.c.b16 %v277, %v274
  %v407 = vpack.c.b16 %v278, %v275
  %v408 = vpack.c.b16 %v279, %v276
  %v409 = vpack.c.b16 %v283, %v280
  %v410 = vpack.c.b16 %v284, %v281
  %v411 = vpack.c.b16 %v285, %v282
  %v412 = vpack.c.b16 %v289, %v286
  %v413 = vpack.c.b16 %v290, %v287
  %v414 = vpack.c.b16 %v291, %v288
  %v415 = vpack.c.b16 %v295, %v292
  %v416 = vpack.c.b16 %v296, %v293
  %v417 = vpack.c.b16 %v297, %v294
  %v418 = vpack.c.b16 %v301, %v298
  %v419 = vpack.c.b16 %v302, %v299
  %v420 = vpack.c.b16 %v303, %v300
  %v421 = vpack.c.b16 %v307, %v304
  %v422 = vpack.c.b16 %v308, %v305
  %v423 = vpack.c.b16 %v309, %v306
  %v424 = vpack.c.b16 %v313, %v310
  %v425 = vpack.c.b16 %v314, %v311
  %v426 = vpack.c.b16 %v315, %v312
  %v427 = vpack.c.b16 %v319, %v316
  %v428 = vpack.c.b16 %v320, %v317
  %v429 = vpack.c.b16 %v321, %v318
  %v430 = vpack.c.b16 %v325, %v322
  %v431 = vpack.c.b16 %v326, %v323
  %v432 = vpack.c.b16 %v327, %v324
  %v433 = vpack.c.b16 %v331, %v328
  %v434 = vpack.c.b16 %v332, %v329
  %v435 = vpack.c.b16 %v333, %v330
  %v436 = vpack.c.b16 %v337, %v334
  %v437 = vpack.c.b16 %v338, %v335
  %v438 = vpack.c.b16 %v339, %v336
  %v439 = vpack.c.b16 %v343, %v340
  %v440 = vpack.c.b16 %v344, %v341
  %v441 = vpack.c.b16 %v345, %v342
  %v442 = vpack.c.b16 %v349, %v346
  %v443 = vpack.c.b16 %v350, %v347
  %v444 = vpack.c.b16 %v351, %v348
  %v445 = vpack.c.b16 %v355, %v352
  %v446 = vpack.c.b16 %v356, %v353
  %v447 = vpack.c.b16 %v357, %v354
  %v448 = vpack.c.b16 %v361, %v358
  %v449 = vpack.c.b16 %v362, %v359
  %v450 = vpack.c.b16 %v363, %v360
  %v451 = vpack.c.b16 %v367, %v364
  %v452 = vpack.c.b16 %v368, %v365
  %v453 = vpack.c.b16 %v369, %v366
  %v454 = vpack.c.b16 %v373, %v370
  %v455 = vpack.c.b16 %v374, %v371
  %v456 = vpack.c.b16 %v375, %v372
  %v457 = vpack.c.b16 %v379, %v376
  %v458 = vpack.c.b16 %v380, %v377
  %v459 = vpack.c.b16 %v381, %v378
  %v460 = vpack.c.b16 %v385, %v382
  %v461 = vpack.c.b16 %v386, %v383
  %v462 = vpack.c.b16 %v387, %v384
  %v463 = vpack.c.b16 %v391, %v388
  %v464 = vpack.c.b16 %v392, %v389
  %v465 = vpack.c.b16 %v393, %v390
  %v550 = vunpack.c.l.b16 %v111
  %v551 = vunpack.c.l.b16 %v112
  %v552 = vunpack.c.l.b16 %v113
  %v553 = vunpack.c.l.b16 %v114
  %v554 = vunpack.c.l.b16 %v115
  %v555 = vunpack.c.l.b16 %v116
  %v556 = vunpack.c.l.b16 %v117
  %v557 = vunpack.c.l.b16 %v118
  %v558 = vunpack.c.l.b16 %v119
  %v559 = vunpack.c.l.b16 %v120
  %v560 = vunpack.c.l.b16 %v121
  %v561 = vunpack.c.l.b16 %v122
  %v562 = vunpack.c.l.b16 %v123
  %v563 = vunpack.c.l.b16 %v124
  %v564 = vunpack.c.l.b16 %v125
  %v565 = vunpack.c.l.b16 %v126
  %v566 = vunpack.c.l.b16 %v127
  %v567 = vunpack.c.l.b16 %v128
  %v568 = vunpack.c.l.b16 %v129
  %v569 = vunpack.c.l.b16 %v130
  %v570 = vunpack.c.l.b16 %v131
  %v571 = vunpack.c.l.b16 %v132
  %v572 = vunpack.c.l.b16 %v133
  %v573 = vunpack.c.l.b16 %v134
  %v574 = vunpack.c.l.b16 %v135
  %v575 = vunpack.c.l.b16 %v136
  %v576 = vunpack.c.l.b16 %v137
  %v577 = vunpack.c.l.b16 %v138
  %v578 = vunpack.c.l.b16 %v139
  %v579 = vunpack.c.l.b16 %v140
  %v580 = vunpack.c.l.b16 %v141
  %v581 = vunpack.c.l.b16 %v142
  %v582 = vunpack.c.l.b16 %v143
  %v583 = vunpack.c.l.b16 %v144
  %v584 = vunpack.c.l.b16 %v145
  %v585 = vunpack.c.l.b16 %v146
  %v586 = vpack.c.b16 %v551, %v550
  %v587 = vpack.c.b16 %v553, %v552
  %v588 = vpack.c.b16 %v555, %v554
  %v589 = vpack.c.b16 %v557, %v556
  %v590 = vpack.c.b16 %v559, %v558
  %v591 = vpack.c.b16 %v561, %v560
  %v592 = vpack.c.b16 %v563, %v562
  %v593 = vpack.c.b16 %v565, %v564
  %v594 = vpack.c.b16 %v567, %v566
  %v595 = vpack.c.b16 %v569, %v568
  %v596 = vpack.c.b16 %v571, %v570
  %v597 = vpack.c.b16 %v573, %v572
  %v598 = vpack.c.b16 %v575, %v574
  %v599 = vpack.c.b16 %v577, %v576
  %v600 = vpack.c.b16 %v579, %v578
  %v601 = vpack.c.b16 %v581, %v580
  %v602 = vpack.c.b16 %v583, %v582
  %v603 = vpack.c.b16 %v585, %v584
  %vm622 = vcmask 261120
  %v624 = vsel %vm622, %v396, 0
  %v627 = vsel %vm622, %v399, 0
  %v630 = vsel %vm622, %v402, 0
  %v633 = vsel %vm622, %v405, 0
  %v636 = vsel %vm622, %v408, 0
  %v639 = vsel %vm622, %v411, 0
  %v642 = vsel %vm622, %v414, 0
  %v645 = vsel %vm622, %v417, 0
  %v648 = vsel %vm622, %v420, 0
  %v651 = vsel %vm622, %v423, 0
  %v654 = vsel %vm622, %v426, 0
  %v657 = vsel %vm622, %v429, 0
  %v660 = vsel %vm622, %v432, 0
  %v663 = vsel %vm622, %v435, 0
  %v666 = vsel %vm622, %v438, 0
  %v669 = vsel %vm622, %v441, 0
  %v672 = vsel %vm622, %v444, 0
  %v675 = vsel %vm622, %v447, 0
  %v678 = vsel %vm622, %v450, 0
  %v681 = vsel %vm622, %v453, 0
  %v684 = vsel %vm622, %v456, 0
  %v687 = vsel %vm622, %v459, 0
  %v690 = vsel %vm622, %v462, 0
  %v693 = vsel %vm622, %v465, 0
  %695 = vmatprep.subr.bf16.mxu0 0
  %696 = vmatpush1.bf16.msra.mxu0 %v586
  %697 = vmatprep.subr.bf16.mxu0 0
  %698 = vmatpush1.bf16.msra.mxu0 %v587
  %699 = vmatprep.subr.bf16.mxu0 0
  %700 = vmatpush1.bf16.msra.mxu0 %v588
  %701 = vmatprep.subr.bf16.mxu0 0
  %702 = vmatpush1.bf16.msra.mxu0 %v589
  %703 = vmatprep.subr.bf16.mxu0 0
  %704 = vmatpush1.bf16.msra.mxu0 %v590
  %705 = vmatprep.subr.bf16.mxu0 0
  %706 = vmatpush1.bf16.msra.mxu0 %v591
  %707 = vmatprep.subr.bf16.mxu0 0
  %708 = vmatpush1.bf16.msra.mxu0 %v592
  %709 = vmatprep.subr.bf16.mxu0 0
  %710 = vmatpush1.bf16.msra.mxu0 %v593
  %711 = vmatprep.subr.bf16.mxu0 0
  %712 = vmatpush1.bf16.msra.mxu0 %v594
  %713 = vmatprep.subr.bf16.mxu0 0
  %714 = vmatpush1.bf16.msra.mxu0 %v595
  %715 = vmatprep.subr.bf16.mxu0 0
  %716 = vmatpush1.bf16.msra.mxu0 %v596
  %717 = vmatprep.subr.bf16.mxu0 0
  %718 = vmatpush1.bf16.msra.mxu0 %v597
  %719 = vmatprep.subr.bf16.mxu0 0
  %720 = vmatpush1.bf16.msra.mxu0 %v598
  %721 = vmatprep.subr.bf16.mxu0 0
  %722 = vmatpush1.bf16.msra.mxu0 %v599
  %723 = vmatprep.subr.bf16.mxu0 0
  %724 = vmatpush1.bf16.msra.mxu0 %v600
  %725 = vmatprep.subr.bf16.mxu0 0
  %726 = vmatpush1.bf16.msra.mxu0 %v601
  %727 = vmatprep.mubr.bf16.mxu0 %v395
  %728 = vmatmul.mubr.bf16.gmra.mrb[0].mxu0 %v394
  %v729 = vpop.f32.mrb[0].mxu0
  %v730 = vadd.f32 %v152, %v729
  %v731 = vpop.f32.mrb[0].mxu0
  %v732 = vpop.f32.mrb[0].mxu0
  %v733 = vadd.f32 %v152, %v732
  %v734 = vpop.f32.mrb[0].mxu0
  %735 = vmatprep.mubr.bf16.mxu0 %v398
  %736 = vmatmul.mubr.bf16.gmra.mrb[0].mxu0 %v397
  %v737 = vpop.f32.mrb[0].mxu0
  %v738 = vadd.f32 %v152, %v737
  %v739 = vpop.f32.mrb[0].mxu0
  %v740 = vpop.f32.mrb[0].mxu0
  %v741 = vadd.f32 %v152, %v740
  %v742 = vpop.f32.mrb[0].mxu0
  %743 = vmatprep.mubr.bf16.mxu0 %v401
  %744 = vmatmul.mubr.bf16.gmra.mrb[0].mxu0 %v400
  %v745 = vpop.f32.mrb[0].mxu0
  %v746 = vadd.f32 %v152, %v745
  %v747 = vpop.f32.mrb[0].mxu0
  %v748 = vpop.f32.mrb[0].mxu0
  %v749 = vadd.f32 %v152, %v748
  %v750 = vpop.f32.mrb[0].mxu0
  %751 = vmatprep.mubr.bf16.mxu0 %v404
  %752 = vmatmul.mubr.bf16.gmra.mrb[0].mxu0 %v403
  %v753 = vpop.f32.mrb[0].mxu0
  %v754 = vadd.f32 %v152, %v753
  %v755 = vpop.f32.mrb[0].mxu0
  %v756 = vpop.f32.mrb[0].mxu0
  %v757 = vadd.f32 %v152, %v756
  %v758 = vpop.f32.mrb[0].mxu0
  %759 = vmatprep.mubr.bf16.mxu0 %v407
  %760 = vmatmul.mubr.bf16.gmra.mrb[0].mxu0 %v406
  %v761 = vpop.f32.mrb[0].mxu0
  %v762 = vadd.f32 %v152, %v761
  %v763 = vpop.f32.mrb[0].mxu0
  %v764 = vpop.f32.mrb[0].mxu0
  %v765 = vadd.f32 %v152, %v764
  %v766 = vpop.f32.mrb[0].mxu0
  %767 = vmatprep.mubr.bf16.mxu0 %v410
  %768 = vmatmul.mubr.bf16.gmra.mrb[0].mxu0 %v409
  %v769 = vpop.f32.mrb[0].mxu0
  %v770 = vadd.f32 %v152, %v769
  %v771 = vpop.f32.mrb[0].mxu0
  %v772 = vpop.f32.mrb[0].mxu0
  %v773 = vadd.f32 %v152, %v772
  %v774 = vpop.f32.mrb[0].mxu0
  %775 = vmatprep.mubr.bf16.mxu0 %v413
  %776 = vmatmul.mubr.bf16.gmra.mrb[0].mxu0 %v412
  %v777 = vpop.f32.mrb[0].mxu0
  %v778 = vadd.f32 %v152, %v777
  %v779 = vpop.f32.mrb[0].mxu0
  %v780 = vpop.f32.mrb[0].mxu0
  %v781 = vadd.f32 %v152, %v780
  %v782 = vpop.f32.mrb[0].mxu0
  %783 = vmatprep.mubr.bf16.mxu0 %v416
  %784 = vmatmul.mubr.bf16.gmra.mrb[0].mxu0 %v415
  %v785 = vpop.f32.mrb[0].mxu0
  %v786 = vadd.f32 %v152, %v785
  %v787 = vpop.f32.mrb[0].mxu0
  %v788 = vpop.f32.mrb[0].mxu0
  %v789 = vadd.f32 %v152, %v788
  %v790 = vpop.f32.mrb[0].mxu0
  %791 = vmatprep.mubr.bf16.mxu0 %v419
  %792 = vmatmul.mubr.bf16.gmra.mrb[0].mxu0 %v418
  %v793 = vpop.f32.mrb[0].mxu0
  %v794 = vadd.f32 %v152, %v793
  %v795 = vpop.f32.mrb[0].mxu0
  %v796 = vpop.f32.mrb[0].mxu0
  %v797 = vadd.f32 %v152, %v796
  %v798 = vpop.f32.mrb[0].mxu0
  %799 = vmatprep.mubr.bf16.mxu0 %v422
  %800 = vmatmul.mubr.bf16.gmra.mrb[0].mxu0 %v421
  %v801 = vpop.f32.mrb[0].mxu0
  %v802 = vadd.f32 %v152, %v801
  %v803 = vpop.f32.mrb[0].mxu0
  %v804 = vpop.f32.mrb[0].mxu0
  %v805 = vadd.f32 %v152, %v804
  %v806 = vpop.f32.mrb[0].mxu0
  %807 = vmatprep.mubr.bf16.mxu0 %v425
  %808 = vmatmul.mubr.bf16.gmra.mrb[0].mxu0 %v424
  %v809 = vpop.f32.mrb[0].mxu0
  %v810 = vadd.f32 %v152, %v809
  %v811 = vpop.f32.mrb[0].mxu0
  %v812 = vpop.f32.mrb[0].mxu0
  %v813 = vadd.f32 %v152, %v812
  %v814 = vpop.f32.mrb[0].mxu0
  %815 = vmatprep.mubr.bf16.mxu0 %v428
  %816 = vmatmul.mubr.bf16.gmra.mrb[0].mxu0 %v427
  %v817 = vpop.f32.mrb[0].mxu0
  %v818 = vadd.f32 %v152, %v817
  %v819 = vpop.f32.mrb[0].mxu0
  %v820 = vpop.f32.mrb[0].mxu0
  %v821 = vadd.f32 %v152, %v820
  %v822 = vpop.f32.mrb[0].mxu0
  %823 = vmatprep.mubr.bf16.mxu0 %v431
  %824 = vmatmul.mubr.bf16.gmra.mrb[0].mxu0 %v430
  %v825 = vpop.f32.mrb[0].mxu0
  %v826 = vadd.f32 %v152, %v825
  %v827 = vpop.f32.mrb[0].mxu0
  %v828 = vpop.f32.mrb[0].mxu0
  %v829 = vadd.f32 %v152, %v828
  %v830 = vpop.f32.mrb[0].mxu0
  %831 = vmatprep.mubr.bf16.mxu0 %v434
  %832 = vmatmul.mubr.bf16.gmra.mrb[0].mxu0 %v433
  %v833 = vpop.f32.mrb[0].mxu0
  %v834 = vadd.f32 %v152, %v833
  %v835 = vpop.f32.mrb[0].mxu0
  %v836 = vpop.f32.mrb[0].mxu0
  %v837 = vadd.f32 %v152, %v836
  %v838 = vpop.f32.mrb[0].mxu0
  %839 = vmatprep.mubr.bf16.mxu0 %v437
  %840 = vmatmul.mubr.bf16.gmra.mrb[0].mxu0 %v436
  %v841 = vpop.f32.mrb[0].mxu0
  %v842 = vadd.f32 %v152, %v841
  %v843 = vpop.f32.mrb[0].mxu0
  %v844 = vpop.f32.mrb[0].mxu0
  %v845 = vadd.f32 %v152, %v844
  %v846 = vpop.f32.mrb[0].mxu0
  %847 = vmatprep.mubr.bf16.mxu0 %v440
  %848 = vmatmul.mubr.bf16.gmra.mrb[0].mxu0 %v439
  %v849 = vpop.f32.mrb[0].mxu0
  %v850 = vadd.f32 %v152, %v849
  %v851 = vpop.f32.mrb[0].mxu0
  %v852 = vpop.f32.mrb[0].mxu0
  %v853 = vadd.f32 %v152, %v852
  %v854 = vpop.f32.mrb[0].mxu0
  %855 = vmatprep.mubr.bf16.mxu0 %v443
  %856 = vmatmul.mubr.bf16.gmra.mrb[0].mxu0 %v442
  %v857 = vpop.f32.mrb[0].mxu0
  %v858 = vadd.f32 %v152, %v857
  %v859 = vpop.f32.mrb[0].mxu0
  %v860 = vpop.f32.mrb[0].mxu0
  %v861 = vadd.f32 %v152, %v860
  %v862 = vpop.f32.mrb[0].mxu0
  %863 = vmatprep.mubr.bf16.mxu0 %v446
  %864 = vmatmul.mubr.bf16.gmra.mrb[0].mxu0 %v445
  %v865 = vpop.f32.mrb[0].mxu0
  %v866 = vadd.f32 %v152, %v865
  %v867 = vpop.f32.mrb[0].mxu0
  %v868 = vpop.f32.mrb[0].mxu0
  %v869 = vadd.f32 %v152, %v868
  %v870 = vpop.f32.mrb[0].mxu0
  %871 = vmatprep.mubr.bf16.mxu0 %v449
  %872 = vmatmul.mubr.bf16.gmra.mrb[0].mxu0 %v448
  %v873 = vpop.f32.mrb[0].mxu0
  %v874 = vadd.f32 %v152, %v873
  %v875 = vpop.f32.mrb[0].mxu0
  %v876 = vpop.f32.mrb[0].mxu0
  %v877 = vadd.f32 %v152, %v876
  %v878 = vpop.f32.mrb[0].mxu0
  %879 = vmatprep.mubr.bf16.mxu0 %v452
  %880 = vmatmul.mubr.bf16.gmra.mrb[0].mxu0 %v451
  %v881 = vpop.f32.mrb[0].mxu0
  %v882 = vadd.f32 %v152, %v881
  %v883 = vpop.f32.mrb[0].mxu0
  %v884 = vpop.f32.mrb[0].mxu0
  %v885 = vadd.f32 %v152, %v884
  %v886 = vpop.f32.mrb[0].mxu0
  %887 = vmatprep.mubr.bf16.mxu0 %v455
  %888 = vmatmul.mubr.bf16.gmra.mrb[0].mxu0 %v454
  %v889 = vpop.f32.mrb[0].mxu0
  %v890 = vadd.f32 %v152, %v889
  %v891 = vpop.f32.mrb[0].mxu0
  %v892 = vpop.f32.mrb[0].mxu0
  %v893 = vadd.f32 %v152, %v892
  %v894 = vpop.f32.mrb[0].mxu0
  %895 = vmatprep.mubr.bf16.mxu0 %v458
  %896 = vmatmul.mubr.bf16.gmra.mrb[0].mxu0 %v457
  %v897 = vpop.f32.mrb[0].mxu0
  %v898 = vadd.f32 %v152, %v897
  %v899 = vpop.f32.mrb[0].mxu0
  %v900 = vpop.f32.mrb[0].mxu0
  %v901 = vadd.f32 %v152, %v900
  %v902 = vpop.f32.mrb[0].mxu0
  %903 = vmatprep.mubr.bf16.mxu0 %v461
  %904 = vmatmul.mubr.bf16.gmra.mrb[0].mxu0 %v460
  %v905 = vpop.f32.mrb[0].mxu0
  %v906 = vadd.f32 %v152, %v905
  %v907 = vpop.f32.mrb[0].mxu0
  %v908 = vpop.f32.mrb[0].mxu0
  %v909 = vadd.f32 %v152, %v908
  %v910 = vpop.f32.mrb[0].mxu0
  %911 = vmatprep.mubr.bf16.mxu0 %v464
  %912 = vmatmul.mubr.bf16.gmra.mrb[0].mxu0 %v463
  %v913 = vpop.f32.mrb[0].mxu0
  %v914 = vadd.f32 %v152, %v913
  %v915 = vpop.f32.mrb[0].mxu0
  %v916 = vpop.f32.mrb[0].mxu0
  %v917 = vadd.f32 %v152, %v916
  %v918 = vpop.f32.mrb[0].mxu0
  %919 = vdwg.mxu0
  %920 = vmatprep.subr.bf16.mxu0 0
  %921 = vmatpush1.bf16.msra.mxu0 %v602
  %922 = vmatprep.subr.bf16.mxu0 0
  %923 = vmatpush1.bf16.msra.mxu0 %v603
  %924 = vmatprep.subr.bf16.mxu0 0
  %925 = vmatpush1.bf16.msra.mxu0 0
  %926 = vmatprep.subr.bf16.mxu0 0
  %927 = vmatpush1.bf16.msra.mxu0 0
  %928 = vmatprep.subr.bf16.mxu0 0
  %929 = vmatpush1.bf16.msra.mxu0 0
  %930 = vmatprep.subr.bf16.mxu0 0
  %931 = vmatpush1.bf16.msra.mxu0 0
  %932 = vmatprep.subr.bf16.mxu0 0
  %933 = vmatpush1.bf16.msra.mxu0 0
  %934 = vmatprep.subr.bf16.mxu0 0
  %935 = vmatpush1.bf16.msra.mxu0 0
  %936 = vmatprep.subr.bf16.mxu0 0
  %937 = vmatpush1.bf16.msra.mxu0 0
  %938 = vmatprep.subr.bf16.mxu0 0
  %939 = vmatpush1.bf16.msra.mxu0 0
  %940 = vmatprep.subr.bf16.mxu0 0
  %941 = vmatpush1.bf16.msra.mxu0 0
  %942 = vmatprep.subr.bf16.mxu0 0
  %943 = vmatpush1.bf16.msra.mxu0 0
  %944 = vmatprep.subr.bf16.mxu0 0
  %945 = vmatpush1.bf16.msra.mxu0 0
  %946 = vmatprep.subr.bf16.mxu0 0
  %947 = vmatpush1.bf16.msra.mxu0 0
  %948 = vmatprep.subr.bf16.mxu0 0
  %949 = vmatpush1.bf16.msra.mxu0 0
  %950 = vmatprep.subr.bf16.mxu0 0
  %951 = vmatpush1.bf16.msra.mxu0 0
  %952 = vmatprep.mubr.bf16.mxu0 0
  %953 = vmatmul.mubr.bf16.gmra.mrb[0].mxu0 %v624
  %v954 = vpop.f32.mrb[0].mxu0
  %v955 = vadd.f32 %v730, %v954
  %v956 = vpop.f32.mrb[0].mxu0
  %v957 = vpop.f32.mrb[0].mxu0
  %v958 = vadd.f32 %v733, %v957
  %v959 = vpop.f32.mrb[0].mxu0
  %960 = vmatprep.mubr.bf16.mxu0 0
  %961 = vmatmul.mubr.bf16.gmra.mrb[0].mxu0 %v627
  %v962 = vpop.f32.mrb[0].mxu0
  %v963 = vadd.f32 %v738, %v962
  %v964 = vpop.f32.mrb[0].mxu0
  %v965 = vpop.f32.mrb[0].mxu0
  %v966 = vadd.f32 %v741, %v965
  %v967 = vpop.f32.mrb[0].mxu0
  %968 = vmatprep.mubr.bf16.mxu0 0
  %969 = vmatmul.mubr.bf16.gmra.mrb[0].mxu0 %v630
  %v970 = vpop.f32.mrb[0].mxu0
  %v971 = vadd.f32 %v746, %v970
  %v972 = vpop.f32.mrb[0].mxu0
  %v973 = vpop.f32.mrb[0].mxu0
  %v974 = vadd.f32 %v749, %v973
  %v975 = vpop.f32.mrb[0].mxu0
  %976 = vmatprep.mubr.bf16.mxu0 0
  %977 = vmatmul.mubr.bf16.gmra.mrb[0].mxu0 %v633
  %v978 = vpop.f32.mrb[0].mxu0
  %v979 = vadd.f32 %v754, %v978
  %v980 = vpop.f32.mrb[0].mxu0
  %v981 = vpop.f32.mrb[0].mxu0
  %v982 = vadd.f32 %v757, %v981
  %v983 = vpop.f32.mrb[0].mxu0
  %984 = vmatprep.mubr.bf16.mxu0 0
  %985 = vmatmul.mubr.bf16.gmra.mrb[0].mxu0 %v636
  %v986 = vpop.f32.mrb[0].mxu0
  %v987 = vadd.f32 %v762, %v986
  %v988 = vpop.f32.mrb[0].mxu0
  %v989 = vpop.f32.mrb[0].mxu0
  %v990 = vadd.f32 %v765, %v989
  %v991 = vpop.f32.mrb[0].mxu0
  %992 = vmatprep.mubr.bf16.mxu0 0
  %993 = vmatmul.mubr.bf16.gmra.mrb[0].mxu0 %v639
  %v994 = vpop.f32.mrb[0].mxu0
  %v995 = vadd.f32 %v770, %v994
  %v996 = vpop.f32.mrb[0].mxu0
  %v997 = vpop.f32.mrb[0].mxu0
  %v998 = vadd.f32 %v773, %v997
  %v999 = vpop.f32.mrb[0].mxu0
  %1000 = vmatprep.mubr.bf16.mxu0 0
  %1001 = vmatmul.mubr.bf16.gmra.mrb[0].mxu0 %v642
  %v1002 = vpop.f32.mrb[0].mxu0
  %v1003 = vadd.f32 %v778, %v1002
  %v1004 = vpop.f32.mrb[0].mxu0
  %v1005 = vpop.f32.mrb[0].mxu0
  %v1006 = vadd.f32 %v781, %v1005
  %v1007 = vpop.f32.mrb[0].mxu0
  %1008 = vmatprep.mubr.bf16.mxu0 0
  %1009 = vmatmul.mubr.bf16.gmra.mrb[0].mxu0 %v645
  %v1010 = vpop.f32.mrb[0].mxu0
  %v1011 = vadd.f32 %v786, %v1010
  %v1012 = vpop.f32.mrb[0].mxu0
  %v1013 = vpop.f32.mrb[0].mxu0
  %v1014 = vadd.f32 %v789, %v1013
  %v1015 = vpop.f32.mrb[0].mxu0
  %1016 = vmatprep.mubr.bf16.mxu0 0
  %1017 = vmatmul.mubr.bf16.gmra.mrb[0].mxu0 %v648
  %v1018 = vpop.f32.mrb[0].mxu0
  %v1019 = vadd.f32 %v794, %v1018
  %v1020 = vpop.f32.mrb[0].mxu0
  %v1021 = vpop.f32.mrb[0].mxu0
  %v1022 = vadd.f32 %v797, %v1021
  %v1023 = vpop.f32.mrb[0].mxu0
  %1024 = vmatprep.mubr.bf16.mxu0 0
  %1025 = vmatmul.mubr.bf16.gmra.mrb[0].mxu0 %v651
  %v1026 = vpop.f32.mrb[0].mxu0
  %v1027 = vadd.f32 %v802, %v1026
  %v1028 = vpop.f32.mrb[0].mxu0
  %v1029 = vpop.f32.mrb[0].mxu0
  %v1030 = vadd.f32 %v805, %v1029
  %v1031 = vpop.f32.mrb[0].mxu0
  %1032 = vmatprep.mubr.bf16.mxu0 0
  %1033 = vmatmul.mubr.bf16.gmra.mrb[0].mxu0 %v654
  %v1034 = vpop.f32.mrb[0].mxu0
  %v1035 = vadd.f32 %v810, %v1034
  %v1036 = vpop.f32.mrb[0].mxu0
  %v1037 = vpop.f32.mrb[0].mxu0
  %v1038 = vadd.f32 %v813, %v1037
  %v1039 = vpop.f32.mrb[0].mxu0
  %1040 = vmatprep.mubr.bf16.mxu0 0
  %1041 = vmatmul.mubr.bf16.gmra.mrb[0].mxu0 %v657
  %v1042 = vpop.f32.mrb[0].mxu0
  %v1043 = vadd.f32 %v818, %v1042
  %v1044 = vpop.f32.mrb[0].mxu0
  %v1045 = vpop.f32.mrb[0].mxu0
  %v1046 = vadd.f32 %v821, %v1045
  %v1047 = vpop.f32.mrb[0].mxu0
  %1048 = vmatprep.mubr.bf16.mxu0 0
  %1049 = vmatmul.mubr.bf16.gmra.mrb[0].mxu0 %v660
  %v1050 = vpop.f32.mrb[0].mxu0
  %v1051 = vadd.f32 %v826, %v1050
  %v1052 = vpop.f32.mrb[0].mxu0
  %v1053 = vpop.f32.mrb[0].mxu0
  %v1054 = vadd.f32 %v829, %v1053
  %v1055 = vpop.f32.mrb[0].mxu0
  %1056 = vmatprep.mubr.bf16.mxu0 0
  %1057 = vmatmul.mubr.bf16.gmra.mrb[0].mxu0 %v663
  %v1058 = vpop.f32.mrb[0].mxu0
  %v1059 = vadd.f32 %v834, %v1058
  %v1060 = vpop.f32.mrb[0].mxu0
  %v1061 = vpop.f32.mrb[0].mxu0
  %v1062 = vadd.f32 %v837, %v1061
  %v1063 = vpop.f32.mrb[0].mxu0
  %1064 = vmatprep.mubr.bf16.mxu0 0
  %1065 = vmatmul.mubr.bf16.gmra.mrb[0].mxu0 %v666
  %v1066 = vpop.f32.mrb[0].mxu0
  %v1067 = vadd.f32 %v842, %v1066
  %v1068 = vpop.f32.mrb[0].mxu0
  %v1069 = vpop.f32.mrb[0].mxu0
  %v1070 = vadd.f32 %v845, %v1069
  %v1071 = vpop.f32.mrb[0].mxu0
  %1072 = vmatprep.mubr.bf16.mxu0 0
  %1073 = vmatmul.mubr.bf16.gmra.mrb[0].mxu0 %v669
  %v1074 = vpop.f32.mrb[0].mxu0
  %v1075 = vadd.f32 %v850, %v1074
  %v1076 = vpop.f32.mrb[0].mxu0
  %v1077 = vpop.f32.mrb[0].mxu0
  %v1078 = vadd.f32 %v853, %v1077
  %v1079 = vpop.f32.mrb[0].mxu0
  %1080 = vmatprep.mubr.bf16.mxu0 0
  %1081 = vmatmul.mubr.bf16.gmra.mrb[0].mxu0 %v672
  %v1082 = vpop.f32.mrb[0].mxu0
  %v1083 = vadd.f32 %v858, %v1082
  %v1084 = vpop.f32.mrb[0].mxu0
  %v1085 = vpop.f32.mrb[0].mxu0
  %v1086 = vadd.f32 %v861, %v1085
  %v1087 = vpop.f32.mrb[0].mxu0
  %1088 = vmatprep.mubr.bf16.mxu0 0
  %1089 = vmatmul.mubr.bf16.gmra.mrb[0].mxu0 %v675
  %v1090 = vpop.f32.mrb[0].mxu0
  %v1091 = vadd.f32 %v866, %v1090
  %v1092 = vpop.f32.mrb[0].mxu0
  %v1093 = vpop.f32.mrb[0].mxu0
  %v1094 = vadd.f32 %v869, %v1093
  %v1095 = vpop.f32.mrb[0].mxu0
  %1096 = vmatprep.mubr.bf16.mxu0 0
  %1097 = vmatmul.mubr.bf16.gmra.mrb[0].mxu0 %v678
  %v1098 = vpop.f32.mrb[0].mxu0
  %v1099 = vadd.f32 %v874, %v1098
  %v1100 = vpop.f32.mrb[0].mxu0
  %v1101 = vpop.f32.mrb[0].mxu0
  %v1102 = vadd.f32 %v877, %v1101
  %v1103 = vpop.f32.mrb[0].mxu0
  %1104 = vmatprep.mubr.bf16.mxu0 0
  %1105 = vmatmul.mubr.bf16.gmra.mrb[0].mxu0 %v681
  %v1106 = vpop.f32.mrb[0].mxu0
  %v1107 = vadd.f32 %v882, %v1106
  %v1108 = vpop.f32.mrb[0].mxu0
  %v1109 = vpop.f32.mrb[0].mxu0
  %v1110 = vadd.f32 %v885, %v1109
  %v1111 = vpop.f32.mrb[0].mxu0
  %1112 = vmatprep.mubr.bf16.mxu0 0
  %1113 = vmatmul.mubr.bf16.gmra.mrb[0].mxu0 %v684
  %v1114 = vpop.f32.mrb[0].mxu0
  %v1115 = vadd.f32 %v890, %v1114
  %v1116 = vpop.f32.mrb[0].mxu0
  %v1117 = vpop.f32.mrb[0].mxu0
  %v1118 = vadd.f32 %v893, %v1117
  %v1119 = vpop.f32.mrb[0].mxu0
  %1120 = vmatprep.mubr.bf16.mxu0 0
  %1121 = vmatmul.mubr.bf16.gmra.mrb[0].mxu0 %v687
  %v1122 = vpop.f32.mrb[0].mxu0
  %v1123 = vadd.f32 %v898, %v1122
  %v1124 = vpop.f32.mrb[0].mxu0
  %v1125 = vpop.f32.mrb[0].mxu0
  %v1126 = vadd.f32 %v901, %v1125
  %v1127 = vpop.f32.mrb[0].mxu0
  %1128 = vmatprep.mubr.bf16.mxu0 0
  %1129 = vmatmul.mubr.bf16.gmra.mrb[0].mxu0 %v690
  %v1130 = vpop.f32.mrb[0].mxu0
  %v1131 = vadd.f32 %v906, %v1130
  %v1132 = vpop.f32.mrb[0].mxu0
  %v1133 = vpop.f32.mrb[0].mxu0
  %v1134 = vadd.f32 %v909, %v1133
  %v1135 = vpop.f32.mrb[0].mxu0
  %1136 = vmatprep.mubr.bf16.mxu0 0
  %1137 = vmatmul.mubr.bf16.gmra.mrb[0].mxu0 %v693
  %v1138 = vpop.f32.mrb[0].mxu0
  %v1139 = vadd.f32 %v914, %v1138
  %v1140 = vpop.f32.mrb[0].mxu0
  %v1141 = vpop.f32.mrb[0].mxu0
  %v1142 = vadd.f32 %v917, %v1141
  %v1143 = vpop.f32.mrb[0].mxu0
  %1144 = vdwg.mxu0
  %v1145 = vmax.f32 %v955, 0.0
  %v1146 = vmax.f32 %v958, 0.0
  %v1147 = vmax.f32 %v963, 0.0
  %v1148 = vmax.f32 %v966, 0.0
  %v1149 = vmax.f32 %v971, 0.0
  %v1150 = vmax.f32 %v974, 0.0
  %v1151 = vmax.f32 %v979, 0.0
  %v1152 = vmax.f32 %v982, 0.0
  %v1153 = vmax.f32 %v987, 0.0
  %v1154 = vmax.f32 %v990, 0.0
  %v1155 = vmax.f32 %v995, 0.0
  %v1156 = vmax.f32 %v998, 0.0
  %v1157 = vmax.f32 %v1003, 0.0
  %v1158 = vmax.f32 %v1006, 0.0
  %v1159 = vmax.f32 %v1011, 0.0
  %v1160 = vmax.f32 %v1014, 0.0
  %v1161 = vmax.f32 %v1019, 0.0
  %v1162 = vmax.f32 %v1022, 0.0
  %v1163 = vmax.f32 %v1027, 0.0
  %v1164 = vmax.f32 %v1030, 0.0
  %v1165 = vmax.f32 %v1035, 0.0
  %v1166 = vmax.f32 %v1038, 0.0
  %v1167 = vmax.f32 %v1043, 0.0
  %v1168 = vmax.f32 %v1046, 0.0
  %v1169 = vmax.f32 %v1051, 0.0
  %v1170 = vmax.f32 %v1054, 0.0
  %v1171 = vmax.f32 %v1059, 0.0
  %v1172 = vmax.f32 %v1062, 0.0
  %v1173 = vmax.f32 %v1067, 0.0
  %v1174 = vmax.f32 %v1070, 0.0
  %v1175 = vmax.f32 %v1075, 0.0
  %v1176 = vmax.f32 %v1078, 0.0
  %v1177 = vmax.f32 %v1083, 0.0
  %v1178 = vmax.f32 %v1086, 0.0
  %v1179 = vmax.f32 %v1091, 0.0
  %v1180 = vmax.f32 %v1094, 0.0
  %v1181 = vmax.f32 %v1099, 0.0
  %v1182 = vmax.f32 %v1102, 0.0
  %v1183 = vmax.f32 %v1107, 0.0
  %v1184 = vmax.f32 %v1110, 0.0
  %v1185 = vmax.f32 %v1115, 0.0
  %v1186 = vmax.f32 %v1118, 0.0
  %v1187 = vmax.f32 %v1123, 0.0
  %v1188 = vmax.f32 %v1126, 0.0
  %v1189 = vmax.f32 %v1131, 0.0
  %v1190 = vmax.f32 %v1134, 0.0
  %v1191 = vmax.f32 %v1139, 0.0
  %v1192 = vmax.f32 %v1142, 0.0
  %v1193 = vpack.c.bf16 %v1146, %v1145
  %v1194 = vpack.c.bf16 %v1148, %v1147
  %v1195 = vpack.c.bf16 %v1150, %v1149
  %v1196 = vpack.c.bf16 %v1152, %v1151
  %v1197 = vpack.c.bf16 %v1154, %v1153
  %v1198 = vpack.c.bf16 %v1156, %v1155
  %v1199 = vpack.c.bf16 %v1158, %v1157
  %v1200 = vpack.c.bf16 %v1160, %v1159
  %v1201 = vpack.c.bf16 %v1162, %v1161
  %v1202 = vpack.c.bf16 %v1164, %v1163
  %v1203 = vpack.c.bf16 %v1166, %v1165
  %v1204 = vpack.c.bf16 %v1168, %v1167
  %v1205 = vpack.c.bf16 %v1170, %v1169
  %v1206 = vpack.c.bf16 %v1172, %v1171
  %v1207 = vpack.c.bf16 %v1174, %v1173
  %v1208 = vpack.c.bf16 %v1176, %v1175
  %v1209 = vpack.c.bf16 %v1178, %v1177
  %v1210 = vpack.c.bf16 %v1180, %v1179
  %v1211 = vpack.c.bf16 %v1182, %v1181
  %v1212 = vpack.c.bf16 %v1184, %v1183
  %v1213 = vpack.c.bf16 %v1186, %v1185
  %v1214 = vpack.c.bf16 %v1188, %v1187
  %v1215 = vpack.c.bf16 %v1190, %v1189
  %v1216 = vpack.c.bf16 %v1192, %v1191
  %v1241 = vunpack.c.l.b16 %v1193
  %v1242 = vunpack.c.h.b16 %v1193
  %v1243 = vunpack.c.l.b16 %v1194
  %v1244 = vunpack.c.h.b16 %v1194
  %v1245 = vunpack.c.l.b16 %v1195
  %v1246 = vunpack.c.h.b16 %v1195
  %v1247 = vunpack.c.l.b16 %v1196
  %v1248 = vunpack.c.h.b16 %v1196
  %v1249 = vunpack.c.l.b16 %v1197
  %v1250 = vunpack.c.h.b16 %v1197
  %v1251 = vunpack.c.l.b16 %v1198
  %v1252 = vunpack.c.h.b16 %v1198
  %v1253 = vunpack.c.l.b16 %v1199
  %v1254 = vunpack.c.h.b16 %v1199
  %v1255 = vunpack.c.l.b16 %v1200
  %v1256 = vunpack.c.h.b16 %v1200
  %v1257 = vunpack.c.l.b16 %v1201
  %v1258 = vunpack.c.h.b16 %v1201
  %v1259 = vunpack.c.l.b16 %v1202
  %v1260 = vunpack.c.h.b16 %v1202
  %v1261 = vunpack.c.l.b16 %v1203
  %v1262 = vunpack.c.h.b16 %v1203
  %v1263 = vunpack.c.l.b16 %v1204
  %v1264 = vunpack.c.h.b16 %v1204
  %v1265 = vunpack.c.l.b16 %v1205
  %v1266 = vunpack.c.h.b16 %v1205
  %v1267 = vunpack.c.l.b16 %v1206
  %v1268 = vunpack.c.h.b16 %v1206
  %v1269 = vunpack.c.l.b16 %v1207
  %v1270 = vunpack.c.h.b16 %v1207
  %v1271 = vunpack.c.l.b16 %v1208
  %v1272 = vunpack.c.h.b16 %v1208
  %v1273 = vunpack.c.l.b16 %v1209
  %v1274 = vunpack.c.h.b16 %v1209
  %v1275 = vunpack.c.l.b16 %v1210
  %v1276 = vunpack.c.h.b16 %v1210
  %v1277 = vunpack.c.l.b16 %v1211
  %v1278 = vunpack.c.h.b16 %v1211
  %v1279 = vunpack.c.l.b16 %v1212
  %v1280 = vunpack.c.h.b16 %v1212
  %v1281 = vunpack.c.l.b16 %v1213
  %v1282 = vunpack.c.h.b16 %v1213
  %v1283 = vunpack.c.l.b16 %v1214
  %v1284 = vunpack.c.h.b16 %v1214
  %v1285 = vunpack.c.l.b16 %v1215
  %v1286 = vunpack.c.h.b16 %v1215
  %v1287 = vunpack.c.l.b16 %v1216
  %v1288 = vunpack.c.h.b16 %v1216
  %v1289 = vpack.c.b16 %v1241, %v1241
  %v1290 = vpack.c.b16 %v1242, %v1242
  %v1291 = vpack.c.b16 %v1243, %v1243
  %v1292 = vpack.c.b16 %v1244, %v1244
  %v1293 = vpack.c.b16 %v1245, %v1245
  %v1294 = vpack.c.b16 %v1246, %v1246
  %v1295 = vpack.c.b16 %v1247, %v1247
  %v1296 = vpack.c.b16 %v1248, %v1248
  %v1297 = vpack.c.b16 %v1249, %v1249
  %v1298 = vpack.c.b16 %v1250, %v1250
  %v1299 = vpack.c.b16 %v1251, %v1251
  %v1300 = vpack.c.b16 %v1252, %v1252
  %v1301 = vpack.c.b16 %v1253, %v1253
  %v1302 = vpack.c.b16 %v1254, %v1254
  %v1303 = vpack.c.b16 %v1255, %v1255
  %v1304 = vpack.c.b16 %v1256, %v1256
  %v1305 = vpack.c.b16 %v1257, %v1257
  %v1306 = vpack.c.b16 %v1258, %v1258
  %v1307 = vpack.c.b16 %v1259, %v1259
  %v1308 = vpack.c.b16 %v1260, %v1260
  %v1309 = vpack.c.b16 %v1261, %v1261
  %v1310 = vpack.c.b16 %v1262, %v1262
  %v1311 = vpack.c.b16 %v1263, %v1263
  %v1312 = vpack.c.b16 %v1264, %v1264
  %v1313 = vpack.c.b16 %v1265, %v1265
  %v1314 = vpack.c.b16 %v1266, %v1266
  %v1315 = vpack.c.b16 %v1267, %v1267
  %v1316 = vpack.c.b16 %v1268, %v1268
  %v1317 = vpack.c.b16 %v1269, %v1269
  %v1318 = vpack.c.b16 %v1270, %v1270
  %v1319 = vpack.c.b16 %v1271, %v1271
  %v1320 = vpack.c.b16 %v1272, %v1272
  %v1321 = vpack.c.b16 %v1273, %v1273
  %v1322 = vpack.c.b16 %v1274, %v1274
  %v1323 = vpack.c.b16 %v1275, %v1275
  %v1324 = vpack.c.b16 %v1276, %v1276
  %v1325 = vpack.c.b16 %v1277, %v1277
  %v1326 = vpack.c.b16 %v1278, %v1278
  %v1327 = vpack.c.b16 %v1279, %v1279
  %v1328 = vpack.c.b16 %v1280, %v1280
  %v1329 = vpack.c.b16 %v1281, %v1281
  %v1330 = vpack.c.b16 %v1282, %v1282
  %v1331 = vpack.c.b16 %v1283, %v1283
  %v1332 = vpack.c.b16 %v1284, %v1284
  %v1333 = vpack.c.b16 %v1285, %v1285
  %v1334 = vpack.c.b16 %v1286, %v1286
  %v1335 = vpack.c.b16 %v1287, %v1287
  %v1336 = vpack.c.b16 %v1288, %v1288
  %vm1385 = vcmask 519168
  %1386 = vst.msk [vmem:[%s3] sm:$0xf] %vm1385, %v1289
  %1387 = vst.msk [vmem:[%s3 + $0x4] sm:$0xf] %vm1385, %v1290
  %1388 = vst.msk [vmem:[%s3 + $0x8] sm:$0xf] %vm1385, %v1291
  %1389 = vst.msk [vmem:[%s3 + $0xc] sm:$0xf] %vm1385, %v1292
  %1390 = vst.msk [vmem:[%s3 + $0x10] sm:$0xf] %vm1385, %v1293
  %1391 = vst.msk [vmem:[%s3 + $0x14] sm:$0xf] %vm1385, %v1294
  %1392 = vst.msk [vmem:[%s3 + $0x18] sm:$0xf] %vm1385, %v1295
  %1393 = vst.msk [vmem:[%s3 + $0x1c] sm:$0xf] %vm1385, %v1296
  %1394 = vst.msk [vmem:[%s3 + $0x20] sm:$0xf] %vm1385, %v1297
  %1395 = vst.msk [vmem:[%s3 + $0x24] sm:$0xf] %vm1385, %v1298
  %1396 = vst.msk [vmem:[%s3 + $0x28] sm:$0xf] %vm1385, %v1299
  %1397 = vst.msk [vmem:[%s3 + $0x2c] sm:$0xf] %vm1385, %v1300
  %1398 = vst.msk [vmem:[%s3 + $0x30] sm:$0xf] %vm1385, %v1301
  %1399 = vst.msk [vmem:[%s3 + $0x34] sm:$0xf] %vm1385, %v1302
  %1400 = vst.msk [vmem:[%s3 + $0x38] sm:$0xf] %vm1385, %v1303
  %1401 = vst.msk [vmem:[%s3 + $0x3c] sm:$0xf] %vm1385, %v1304
  %1402 = vst.msk [vmem:[%s3 + $0x40] sm:$0xf] %vm1385, %v1305
  %1403 = vst.msk [vmem:[%s3 + $0x44] sm:$0xf] %vm1385, %v1306
  %1404 = vst.msk [vmem:[%s3 + $0x48] sm:$0xf] %vm1385, %v1307
  %1405 = vst.msk [vmem:[%s3 + $0x4c] sm:$0xf] %vm1385, %v1308
  %1406 = vst.msk [vmem:[%s3 + $0x50] sm:$0xf] %vm1385, %v1309
  %1407 = vst.msk [vmem:[%s3 + $0x54] sm:$0xf] %vm1385, %v1310
  %1408 = vst.msk [vmem:[%s3 + $0x58] sm:$0xf] %vm1385, %v1311
  %1409 = vst.msk [vmem:[%s3 + $0x5c] sm:$0xf] %vm1385, %v1312
  %1410 = vst.msk [vmem:[%s3 + $0x60] sm:$0xf] %vm1385, %v1313
  %1411 = vst.msk [vmem:[%s3 + $0x64] sm:$0xf] %vm1385, %v1314
  %1412 = vst.msk [vmem:[%s3 + $0x68] sm:$0xf] %vm1385, %v1315
  %1413 = vst.msk [vmem:[%s3 + $0x6c] sm:$0xf] %vm1385, %v1316
  %1414 = vst.msk [vmem:[%s3 + $0x70] sm:$0xf] %vm1385, %v1317
  %1415 = vst.msk [vmem:[%s3 + $0x74] sm:$0xf] %vm1385, %v1318
  %1416 = vst.msk [vmem:[%s3 + $0x78] sm:$0xf] %vm1385, %v1319
  %1417 = vst.msk [vmem:[%s3 + $0x7c] sm:$0xf] %vm1385, %v1320
  %1418 = vst.msk [vmem:[%s3 + $0x80] sm:$0xf] %vm1385, %v1321
  %1419 = vst.msk [vmem:[%s3 + $0x84] sm:$0xf] %vm1385, %v1322
  %1420 = vst.msk [vmem:[%s3 + $0x88] sm:$0xf] %vm1385, %v1323
  %1421 = vst.msk [vmem:[%s3 + $0x8c] sm:$0xf] %vm1385, %v1324
  %1422 = vst.msk [vmem:[%s3 + $0x90] sm:$0xf] %vm1385, %v1325
  %1423 = vst.msk [vmem:[%s3 + $0x94] sm:$0xf] %vm1385, %v1326
  %1424 = vst.msk [vmem:[%s3 + $0x98] sm:$0xf] %vm1385, %v1327
  %1425 = vst.msk [vmem:[%s3 + $0x9c] sm:$0xf] %vm1385, %v1328
  %1426 = vst.msk [vmem:[%s3 + $0xa0] sm:$0xf] %vm1385, %v1329
  %1427 = vst.msk [vmem:[%s3 + $0xa4] sm:$0xf] %vm1385, %v1330
  %1428 = vst.msk [vmem:[%s3 + $0xa8] sm:$0xf] %vm1385, %v1331
  %1429 = vst.msk [vmem:[%s3 + $0xac] sm:$0xf] %vm1385, %v1332
  %1430 = vst.msk [vmem:[%s3 + $0xb0] sm:$0xf] %vm1385, %v1333
  %1431 = vst.msk [vmem:[%s3 + $0xb4] sm:$0xf] %vm1385, %v1334
  %1432 = vst.msk [vmem:[%s3 + $0xb8] sm:$0xf] %vm1385, %v1335
  %1433 = vst.msk [vmem:[%s3 + $0xbc] sm:$0xf] %vm1385, %v1336
  // Predicated region
  $region14: #{speinet_forward.9} parent=0 // pred_check
    _
  $region15: #{speinet_forward.9} parent=0 // pred_check_branch
    %1435 = sbr.rel (0) target = $region17
  $region16: #{speinet_forward.9} parent=0 // pred_region
    _
  $region17: #{speinet_forward.9} parent=0 // pred_fallthru
    _
  // Predicated region
  $region18: #{speinet_forward.9} parent=0 // pred_check
    _
  $region19: #{speinet_forward.9} parent=0 // pred_check_branch
    %1437 = sbr.rel (0) target = $region21
  $region20: #{speinet_forward.9} parent=0 // pred_region
    _
  $region21: #{speinet_forward.9} parent=0 // pred_fallthru
    _

// kernel: speinet_forward.10
$region0: #{speinet_forward.10}
  #allocation0 [shape = 'u32[]', space=smem, size = 0x4, offset = 0x4, fixed_abs, tag = 'smem constant byte address 0x4 - core index']
  #allocation1 [shape = 'u32[144,128]{1,0:T(1,128)}', space=vmem, size = 0x12000, scoped, tag = 'internal scratch']
  %s0 = inlined_call_operand.vmem [shape: bf16[96,576], index: 0, kind: input, shape index: {}]
  %s1 = inlined_call_operand.vmem [shape: bf16[576,128], index: 1, kind: input, shape index: {}]
  %s2 = inlined_call_operand.vmem [shape: f32[1,128], index: 2, kind: input, shape index: {}]
  %s3 = inlined_call_operand.vmem [shape: bf16[96,128], index: 3, kind: output, shape index: {}]
  %s4 = sld [smem:[#allocation0]]
  $region22: #{speinet_forward.10} parent=0
    _
  %s6 = ssub.s32 1, %s4
  %s7 = scalar_select 0, %s6, %s4
  // Predicated region
  $region2: #{speinet_forward.10} parent=0 // pred_check
    _
  $region3: #{speinet_forward.10} parent=0 // pred_check_branch
    %9 = sbr.rel (0) target = $region5
  $region4: #{speinet_forward.10} parent=0 // pred_region
    _
  $region5: #{speinet_forward.10} parent=0 // pred_fallthru
    _
  // Predicated region
  $region6: #{speinet_forward.10} parent=0 // pred_check
    _
  $region7: #{speinet_forward.10} parent=0 // pred_check_branch
    %11 = sbr.rel (0) target = $region9
  $region8: #{speinet_forward.10} parent=0 // pred_region
    _
  $region9: #{speinet_forward.10} parent=0 // pred_fallthru
    _
  // Predicated region
  $region10: #{speinet_forward.10} parent=0 // pred_check
    _
  $region11: #{speinet_forward.10} parent=0 // pred_check_branch
    %13 = sbr.rel (0) target = $region13
  $region12: #{speinet_forward.10} parent=0 // pred_region
    _
  $region13: #{speinet_forward.10} parent=0 // pred_fallthru
    _
  %v15 = vld [vmem:[%s0] sm:$0xff]
  %v16 = vld [vmem:[%s0 + $0x8] sm:$0xff]
  %v17 = vld [vmem:[%s0 + $0x10] sm:$0xf]
  %v18 = vld [vmem:[%s0 + $0x14] sm:$0xff]
  %v19 = vld [vmem:[%s0 + $0x1c] sm:$0xff]
  %v20 = vld [vmem:[%s0 + $0x24] sm:$0xf]
  %v21 = vld [vmem:[%s0 + $0x28] sm:$0xff]
  %v22 = vld [vmem:[%s0 + $0x30] sm:$0xff]
  %v23 = vld [vmem:[%s0 + $0x38] sm:$0xf]
  %v24 = vld [vmem:[%s0 + $0x3c] sm:$0xff]
  %v25 = vld [vmem:[%s0 + $0x44] sm:$0xff]
  %v26 = vld [vmem:[%s0 + $0x4c] sm:$0xf]
  %v27 = vld [vmem:[%s0 + $0x50] sm:$0xff]
  %v28 = vld [vmem:[%s0 + $0x58] sm:$0xff]
  %v29 = vld [vmem:[%s0 + $0x60] sm:$0xf]
  %v30 = vld [vmem:[%s0 + $0x64] sm:$0xff]
  %v31 = vld [vmem:[%s0 + $0x6c] sm:$0xff]
  %v32 = vld [vmem:[%s0 + $0x74] sm:$0xf]
  %v33 = vld [vmem:[%s0 + $0x78] sm:$0xff]
  %v34 = vld [vmem:[%s0 + $0x80] sm:$0xff]
  %v35 = vld [vmem:[%s0 + $0x88] sm:$0xf]
  %v36 = vld [vmem:[%s0 + $0x8c] sm:$0xff]
  %v37 = vld [vmem:[%s0 + $0x94] sm:$0xff]
  %v38 = vld [vmem:[%s0 + $0x9c] sm:$0xf]
  %v39 = vld [vmem:[%s0 + $0xa0] sm:$0xff]
  %v40 = vld [vmem:[%s0 + $0xa8] sm:$0xff]
  %v41 = vld [vmem:[%s0 + $0xb0] sm:$0xf]
  %v42 = vld [vmem:[%s0 + $0xb4] sm:$0xff]
  %v43 = vld [vmem:[%s0 + $0xbc] sm:$0xff]
  %v44 = vld [vmem:[%s0 + $0xc4] sm:$0xf]
  %v45 = vld [vmem:[%s0 + $0xc8] sm:$0xff]
  %v46 = vld [vmem:[%s0 + $0xd0] sm:$0xff]
  %v47 = vld [vmem:[%s0 + $0xd8] sm:$0xf]
  %v48 = vld [vmem:[%s0 + $0xdc] sm:$0xff]
  %v49 = vld [vmem:[%s0 + $0xe4] sm:$0xff]
  %v50 = vld [vmem:[%s0 + $0xec] sm:$0xf]
  %v51 = vld [vmem:[%s1] sm:$0xf]
  %v52 = vld [vmem:[%s1 + $0x4] sm:$0xf]
  %v53 = vld [vmem:[%s1 + $0x8] sm:$0xf]
  %v54 = vld [vmem:[%s1 + $0xc] sm:$0xf]
  %v55 = vld [vmem:[%s1 + $0x10] sm:$0xf]
  %v56 = vld [vmem:[%s1 + $0x14] sm:$0xf]
  %v57 = vld [vmem:[%s1 + $0x18] sm:$0xf]
  %v58 = vld [vmem:[%s1 + $0x1c] sm:$0xf]
  %v59 = vld [vmem:[%s1 + $0x20] sm:$0xf]
  %v60 = vld [vmem:[%s1 + $0x24] sm:$0xf]
  %v61 = vld [vmem:[%s1 + $0x28] sm:$0xf]
  %v62 = vld [vmem:[%s1 + $0x2c] sm:$0xf]
  %v63 = vld [vmem:[%s1 + $0x30] sm:$0xf]
  %v64 = vld [vmem:[%s1 + $0x34] sm:$0xf]
  %v65 = vld [vmem:[%s1 + $0x38] sm:$0xf]
  %v66 = vld [vmem:[%s1 + $0x3c] sm:$0xf]
  %v67 = vld [vmem:[%s1 + $0x40] sm:$0xf]
  %v68 = vld [vmem:[%s1 + $0x44] sm:$0xf]
  %v69 = vld [vmem:[%s1 + $0x48] sm:$0xf]
  %v70 = vld [vmem:[%s1 + $0x4c] sm:$0xf]
  %v71 = vld [vmem:[%s1 + $0x50] sm:$0xf]
  %v72 = vld [vmem:[%s1 + $0x54] sm:$0xf]
  %v73 = vld [vmem:[%s1 + $0x58] sm:$0xf]
  %v74 = vld [vmem:[%s1 + $0x5c] sm:$0xf]
  %v75 = vld [vmem:[%s1 + $0x60] sm:$0xf]
  %v76 = vld [vmem:[%s1 + $0x64] sm:$0xf]
  %v77 = vld [vmem:[%s1 + $0x68] sm:$0xf]
  %v78 = vld [vmem:[%s1 + $0x6c] sm:$0xf]
  %v79 = vld [vmem:[%s1 + $0x70] sm:$0xf]
  %v80 = vld [vmem:[%s1 + $0x74] sm:$0xf]
  %v81 = vld [vmem:[%s1 + $0x78] sm:$0xf]
  %v82 = vld [vmem:[%s1 + $0x7c] sm:$0xf]
  %v83 = vld [vmem:[%s1 + $0x80] sm:$0xf]
  %v84 = vld [vmem:[%s1 + $0x84] sm:$0xf]
  %v85 = vld [vmem:[%s1 + $0x88] sm:$0xf]
  %v86 = vld [vmem:[%s1 + $0x8c] sm:$0xf]
  %v87 = vld [vmem:[%s1 + $0x90] sm:$0xf]
  %v88 = vld [vmem:[%s1 + $0x94] sm:$0xf]
  %v89 = vld [vmem:[%s1 + $0x98] sm:$0xf]
  %v90 = vld [vmem:[%s1 + $0x9c] sm:$0xf]
  %v91 = vld [vmem:[%s1 + $0xa0] sm:$0xf]
  %v92 = vld [vmem:[%s1 + $0xa4] sm:$0xf]
  %v93 = vld [vmem:[%s1 + $0xa8] sm:$0xf]
  %v94 = vld [vmem:[%s1 + $0xac] sm:$0xf]
  %v95 = vld [vmem:[%s1 + $0xb0] sm:$0xf]
  %v96 = vld [vmem:[%s1 + $0xb4] sm:$0xf]
  %v97 = vld [vmem:[%s1 + $0xb8] sm:$0xf]
  %v98 = vld [vmem:[%s1 + $0xbc] sm:$0xf]
  %v99 = vld [vmem:[%s1 + $0xc0] sm:$0xf]
  %v100 = vld [vmem:[%s1 + $0xc4] sm:$0xf]
  %v101 = vld [vmem:[%s1 + $0xc8] sm:$0xf]
  %v102 = vld [vmem:[%s1 + $0xcc] sm:$0xf]
  %v103 = vld [vmem:[%s1 + $0xd0] sm:$0xf]
  %v104 = vld [vmem:[%s1 + $0xd4] sm:$0xf]
  %v105 = vld [vmem:[%s1 + $0xd8] sm:$0xf]
  %v106 = vld [vmem:[%s1 + $0xdc] sm:$0xf]
  %v107 = vld [vmem:[%s1 + $0xe0] sm:$0xf]
  %v108 = vld [vmem:[%s1 + $0xe4] sm:$0xf]
  %v109 = vld [vmem:[%s1 + $0xe8] sm:$0xf]
  %v110 = vld [vmem:[%s1 + $0xec] sm:$0xf]
  %v111 = vld [vmem:[%s1 + $0xf0] sm:$0xf]
  %v112 = vld [vmem:[%s1 + $0xf4] sm:$0xf]
  %v113 = vld [vmem:[%s1 + $0xf8] sm:$0xf]
  %v114 = vld [vmem:[%s1 + $0xfc] sm:$0xf]
  %v115 = vld [vmem:[%s1 + $0x100] sm:$0xf]
  %v116 = vld [vmem:[%s1 + $0x104] sm:$0xf]
  %v117 = vld [vmem:[%s1 + $0x108] sm:$0xf]
  %v118 = vld [vmem:[%s1 + $0x10c] sm:$0xf]
  %v119 = vld [vmem:[%s1 + $0x110] sm:$0xf]
  %v120 = vld [vmem:[%s1 + $0x114] sm:$0xf]
  %v121 = vld [vmem:[%s1 + $0x118] sm:$0xf]
  %v122 = vld [vmem:[%s1 + $0x11c] sm:$0xf]
  %v123 = vld [vmem:[%s2] sm:$0x1]
  %v125 = vlaneseq
  %v126 = vshrl.u32 %v125, 7
  %v127 = vsub.s32 0, %v126
  %v128 = vrot.slane %v123, %v127
  %v166 = vunpack.c.l.b16 %v15
  %v167 = vunpack.c.h.b16 %v15
  %v168 = vunpack.c.l.b16 %v16
  %v169 = vunpack.c.h.b16 %v16
  %v170 = vunpack.c.l.b16 %v17
  %v171 = vunpack.c.l.b16 %v18
  %v172 = vunpack.c.h.b16 %v18
  %v173 = vunpack.c.l.b16 %v19
  %v174 = vunpack.c.h.b16 %v19
  %v175 = vunpack.c.l.b16 %v20
  %v176 = vunpack.c.l.b16 %v21
  %v177 = vunpack.c.h.b16 %v21
  %v178 = vunpack.c.l.b16 %v22
  %v179 = vunpack.c.h.b16 %v22
  %v180 = vunpack.c.l.b16 %v23
  %v181 = vunpack.c.l.b16 %v24
  %v182 = vunpack.c.h.b16 %v24
  %v183 = vunpack.c.l.b16 %v25
  %v184 = vunpack.c.h.b16 %v25
  %v185 = vunpack.c.l.b16 %v26
  %v186 = vunpack.c.l.b16 %v27
  %v187 = vunpack.c.h.b16 %v27
  %v188 = vunpack.c.l.b16 %v28
  %v189 = vunpack.c.h.b16 %v28
  %v190 = vunpack.c.l.b16 %v29
  %v191 = vunpack.c.l.b16 %v30
  %v192 = vunpack.c.h.b16 %v30
  %v193 = vunpack.c.l.b16 %v31
  %v194 = vunpack.c.h.b16 %v31
  %v195 = vunpack.c.l.b16 %v32
  %v196 = vunpack.c.l.b16 %v33
  %v197 = vunpack.c.h.b16 %v33
  %v198 = vunpack.c.l.b16 %v34
  %v199 = vunpack.c.h.b16 %v34
  %v200 = vunpack.c.l.b16 %v35
  %v201 = vunpack.c.l.b16 %v36
  %v202 = vunpack.c.h.b16 %v36
  %v203 = vunpack.c.l.b16 %v37
  %v204 = vunpack.c.h.b16 %v37
  %v205 = vunpack.c.l.b16 %v38
  %v206 = vunpack.c.l.b16 %v39
  %v207 = vunpack.c.h.b16 %v39
  %v208 = vunpack.c.l.b16 %v40
  %v209 = vunpack.c.h.b16 %v40
  %v210 = vunpack.c.l.b16 %v41
  %v211 = vunpack.c.l.b16 %v42
  %v212 = vunpack.c.h.b16 %v42
  %v213 = vunpack.c.l.b16 %v43
  %v214 = vunpack.c.h.b16 %v43
  %v215 = vunpack.c.l.b16 %v44
  %v216 = vunpack.c.l.b16 %v45
  %v217 = vunpack.c.h.b16 %v45
  %v218 = vunpack.c.l.b16 %v46
  %v219 = vunpack.c.h.b16 %v46
  %v220 = vunpack.c.l.b16 %v47
  %v221 = vunpack.c.l.b16 %v48
  %v222 = vunpack.c.h.b16 %v48
  %v223 = vunpack.c.l.b16 %v49
  %v224 = vunpack.c.h.b16 %v49
  %v225 = vunpack.c.l.b16 %v50
  %v226 = vpack.c.b16 %v171, %v166
  %v227 = vpack.c.b16 %v172, %v167
  %v228 = vpack.c.b16 %v173, %v168
  %v229 = vpack.c.b16 %v174, %v169
  %v230 = vpack.c.b16 %v175, %v170
  %v231 = vpack.c.b16 %v181, %v176
  %v232 = vpack.c.b16 %v182, %v177
  %v233 = vpack.c.b16 %v183, %v178
  %v234 = vpack.c.b16 %v184, %v179
  %v235 = vpack.c.b16 %v185, %v180
  %v236 = vpack.c.b16 %v191, %v186
  %v237 = vpack.c.b16 %v192, %v187
  %v238 = vpack.c.b16 %v193, %v188
  %v239 = vpack.c.b16 %v194, %v189
  %v240 = vpack.c.b16 %v195, %v190
  %v241 = vpack.c.b16 %v201, %v196
  %v242 = vpack.c.b16 %v202, %v197
  %v243 = vpack.c.b16 %v203, %v198
  %v244 = vpack.c.b16 %v204, %v199
  %v245 = vpack.c.b16 %v205, %v200
  %v246 = vpack.c.b16 %v211, %v206
  %v247 = vpack.c.b16 %v212, %v207
  %v248 = vpack.c.b16 %v213, %v208
  %v249 = vpack.c.b16 %v214, %v209
  %v250 = vpack.c.b16 %v215, %v210
  %v251 = vpack.c.b16 %v221, %v216
  %v252 = vpack.c.b16 %v222, %v217
  %v253 = vpack.c.b16 %v223, %v218
  %v254 = vpack.c.b16 %v224, %v219
  %v255 = vpack.c.b16 %v225, %v220
  %v352 = vunpack.c.l.b16 %v51
  %v353 = vunpack.c.l.b16 %v52
  %v354 = vunpack.c.l.b16 %v53
  %v355 = vunpack.c.l.b16 %v54
  %v356 = vunpack.c.l.b16 %v55
  %v357 = vunpack.c.l.b16 %v56
  %v358 = vunpack.c.l.b16 %v57
  %v359 = vunpack.c.l.b16 %v58
  %v360 = vunpack.c.l.b16 %v59
  %v361 = vunpack.c.l.b16 %v60
  %v362 = vunpack.c.l.b16 %v61
  %v363 = vunpack.c.l.b16 %v62
  %v364 = vunpack.c.l.b16 %v63
  %v365 = vunpack.c.l.b16 %v64
  %v366 = vunpack.c.l.b16 %v65
  %v367 = vunpack.c.l.b16 %v66
  %v368 = vunpack.c.l.b16 %v67
  %v369 = vunpack.c.l.b16 %v68
  %v370 = vunpack.c.l.b16 %v69
  %v371 = vunpack.c.l.b16 %v70
  %v372 = vunpack.c.l.b16 %v71
  %v373 = vunpack.c.l.b16 %v72
  %v374 = vunpack.c.l.b16 %v73
  %v375 = vunpack.c.l.b16 %v74
  %v376 = vunpack.c.l.b16 %v75
  %v377 = vunpack.c.l.b16 %v76
  %v378 = vunpack.c.l.b16 %v77
  %v379 = vunpack.c.l.b16 %v78
  %v380 = vunpack.c.l.b16 %v79
  %v381 = vunpack.c.l.b16 %v80
  %v382 = vunpack.c.l.b16 %v81
  %v383 = vunpack.c.l.b16 %v82
  %v384 = vunpack.c.l.b16 %v83
  %v385 = vunpack.c.l.b16 %v84
  %v386 = vunpack.c.l.b16 %v85
  %v387 = vunpack.c.l.b16 %v86
  %v388 = vunpack.c.l.b16 %v87
  %v389 = vunpack.c.l.b16 %v88
  %v390 = vunpack.c.l.b16 %v89
  %v391 = vunpack.c.l.b16 %v90
  %v392 = vunpack.c.l.b16 %v91
  %v393 = vunpack.c.l.b16 %v92
  %v394 = vunpack.c.l.b16 %v93
  %v395 = vunpack.c.l.b16 %v94
  %v396 = vunpack.c.l.b16 %v95
  %v397 = vunpack.c.l.b16 %v96
  %v398 = vunpack.c.l.b16 %v97
  %v399 = vunpack.c.l.b16 %v98
  %v400 = vunpack.c.l.b16 %v99
  %v401 = vunpack.c.l.b16 %v100
  %v402 = vunpack.c.l.b16 %v101
  %v403 = vunpack.c.l.b16 %v102
  %v404 = vunpack.c.l.b16 %v103
  %v405 = vunpack.c.l.b16 %v104
  %v406 = vunpack.c.l.b16 %v105
  %v407 = vunpack.c.l.b16 %v106
  %v408 = vunpack.c.l.b16 %v107
  %v409 = vunpack.c.l.b16 %v108
  %v410 = vunpack.c.l.b16 %v109
  %v411 = vunpack.c.l.b16 %v110
  %v412 = vunpack.c.l.b16 %v111
  %v413 = vunpack.c.l.b16 %v112
  %v414 = vunpack.c.l.b16 %v113
  %v415 = vunpack.c.l.b16 %v114
  %v416 = vunpack.c.l.b16 %v115
  %v417 = vunpack.c.l.b16 %v116
  %v418 = vunpack.c.l.b16 %v117
  %v419 = vunpack.c.l.b16 %v118
  %v420 = vunpack.c.l.b16 %v119
  %v421 = vunpack.c.l.b16 %v120
  %v422 = vunpack.c.l.b16 %v121
  %v423 = vunpack.c.l.b16 %v122
  %v424 = vpack.c.b16 %v353, %v352
  %v425 = vpack.c.b16 %v355, %v354
  %v426 = vpack.c.b16 %v357, %v356
  %v427 = vpack.c.b16 %v359, %v358
  %v428 = vpack.c.b16 %v361, %v360
  %v429 = vpack.c.b16 %v363, %v362
  %v430 = vpack.c.b16 %v365, %v364
  %v431 = vpack.c.b16 %v367, %v366
  %v432 = vpack.c.b16 %v369, %v368
  %v433 = vpack.c.b16 %v371, %v370
  %v434 = vpack.c.b16 %v373, %v372
  %v435 = vpack.c.b16 %v375, %v374
  %v436 = vpack.c.b16 %v377, %v376
  %v437 = vpack.c.b16 %v379, %v378
  %v438 = vpack.c.b16 %v381, %v380
  %v439 = vpack.c.b16 %v383, %v382
  %v440 = vpack.c.b16 %v385, %v384
  %v441 = vpack.c.b16 %v387, %v386
  %v442 = vpack.c.b16 %v389, %v388
  %v443 = vpack.c.b16 %v391, %v390
  %v444 = vpack.c.b16 %v393, %v392
  %v445 = vpack.c.b16 %v395, %v394
  %v446 = vpack.c.b16 %v397, %v396
  %v447 = vpack.c.b16 %v399, %v398
  %v448 = vpack.c.b16 %v401, %v400
  %v449 = vpack.c.b16 %v403, %v402
  %v450 = vpack.c.b16 %v405, %v404
  %v451 = vpack.c.b16 %v407, %v406
  %v452 = vpack.c.b16 %v409, %v408
  %v453 = vpack.c.b16 %v411, %v410
  %v454 = vpack.c.b16 %v413, %v412
  %v455 = vpack.c.b16 %v415, %v414
  %v456 = vpack.c.b16 %v417, %v416
  %v457 = vpack.c.b16 %v419, %v418
  %v458 = vpack.c.b16 %v421, %v420
  %v459 = vpack.c.b16 %v423, %v422
  %vm496 = vcmask 523264
  %v498 = vsel %vm496, %v230, 0
  %v501 = vsel %vm496, %v235, 0
  %v504 = vsel %vm496, %v240, 0
  %v507 = vsel %vm496, %v245, 0
  %v510 = vsel %vm496, %v250, 0
  %v513 = vsel %vm496, %v255, 0
  %515 = vmatprep.subr.bf16.mxu0 0
  %516 = vmatpush1.bf16.msra.mxu0 %v424
  %517 = vmatprep.subr.bf16.mxu0 0
  %518 = vmatpush1.bf16.msra.mxu0 %v425
  %519 = vmatprep.subr.bf16.mxu0 0
  %520 = vmatpush1.bf16.msra.mxu0 %v426
  %521 = vmatprep.subr.bf16.mxu0 0
  %522 = vmatpush1.bf16.msra.mxu0 %v427
  %523 = vmatprep.subr.bf16.mxu0 0
  %524 = vmatpush1.bf16.msra.mxu0 %v428
  %525 = vmatprep.subr.bf16.mxu0 0
  %526 = vmatpush1.bf16.msra.mxu0 %v429
  %527 = vmatprep.subr.bf16.mxu0 0
  %528 = vmatpush1.bf16.msra.mxu0 %v430
  %529 = vmatprep.subr.bf16.mxu0 0
  %530 = vmatpush1.bf16.msra.mxu0 %v431
  %531 = vmatprep.subr.bf16.mxu0 0
  %532 = vmatpush1.bf16.msra.mxu0 %v432
  %533 = vmatprep.subr.bf16.mxu0 0
  %534 = vmatpush1.bf16.msra.mxu0 %v433
  %535 = vmatprep.subr.bf16.mxu0 0
  %536 = vmatpush1.bf16.msra.mxu0 %v434
  %537 = vmatprep.subr.bf16.mxu0 0
  %538 = vmatpush1.bf16.msra.mxu0 %v435
  %539 = vmatprep.subr.bf16.mxu0 0
  %540 = vmatpush1.bf16.msra.mxu0 %v436
  %541 = vmatprep.subr.bf16.mxu0 0
  %542 = vmatpush1.bf16.msra.mxu0 %v437
  %543 = vmatprep.subr.bf16.mxu0 0
  %544 = vmatpush1.bf16.msra.mxu0 %v438
  %545 = vmatprep.subr.bf16.mxu0 0
  %546 = vmatpush1.bf16.msra.mxu0 %v439
  %547 = vmatprep.mubr.bf16.mxu0 %v227
  %548 = vmatmul.mubr.bf16.gmra.mrb[0].mxu0 %v226
  %v549 = vpop.f32.mrb[0].mxu0
  %v550 = vadd.f32 %v128, %v549
  %v551 = vpop.f32.mrb[0].mxu0
  %v552 = vpop.f32.mrb[0].mxu0
  %v553 = vadd.f32 %v128, %v552
  %v554 = vpop.f32.mrb[0].mxu0
  %555 = vmatprep.mubr.bf16.mxu0 %v232
  %556 = vmatmul.mubr.bf16.gmra.mrb[0].mxu0 %v231
  %v557 = vpop.f32.mrb[0].mxu0
  %v558 = vadd.f32 %v128, %v557
  %v559 = vpop.f32.mrb[0].mxu0
  %v560 = vpop.f32.mrb[0].mxu0
  %v561 = vadd.f32 %v128, %v560
  %v562 = vpop.f32.mrb[0].mxu0
  %563 = vmatprep.mubr.bf16.mxu0 %v237
  %564 = vmatmul.mubr.bf16.gmra.mrb[0].mxu0 %v236
  %v565 = vpop.f32.mrb[0].mxu0
  %v566 = vadd.f32 %v128, %v565
  %v567 = vpop.f32.mrb[0].mxu0
  %v568 = vpop.f32.mrb[0].mxu0
  %v569 = vadd.f32 %v128, %v568
  %v570 = vpop.f32.mrb[0].mxu0
  %571 = vmatprep.mubr.bf16.mxu0 %v242
  %572 = vmatmul.mubr.bf16.gmra.mrb[0].mxu0 %v241
  %v573 = vpop.f32.mrb[0].mxu0
  %v574 = vadd.f32 %v128, %v573
  %v575 = vpop.f32.mrb[0].mxu0
  %v576 = vpop.f32.mrb[0].mxu0
  %v577 = vadd.f32 %v128, %v576
  %v578 = vpop.f32.mrb[0].mxu0
  %579 = vmatprep.mubr.bf16.mxu0 %v247
  %580 = vmatmul.mubr.bf16.gmra.mrb[0].mxu0 %v246
  %v581 = vpop.f32.mrb[0].mxu0
  %v582 = vadd.f32 %v128, %v581
  %v583 = vpop.f32.mrb[0].mxu0
  %v584 = vpop.f32.mrb[0].mxu0
  %v585 = vadd.f32 %v128, %v584
  %v586 = vpop.f32.mrb[0].mxu0
  %587 = vmatprep.mubr.bf16.mxu0 %v252
  %588 = vmatmul.mubr.bf16.gmra.mrb[0].mxu0 %v251
  %v589 = vpop.f32.mrb[0].mxu0
  %v590 = vadd.f32 %v128, %v589
  %v591 = vpop.f32.mrb[0].mxu0
  %v592 = vpop.f32.mrb[0].mxu0
  %v593 = vadd.f32 %v128, %v592
  %v594 = vpop.f32.mrb[0].mxu0
  %595 = vdwg.mxu0
  %596 = vmatprep.subr.bf16.mxu0 0
  %597 = vmatpush1.bf16.msra.mxu0 %v440
  %598 = vmatprep.subr.bf16.mxu0 0
  %599 = vmatpush1.bf16.msra.mxu0 %v441
  %600 = vmatprep.subr.bf16.mxu0 0
  %601 = vmatpush1.bf16.msra.mxu0 %v442
  %602 = vmatprep.subr.bf16.mxu0 0
  %603 = vmatpush1.bf16.msra.mxu0 %v443
  %604 = vmatprep.subr.bf16.mxu0 0
  %605 = vmatpush1.bf16.msra.mxu0 %v444
  %606 = vmatprep.subr.bf16.mxu0 0
  %607 = vmatpush1.bf16.msra.mxu0 %v445
  %608 = vmatprep.subr.bf16.mxu0 0
  %609 = vmatpush1.bf16.msra.mxu0 %v446
  %610 = vmatprep.subr.bf16.mxu0 0
  %611 = vmatpush1.bf16.msra.mxu0 %v447
  %612 = vmatprep.subr.bf16.mxu0 0
  %613 = vmatpush1.bf16.msra.mxu0 %v448
  %614 = vmatprep.subr.bf16.mxu0 0
  %615 = vmatpush1.bf16.msra.mxu0 %v449
  %616 = vmatprep.subr.bf16.mxu0 0
  %617 = vmatpush1.bf16.msra.mxu0 %v450
  %618 = vmatprep.subr.bf16.mxu0 0
  %619 = vmatpush1.bf16.msra.mxu0 %v451
  %620 = vmatprep.subr.bf16.mxu0 0
  %621 = vmatpush1.bf16.msra.mxu0 %v452
  %622 = vmatprep.subr.bf16.mxu0 0
  %623 = vmatpush1.bf16.msra.mxu0 %v453
  %624 = vmatprep.subr.bf16.mxu0 0
  %625 = vmatpush1.bf16.msra.mxu0 %v454
  %626 = vmatprep.subr.bf16.mxu0 0
  %627 = vmatpush1.bf16.msra.mxu0 %v455
  %628 = vmatprep.mubr.bf16.mxu0 %v229
  %629 = vmatmul.mubr.bf16.gmra.mrb[0].mxu0 %v228
  %v630 = vpop.f32.mrb[0].mxu0
  %v631 = vadd.f32 %v550, %v630
  %v632 = vpop.f32.mrb[0].mxu0
  %v633 = vpop.f32.mrb[0].mxu0
  %v634 = vadd.f32 %v553, %v633
  %v635 = vpop.f32.mrb[0].mxu0
  %636 = vmatprep.mubr.bf16.mxu0 %v234
  %637 = vmatmul.mubr.bf16.gmra.mrb[0].mxu0 %v233
  %v638 = vpop.f32.mrb[0].mxu0
  %v639 = vadd.f32 %v558, %v638
  %v640 = vpop.f32.mrb[0].mxu0
  %v641 = vpop.f32.mrb[0].mxu0
  %v642 = vadd.f32 %v561, %v641
  %v643 = vpop.f32.mrb[0].mxu0
  %644 = vmatprep.mubr.bf16.mxu0 %v239
  %645 = vmatmul.mubr.bf16.gmra.mrb[0].mxu0 %v238
  %v646 = vpop.f32.mrb[0].mxu0
  %v647 = vadd.f32 %v566, %v646
  %v648 = vpop.f32.mrb[0].mxu0
  %v649 = vpop.f32.mrb[0].mxu0
  %v650 = vadd.f32 %v569, %v649
  %v651 = vpop.f32.mrb[0].mxu0
  %652 = vmatprep.mubr.bf16.mxu0 %v244
  %653 = vmatmul.mubr.bf16.gmra.mrb[0].mxu0 %v243
  %v654 = vpop.f32.mrb[0].mxu0
  %v655 = vadd.f32 %v574, %v654
  %v656 = vpop.f32.mrb[0].mxu0
  %v657 = vpop.f32.mrb[0].mxu0
  %v658 = vadd.f32 %v577, %v657
  %v659 = vpop.f32.mrb[0].mxu0
  %660 = vmatprep.mubr.bf16.mxu0 %v249
  %661 = vmatmul.mubr.bf16.gmra.mrb[0].mxu0 %v248
  %v662 = vpop.f32.mrb[0].mxu0
  %v663 = vadd.f32 %v582, %v662
  %v664 = vpop.f32.mrb[0].mxu0
  %v665 = vpop.f32.mrb[0].mxu0
  %v666 = vadd.f32 %v585, %v665
  %v667 = vpop.f32.mrb[0].mxu0
  %668 = vmatprep.mubr.bf16.mxu0 %v254
  %669 = vmatmul.mubr.bf16.gmra.mrb[0].mxu0 %v253
  %v670 = vpop.f32.mrb[0].mxu0
  %v671 = vadd.f32 %v590, %v670
  %v672 = vpop.f32.mrb[0].mxu0
  %v673 = vpop.f32.mrb[0].mxu0
  %v674 = vadd.f32 %v593, %v673
  %v675 = vpop.f32.mrb[0].mxu0
  %676 = vdwg.mxu0
  %677 = vmatprep.subr.bf16.mxu0 0
  %678 = vmatpush1.bf16.msra.mxu0 %v456
  %679 = vmatprep.subr.bf16.mxu0 0
  %680 = vmatpush1.bf16.msra.mxu0 %v457
  %681 = vmatprep.subr.bf16.mxu0 0
  %682 = vmatpush1.bf16.msra.mxu0 %v458
  %683 = vmatprep.subr.bf16.mxu0 0
  %684 = vmatpush1.bf16.msra.mxu0 %v459
  %685 = vmatprep.subr.bf16.mxu0 0
  %686 = vmatpush1.bf16.msra.mxu0 0
  %687 = vmatprep.subr.bf16.mxu0 0
  %688 = vmatpush1.bf16.msra.mxu0 0
  %689 = vmatprep.subr.bf16.mxu0 0
  %690 = vmatpush1.bf16.msra.mxu0 0
  %691 = vmatprep.subr.bf16.mxu0 0
  %692 = vmatpush1.bf16.msra.mxu0 0
  %693 = vmatprep.subr.bf16.mxu0 0
  %694 = vmatpush1.bf16.msra.mxu0 0
  %695 = vmatprep.subr.bf16.mxu0 0
  %696 = vmatpush1.bf16.msra.mxu0 0
  %697 = vmatprep.subr.bf16.mxu0 0
  %698 = vmatpush1.bf16.msra.mxu0 0
  %699 = vmatprep.subr.bf16.mxu0 0
  %700 = vmatpush1.bf16.msra.mxu0 0
  %701 = vmatprep.subr.bf16.mxu0 0
  %702 = vmatpush1.bf16.msra.mxu0 0
  %703 = vmatprep.subr.bf16.mxu0 0
  %704 = vmatpush1.bf16.msra.mxu0 0
  %705 = vmatprep.subr.bf16.mxu0 0
  %706 = vmatpush1.bf16.msra.mxu0 0
  %707 = vmatprep.subr.bf16.mxu0 0
  %708 = vmatpush1.bf16.msra.mxu0 0
  %709 = vmatprep.mubr.bf16.mxu0 0
  %710 = vmatmul.mubr.bf16.gmra.mrb[0].mxu0 %v498
  %v711 = vpop.f32.mrb[0].mxu0
  %v712 = vadd.f32 %v631, %v711
  %v713 = vpop.f32.mrb[0].mxu0
  %v714 = vpop.f32.mrb[0].mxu0
  %v715 = vadd.f32 %v634, %v714
  %v716 = vpop.f32.mrb[0].mxu0
  %717 = vmatprep.mubr.bf16.mxu0 0
  %718 = vmatmul.mubr.bf16.gmra.mrb[0].mxu0 %v501
  %v719 = vpop.f32.mrb[0].mxu0
  %v720 = vadd.f32 %v639, %v719
  %v721 = vpop.f32.mrb[0].mxu0
  %v722 = vpop.f32.mrb[0].mxu0
  %v723 = vadd.f32 %v642, %v722
  %v724 = vpop.f32.mrb[0].mxu0
  %725 = vmatprep.mubr.bf16.mxu0 0
  %726 = vmatmul.mubr.bf16.gmra.mrb[0].mxu0 %v504
  %v727 = vpop.f32.mrb[0].mxu0
  %v728 = vadd.f32 %v647, %v727
  %v729 = vpop.f32.mrb[0].mxu0
  %v730 = vpop.f32.mrb[0].mxu0
  %v731 = vadd.f32 %v650, %v730
  %v732 = vpop.f32.mrb[0].mxu0
  %733 = vmatprep.mubr.bf16.mxu0 0
  %734 = vmatmul.mubr.bf16.gmra.mrb[0].mxu0 %v507
  %v735 = vpop.f32.mrb[0].mxu0
  %v736 = vadd.f32 %v655, %v735
  %v737 = vpop.f32.mrb[0].mxu0
  %v738 = vpop.f32.mrb[0].mxu0
  %v739 = vadd.f32 %v658, %v738
  %v740 = vpop.f32.mrb[0].mxu0
  %741 = vmatprep.mubr.bf16.mxu0 0
  %742 = vmatmul.mubr.bf16.gmra.mrb[0].mxu0 %v510
  %v743 = vpop.f32.mrb[0].mxu0
  %v744 = vadd.f32 %v663, %v743
  %v745 = vpop.f32.mrb[0].mxu0
  %v746 = vpop.f32.mrb[0].mxu0
  %v747 = vadd.f32 %v666, %v746
  %v748 = vpop.f32.mrb[0].mxu0
  %749 = vmatprep.mubr.bf16.mxu0 0
  %750 = vmatmul.mubr.bf16.gmra.mrb[0].mxu0 %v513
  %v751 = vpop.f32.mrb[0].mxu0
  %v752 = vadd.f32 %v671, %v751
  %v753 = vpop.f32.mrb[0].mxu0
  %v754 = vpop.f32.mrb[0].mxu0
  %v755 = vadd.f32 %v674, %v754
  %v756 = vpop.f32.mrb[0].mxu0
  %757 = vdwg.mxu0
  %v758 = vmax.f32 %v712, 0.0
  %v759 = vmax.f32 %v715, 0.0
  %v760 = vmax.f32 %v720, 0.0
  %v761 = vmax.f32 %v723, 0.0
  %v762 = vmax.f32 %v728, 0.0
  %v763 = vmax.f32 %v731, 0.0
  %v764 = vmax.f32 %v736, 0.0
  %v765 = vmax.f32 %v739, 0.0
  %v766 = vmax.f32 %v744, 0.0
  %v767 = vmax.f32 %v747, 0.0
  %v768 = vmax.f32 %v752, 0.0
  %v769 = vmax.f32 %v755, 0.0
  %v770 = vpack.c.bf16 %v759, %v758
  %v771 = vpack.c.bf16 %v761, %v760
  %v772 = vpack.c.bf16 %v763, %v762
  %v773 = vpack.c.bf16 %v765, %v764
  %v774 = vpack.c.bf16 %v767, %v766
  %v775 = vpack.c.bf16 %v769, %v768
  %v782 = vunpack.c.l.b16 %v770
  %v783 = vunpack.c.h.b16 %v770
  %v784 = vunpack.c.l.b16 %v771
  %v785 = vunpack.c.h.b16 %v771
  %v786 = vunpack.c.l.b16 %v772
  %v787 = vunpack.c.h.b16 %v772
  %v788 = vunpack.c.l.b16 %v773
  %v789 = vunpack.c.h.b16 %v773
  %v790 = vunpack.c.l.b16 %v774
  %v791 = vunpack.c.h.b16 %v774
  %v792 = vunpack.c.l.b16 %v775
  %v793 = vunpack.c.h.b16 %v775
  %v794 = vpack.c.b16 %v782, %v782
  %v795 = vpack.c.b16 %v783, %v783
  %v796 = vpack.c.b16 %v784, %v784
  %v797 = vpack.c.b16 %v785, %v785
  %v798 = vpack.c.b16 %v786, %v786
  %v799 = vpack.c.b16 %v787, %v787
  %v800 = vpack.c.b16 %v788, %v788
  %v801 = vpack.c.b16 %v789, %v789
  %v802 = vpack.c.b16 %v790, %v790
  %v803 = vpack.c.b16 %v791, %v791
  %v804 = vpack.c.b16 %v792, %v792
  %v805 = vpack.c.b16 %v793, %v793
  %818 = vst [vmem:[%s3] sm:$0xf] %v794
  %819 = vst [vmem:[%s3 + $0x4] sm:$0xf] %v795
  %820 = vst [vmem:[%s3 + $0x8] sm:$0xf] %v796
  %821 = vst [vmem:[%s3 + $0xc] sm:$0xf] %v797
  %822 = vst [vmem:[%s3 + $0x10] sm:$0xf] %v798
  %823 = vst [vmem:[%s3 + $0x14] sm:$0xf] %v799
  %824 = vst [vmem:[%s3 + $0x18] sm:$0xf] %v800
  %825 = vst [vmem:[%s3 + $0x1c] sm:$0xf] %v801
  %826 = vst [vmem:[%s3 + $0x20] sm:$0xf] %v802
  %827 = vst [vmem:[%s3 + $0x24] sm:$0xf] %v803
  %828 = vst [vmem:[%s3 + $0x28] sm:$0xf] %v804
  %829 = vst [vmem:[%s3 + $0x2c] sm:$0xf] %v805
  // Predicated region
  $region14: #{speinet_forward.10} parent=0 // pred_check
    _
  $region15: #{speinet_forward.10} parent=0 // pred_check_branch
    %831 = sbr.rel (0) target = $region17
  $region16: #{speinet_forward.10} parent=0 // pred_region
    _
  $region17: #{speinet_forward.10} parent=0 // pred_fallthru
    _
  // Predicated region
  $region18: #{speinet_forward.10} parent=0 // pred_check
    _
  $region19: #{speinet_forward.10} parent=0 // pred_check_branch
    %833 = sbr.rel (0) target = $region21
  $region20: #{speinet_forward.10} parent=0 // pred_region
    _
  $region21: #{speinet_forward.10} parent=0 // pred_fallthru
    _

// kernel: tile.13
$region0: #{tile.13}
  #allocation0 [shape = 's32[1]{0}', space=sflag, size = 0x4, scoped, tag = 'scoped memory for tile.13']
  %s0 = inlined_call_operand.vmem [shape: f32[64], index: 0, kind: input, shape index: {}]
  %s1 = inlined_call_operand.vmem [shape: f32[4,64], index: 1, kind: output, shape index: {}]
  // Predicated region
  $region2: #{tile.13} parent=0 // pred_check
    _
  $region3: #{tile.13} parent=0 // pred_check_branch
    %3 = sbr.rel (0) target = $region5
  $region4: #{tile.13} parent=0 // pred_region
    _
  $region5: #{tile.13} parent=0 // pred_fallthru
    _
  %v4 = vld [vmem:[%s0] ss:$0 sm:$0xff]
  %5 = vst [vmem:[%s1] sm:$0xf] %v4

// kernel: tile.14
$region0: #{tile.14}
  %s0 = inlined_call_operand.vmem [shape: f32[4,64], index: 0, kind: input, shape index: {}]
  %s1 = inlined_call_operand.vmem [shape: f32[1,256], index: 1, kind: output, shape index: {}]
  $region1: #{tile.14} parent=0
    #allocation0 [shape = 'u8[8192]{0}', space=vmem, size = 0x2000, scoped, tag = 'scoped mem for output reshape']
    #allocation1 [shape = 'u8[4096]{0}', space=vmem, size = 0x1000, scoped, tag = 'scoped mem for input reshape']
    %s3 = sshllo.u32 0, 4
    %v4 = vld [vmem:[%s0] sm:%s3]
    %5 = vst [vmem:[#allocation1] sm:%s3] %v4
    %s6 = smov 3
    %v7 = vld [vmem:[#allocation1] ss:$2 sm:%s6]
    %vm8 = vcmask 523264
    %9 = vst.msk [vmem:[#allocation0] ss:$8 sm:$0x3] %vm8, %v7
    %s10 = scalar_lea.vmem [#allocation1], 1
    %s11 = smov 3
    %v12 = vld [vmem:[%s10] ss:$2 sm:%s11]
    %13 = vrot.lane.b32.xlu0 %v12, 64
    %v14 = vpop.permute.xlu0 %13
    %vm15 = vcmask 1048064
    %16 = vst.msk [vmem:[#allocation0] ss:$8 sm:$0x3] %vm15, %v14
    %s18 = sshllo.u32 0, 1
    %v20 = vld [vmem:[#allocation0] sm:%s18]
    %s21 = sshllo.u32 0, 1
    %22 = vst [vmem:[%s1] sm:%s21] %v20
    %s23 = scalar_lea.vmem [#allocation0], 8
    %v24 = vld [vmem:[%s23] sm:%s18]
    %s25 = sshllo.u32 0, 1
    %s26 = scalar_lea.vmem %s1, 1
    %27 = vst [vmem:[%s26] sm:%s25] %v24

// kernel: speinet_forward.13
$region0: #{speinet_forward.13}
  #allocation0 [shape = 'u32[]', space=smem, size = 0x4, offset = 0x4, fixed_abs, tag = 'smem constant byte address 0x4 - core index']
  #allocation1 [shape = 'u32[144,128]{1,0:T(1,128)}', space=vmem, size = 0x12000, scoped, tag = 'internal scratch']
  %s0 = inlined_call_operand.vmem [shape: bf16[32,128], index: 0, kind: input, shape index: {}]
  %s1 = inlined_call_operand.vmem [shape: bf16[128,256], index: 1, kind: input, shape index: {}]
  %s2 = inlined_call_operand.vmem [shape: f32[1,256], index: 2, kind: input, shape index: {}]
  %s3 = inlined_call_operand.vmem [shape: bf16[32,256], index: 3, kind: output, shape index: {}]
  %s4 = sld [smem:[#allocation0]]
  $region22: #{speinet_forward.13} parent=0
    _
  %s6 = ssub.s32 1, %s4
  %s7 = scalar_select 0, %s6, %s4
  // Predicated region
  $region2: #{speinet_forward.13} parent=0 // pred_check
    _
  $region3: #{speinet_forward.13} parent=0 // pred_check_branch
    %9 = sbr.rel (0) target = $region5
  $region4: #{speinet_forward.13} parent=0 // pred_region
    _
  $region5: #{speinet_forward.13} parent=0 // pred_fallthru
    _
  // Predicated region
  $region6: #{speinet_forward.13} parent=0 // pred_check
    _
  $region7: #{speinet_forward.13} parent=0 // pred_check_branch
    %11 = sbr.rel (0) target = $region9
  $region8: #{speinet_forward.13} parent=0 // pred_region
    _
  $region9: #{speinet_forward.13} parent=0 // pred_fallthru
    _
  // Predicated region
  $region10: #{speinet_forward.13} parent=0 // pred_check
    _
  $region11: #{speinet_forward.13} parent=0 // pred_check_branch
    %13 = sbr.rel (0) target = $region13
  $region12: #{speinet_forward.13} parent=0 // pred_region
    _
  $region13: #{speinet_forward.13} parent=0 // pred_fallthru
    _
  %v15 = vld [vmem:[%s0] sm:$0xf]
  %v16 = vld [vmem:[%s0 + $0x4] sm:$0xf]
  %v17 = vld [vmem:[%s0 + $0x8] sm:$0xf]
  %v18 = vld [vmem:[%s0 + $0xc] sm:$0xf]
  %v19 = vld [vmem:[%s1] sm:$0xff]
  %v20 = vld [vmem:[%s1 + $0x8] sm:$0xff]
  %v21 = vld [vmem:[%s1 + $0x10] sm:$0xff]
  %v22 = vld [vmem:[%s1 + $0x18] sm:$0xff]
  %v23 = vld [vmem:[%s1 + $0x20] sm:$0xff]
  %v24 = vld [vmem:[%s1 + $0x28] sm:$0xff]
  %v25 = vld [vmem:[%s1 + $0x30] sm:$0xff]
  %v26 = vld [vmem:[%s1 + $0x38] sm:$0xff]
  %v27 = vld [vmem:[%s1 + $0x40] sm:$0xff]
  %v28 = vld [vmem:[%s1 + $0x48] sm:$0xff]
  %v29 = vld [vmem:[%s1 + $0x50] sm:$0xff]
  %v30 = vld [vmem:[%s1 + $0x58] sm:$0xff]
  %v31 = vld [vmem:[%s1 + $0x60] sm:$0xff]
  %v32 = vld [vmem:[%s1 + $0x68] sm:$0xff]
  %v33 = vld [vmem:[%s1 + $0x70] sm:$0xff]
  %v34 = vld [vmem:[%s1 + $0x78] sm:$0xff]
  %v35 = vld [vmem:[%s2] sm:$0x3]
  %v37 = vlaneseq
  %v38 = vshrl.u32 %v37, 7
  %v39 = vsub.s32 0, %v38
  %v40 = vrot.slane %v35, %v39
  %v41 = vlaneseq
  %v42 = vshrl.u32 %v41, 7
  %v43 = vsub.s32 1, %v42
  %v44 = vrot.slane %v35, %v43
  %v51 = vunpack.c.l.b16 %v15
  %v52 = vunpack.c.l.b16 %v16
  %v53 = vunpack.c.l.b16 %v17
  %v54 = vunpack.c.l.b16 %v18
  %v55 = vpack.c.b16 %v52, %v51
  %v56 = vpack.c.b16 %v54, %v53
  %v75 = vunpack.c.l.b16 %v19
  %v76 = vunpack.c.h.b16 %v19
  %v77 = vunpack.c.l.b16 %v20
  %v78 = vunpack.c.h.b16 %v20
  %v79 = vunpack.c.l.b16 %v21
  %v80 = vunpack.c.h.b16 %v21
  %v81 = vunpack.c.l.b16 %v22
  %v82 = vunpack.c.h.b16 %v22
  %v83 = vunpack.c.l.b16 %v23
  %v84 = vunpack.c.h.b16 %v23
  %v85 = vunpack.c.l.b16 %v24
  %v86 = vunpack.c.h.b16 %v24
  %v87 = vunpack.c.l.b16 %v25
  %v88 = vunpack.c.h.b16 %v25
  %v89 = vunpack.c.l.b16 %v26
  %v90 = vunpack.c.h.b16 %v26
  %v91 = vunpack.c.l.b16 %v27
  %v92 = vunpack.c.h.b16 %v27
  %v93 = vunpack.c.l.b16 %v28
  %v94 = vunpack.c.h.b16 %v28
  %v95 = vunpack.c.l.b16 %v29
  %v96 = vunpack.c.h.b16 %v29
  %v97 = vunpack.c.l.b16 %v30
  %v98 = vunpack.c.h.b16 %v30
  %v99 = vunpack.c.l.b16 %v31
  %v100 = vunpack.c.h.b16 %v31
  %v101 = vunpack.c.l.b16 %v32
  %v102 = vunpack.c.h.b16 %v32
  %v103 = vunpack.c.l.b16 %v33
  %v104 = vunpack.c.h.b16 %v33
  %v105 = vunpack.c.l.b16 %v34
  %v106 = vunpack.c.h.b16 %v34
  %v107 = vpack.c.b16 %v77, %v75
  %v108 = vpack.c.b16 %v78, %v76
  %v109 = vpack.c.b16 %v81, %v79
  %v110 = vpack.c.b16 %v82, %v80
  %v111 = vpack.c.b16 %v85, %v83
  %v112 = vpack.c.b16 %v86, %v84
  %v113 = vpack.c.b16 %v89, %v87
  %v114 = vpack.c.b16 %v90, %v88
  %v115 = vpack.c.b16 %v93, %v91
  %v116 = vpack.c.b16 %v94, %v92
  %v117 = vpack.c.b16 %v97, %v95
  %v118 = vpack.c.b16 %v98, %v96
  %v119 = vpack.c.b16 %v101, %v99
  %v120 = vpack.c.b16 %v102, %v100
  %v121 = vpack.c.b16 %v105, %v103
  %v122 = vpack.c.b16 %v106, %v104
  %139 = vmatprep.subr.bf16.mxu0 %v108
  %140 = vmatpush1.bf16.msra.mxu0 %v107
  %141 = vmatprep.subr.bf16.mxu0 %v110
  %142 = vmatpush1.bf16.msra.mxu0 %v109
  %143 = vmatprep.subr.bf16.mxu0 %v112
  %144 = vmatpush1.bf16.msra.mxu0 %v111
  %145 = vmatprep.subr.bf16.mxu0 %v114
  %146 = vmatpush1.bf16.msra.mxu0 %v113
  %147 = vmatprep.subr.bf16.mxu0 %v116
  %148 = vmatpush1.bf16.msra.mxu0 %v115
  %149 = vmatprep.subr.bf16.mxu0 %v118
  %150 = vmatpush1.bf16.msra.mxu0 %v117
  %151 = vmatprep.subr.bf16.mxu0 %v120
  %152 = vmatpush1.bf16.msra.mxu0 %v119
  %153 = vmatprep.subr.bf16.mxu0 %v122
  %154 = vmatpush1.bf16.msra.mxu0 %v121
  %155 = vmatprep.subr.bf16.mxu0 0
  %156 = vmatpush1.bf16.msra.mxu0 0
  %157 = vmatprep.subr.bf16.mxu0 0
  %158 = vmatpush1.bf16.msra.mxu0 0
  %159 = vmatprep.subr.bf16.mxu0 0
  %160 = vmatpush1.bf16.msra.mxu0 0
  %161 = vmatprep.subr.bf16.mxu0 0
  %162 = vmatpush1.bf16.msra.mxu0 0
  %163 = vmatprep.subr.bf16.mxu0 0
  %164 = vmatpush1.bf16.msra.mxu0 0
  %165 = vmatprep.subr.bf16.mxu0 0
  %166 = vmatpush1.bf16.msra.mxu0 0
  %167 = vmatprep.subr.bf16.mxu0 0
  %168 = vmatpush1.bf16.msra.mxu0 0
  %169 = vmatprep.subr.bf16.mxu0 0
  %170 = vmatpush1.bf16.msra.mxu0 0
  %171 = vmatprep.mubr.bf16.mxu0 0
  %172 = vmatmul.mubr.bf16.gmra.mrb[0].mxu0 %v55
  %v173 = vpop.f32.mrb[0].mxu0
  %v174 = vadd.f32 %v40, %v173
  %v175 = vpop.f32.mrb[0].mxu0
  %v176 = vadd.f32 %v44, %v175
  %v177 = vpop.f32.mrb[0].mxu0
  %v178 = vadd.f32 %v40, %v177
  %v179 = vpop.f32.mrb[0].mxu0
  %v180 = vadd.f32 %v44, %v179
  %181 = vmatprep.mubr.bf16.mxu0 0
  %182 = vmatmul.mubr.bf16.gmra.mrb[0].mxu0 %v56
  %v183 = vpop.f32.mrb[0].mxu0
  %v184 = vadd.f32 %v40, %v183
  %v185 = vpop.f32.mrb[0].mxu0
  %v186 = vadd.f32 %v44, %v185
  %v187 = vpop.f32.mrb[0].mxu0
  %v188 = vadd.f32 %v40, %v187
  %v189 = vpop.f32.mrb[0].mxu0
  %v190 = vadd.f32 %v44, %v189
  %191 = vdwg.mxu0
  %v192 = vmax.f32 %v174, 0.0
  %v193 = vmax.f32 %v176, 0.0
  %v194 = vmax.f32 %v178, 0.0
  %v195 = vmax.f32 %v180, 0.0
  %v196 = vmax.f32 %v184, 0.0
  %v197 = vmax.f32 %v186, 0.0
  %v198 = vmax.f32 %v188, 0.0
  %v199 = vmax.f32 %v190, 0.0
  %v200 = vpack.c.bf16 %v194, %v192
  %v201 = vpack.c.bf16 %v195, %v193
  %v202 = vpack.c.bf16 %v198, %v196
  %v203 = vpack.c.bf16 %v199, %v197
  %v208 = vunpack.c.l.b16 %v200
  %v209 = vunpack.c.l.b16 %v201
  %v210 = vunpack.c.h.b16 %v200
  %v211 = vunpack.c.h.b16 %v201
  %v212 = vunpack.c.l.b16 %v202
  %v213 = vunpack.c.l.b16 %v203
  %v214 = vunpack.c.h.b16 %v202
  %v215 = vunpack.c.h.b16 %v203
  %v216 = vpack.c.b16 %v209, %v208
  %v217 = vpack.c.b16 %v211, %v210
  %v218 = vpack.c.b16 %v213, %v212
  %v219 = vpack.c.b16 %v215, %v214
  %224 = vst [vmem:[%s3] sm:$0xff] %v216
  %225 = vst [vmem:[%s3 + $0x8] sm:$0xff] %v217
  %226 = vst [vmem:[%s3 + $0x10] sm:$0xff] %v218
  %227 = vst [vmem:[%s3 + $0x18] sm:$0xff] %v219
  // Predicated region
  $region14: #{speinet_forward.13} parent=0 // pred_check
    _
  $region15: #{speinet_forward.13} parent=0 // pred_check_branch
    %229 = sbr.rel (0) target = $region17
  $region16: #{speinet_forward.13} parent=0 // pred_region
    _
  $region17: #{speinet_forward.13} parent=0 // pred_fallthru
    _
  // Predicated region
  $region18: #{speinet_forward.13} parent=0 // pred_check
    _
  $region19: #{speinet_forward.13} parent=0 // pred_check_branch
    %231 = sbr.rel (0) target = $region21
  $region20: #{speinet_forward.13} parent=0 // pred_region
    _
  $region21: #{speinet_forward.13} parent=0 // pred_fallthru
    _

// kernel: speinet_forward.12
$region0: #{speinet_forward.12}
  #allocation0 [shape = 'u32[]', space=smem, size = 0x4, offset = 0x4, fixed_abs, tag = 'smem constant byte address 0x4 - core index']
  #allocation1 [shape = 'u32[144,128]{1,0:T(1,128)}', space=vmem, size = 0x12000, scoped, tag = 'internal scratch']
  %s0 = inlined_call_operand.vmem [shape: bf16[32,384], index: 0, kind: input, shape index: {}]
  %s1 = inlined_call_operand.vmem [shape: bf16[384,128], index: 1, kind: input, shape index: {}]
  %s2 = inlined_call_operand.vmem [shape: f32[1,128], index: 2, kind: input, shape index: {}]
  %s3 = inlined_call_operand.vmem [shape: bf16[32,128], index: 3, kind: output, shape index: {}]
  %s4 = sld [smem:[#allocation0]]
  $region22: #{speinet_forward.12} parent=0
    _
  %s6 = ssub.s32 1, %s4
  %s7 = scalar_select 0, %s6, %s4
  // Predicated region
  $region2: #{speinet_forward.12} parent=0 // pred_check
    _
  $region3: #{speinet_forward.12} parent=0 // pred_check_branch
    %9 = sbr.rel (0) target = $region5
  $region4: #{speinet_forward.12} parent=0 // pred_region
    _
  $region5: #{speinet_forward.12} parent=0 // pred_fallthru
    _
  // Predicated region
  $region6: #{speinet_forward.12} parent=0 // pred_check
    _
  $region7: #{speinet_forward.12} parent=0 // pred_check_branch
    %11 = sbr.rel (0) target = $region9
  $region8: #{speinet_forward.12} parent=0 // pred_region
    _
  $region9: #{speinet_forward.12} parent=0 // pred_fallthru
    _
  // Predicated region
  $region10: #{speinet_forward.12} parent=0 // pred_check
    _
  $region11: #{speinet_forward.12} parent=0 // pred_check_branch
    %13 = sbr.rel (0) target = $region13
  $region12: #{speinet_forward.12} parent=0 // pred_region
    _
  $region13: #{speinet_forward.12} parent=0 // pred_fallthru
    _
  %v15 = vld [vmem:[%s0] sm:$0xff]
  %v16 = vld [vmem:[%s0 + $0x8] sm:$0xf]
  %v17 = vld [vmem:[%s0 + $0xc] sm:$0xff]
  %v18 = vld [vmem:[%s0 + $0x14] sm:$0xf]
  %v19 = vld [vmem:[%s0 + $0x18] sm:$0xff]
  %v20 = vld [vmem:[%s0 + $0x20] sm:$0xf]
  %v21 = vld [vmem:[%s0 + $0x24] sm:$0xff]
  %v22 = vld [vmem:[%s0 + $0x2c] sm:$0xf]
  %v23 = vld [vmem:[%s1] sm:$0xf]
  %v24 = vld [vmem:[%s1 + $0x4] sm:$0xf]
  %v25 = vld [vmem:[%s1 + $0x8] sm:$0xf]
  %v26 = vld [vmem:[%s1 + $0xc] sm:$0xf]
  %v27 = vld [vmem:[%s1 + $0x10] sm:$0xf]
  %v28 = vld [vmem:[%s1 + $0x14] sm:$0xf]
  %v29 = vld [vmem:[%s1 + $0x18] sm:$0xf]
  %v30 = vld [vmem:[%s1 + $0x1c] sm:$0xf]
  %v31 = vld [vmem:[%s1 + $0x20] sm:$0xf]
  %v32 = vld [vmem:[%s1 + $0x24] sm:$0xf]
  %v33 = vld [vmem:[%s1 + $0x28] sm:$0xf]
  %v34 = vld [vmem:[%s1 + $0x2c] sm:$0xf]
  %v35 = vld [vmem:[%s1 + $0x30] sm:$0xf]
  %v36 = vld [vmem:[%s1 + $0x34] sm:$0xf]
  %v37 = vld [vmem:[%s1 + $0x38] sm:$0xf]
  %v38 = vld [vmem:[%s1 + $0x3c] sm:$0xf]
  %v39 = vld [vmem:[%s1 + $0x40] sm:$0xf]
  %v40 = vld [vmem:[%s1 + $0x44] sm:$0xf]
  %v41 = vld [vmem:[%s1 + $0x48] sm:$0xf]
  %v42 = vld [vmem:[%s1 + $0x4c] sm:$0xf]
  %v43 = vld [vmem:[%s1 + $0x50] sm:$0xf]
  %v44 = vld [vmem:[%s1 + $0x54] sm:$0xf]
  %v45 = vld [vmem:[%s1 + $0x58] sm:$0xf]
  %v46 = vld [vmem:[%s1 + $0x5c] sm:$0xf]
  %v47 = vld [vmem:[%s1 + $0x60] sm:$0xf]
  %v48 = vld [vmem:[%s1 + $0x64] sm:$0xf]
  %v49 = vld [vmem:[%s1 + $0x68] sm:$0xf]
  %v50 = vld [vmem:[%s1 + $0x6c] sm:$0xf]
  %v51 = vld [vmem:[%s1 + $0x70] sm:$0xf]
  %v52 = vld [vmem:[%s1 + $0x74] sm:$0xf]
  %v53 = vld [vmem:[%s1 + $0x78] sm:$0xf]
  %v54 = vld [vmem:[%s1 + $0x7c] sm:$0xf]
  %v55 = vld [vmem:[%s1 + $0x80] sm:$0xf]
  %v56 = vld [vmem:[%s1 + $0x84] sm:$0xf]
  %v57 = vld [vmem:[%s1 + $0x88] sm:$0xf]
  %v58 = vld [vmem:[%s1 + $0x8c] sm:$0xf]
  %v59 = vld [vmem:[%s1 + $0x90] sm:$0xf]
  %v60 = vld [vmem:[%s1 + $0x94] sm:$0xf]
  %v61 = vld [vmem:[%s1 + $0x98] sm:$0xf]
  %v62 = vld [vmem:[%s1 + $0x9c] sm:$0xf]
  %v63 = vld [vmem:[%s1 + $0xa0] sm:$0xf]
  %v64 = vld [vmem:[%s1 + $0xa4] sm:$0xf]
  %v65 = vld [vmem:[%s1 + $0xa8] sm:$0xf]
  %v66 = vld [vmem:[%s1 + $0xac] sm:$0xf]
  %v67 = vld [vmem:[%s1 + $0xb0] sm:$0xf]
  %v68 = vld [vmem:[%s1 + $0xb4] sm:$0xf]
  %v69 = vld [vmem:[%s1 + $0xb8] sm:$0xf]
  %v70 = vld [vmem:[%s1 + $0xbc] sm:$0xf]
  %v71 = vld [vmem:[%s2] sm:$0x1]
  %v73 = vlaneseq
  %v74 = vshrl.u32 %v73, 7
  %v75 = vsub.s32 0, %v74
  %v76 = vrot.slane %v71, %v75
  %v86 = vunpack.c.l.b16 %v15
  %v87 = vunpack.c.h.b16 %v15
  %v88 = vunpack.c.l.b16 %v16
  %v89 = vunpack.c.l.b16 %v17
  %v90 = vunpack.c.h.b16 %v17
  %v91 = vunpack.c.l.b16 %v18
  %v92 = vunpack.c.l.b16 %v19
  %v93 = vunpack.c.h.b16 %v19
  %v94 = vunpack.c.l.b16 %v20
  %v95 = vunpack.c.l.b16 %v21
  %v96 = vunpack.c.h.b16 %v21
  %v97 = vunpack.c.l.b16 %v22
  %v98 = vpack.c.b16 %v89, %v86
  %v99 = vpack.c.b16 %v90, %v87
  %v100 = vpack.c.b16 %v91, %v88
  %v101 = vpack.c.b16 %v95, %v92
  %v102 = vpack.c.b16 %v96, %v93
  %v103 = vpack.c.b16 %v97, %v94
  %v158 = vunpack.c.l.b16 %v23
  %v159 = vunpack.c.l.b16 %v24
  %v160 = vunpack.c.l.b16 %v25
  %v161 = vunpack.c.l.b16 %v26
  %v162 = vunpack.c.l.b16 %v27
  %v163 = vunpack.c.l.b16 %v28
  %v164 = vunpack.c.l.b16 %v29
  %v165 = vunpack.c.l.b16 %v30
  %v166 = vunpack.c.l.b16 %v31
  %v167 = vunpack.c.l.b16 %v32
  %v168 = vunpack.c.l.b16 %v33
  %v169 = vunpack.c.l.b16 %v34
  %v170 = vunpack.c.l.b16 %v35
  %v171 = vunpack.c.l.b16 %v36
  %v172 = vunpack.c.l.b16 %v37
  %v173 = vunpack.c.l.b16 %v38
  %v174 = vunpack.c.l.b16 %v39
  %v175 = vunpack.c.l.b16 %v40
  %v176 = vunpack.c.l.b16 %v41
  %v177 = vunpack.c.l.b16 %v42
  %v178 = vunpack.c.l.b16 %v43
  %v179 = vunpack.c.l.b16 %v44
  %v180 = vunpack.c.l.b16 %v45
  %v181 = vunpack.c.l.b16 %v46
  %v182 = vunpack.c.l.b16 %v47
  %v183 = vunpack.c.l.b16 %v48
  %v184 = vunpack.c.l.b16 %v49
  %v185 = vunpack.c.l.b16 %v50
  %v186 = vunpack.c.l.b16 %v51
  %v187 = vunpack.c.l.b16 %v52
  %v188 = vunpack.c.l.b16 %v53
  %v189 = vunpack.c.l.b16 %v54
  %v190 = vunpack.c.l.b16 %v55
  %v191 = vunpack.c.l.b16 %v56
  %v192 = vunpack.c.l.b16 %v57
  %v193 = vunpack.c.l.b16 %v58
  %v194 = vunpack.c.l.b16 %v59
  %v195 = vunpack.c.l.b16 %v60
  %v196 = vunpack.c.l.b16 %v61
  %v197 = vunpack.c.l.b16 %v62
  %v198 = vunpack.c.l.b16 %v63
  %v199 = vunpack.c.l.b16 %v64
  %v200 = vunpack.c.l.b16 %v65
  %v201 = vunpack.c.l.b16 %v66
  %v202 = vunpack.c.l.b16 %v67
  %v203 = vunpack.c.l.b16 %v68
  %v204 = vunpack.c.l.b16 %v69
  %v205 = vunpack.c.l.b16 %v70
  %v206 = vpack.c.b16 %v159, %v158
  %v207 = vpack.c.b16 %v161, %v160
  %v208 = vpack.c.b16 %v163, %v162
  %v209 = vpack.c.b16 %v165, %v164
  %v210 = vpack.c.b16 %v167, %v166
  %v211 = vpack.c.b16 %v169, %v168
  %v212 = vpack.c.b16 %v171, %v170
  %v213 = vpack.c.b16 %v173, %v172
  %v214 = vpack.c.b16 %v175, %v174
  %v215 = vpack.c.b16 %v177, %v176
  %v216 = vpack.c.b16 %v179, %v178
  %v217 = vpack.c.b16 %v181, %v180
  %v218 = vpack.c.b16 %v183, %v182
  %v219 = vpack.c.b16 %v185, %v184
  %v220 = vpack.c.b16 %v187, %v186
  %v221 = vpack.c.b16 %v189, %v188
  %v222 = vpack.c.b16 %v191, %v190
  %v223 = vpack.c.b16 %v193, %v192
  %v224 = vpack.c.b16 %v195, %v194
  %v225 = vpack.c.b16 %v197, %v196
  %v226 = vpack.c.b16 %v199, %v198
  %v227 = vpack.c.b16 %v201, %v200
  %v228 = vpack.c.b16 %v203, %v202
  %v229 = vpack.c.b16 %v205, %v204
  %254 = vmatprep.subr.bf16.mxu0 0
  %255 = vmatpush1.bf16.msra.mxu0 %v206
  %256 = vmatprep.subr.bf16.mxu0 0
  %257 = vmatpush1.bf16.msra.mxu0 %v207
  %258 = vmatprep.subr.bf16.mxu0 0
  %259 = vmatpush1.bf16.msra.mxu0 %v208
  %260 = vmatprep.subr.bf16.mxu0 0
  %261 = vmatpush1.bf16.msra.mxu0 %v209
  %262 = vmatprep.subr.bf16.mxu0 0
  %263 = vmatpush1.bf16.msra.mxu0 %v210
  %264 = vmatprep.subr.bf16.mxu0 0
  %265 = vmatpush1.bf16.msra.mxu0 %v211
  %266 = vmatprep.subr.bf16.mxu0 0
  %267 = vmatpush1.bf16.msra.mxu0 %v212
  %268 = vmatprep.subr.bf16.mxu0 0
  %269 = vmatpush1.bf16.msra.mxu0 %v213
  %270 = vmatprep.subr.bf16.mxu0 0
  %271 = vmatpush1.bf16.msra.mxu0 %v214
  %272 = vmatprep.subr.bf16.mxu0 0
  %273 = vmatpush1.bf16.msra.mxu0 %v215
  %274 = vmatprep.subr.bf16.mxu0 0
  %275 = vmatpush1.bf16.msra.mxu0 %v216
  %276 = vmatprep.subr.bf16.mxu0 0
  %277 = vmatpush1.bf16.msra.mxu0 %v217
  %278 = vmatprep.subr.bf16.mxu0 0
  %279 = vmatpush1.bf16.msra.mxu0 %v218
  %280 = vmatprep.subr.bf16.mxu0 0
  %281 = vmatpush1.bf16.msra.mxu0 %v219
  %282 = vmatprep.subr.bf16.mxu0 0
  %283 = vmatpush1.bf16.msra.mxu0 %v220
  %284 = vmatprep.subr.bf16.mxu0 0
  %285 = vmatpush1.bf16.msra.mxu0 %v221
  %286 = vmatprep.mubr.bf16.mxu0 %v99
  %287 = vmatmul.mubr.bf16.gmra.mrb[0].mxu0 %v98
  %v288 = vpop.f32.mrb[0].mxu0
  %v289 = vadd.f32 %v76, %v288
  %v290 = vpop.f32.mrb[0].mxu0
  %v291 = vpop.f32.mrb[0].mxu0
  %v292 = vadd.f32 %v76, %v291
  %v293 = vpop.f32.mrb[0].mxu0
  %294 = vmatprep.mubr.bf16.mxu0 %v102
  %295 = vmatmul.mubr.bf16.gmra.mrb[0].mxu0 %v101
  %v296 = vpop.f32.mrb[0].mxu0
  %v297 = vadd.f32 %v76, %v296
  %v298 = vpop.f32.mrb[0].mxu0
  %v299 = vpop.f32.mrb[0].mxu0
  %v300 = vadd.f32 %v76, %v299
  %v301 = vpop.f32.mrb[0].mxu0
  %302 = vdwg.mxu0
  %303 = vmatprep.subr.bf16.mxu0 0
  %304 = vmatpush1.bf16.msra.mxu0 %v222
  %305 = vmatprep.subr.bf16.mxu0 0
  %306 = vmatpush1.bf16.msra.mxu0 %v223
  %307 = vmatprep.subr.bf16.mxu0 0
  %308 = vmatpush1.bf16.msra.mxu0 %v224
  %309 = vmatprep.subr.bf16.mxu0 0
  %310 = vmatpush1.bf16.msra.mxu0 %v225
  %311 = vmatprep.subr.bf16.mxu0 0
  %312 = vmatpush1.bf16.msra.mxu0 %v226
  %313 = vmatprep.subr.bf16.mxu0 0
  %314 = vmatpush1.bf16.msra.mxu0 %v227
  %315 = vmatprep.subr.bf16.mxu0 0
  %316 = vmatpush1.bf16.msra.mxu0 %v228
  %317 = vmatprep.subr.bf16.mxu0 0
  %318 = vmatpush1.bf16.msra.mxu0 %v229
  %319 = vmatprep.subr.bf16.mxu0 0
  %320 = vmatpush1.bf16.msra.mxu0 0
  %321 = vmatprep.subr.bf16.mxu0 0
  %322 = vmatpush1.bf16.msra.mxu0 0
  %323 = vmatprep.subr.bf16.mxu0 0
  %324 = vmatpush1.bf16.msra.mxu0 0
  %325 = vmatprep.subr.bf16.mxu0 0
  %326 = vmatpush1.bf16.msra.mxu0 0
  %327 = vmatprep.subr.bf16.mxu0 0
  %328 = vmatpush1.bf16.msra.mxu0 0
  %329 = vmatprep.subr.bf16.mxu0 0
  %330 = vmatpush1.bf16.msra.mxu0 0
  %331 = vmatprep.subr.bf16.mxu0 0
  %332 = vmatpush1.bf16.msra.mxu0 0
  %333 = vmatprep.subr.bf16.mxu0 0
  %334 = vmatpush1.bf16.msra.mxu0 0
  %335 = vmatprep.mubr.bf16.mxu0 0
  %336 = vmatmul.mubr.bf16.gmra.mrb[0].mxu0 %v100
  %v337 = vpop.f32.mrb[0].mxu0
  %v338 = vadd.f32 %v289, %v337
  %v339 = vpop.f32.mrb[0].mxu0
  %v340 = vpop.f32.mrb[0].mxu0
  %v341 = vadd.f32 %v292, %v340
  %v342 = vpop.f32.mrb[0].mxu0
  %343 = vmatprep.mubr.bf16.mxu0 0
  %344 = vmatmul.mubr.bf16.gmra.mrb[0].mxu0 %v103
  %v345 = vpop.f32.mrb[0].mxu0
  %v346 = vadd.f32 %v297, %v345
  %v347 = vpop.f32.mrb[0].mxu0
  %v348 = vpop.f32.mrb[0].mxu0
  %v349 = vadd.f32 %v300, %v348
  %v350 = vpop.f32.mrb[0].mxu0
  %351 = vdwg.mxu0
  %v352 = vpack.c.bf16 %v341, %v338
  %v353 = vpack.c.bf16 %v349, %v346
  %v356 = vunpack.c.l.b16 %v352
  %v357 = vunpack.c.h.b16 %v352
  %v358 = vunpack.c.l.b16 %v353
  %v359 = vunpack.c.h.b16 %v353
  %v360 = vpack.c.b16 %v356, %v356
  %v361 = vpack.c.b16 %v357, %v357
  %v362 = vpack.c.b16 %v358, %v358
  %v363 = vpack.c.b16 %v359, %v359
  %368 = vst [vmem:[%s3] sm:$0xf] %v360
  %369 = vst [vmem:[%s3 + $0x4] sm:$0xf] %v361
  %370 = vst [vmem:[%s3 + $0x8] sm:$0xf] %v362
  %371 = vst [vmem:[%s3 + $0xc] sm:$0xf] %v363
  // Predicated region
  $region14: #{speinet_forward.12} parent=0 // pred_check
    _
  $region15: #{speinet_forward.12} parent=0 // pred_check_branch
    %373 = sbr.rel (0) target = $region17
  $region16: #{speinet_forward.12} parent=0 // pred_region
    _
  $region17: #{speinet_forward.12} parent=0 // pred_fallthru
    _
  // Predicated region
  $region18: #{speinet_forward.12} parent=0 // pred_check
    _
  $region19: #{speinet_forward.12} parent=0 // pred_check_branch
    %375 = sbr.rel (0) target = $region21
  $region20: #{speinet_forward.12} parent=0 // pred_region
    _
  $region21: #{speinet_forward.12} parent=0 // pred_fallthru
    _

// kernel: tile.18
$region0: #{tile.18}
  #allocation0 [shape = 's32[1]{0}', space=sflag, size = 0x4, scoped, tag = 'scoped memory for tile.18']
  %s0 = inlined_call_operand.vmem [shape: f32[32], index: 0, kind: input, shape index: {}]
  %s1 = inlined_call_operand.vmem [shape: f32[4,32], index: 1, kind: output, shape index: {}]
  // Predicated region
  $region2: #{tile.18} parent=0 // pred_check
    _
  $region3: #{tile.18} parent=0 // pred_check_branch
    %3 = sbr.rel (0) target = $region5
  $region4: #{tile.18} parent=0 // pred_region
    _
  $region5: #{tile.18} parent=0 // pred_fallthru
    _
  %v4 = vld [vmem:[%s0] ss:$0 sm:$0xff]
  %5 = vst [vmem:[%s1] sm:$0xf] %v4

// kernel: speinet_forward.11
$region0: #{speinet_forward.11}
  #allocation0 [shape = 'u32[]', space=smem, size = 0x4, offset = 0x4, fixed_abs, tag = 'smem constant byte address 0x4 - core index']
  #allocation1 [shape = 'u32[144,128]{1,0:T(1,128)}', space=vmem, size = 0x12000, scoped, tag = 'internal scratch']
  %s0 = inlined_call_operand.vmem [shape: bf16[4,16,128], index: 0, kind: input, shape index: {}]
  %s1 = inlined_call_operand.vmem [shape: bf16[4,16,128], index: 1, kind: input, shape index: {}]
  %s2 = inlined_call_operand.vmem [shape: f32[6,128], index: 2, kind: input, shape index: {}]
  %s3 = inlined_call_operand.vmem [shape: bf16[128,128], index: 3, kind: input, shape index: {}]
  %s4 = inlined_call_operand.vmem [shape: f32[1,128], index: 4, kind: input, shape index: {}]
  %s5 = inlined_call_operand.vmem [shape: bf16[128,256], index: 5, kind: input, shape index: {}]
  %s6 = inlined_call_operand.vmem [shape: f32[1,256], index: 6, kind: input, shape index: {}]
  %s7 = inlined_call_operand.vmem [shape: bf16[128,128], index: 7, kind: input, shape index: {}]
  %s8 = inlined_call_operand.vmem [shape: f32[1,128], index: 8, kind: input, shape index: {}]
  %s9 = inlined_call_operand.vmem [shape: bf16[128,256], index: 9, kind: input, shape index: {}]
  %s10 = inlined_call_operand.vmem [shape: f32[1,256], index: 10, kind: input, shape index: {}]
  %s11 = inlined_call_operand.vmem [shape: bf16[256,128], index: 11, kind: input, shape index: {}]
  %s12 = inlined_call_operand.vmem [shape: f32[1,128], index: 12, kind: input, shape index: {}]
  %s13 = inlined_call_operand.vmem [shape: bf16[4,16,128], index: 13, kind: output, shape index: {}]
  %s14 = sld [smem:[#allocation0]]
  $region85: #{speinet_forward.11} parent=0
    _
  %s16 = ssub.s32 1, %s14
  %s17 = scalar_select 0, %s16, %s14
  loop: start=0, step=1, limit=6
  $region2: #{speinet_forward.11} parent=0 // loop_pre_header
    _
  $region3: #{speinet_forward.11} parent=0 // loop_header
    %s19 = sphi 0, %s23
    %p20 = scmp.ge.s32.totalorder %s19, 6
    %s29 = sphi 0, %s31
    %s32 = sphi 0, %s29
    %s33 = sphi 0, %s32
    %s49 = sphi 0, %s33
    %s55 = sphi 0, %s57
    %s58 = sphi 0, %s55
    %s59 = sphi 0, %s58
    %s75 = sphi 0, %s59
    %s79 = sphi 0, %s79
    %s81 = sphi 0, %s79
    %s82 = sphi 0, %s81
    %s96 = sphi 0, %s82
    %s100 = sphi 0, %s100
    %s102 = sphi 0, %s100
    %s103 = sphi 0, %s102
    %s117 = sphi 0, %s103
    %s121 = sphi 0, %s121
    %s123 = sphi 0, %s121
    %s124 = sphi 0, %s123
    %s138 = sphi 0, %s124
    %s142 = sphi 0, %s142
    %s144 = sphi 0, %s142
    %s145 = sphi 0, %s144
    %s159 = sphi 0, %s145
    %s163 = sphi 0, %s163
    %s165 = sphi 0, %s163
    %s166 = sphi 0, %s165
    %s180 = sphi 0, %s166
    %s184 = sphi 0, %s184
    %s186 = sphi 0, %s184
    %s187 = sphi 0, %s186
    %s201 = sphi 0, %s187
    %s205 = sphi 0, %s205
    %s207 = sphi 0, %s205
    %s208 = sphi 0, %s207
    %s222 = sphi 0, %s208
    %s226 = sphi 0, %s226
    %s228 = sphi 0, %s226
    %s229 = sphi 0, %s228
    %s243 = sphi 0, %s229
    %s247 = sphi 0, %s247
    %s249 = sphi 0, %s247
    %s250 = sphi 0, %s249
    %s264 = sphi 0, %s250
    %s268 = sphi 0, %s268
    %s270 = sphi 0, %s268
    %s271 = sphi 0, %s270
    %s285 = sphi 0, %s271
    %s289 = sphi 0, %s289
    %s291 = sphi 0, %s289
    %s292 = sphi 0, %s291
    %s306 = sphi 0, %s292
    %s312 = sphi 0, %s314
    %s315 = sphi 0, %s312
    %s316 = sphi 0, %s315
    %s332 = sphi 0, %s316
  $region4: #{speinet_forward.11} parent=0 // loop_header_branch
    %22 = sbr.rel (%p20) target = $region8
  $region5: #{speinet_forward.11} parent=0 // loop_body
    %s24 = ssub.s32 %s19, 1
    %s25 = ssub.s32 %s19, 2
    %s26 = sadd.s32 %s19, 1
    %s27 = ssub.s32 %s19, %s26
    %p28 = scmp.eq.s32.totalorder %s27, 0
    %s30 = sadd.s32 %s29, 1
    %s31 = scalar_select %p28, %s29, %s30
    %p34 = pneg %p28
    %p35 = scmp.eq.s32.totalorder %s19, 3
    %p36 = por %p34, %p35
    %p37 = scmp.ne.s32.totalorder %s29, %s32
    %p38 = scmp.eq.s32.totalorder %s19, 0
    %p39 = por %p37, %p38
    %p40 = scmp.ne.s32.totalorder %s29, %s32
    %p41 = scmp.eq.s32.totalorder %s24, 3
    %p42 = por %p40, %p41
    %p43 = scmp.ne.s32.totalorder %s32, %s33
    %p44 = scmp.eq.s32.totalorder %s24, 0
    %p45 = por %p43, %p44
    %p46 = scmp.ne.s32.totalorder %s32, %s33
    %p47 = scmp.eq.s32.totalorder %s25, 3
    %p48 = por %p46, %p47
    %p50 = scmp.ne.s32.totalorder %s33, %s49
    %p51 = scmp.eq.s32.totalorder %s25, 0
    %p52 = por %p50, %p51
    %s53 = ssub.s32 %s19, %s26
    %p54 = scmp.eq.s32.totalorder %s53, 0
    %s56 = sadd.s32 %s55, 1
    %s57 = scalar_select %p54, %s55, %s56
    %p60 = pneg %p54
    %p61 = scmp.eq.s32.totalorder %s19, 3
    %p62 = por %p60, %p61
    %p63 = scmp.ne.s32.totalorder %s55, %s58
    %p64 = scmp.eq.s32.totalorder %s19, 0
    %p65 = por %p63, %p64
    %p66 = scmp.ne.s32.totalorder %s55, %s58
    %p67 = scmp.eq.s32.totalorder %s24, 3
    %p68 = por %p66, %p67
    %p69 = scmp.ne.s32.totalorder %s58, %s59
    %p70 = scmp.eq.s32.totalorder %s24, 0
    %p71 = por %p69, %p70
    %p72 = scmp.ne.s32.totalorder %s58, %s59
    %p73 = scmp.eq.s32.totalorder %s25, 3
    %p74 = por %p72, %p73
    %p76 = scmp.ne.s32.totalorder %s59, %s75
    %p77 = scmp.eq.s32.totalorder %s25, 0
    %p78 = por %p76, %p77
    %s80 = sadd.s32 %s79, 1
    %p83 = scmp.eq.s32.totalorder %s19, 3
    %p84 = scmp.ne.s32.totalorder %s79, %s81
    %p85 = scmp.eq.s32.totalorder %s19, 0
    %p86 = por %p84, %p85
    %p87 = scmp.ne.s32.totalorder %s79, %s81
    %p88 = scmp.eq.s32.totalorder %s24, 3
    %p89 = por %p87, %p88
    %p90 = scmp.ne.s32.totalorder %s81, %s82
    %p91 = scmp.eq.s32.totalorder %s24, 0
    %p92 = por %p90, %p91
    %p93 = scmp.ne.s32.totalorder %s81, %s82
    %p94 = scmp.eq.s32.totalorder %s25, 3
    %p95 = por %p93, %p94
    %p97 = scmp.ne.s32.totalorder %s82, %s96
    %p98 = scmp.eq.s32.totalorder %s25, 0
    %p99 = por %p97, %p98
    %s101 = sadd.s32 %s100, 1
    %p104 = scmp.eq.s32.totalorder %s19, 3
    %p105 = scmp.ne.s32.totalorder %s100, %s102
    %p106 = scmp.eq.s32.totalorder %s19, 0
    %p107 = por %p105, %p106
    %p108 = scmp.ne.s32.totalorder %s100, %s102
    %p109 = scmp.eq.s32.totalorder %s24, 3
    %p110 = por %p108, %p109
    %p111 = scmp.ne.s32.totalorder %s102, %s103
    %p112 = scmp.eq.s32.totalorder %s24, 0
    %p113 = por %p111, %p112
    %p114 = scmp.ne.s32.totalorder %s102, %s103
    %p115 = scmp.eq.s32.totalorder %s25, 3
    %p116 = por %p114, %p115
    %p118 = scmp.ne.s32.totalorder %s103, %s117
    %p119 = scmp.eq.s32.totalorder %s25, 0
    %p120 = por %p118, %p119
    %s122 = sadd.s32 %s121, 1
    %p125 = scmp.eq.s32.totalorder %s19, 3
    %p126 = scmp.ne.s32.totalorder %s121, %s123
    %p127 = scmp.eq.s32.totalorder %s19, 0
    %p128 = por %p126, %p127
    %p129 = scmp.ne.s32.totalorder %s121, %s123
    %p130 = scmp.eq.s32.totalorder %s24, 3
    %p131 = por %p129, %p130
    %p132 = scmp.ne.s32.totalorder %s123, %s124
    %p133 = scmp.eq.s32.totalorder %s24, 0
    %p134 = por %p132, %p133
    %p135 = scmp.ne.s32.totalorder %s123, %s124
    %p136 = scmp.eq.s32.totalorder %s25, 3
    %p137 = por %p135, %p136
    %p139 = scmp.ne.s32.totalorder %s124, %s138
    %p140 = scmp.eq.s32.totalorder %s25, 0
    %p141 = por %p139, %p140
    %s143 = sadd.s32 %s142, 1
    %p146 = scmp.eq.s32.totalorder %s19, 3
    %p147 = scmp.ne.s32.totalorder %s142, %s144
    %p148 = scmp.eq.s32.totalorder %s19, 0
    %p149 = por %p147, %p148
    %p150 = scmp.ne.s32.totalorder %s142, %s144
    %p151 = scmp.eq.s32.totalorder %s24, 3
    %p152 = por %p150, %p151
    %p153 = scmp.ne.s32.totalorder %s144, %s145
    %p154 = scmp.eq.s32.totalorder %s24, 0
    %p155 = por %p153, %p154
    %p156 = scmp.ne.s32.totalorder %s144, %s145
    %p157 = scmp.eq.s32.totalorder %s25, 3
    %p158 = por %p156, %p157
    %p160 = scmp.ne.s32.totalorder %s145, %s159
    %p161 = scmp.eq.s32.totalorder %s25, 0
    %p162 = por %p160, %p161
    %s164 = sadd.s32 %s163, 1
    %p167 = scmp.eq.s32.totalorder %s19, 3
    %p168 = scmp.ne.s32.totalorder %s163, %s165
    %p169 = scmp.eq.s32.totalorder %s19, 0
    %p170 = por %p168, %p169
    %p171 = scmp.ne.s32.totalorder %s163, %s165
    %p172 = scmp.eq.s32.totalorder %s24, 3
    %p173 = por %p171, %p172
    %p174 = scmp.ne.s32.totalorder %s165, %s166
    %p175 = scmp.eq.s32.totalorder %s24, 0
    %p176 = por %p174, %p175
    %p177 = scmp.ne.s32.totalorder %s165, %s166
    %p178 = scmp.eq.s32.totalorder %s25, 3
    %p179 = por %p177, %p178
    %p181 = scmp.ne.s32.totalorder %s166, %s180
    %p182 = scmp.eq.s32.totalorder %s25, 0
    %p183 = por %p181, %p182
    %s185 = sadd.s32 %s184, 1
    %p188 = scmp.eq.s32.totalorder %s19, 3
    %p189 = scmp.ne.s32.totalorder %s184, %s186
    %p190 = scmp.eq.s32.totalorder %s19, 0
    %p191 = por %p189, %p190
    %p192 = scmp.ne.s32.totalorder %s184, %s186
    %p193 = scmp.eq.s32.totalorder %s24, 3
    %p194 = por %p192, %p193
    %p195 = scmp.ne.s32.totalorder %s186, %s187
    %p196 = scmp.eq.s32.totalorder %s24, 0
    %p197 = por %p195, %p196
    %p198 = scmp.ne.s32.totalorder %s186, %s187
    %p199 = scmp.eq.s32.totalorder %s25, 3
    %p200 = por %p198, %p199
    %p202 = scmp.ne.s32.totalorder %s187, %s201
    %p203 = scmp.eq.s32.totalorder %s25, 0
    %p204 = por %p202, %p203
    %s206 = sadd.s32 %s205, 1
    %p209 = scmp.eq.s32.totalorder %s19, 3
    %p210 = scmp.ne.s32.totalorder %s205, %s207
    %p211 = scmp.eq.s32.totalorder %s19, 0
    %p212 = por %p210, %p211
    %p213 = scmp.ne.s32.totalorder %s205, %s207
    %p214 = scmp.eq.s32.totalorder %s24, 3
    %p215 = por %p213, %p214
    %p216 = scmp.ne.s32.totalorder %s207, %s208
    %p217 = scmp.eq.s32.totalorder %s24, 0
    %p218 = por %p216, %p217
    %p219 = scmp.ne.s32.totalorder %s207, %s208
    %p220 = scmp.eq.s32.totalorder %s25, 3
    %p221 = por %p219, %p220
    %p223 = scmp.ne.s32.totalorder %s208, %s222
    %p224 = scmp.eq.s32.totalorder %s25, 0
    %p225 = por %p223, %p224
    %s227 = sadd.s32 %s226, 1
    %p230 = scmp.eq.s32.totalorder %s19, 3
    %p231 = scmp.ne.s32.totalorder %s226, %s228
    %p232 = scmp.eq.s32.totalorder %s19, 0
    %p233 = por %p231, %p232
    %p234 = scmp.ne.s32.totalorder %s226, %s228
    %p235 = scmp.eq.s32.totalorder %s24, 3
    %p236 = por %p234, %p235
    %p237 = scmp.ne.s32.totalorder %s228, %s229
    %p238 = scmp.eq.s32.totalorder %s24, 0
    %p239 = por %p237, %p238
    %p240 = scmp.ne.s32.totalorder %s228, %s229
    %p241 = scmp.eq.s32.totalorder %s25, 3
    %p242 = por %p240, %p241
    %p244 = scmp.ne.s32.totalorder %s229, %s243
    %p245 = scmp.eq.s32.totalorder %s25, 0
    %p246 = por %p244, %p245
    %s248 = sadd.s32 %s247, 1
    %p251 = scmp.eq.s32.totalorder %s19, 3
    %p252 = scmp.ne.s32.totalorder %s247, %s249
    %p253 = scmp.eq.s32.totalorder %s19, 0
    %p254 = por %p252, %p253
    %p255 = scmp.ne.s32.totalorder %s247, %s249
    %p256 = scmp.eq.s32.totalorder %s24, 3
    %p257 = por %p255, %p256
    %p258 = scmp.ne.s32.totalorder %s249, %s250
    %p259 = scmp.eq.s32.totalorder %s24, 0
    %p260 = por %p258, %p259
    %p261 = scmp.ne.s32.totalorder %s249, %s250
    %p262 = scmp.eq.s32.totalorder %s25, 3
    %p263 = por %p261, %p262
    %p265 = scmp.ne.s32.totalorder %s250, %s264
    %p266 = scmp.eq.s32.totalorder %s25, 0
    %p267 = por %p265, %p266
    %s269 = sadd.s32 %s268, 1
    %p272 = scmp.eq.s32.totalorder %s19, 3
    %p273 = scmp.ne.s32.totalorder %s268, %s270
    %p274 = scmp.eq.s32.totalorder %s19, 0
    %p275 = por %p273, %p274
    %p276 = scmp.ne.s32.totalorder %s268, %s270
    %p277 = scmp.eq.s32.totalorder %s24, 3
    %p278 = por %p276, %p277
    %p279 = scmp.ne.s32.totalorder %s270, %s271
    %p280 = scmp.eq.s32.totalorder %s24, 0
    %p281 = por %p279, %p280
    %p282 = scmp.ne.s32.totalorder %s270, %s271
    %p283 = scmp.eq.s32.totalorder %s25, 3
    %p284 = por %p282, %p283
    %p286 = scmp.ne.s32.totalorder %s271, %s285
    %p287 = scmp.eq.s32.totalorder %s25, 0
    %p288 = por %p286, %p287
    %s290 = sadd.s32 %s289, 1
    %p293 = scmp.eq.s32.totalorder %s19, 3
    %p294 = scmp.ne.s32.totalorder %s289, %s291
    %p295 = scmp.eq.s32.totalorder %s19, 0
    %p296 = por %p294, %p295
    %p297 = scmp.ne.s32.totalorder %s289, %s291
    %p298 = scmp.eq.s32.totalorder %s24, 3
    %p299 = por %p297, %p298
    %p300 = scmp.ne.s32.totalorder %s291, %s292
    %p301 = scmp.eq.s32.totalorder %s24, 0
    %p302 = por %p300, %p301
    %p303 = scmp.ne.s32.totalorder %s291, %s292
    %p304 = scmp.eq.s32.totalorder %s25, 3
    %p305 = por %p303, %p304
    %p307 = scmp.ne.s32.totalorder %s292, %s306
    %p308 = scmp.eq.s32.totalorder %s25, 0
    %p309 = por %p307, %p308
    %s310 = ssub.s32 %s19, %s26
    %p311 = scmp.eq.s32.totalorder %s310, 0
    %s313 = sadd.s32 %s312, 1
    %s314 = scalar_select %p311, %s312, %s313
    %p317 = pneg %p311
    %p318 = scmp.eq.s32.totalorder %s19, 3
    %p319 = por %p317, %p318
    %p320 = scmp.ne.s32.totalorder %s312, %s315
    %p321 = scmp.eq.s32.totalorder %s19, 0
    %p322 = por %p320, %p321
    %p323 = scmp.ne.s32.totalorder %s312, %s315
    %p324 = scmp.eq.s32.totalorder %s24, 3
    %p325 = por %p323, %p324
    %p326 = scmp.ne.s32.totalorder %s315, %s316
    %p327 = scmp.eq.s32.totalorder %s24, 0
    %p328 = por %p326, %p327
    %p329 = scmp.ne.s32.totalorder %s315, %s316
    %p330 = scmp.eq.s32.totalorder %s25, 3
    %p331 = por %p329, %p330
    %p333 = scmp.ne.s32.totalorder %s316, %s332
    %p334 = scmp.eq.s32.totalorder %s25, 0
    %p335 = por %p333, %p334
    %p336 = scmp.le.s32.totalorder 1, %s19
    %p337 = scmp.lt.s32.totalorder %s19, 5
    %p338 = pnand %p336, %p337
    %p339 = pneg %p338
    // Predicated region
    $region9: #{speinet_forward.11} parent=5 // pred_check
      _
    $region10: #{speinet_forward.11} parent=5 // pred_check_branch
      %341 = sbr.rel (%p338) target = $region12
    $region11: #{speinet_forward.11} parent=5 // pred_region
      %s342 = ssub.s32 %s19, 1
      // Predicated region
      $region13: #{speinet_forward.11} parent=11 // pred_check
        %p343 = pneg %p92
      $region14: #{speinet_forward.11} parent=11 // pred_check_branch
        %345 = sbr.rel (%p343) target = $region16
      $region15: #{speinet_forward.11} parent=11 // pred_region
        _
      $region16: #{speinet_forward.11} parent=11 // pred_fallthru
        _
      // Predicated region
      $region17: #{speinet_forward.11} parent=11 // pred_check
        %p346 = pneg %p113
      $region18: #{speinet_forward.11} parent=11 // pred_check_branch
        %348 = sbr.rel (%p346) target = $region20
      $region19: #{speinet_forward.11} parent=11 // pred_region
        _
      $region20: #{speinet_forward.11} parent=11 // pred_fallthru
        _
      // Predicated region
      $region21: #{speinet_forward.11} parent=11 // pred_check
        %p349 = pneg %p134
      $region22: #{speinet_forward.11} parent=11 // pred_check_branch
        %351 = sbr.rel (%p349) target = $region24
      $region23: #{speinet_forward.11} parent=11 // pred_region
        _
      $region24: #{speinet_forward.11} parent=11 // pred_fallthru
        _
      // Predicated region
      $region25: #{speinet_forward.11} parent=11 // pred_check
        %p352 = pneg %p155
      $region26: #{speinet_forward.11} parent=11 // pred_check_branch
        %354 = sbr.rel (%p352) target = $region28
      $region27: #{speinet_forward.11} parent=11 // pred_region
        _
      $region28: #{speinet_forward.11} parent=11 // pred_fallthru
        _
      // Predicated region
      $region29: #{speinet_forward.11} parent=11 // pred_check
        %p355 = pneg %p176
      $region30: #{speinet_forward.11} parent=11 // pred_check_branch
        %357 = sbr.rel (%p355) target = $region32
      $region31: #{speinet_forward.11} parent=11 // pred_region
        _
      $region32: #{speinet_forward.11} parent=11 // pred_fallthru
        _
      // Predicated region
      $region33: #{speinet_forward.11} parent=11 // pred_check
        %p358 = pneg %p197
      $region34: #{speinet_forward.11} parent=11 // pred_check_branch
        %360 = sbr.rel (%p358) target = $region36
      $region35: #{speinet_forward.11} parent=11 // pred_region
        _
      $region36: #{speinet_forward.11} parent=11 // pred_fallthru
        _
      // Predicated region
      $region37: #{speinet_forward.11} parent=11 // pred_check
        %p361 = pneg %p218
      $region38: #{speinet_forward.11} parent=11 // pred_check_branch
        %363 = sbr.rel (%p361) target = $region40
      $region39: #{speinet_forward.11} parent=11 // pred_region
        _
      $region40: #{speinet_forward.11} parent=11 // pred_fallthru
        _
      // Predicated region
      $region41: #{speinet_forward.11} parent=11 // pred_check
        %p364 = pneg %p239
      $region42: #{speinet_forward.11} parent=11 // pred_check_branch
        %366 = sbr.rel (%p364) target = $region44
      $region43: #{speinet_forward.11} parent=11 // pred_region
        _
      $region44: #{speinet_forward.11} parent=11 // pred_fallthru
        _
      // Predicated region
      $region45: #{speinet_forward.11} parent=11 // pred_check
        %p367 = pneg %p260
      $region46: #{speinet_forward.11} parent=11 // pred_check_branch
        %369 = sbr.rel (%p367) target = $region48
      $region47: #{speinet_forward.11} parent=11 // pred_region
        _
      $region48: #{speinet_forward.11} parent=11 // pred_fallthru
        _
      // Predicated region
      $region49: #{speinet_forward.11} parent=11 // pred_check
        %p370 = pneg %p281
      $region50: #{speinet_forward.11} parent=11 // pred_check_branch
        %372 = sbr.rel (%p370) target = $region52
      $region51: #{speinet_forward.11} parent=11 // pred_region
        _
      $region52: #{speinet_forward.11} parent=11 // pred_fallthru
        _
      // Predicated region
      $region53: #{speinet_forward.11} parent=11 // pred_check
        %p373 = pneg %p302
      $region54: #{speinet_forward.11} parent=11 // pred_check_branch
        %375 = sbr.rel (%p373) target = $region56
      $region55: #{speinet_forward.11} parent=11 // pred_region
        _
      $region56: #{speinet_forward.11} parent=11 // pred_fallthru
        _
    $region12: #{speinet_forward.11} parent=5 // pred_fallthru
      _
    %p376 = scmp.lt.s32.totalorder %s19, 4
    // Predicated region
    $region57: #{speinet_forward.11} parent=5 // pred_check
      %p377 = pneg %p376
    $region58: #{speinet_forward.11} parent=5 // pred_check_branch
      %379 = sbr.rel (%p377) target = $region60
    $region59: #{speinet_forward.11} parent=5 // pred_region
      // Predicated region
      $region61: #{speinet_forward.11} parent=59 // pred_check
        %p380 = pneg %p39
      $region62: #{speinet_forward.11} parent=59 // pred_check_branch
        %382 = sbr.rel (%p380) target = $region64
      $region63: #{speinet_forward.11} parent=59 // pred_region
        %p383 = scmp.lt.s32.totalorder %s19, 3
        %s384 = scalar_select %p383, %s19, 3
        %s385 = smul.addr %s384, 2
        %s386 = smul.addr %s385, 4
        %s387 = scalar_lea.vmem %s0, %s386
      $region64: #{speinet_forward.11} parent=59 // pred_fallthru
        _
      // Predicated region
      $region65: #{speinet_forward.11} parent=59 // pred_check
        %p388 = pneg %p65
      $region66: #{speinet_forward.11} parent=59 // pred_check_branch
        %390 = sbr.rel (%p388) target = $region68
      $region67: #{speinet_forward.11} parent=59 // pred_region
        %p391 = scmp.lt.s32.totalorder %s19, 3
        %s392 = scalar_select %p391, %s19, 3
        %s393 = smul.addr %s392, 2
        %s394 = smul.addr %s393, 4
        %s395 = scalar_lea.vmem %s1, %s394
      $region68: #{speinet_forward.11} parent=59 // pred_fallthru
        _
    $region60: #{speinet_forward.11} parent=5 // pred_fallthru
      _
    %p396 = scmp.le.s32.totalorder 1, %s19
    %p397 = scmp.lt.s32.totalorder %s19, 5
    %p398 = pnand %p396, %p397
    %p399 = pneg %p398
    // Predicated region
    $region69: #{speinet_forward.11} parent=5 // pred_check
      _
    $region70: #{speinet_forward.11} parent=5 // pred_check_branch
      %401 = sbr.rel (%p398) target = $region72
    $region71: #{speinet_forward.11} parent=5 // pred_region
      %s402 = ssub.s32 %s19, 1
      %p403 = scmp.lt.s32.totalorder %s24, 3
      %s404 = scalar_select %p403, %s24, 3
      %s405 = smul.addr %s404, 2
      %s406 = smul.addr %s405, 4
      %s407 = scalar_lea.vmem %s0, %s406
      %p408 = pneg %p45
      %p409 = pneg %p42
      %p410 = scmp.lt.s32.totalorder %s24, 3
      %s411 = scalar_select %p410, %s24, 3
      %s412 = smul.addr %s411, 2
      %s413 = smul.addr %s412, 4
      %s414 = scalar_lea.vmem %s1, %s413
      %p415 = pneg %p71
      %p416 = pneg %p68
      %p417 = pneg %p92
      %p418 = pneg %p89
      %p419 = pneg %p113
      %p420 = pneg %p110
      %p421 = pneg %p134
      %p422 = pneg %p131
      %p423 = pneg %p155
      %p424 = pneg %p152
      %p425 = pneg %p176
      %p426 = pneg %p173
      %p427 = pneg %p197
      %p428 = pneg %p194
      %p429 = pneg %p218
      %p430 = pneg %p215
      %p431 = pneg %p239
      %p432 = pneg %p236
      %p433 = pneg %p260
      %p434 = pneg %p257
      %p435 = pneg %p281
      %p436 = pneg %p278
      %p437 = pneg %p302
      %p438 = pneg %p299
      %p439 = pneg %p328
      %p440 = pneg %p325
      %p441 = scmp.lt.s32.totalorder %s24, 3
      %s442 = scalar_select %p441, %s24, 3
      %s443 = smul.addr %s442, 2
      %s444 = smul.addr %s443, 4
      %s445 = scalar_lea.vmem %s13, %s444
      %p446 = scmp.lt.s32.totalorder %s24, 3
      %s447 = scalar_select %p446, %s24, 3
      %s448 = smul.addr %s447, 2
      %s449 = smul.addr %s448, 4
      %s450 = scalar_lea.vmem %s0, %s449
      %p451 = scmp.lt.s32.totalorder %s24, 3
      %s452 = scalar_select %p451, %s24, 3
      %s453 = smul.addr %s452, 2
      %s454 = smul.addr %s453, 4
      %s455 = scalar_lea.vmem %s1, %s454
      %p456 = scmp.lt.s32.totalorder %s24, 3
      %s457 = scalar_select %p456, %s24, 3
      %s458 = smul.addr %s457, 2
      %s459 = smul.addr %s458, 4
      %s460 = scalar_lea.vmem %s13, %s459
      %v462 = vld [vmem:[%s450] sm:$0xf]
      %v463 = vld [vmem:[%s450 + $0x4] sm:$0xf]
      %v464 = vunpack.c.l.bf16 %v462
      %v465 = vunpack.c.l.bf16 %v463
      %v466 = vld [vmem:[%s455] sm:$0xf]
      %v467 = vld [vmem:[%s455 + $0x4] sm:$0xf]
      %v468 = vunpack.c.l.bf16 %v466
      %v469 = vunpack.c.l.bf16 %v467
      %v470 = vld [vmem:[%s2] sm:$0x3f]
      %471 = vadd.xlane.f32.xlu0 %v464
      %v472 = vpop.xlane.xlu0 %471
      %473 = vadd.xlane.f32.xlu0 %v465
      %v474 = vpop.xlane.xlu0 %473
      %v475 = vrcp.pop 128.0
      %v476 = vmul.f32 %v472, %v475
      %v477 = vmul.f32 %v474, %v475
      %v478 = vsub.f32 %v464, %v476
      %v479 = vsub.f32 %v465, %v477
      %v480 = vmul.f32 %v478, %v478
      %v481 = vmul.f32 %v479, %v479
      %482 = vadd.xlane.f32.xlu0 %v480
      %v483 = vpop.xlane.xlu0 %482
      %484 = vadd.xlane.f32.xlu0 %v481
      %v485 = vpop.xlane.xlu0 %484
      %v486 = vmul.f32 %v483, %v475
      %v487 = vmul.f32 %v485, %v475
      %v488 = vadd.f32 %v486, 1e-05
      %v489 = vadd.f32 %v487, 1e-05
      %v490 = vrsqrt.pop %v488
      %v491 = vrsqrt.pop %v489
      %v492 = vmul.f32 %v478, %v490
      %v493 = vmul.f32 %v479, %v491
      %v494 = vlaneseq
      %v495 = vshrl.u32 %v494, 7
      %v496 = vsub.s32 0, %v495
      %v497 = vrot.slane %v470, %v496
      %v498 = vmul.f32 %v492, %v497
      %v499 = vmul.f32 %v493, %v497
      %v500 = vlaneseq
      %v501 = vshrl.u32 %v500, 7
      %v502 = vsub.s32 1, %v501
      %v503 = vrot.slane %v470, %v502
      %v504 = vadd.f32 %v498, %v503
      %v505 = vadd.f32 %v499, %v503
      %506 = vadd.xlane.f32.xlu0 %v468
      %v507 = vpop.xlane.xlu0 %506
      %508 = vadd.xlane.f32.xlu0 %v469
      %v509 = vpop.xlane.xlu0 %508
      %v510 = vmul.f32 %v507, %v475
      %v511 = vmul.f32 %v509, %v475
      %v512 = vsub.f32 %v468, %v510
      %v513 = vsub.f32 %v469, %v511
      %v514 = vmul.f32 %v512, %v512
      %v515 = vmul.f32 %v513, %v513
      %516 = vadd.xlane.f32.xlu0 %v514
      %v517 = vpop.xlane.xlu0 %516
      %518 = vadd.xlane.f32.xlu0 %v515
      %v519 = vpop.xlane.xlu0 %518
      %v520 = vmul.f32 %v517, %v475
      %v521 = vmul.f32 %v519, %v475
      %v522 = vadd.f32 %v520, 1e-05
      %v523 = vadd.f32 %v521, 1e-05
      %v524 = vrsqrt.pop %v522
      %v525 = vrsqrt.pop %v523
      %v526 = vmul.f32 %v512, %v524
      %v527 = vmul.f32 %v513, %v525
      %v528 = vlaneseq
      %v529 = vshrl.u32 %v528, 7
      %v530 = vsub.s32 2, %v529
      %v531 = vrot.slane %v470, %v530
      %v532 = vmul.f32 %v526, %v531
      %v533 = vmul.f32 %v527, %v531
      %v534 = vlaneseq
      %v535 = vshrl.u32 %v534, 7
      %v536 = vsub.s32 3, %v535
      %v537 = vrot.slane %v470, %v536
      %v538 = vadd.f32 %v532, %v537
      %v539 = vadd.f32 %v533, %v537
      %v540 = vpack.c.bf16 %v505, %v504
      %v541 = vld [vmem:[%s3] sm:$0xf]
      %v542 = vld [vmem:[%s3 + $0x4] sm:$0xf]
      %v543 = vld [vmem:[%s3 + $0x8] sm:$0xf]
      %v544 = vld [vmem:[%s3 + $0xc] sm:$0xf]
      %v545 = vld [vmem:[%s3 + $0x10] sm:$0xf]
      %v546 = vld [vmem:[%s3 + $0x14] sm:$0xf]
      %v547 = vld [vmem:[%s3 + $0x18] sm:$0xf]
      %v548 = vld [vmem:[%s3 + $0x1c] sm:$0xf]
      %v549 = vld [vmem:[%s3 + $0x20] sm:$0xf]
      %v550 = vld [vmem:[%s3 + $0x24] sm:$0xf]
      %v551 = vld [vmem:[%s3 + $0x28] sm:$0xf]
      %v552 = vld [vmem:[%s3 + $0x2c] sm:$0xf]
      %v553 = vld [vmem:[%s3 + $0x30] sm:$0xf]
      %v554 = vld [vmem:[%s3 + $0x34] sm:$0xf]
      %v555 = vld [vmem:[%s3 + $0x38] sm:$0xf]
      %v556 = vld [vmem:[%s3 + $0x3c] sm:$0xf]
      %v557 = vld [vmem:[%s4] sm:$0x1]
      %v559 = vlaneseq
      %v560 = vshrl.u32 %v559, 7
      %v561 = vsub.s32 0, %v560
      %v562 = vrot.slane %v557, %v561
      %v580 = vunpack.c.l.b16 %v541
      %v581 = vunpack.c.l.b16 %v542
      %v582 = vunpack.c.l.b16 %v543
      %v583 = vunpack.c.l.b16 %v544
      %v584 = vunpack.c.l.b16 %v545
      %v585 = vunpack.c.l.b16 %v546
      %v586 = vunpack.c.l.b16 %v547
      %v587 = vunpack.c.l.b16 %v548
      %v588 = vunpack.c.l.b16 %v549
      %v589 = vunpack.c.l.b16 %v550
      %v590 = vunpack.c.l.b16 %v551
      %v591 = vunpack.c.l.b16 %v552
      %v592 = vunpack.c.l.b16 %v553
      %v593 = vunpack.c.l.b16 %v554
      %v594 = vunpack.c.l.b16 %v555
      %v595 = vunpack.c.l.b16 %v556
      %v596 = vpack.c.b16 %v581, %v580
      %v597 = vpack.c.b16 %v583, %v582
      %v598 = vpack.c.b16 %v585, %v584
      %v599 = vpack.c.b16 %v587, %v586
      %v600 = vpack.c.b16 %v589, %v588
      %v601 = vpack.c.b16 %v591, %v590
      %v602 = vpack.c.b16 %v593, %v592
      %v603 = vpack.c.b16 %v595, %v594
      %612 = vmatprep.subr.bf16.mxu0 0
      %613 = vmatpush1.bf16.msra.mxu0 %v596
      %614 = vmatprep.subr.bf16.mxu0 0
      %615 = vmatpush1.bf16.msra.mxu0 %v597
      %616 = vmatprep.subr.bf16.mxu0 0
      %617 = vmatpush1.bf16.msra.mxu0 %v598
      %618 = vmatprep.subr.bf16.mxu0 0
      %619 = vmatpush1.bf16.msra.mxu0 %v599
      %620 = vmatprep.subr.bf16.mxu0 0
      %621 = vmatpush1.bf16.msra.mxu0 %v600
      %622 = vmatprep.subr.bf16.mxu0 0
      %623 = vmatpush1.bf16.msra.mxu0 %v601
      %624 = vmatprep.subr.bf16.mxu0 0
      %625 = vmatpush1.bf16.msra.mxu0 %v602
      %626 = vmatprep.subr.bf16.mxu0 0
      %627 = vmatpush1.bf16.msra.mxu0 %v603
      %628 = vmatprep.subr.bf16.mxu0 0
      %629 = vmatpush1.bf16.msra.mxu0 0
      %630 = vmatprep.subr.bf16.mxu0 0
      %631 = vmatpush1.bf16.msra.mxu0 0
      %632 = vmatprep.subr.bf16.mxu0 0
      %633 = vmatpush1.bf16.msra.mxu0 0
      %634 = vmatprep.subr.bf16.mxu0 0
      %635 = vmatpush1.bf16.msra.mxu0 0
      %636 = vmatprep.subr.bf16.mxu0 0
      %637 = vmatpush1.bf16.msra.mxu0 0
      %638 = vmatprep.subr.bf16.mxu0 0
      %639 = vmatpush1.bf16.msra.mxu0 0
      %640 = vmatprep.subr.bf16.mxu0 0
      %641 = vmatpush1.bf16.msra.mxu0 0
      %642 = vmatprep.subr.bf16.mxu0 0
      %643 = vmatpush1.bf16.msra.mxu0 0
      %644 = vmatprep.mubr.bf16.mxu0 0
      %645 = vmatmul.mubr.bf16.gmra.mrb[0].mxu0 %v540
      %v646 = vpop.f32.mrb[0].mxu0
      %v647 = vadd.f32 %v562, %v646
      %v648 = vpop.f32.mrb[0].mxu0
      %v649 = vpop.f32.mrb[0].mxu0
      %v650 = vadd.f32 %v562, %v649
      %v651 = vpop.f32.mrb[0].mxu0
      %652 = vdwg.mxu0
      %v653 = vpack.c.bf16 %v539, %v538
      %v654 = vld [vmem:[%s5] sm:$0xff]
      %v655 = vld [vmem:[%s5 + $0x8] sm:$0xff]
      %v656 = vld [vmem:[%s5 + $0x10] sm:$0xff]
      %v657 = vld [vmem:[%s5 + $0x18] sm:$0xff]
      %v658 = vld [vmem:[%s5 + $0x20] sm:$0xff]
      %v659 = vld [vmem:[%s5 + $0x28] sm:$0xff]
      %v660 = vld [vmem:[%s5 + $0x30] sm:$0xff]
      %v661 = vld [vmem:[%s5 + $0x38] sm:$0xff]
      %v662 = vld [vmem:[%s5 + $0x40] sm:$0xff]
      %v663 = vld [vmem:[%s5 + $0x48] sm:$0xff]
      %v664 = vld [vmem:[%s5 + $0x50] sm:$0xff]
      %v665 = vld [vmem:[%s5 + $0x58] sm:$0xff]
      %v666 = vld [vmem:[%s5 + $0x60] sm:$0xff]
      %v667 = vld [vmem:[%s5 + $0x68] sm:$0xff]
      %v668 = vld [vmem:[%s5 + $0x70] sm:$0xff]
      %v669 = vld [vmem:[%s5 + $0x78] sm:$0xff]
      %v670 = vld [vmem:[%s6] sm:$0x3]
      %v672 = vlaneseq
      %v673 = vshrl.u32 %v672, 7
      %v674 = vsub.s32 0, %v673
      %v675 = vrot.slane %v670, %v674
      %v676 = vlaneseq
      %v677 = vshrl.u32 %v676, 7
      %v678 = vsub.s32 1, %v677
      %v679 = vrot.slane %v670, %v678
      %v698 = vunpack.c.l.b16 %v654
      %v699 = vunpack.c.h.b16 %v654
      %v700 = vunpack.c.l.b16 %v655
      %v701 = vunpack.c.h.b16 %v655
      %v702 = vunpack.c.l.b16 %v656
      %v703 = vunpack.c.h.b16 %v656
      %v704 = vunpack.c.l.b16 %v657
      %v705 = vunpack.c.h.b16 %v657
      %v706 = vunpack.c.l.b16 %v658
      %v707 = vunpack.c.h.b16 %v658
      %v708 = vunpack.c.l.b16 %v659
      %v709 = vunpack.c.h.b16 %v659
      %v710 = vunpack.c.l.b16 %v660
      %v711 = vunpack.c.h.b16 %v660
      %v712 = vunpack.c.l.b16 %v661
      %v713 = vunpack.c.h.b16 %v661
      %v714 = vunpack.c.l.b16 %v662
      %v715 = vunpack.c.h.b16 %v662
      %v716 = vunpack.c.l.b16 %v663
      %v717 = vunpack.c.h.b16 %v663
      %v718 = vunpack.c.l.b16 %v664
      %v719 = vunpack.c.h.b16 %v664
      %v720 = vunpack.c.l.b16 %v665
      %v721 = vunpack.c.h.b16 %v665
      %v722 = vunpack.c.l.b16 %v666
      %v723 = vunpack.c.h.b16 %v666
      %v724 = vunpack.c.l.b16 %v667
      %v725 = vunpack.c.h.b16 %v667
      %v726 = vunpack.c.l.b16 %v668
      %v727 = vunpack.c.h.b16 %v668
      %v728 = vunpack.c.l.b16 %v669
      %v729 = vunpack.c.h.b16 %v669
      %v730 = vpack.c.b16 %v700, %v698
      %v731 = vpack.c.b16 %v701, %v699
      %v732 = vpack.c.b16 %v704, %v702
      %v733 = vpack.c.b16 %v705, %v703
      %v734 = vpack.c.b16 %v708, %v706
      %v735 = vpack.c.b16 %v709, %v707
      %v736 = vpack.c.b16 %v712, %v710
      %v737 = vpack.c.b16 %v713, %v711
      %v738 = vpack.c.b16 %v716, %v714
      %v739 = vpack.c.b16 %v717, %v715
      %v740 = vpack.c.b16 %v720, %v718
      %v741 = vpack.c.b16 %v721, %v719
      %v742 = vpack.c.b16 %v724, %v722
      %v743 = vpack.c.b16 %v725, %v723
      %v744 = vpack.c.b16 %v728, %v726
      %v745 = vpack.c.b16 %v729, %v727
      %762 = vmatprep.subr.bf16.mxu0 %v731
      %763 = vmatpush1.bf16.msra.mxu0 %v730
      %764 = vmatprep.subr.bf16.mxu0 %v733
      %765 = vmatpush1.bf16.msra.mxu0 %v732
      %766 = vmatprep.subr.bf16.mxu0 %v735
      %767 = vmatpush1.bf16.msra.mxu0 %v734
      %768 = vmatprep.subr.bf16.mxu0 %v737
      %769 = vmatpush1.bf16.msra.mxu0 %v736
      %770 = vmatprep.subr.bf16.mxu0 %v739
      %771 = vmatpush1.bf16.msra.mxu0 %v738
      %772 = vmatprep.subr.bf16.mxu0 %v741
      %773 = vmatpush1.bf16.msra.mxu0 %v740
      %774 = vmatprep.subr.bf16.mxu0 %v743
      %775 = vmatpush1.bf16.msra.mxu0 %v742
      %776 = vmatprep.subr.bf16.mxu0 %v745
      %777 = vmatpush1.bf16.msra.mxu0 %v744
      %778 = vmatprep.subr.bf16.mxu0 0
      %779 = vmatpush1.bf16.msra.mxu0 0
      %780 = vmatprep.subr.bf16.mxu0 0
      %781 = vmatpush1.bf16.msra.mxu0 0
      %782 = vmatprep.subr.bf16.mxu0 0
      %783 = vmatpush1.bf16.msra.mxu0 0
      %784 = vmatprep.subr.bf16.mxu0 0
      %785 = vmatpush1.bf16.msra.mxu0 0
      %786 = vmatprep.subr.bf16.mxu0 0
      %787 = vmatpush1.bf16.msra.mxu0 0
      %788 = vmatprep.subr.bf16.mxu0 0
      %789 = vmatpush1.bf16.msra.mxu0 0
      %790 = vmatprep.subr.bf16.mxu0 0
      %791 = vmatpush1.bf16.msra.mxu0 0
      %792 = vmatprep.subr.bf16.mxu0 0
      %793 = vmatpush1.bf16.msra.mxu0 0
      %794 = vmatprep.mubr.bf16.mxu0 0
      %795 = vmatmul.mubr.bf16.gmra.mrb[0].mxu0 %v653
      %v796 = vpop.f32.mrb[0].mxu0
      %v797 = vadd.f32 %v675, %v796
      %v798 = vpop.f32.mrb[0].mxu0
      %v799 = vadd.f32 %v679, %v798
      %v800 = vpop.f32.mrb[0].mxu0
      %v801 = vadd.f32 %v675, %v800
      %v802 = vpop.f32.mrb[0].mxu0
      %v803 = vadd.f32 %v679, %v802
      %804 = vdwg.mxu0
      %v805 = vpack.c.bf16 %v650, %v647
      %v806 = vpack.c.bf16 %v801, %v797
      %v807 = vpack.c.bf16 %v803, %v799
      %vm808 = vcmask 261120
      %v810 = vsel %vm808, %v805, 0
      %v813 = vsel %vm808, %v806, 0
      %815 = vmatprep.subr.bf16.mxu0 0
      %816 = vmatpush1.bf16.xpose.msra.mxu0 %v813
      %817 = vmatprep.subr.bf16.mxu0 0
      %818 = vmatpush1.bf16.xpose.msra.mxu0 0
      %819 = vmatprep.subr.bf16.mxu0 0
      %820 = vmatpush1.bf16.xpose.msra.mxu0 0
      %821 = vmatprep.subr.bf16.mxu0 0
      %822 = vmatpush1.bf16.xpose.msra.mxu0 0
      %823 = vmatprep.subr.bf16.mxu0 0
      %824 = vmatpush1.bf16.xpose.msra.mxu0 0
      %825 = vmatprep.subr.bf16.mxu0 0
      %826 = vmatpush1.bf16.xpose.msra.mxu0 0
      %827 = vmatprep.subr.bf16.mxu0 0
      %828 = vmatpush1.bf16.xpose.msra.mxu0 0
      %829 = vmatprep.subr.bf16.mxu0 0
      %830 = vmatpush1.bf16.xpose.msra.mxu0 0
      %831 = vmatprep.subr.bf16.mxu0 0
      %832 = vmatpush1.bf16.xpose.msra.mxu0 0
      %833 = vmatprep.subr.bf16.mxu0 0
      %834 = vmatpush1.bf16.xpose.msra.mxu0 0
      %835 = vmatprep.subr.bf16.mxu0 0
      %836 = vmatpush1.bf16.xpose.msra.mxu0 0
      %837 = vmatprep.subr.bf16.mxu0 0
      %838 = vmatpush1.bf16.xpose.msra.mxu0 0
      %839 = vmatprep.subr.bf16.mxu0 0
      %840 = vmatpush1.bf16.xpose.msra.mxu0 0
      %841 = vmatprep.subr.bf16.mxu0 0
      %842 = vmatpush1.bf16.xpose.msra.mxu0 0
      %843 = vmatprep.subr.bf16.mxu0 0
      %844 = vmatpush1.bf16.xpose.msra.mxu0 0
      %845 = vmatprep.subr.bf16.mxu0 0
      %846 = vmatpush1.bf16.xpose.msra.mxu0 0
      %847 = vmatprep.mubr.bf16.mxu0 0
      %848 = vmatmul.mubr.bf16.gmra.mrb[0].mxu0 %v810
      %v849 = vpop.f32.mrb[0].mxu0
      %v850 = vadd.f32 0.0, %v849
      %v851 = vpop.f32.mrb[0].mxu0
      %v852 = vpop.f32.mrb[0].mxu0
      %v853 = vadd.f32 0.0, %v852
      %v854 = vpop.f32.mrb[0].mxu0
      %855 = vdwg.mxu0
      %v856 = vmul.f32 %v850, 0.17677669
      %v857 = vmul.f32 %v853, 0.17677669
      %vm858 = vcmask 130048
      %v859 = vsel %vm858, %v856, -inf
      %860 = vmax.xlane.f32.xlu0 %v859
      %v861 = vpop.xlane.xlu0 %860
      %v862 = vsel %vm858, %v857, -inf
      %863 = vmax.xlane.f32.xlu0 %v862
      %v864 = vpop.xlane.xlu0 %863
      %v865 = vsub.f32 %v856, %v861
      %v866 = vsub.f32 %v857, %v864
      %v867 = vmul.f32 %v865, 1.442695
      %v868 = vpow.pop %v867
      %v869 = vmul.f32 %v866, 1.442695
      %v870 = vpow.pop %v869
      %v871 = vsel %vm858, %v868, 0.0
      %872 = vadd.xlane.f32.xlu0 %v871
      %v873 = vpop.xlane.xlu0 %872
      %v874 = vsel %vm858, %v870, 0.0
      %875 = vadd.xlane.f32.xlu0 %v874
      %v876 = vpop.xlane.xlu0 %875
      %v877 = vrcp.pop %v873
      %v878 = vrcp.pop %v876
      %v879 = vmul.f32 %v868, %v877
      %v880 = vmul.f32 %v870, %v878
      %v881 = vpack.c.bf16 %v880, %v879
      %v883 = vsel %vm858, %v881, 0
      %885 = vmatprep.subr.bf16.mxu0 0
      %886 = vmatpush1.bf16.msra.mxu0 %v807
      %887 = vmatprep.subr.bf16.mxu0 0
      %888 = vmatpush1.bf16.msra.mxu0 0
      %889 = vmatprep.subr.bf16.mxu0 0
      %890 = vmatpush1.bf16.msra.mxu0 0
      %891 = vmatprep.subr.bf16.mxu0 0
      %892 = vmatpush1.bf16.msra.mxu0 0
      %893 = vmatprep.subr.bf16.mxu0 0
      %894 = vmatpush1.bf16.msra.mxu0 0
      %895 = vmatprep.subr.bf16.mxu0 0
      %896 = vmatpush1.bf16.msra.mxu0 0
      %897 = vmatprep.subr.bf16.mxu0 0
      %898 = vmatpush1.bf16.msra.mxu0 0
      %899 = vmatprep.subr.bf16.mxu0 0
      %900 = vmatpush1.bf16.msra.mxu0 0
      %901 = vmatprep.subr.bf16.mxu0 0
      %902 = vmatpush1.bf16.msra.mxu0 0
      %903 = vmatprep.subr.bf16.mxu0 0
      %904 = vmatpush1.bf16.msra.mxu0 0
      %905 = vmatprep.subr.bf16.mxu0 0
      %906 = vmatpush1.bf16.msra.mxu0 0
      %907 = vmatprep.subr.bf16.mxu0 0
      %908 = vmatpush1.bf16.msra.mxu0 0
      %909 = vmatprep.subr.bf16.mxu0 0
      %910 = vmatpush1.bf16.msra.mxu0 0
      %911 = vmatprep.subr.bf16.mxu0 0
      %912 = vmatpush1.bf16.msra.mxu0 0
      %913 = vmatprep.subr.bf16.mxu0 0
      %914 = vmatpush1.bf16.msra.mxu0 0
      %915 = vmatprep.subr.bf16.mxu0 0
      %916 = vmatpush1.bf16.msra.mxu0 0
      %917 = vmatprep.mubr.bf16.mxu0 0
      %918 = vmatmul.mubr.bf16.gmra.mrb[0].mxu0 %v883
      %v919 = vpop.f32.mrb[0].mxu0
      %v920 = vadd.f32 0.0, %v919
      %v921 = vpop.f32.mrb[0].mxu0
      %v922 = vpop.f32.mrb[0].mxu0
      %v923 = vadd.f32 0.0, %v922
      %v924 = vpop.f32.mrb[0].mxu0
      %925 = vdwg.mxu0
      %v926 = vpack.c.bf16 %v923, %v920
      %v927 = vld [vmem:[%s7] sm:$0xf]
      %v928 = vld [vmem:[%s7 + $0x4] sm:$0xf]
      %v929 = vld [vmem:[%s7 + $0x8] sm:$0xf]
      %v930 = vld [vmem:[%s7 + $0xc] sm:$0xf]
      %932 = vrot.lane.b32.xlu0 %v805, 96
      %v933 = vpop.permute.xlu0 %932
      %935 = vrot.lane.b32.xlu0 %v806, 96
      %v936 = vpop.permute.xlu0 %935
      %v938 = vsel %vm808, %v933, 0
      %v941 = vsel %vm808, %v936, 0
      %943 = vmatprep.subr.bf16.mxu0 0
      %944 = vmatpush1.bf16.xpose.msra.mxu0 %v941
      %945 = vmatprep.subr.bf16.mxu0 0
      %946 = vmatpush1.bf16.xpose.msra.mxu0 0
      %947 = vmatprep.subr.bf16.mxu0 0
      %948 = vmatpush1.bf16.xpose.msra.mxu0 0
      %949 = vmatprep.subr.bf16.mxu0 0
      %950 = vmatpush1.bf16.xpose.msra.mxu0 0
      %951 = vmatprep.subr.bf16.mxu0 0
      %952 = vmatpush1.bf16.xpose.msra.mxu0 0
      %953 = vmatprep.subr.bf16.mxu0 0
      %954 = vmatpush1.bf16.xpose.msra.mxu0 0
      %955 = vmatprep.subr.bf16.mxu0 0
      %956 = vmatpush1.bf16.xpose.msra.mxu0 0
      %957 = vmatprep.subr.bf16.mxu0 0
      %958 = vmatpush1.bf16.xpose.msra.mxu0 0
      %959 = vmatprep.subr.bf16.mxu0 0
      %960 = vmatpush1.bf16.xpose.msra.mxu0 0
      %961 = vmatprep.subr.bf16.mxu0 0
      %962 = vmatpush1.bf16.xpose.msra.mxu0 0
      %963 = vmatprep.subr.bf16.mxu0 0
      %964 = vmatpush1.bf16.xpose.msra.mxu0 0
      %965 = vmatprep.subr.bf16.mxu0 0
      %966 = vmatpush1.bf16.xpose.msra.mxu0 0
      %967 = vmatprep.subr.bf16.mxu0 0
      %968 = vmatpush1.bf16.xpose.msra.mxu0 0
      %969 = vmatprep.subr.bf16.mxu0 0
      %970 = vmatpush1.bf16.xpose.msra.mxu0 0
      %971 = vmatprep.subr.bf16.mxu0 0
      %972 = vmatpush1.bf16.xpose.msra.mxu0 0
      %973 = vmatprep.subr.bf16.mxu0 0
      %974 = vmatpush1.bf16.xpose.msra.mxu0 0
      %975 = vmatprep.mubr.bf16.mxu0 0
      %976 = vmatmul.mubr.bf16.gmra.mrb[0].mxu0 %v938
      %v977 = vpop.f32.mrb[0].mxu0
      %v978 = vadd.f32 0.0, %v977
      %v979 = vpop.f32.mrb[0].mxu0
      %v980 = vpop.f32.mrb[0].mxu0
      %v981 = vadd.f32 0.0, %v980
      %v982 = vpop.f32.mrb[0].mxu0
      %983 = vdwg.mxu0
      %v984 = vmul.f32 %v978, 0.17677669
      %v985 = vmul.f32 %v981, 0.17677669
      %v986 = vsel %vm858, %v984, -inf
      %987 = vmax.xlane.f32.xlu0 %v986
      %v988 = vpop.xlane.xlu0 %987
      %v989 = vsel %vm858, %v985, -inf
      %990 = vmax.xlane.f32.xlu0 %v989
      %v991 = vpop.xlane.xlu0 %990
      %v992 = vsub.f32 %v984, %v988
      %v993 = vsub.f32 %v985, %v991
      %v994 = vmul.f32 %v992, 1.442695
      %v995 = vpow.pop %v994
      %v996 = vmul.f32 %v993, 1.442695
      %v997 = vpow.pop %v996
      %v998 = vsel %vm858, %v995, 0.0
      %999 = vadd.xlane.f32.xlu0 %v998
      %v1000 = vpop.xlane.xlu0 %999
      %v1001 = vsel %vm858, %v997, 0.0
      %1002 = vadd.xlane.f32.xlu0 %v1001
      %v1003 = vpop.xlane.xlu0 %1002
      %v1004 = vrcp.pop %v1000
      %v1005 = vrcp.pop %v1003
      %v1006 = vmul.f32 %v995, %v1004
      %v1007 = vmul.f32 %v997, %v1005
      %v1008 = vpack.c.bf16 %v1007, %v1006
      %1010 = vrot.lane.b32.xlu0 %v807, 96
      %v1011 = vpop.permute.xlu0 %1010
      %v1014 = vsel %vm858, %v1008, 0
      %1016 = vmatprep.subr.bf16.mxu0 0
      %1017 = vmatpush1.bf16.msra.mxu0 %v1011
      %1018 = vmatprep.subr.bf16.mxu0 0
      %1019 = vmatpush1.bf16.msra.mxu0 0
      %1020 = vmatprep.subr.bf16.mxu0 0
      %1021 = vmatpush1.bf16.msra.mxu0 0
      %1022 = vmatprep.subr.bf16.mxu0 0
      %1023 = vmatpush1.bf16.msra.mxu0 0
      %1024 = vmatprep.subr.bf16.mxu0 0
      %1025 = vmatpush1.bf16.msra.mxu0 0
      %1026 = vmatprep.subr.bf16.mxu0 0
      %1027 = vmatpush1.bf16.msra.mxu0 0
      %1028 = vmatprep.subr.bf16.mxu0 0
      %1029 = vmatpush1.bf16.msra.mxu0 0
      %1030 = vmatprep.subr.bf16.mxu0 0
      %1031 = vmatpush1.bf16.msra.mxu0 0
      %1032 = vmatprep.subr.bf16.mxu0 0
      %1033 = vmatpush1.bf16.msra.mxu0 0
      %1034 = vmatprep.subr.bf16.mxu0 0
      %1035 = vmatpush1.bf16.msra.mxu0 0
      %1036 = vmatprep.subr.bf16.mxu0 0
      %1037 = vmatpush1.bf16.msra.mxu0 0
      %1038 = vmatprep.subr.bf16.mxu0 0
      %1039 = vmatpush1.bf16.msra.mxu0 0
      %1040 = vmatprep.subr.bf16.mxu0 0
      %1041 = vmatpush1.bf16.msra.mxu0 0
      %1042 = vmatprep.subr.bf16.mxu0 0
      %1043 = vmatpush1.bf16.msra.mxu0 0
      %1044 = vmatprep.subr.bf16.mxu0 0
      %1045 = vmatpush1.bf16.msra.mxu0 0
      %1046 = vmatprep.subr.bf16.mxu0 0
      %1047 = vmatpush1.bf16.msra.mxu0 0
      %1048 = vmatprep.mubr.bf16.mxu0 0
      %1049 = vmatmul.mubr.bf16.gmra.mrb[0].mxu0 %v1014
      %v1050 = vpop.f32.mrb[0].mxu0
      %v1051 = vadd.f32 0.0, %v1050
      %v1052 = vpop.f32.mrb[0].mxu0
      %v1053 = vpop.f32.mrb[0].mxu0
      %v1054 = vadd.f32 0.0, %v1053
      %v1055 = vpop.f32.mrb[0].mxu0
      %1056 = vdwg.mxu0
      %v1057 = vpack.c.bf16 %v1054, %v1051
      %v1058 = vld [vmem:[%s7 + $0x10] sm:$0xf]
      %v1059 = vld [vmem:[%s7 + $0x14] sm:$0xf]
      %v1060 = vld [vmem:[%s7 + $0x18] sm:$0xf]
      %v1061 = vld [vmem:[%s7 + $0x1c] sm:$0xf]
      %v1066 = vunpack.c.l.b16 %v1058
      %v1067 = vunpack.c.l.b16 %v1059
      %v1068 = vunpack.c.l.b16 %v1060
      %v1069 = vunpack.c.l.b16 %v1061
      %v1070 = vpack.c.b16 %v1067, %v1066
      %v1071 = vpack.c.b16 %v1069, %v1068
      %v1075 = vsel %vm808, %v1057, 0
      %1077 = vmatprep.subr.bf16.mxu0 0
      %1078 = vmatpush1.bf16.msra.mxu0 %v1070
      %1079 = vmatprep.subr.bf16.mxu0 0
      %1080 = vmatpush1.bf16.msra.mxu0 %v1071
      %1081 = vmatprep.subr.bf16.mxu0 0
      %1082 = vmatpush1.bf16.msra.mxu0 0
      %1083 = vmatprep.subr.bf16.mxu0 0
      %1084 = vmatpush1.bf16.msra.mxu0 0
      %1085 = vmatprep.subr.bf16.mxu0 0
      %1086 = vmatpush1.bf16.msra.mxu0 0
      %1087 = vmatprep.subr.bf16.mxu0 0
      %1088 = vmatpush1.bf16.msra.mxu0 0
      %1089 = vmatprep.subr.bf16.mxu0 0
      %1090 = vmatpush1.bf16.msra.mxu0 0
      %1091 = vmatprep.subr.bf16.mxu0 0
      %1092 = vmatpush1.bf16.msra.mxu0 0
      %1093 = vmatprep.subr.bf16.mxu0 0
      %1094 = vmatpush1.bf16.msra.mxu0 0
      %1095 = vmatprep.subr.bf16.mxu0 0
      %1096 = vmatpush1.bf16.msra.mxu0 0
      %1097 = vmatprep.subr.bf16.mxu0 0
      %1098 = vmatpush1.bf16.msra.mxu0 0
      %1099 = vmatprep.subr.bf16.mxu0 0
      %1100 = vmatpush1.bf16.msra.mxu0 0
      %1101 = vmatprep.subr.bf16.mxu0 0
      %1102 = vmatpush1.bf16.msra.mxu0 0
      %1103 = vmatprep.subr.bf16.mxu0 0
      %1104 = vmatpush1.bf16.msra.mxu0 0
      %1105 = vmatprep.subr.bf16.mxu0 0
      %1106 = vmatpush1.bf16.msra.mxu0 0
      %1107 = vmatprep.subr.bf16.mxu0 0
      %1108 = vmatpush1.bf16.msra.mxu0 0
      %1109 = vmatprep.mubr.bf16.mxu0 0
      %1110 = vmatmul.mubr.bf16.gmra.mrb[0].mxu0 %v1075
      %v1111 = vpop.f32.mrb[0].mxu0
      %v1112 = vadd.f32 0.0, %v1111
      %v1113 = vpop.f32.mrb[0].mxu0
      %v1114 = vpop.f32.mrb[0].mxu0
      %v1115 = vadd.f32 0.0, %v1114
      %v1116 = vpop.f32.mrb[0].mxu0
      %1117 = vdwg.mxu0
      %v1122 = vunpack.c.l.b16 %v927
      %v1123 = vunpack.c.l.b16 %v928
      %v1124 = vunpack.c.l.b16 %v929
      %v1125 = vunpack.c.l.b16 %v930
      %v1126 = vpack.c.b16 %v1123, %v1122
      %v1127 = vpack.c.b16 %v1125, %v1124
      %v1131 = vsel %vm808, %v926, 0
      %1133 = vmatprep.subr.bf16.mxu0 0
      %1134 = vmatpush1.bf16.msra.mxu0 %v1126
      %1135 = vmatprep.subr.bf16.mxu0 0
      %1136 = vmatpush1.bf16.msra.mxu0 %v1127
      %1137 = vmatprep.subr.bf16.mxu0 0
      %1138 = vmatpush1.bf16.msra.mxu0 0
      %1139 = vmatprep.subr.bf16.mxu0 0
      %1140 = vmatpush1.bf16.msra.mxu0 0
      %1141 = vmatprep.subr.bf16.mxu0 0
      %1142 = vmatpush1.bf16.msra.mxu0 0
      %1143 = vmatprep.subr.bf16.mxu0 0
      %1144 = vmatpush1.bf16.msra.mxu0 0
      %1145 = vmatprep.subr.bf16.mxu0 0
      %1146 = vmatpush1.bf16.msra.mxu0 0
      %1147 = vmatprep.subr.bf16.mxu0 0
      %1148 = vmatpush1.bf16.msra.mxu0 0
      %1149 = vmatprep.subr.bf16.mxu0 0
      %1150 = vmatpush1.bf16.msra.mxu0 0
      %1151 = vmatprep.subr.bf16.mxu0 0
      %1152 = vmatpush1.bf16.msra.mxu0 0
      %1153 = vmatprep.subr.bf16.mxu0 0
      %1154 = vmatpush1.bf16.msra.mxu0 0
      %1155 = vmatprep.subr.bf16.mxu0 0
      %1156 = vmatpush1.bf16.msra.mxu0 0
      %1157 = vmatprep.subr.bf16.mxu0 0
      %1158 = vmatpush1.bf16.msra.mxu0 0
      %1159 = vmatprep.subr.bf16.mxu0 0
      %1160 = vmatpush1.bf16.msra.mxu0 0
      %1161 = vmatprep.subr.bf16.mxu0 0
      %1162 = vmatpush1.bf16.msra.mxu0 0
      %1163 = vmatprep.subr.bf16.mxu0 0
      %1164 = vmatpush1.bf16.msra.mxu0 0
      %1165 = vmatprep.mubr.bf16.mxu0 0
      %1166 = vmatmul.mubr.bf16.gmra.mrb[0].mxu0 %v1131
      %v1167 = vpop.f32.mrb[0].mxu0
      %v1168 = vadd.f32 %v1112, %v1167
      %v1169 = vpop.f32.mrb[0].mxu0
      %v1170 = vpop.f32.mrb[0].mxu0
      %v1171 = vadd.f32 %v1115, %v1170
      %v1172 = vpop.f32.mrb[0].mxu0
      %1173 = vdwg.mxu0
      %1174 = vrot.lane.b32.xlu0 %v805, 64
      %v1175 = vpop.permute.xlu0 %1174
      %1176 = vrot.lane.b32.xlu0 %v806, 64
      %v1177 = vpop.permute.xlu0 %1176
      %v1179 = vsel %vm808, %v1175, 0
      %v1182 = vsel %vm808, %v1177, 0
      %1184 = vmatprep.subr.bf16.mxu0 0
      %1185 = vmatpush1.bf16.xpose.msra.mxu0 %v1182
      %1186 = vmatprep.subr.bf16.mxu0 0
      %1187 = vmatpush1.bf16.xpose.msra.mxu0 0
      %1188 = vmatprep.subr.bf16.mxu0 0
      %1189 = vmatpush1.bf16.xpose.msra.mxu0 0
      %1190 = vmatprep.subr.bf16.mxu0 0
      %1191 = vmatpush1.bf16.xpose.msra.mxu0 0
      %1192 = vmatprep.subr.bf16.mxu0 0
      %1193 = vmatpush1.bf16.xpose.msra.mxu0 0
      %1194 = vmatprep.subr.bf16.mxu0 0
      %1195 = vmatpush1.bf16.xpose.msra.mxu0 0
      %1196 = vmatprep.subr.bf16.mxu0 0
      %1197 = vmatpush1.bf16.xpose.msra.mxu0 0
      %1198 = vmatprep.subr.bf16.mxu0 0
      %1199 = vmatpush1.bf16.xpose.msra.mxu0 0
      %1200 = vmatprep.subr.bf16.mxu0 0
      %1201 = vmatpush1.bf16.xpose.msra.mxu0 0
      %1202 = vmatprep.subr.bf16.mxu0 0
      %1203 = vmatpush1.bf16.xpose.msra.mxu0 0
      %1204 = vmatprep.subr.bf16.mxu0 0
      %1205 = vmatpush1.bf16.xpose.msra.mxu0 0
      %1206 = vmatprep.subr.bf16.mxu0 0
      %1207 = vmatpush1.bf16.xpose.msra.mxu0 0
      %1208 = vmatprep.subr.bf16.mxu0 0
      %1209 = vmatpush1.bf16.xpose.msra.mxu0 0
      %1210 = vmatprep.subr.bf16.mxu0 0
      %1211 = vmatpush1.bf16.xpose.msra.mxu0 0
      %1212 = vmatprep.subr.bf16.mxu0 0
      %1213 = vmatpush1.bf16.xpose.msra.mxu0 0
      %1214 = vmatprep.subr.bf16.mxu0 0
      %1215 = vmatpush1.bf16.xpose.msra.mxu0 0
      %1216 = vmatprep.mubr.bf16.mxu0 0
      %1217 = vmatmul.mubr.bf16.gmra.mrb[0].mxu0 %v1179
      %v1218 = vpop.f32.mrb[0].mxu0
      %v1219 = vadd.f32 0.0, %v1218
      %v1220 = vpop.f32.mrb[0].mxu0
      %v1221 = vpop.f32.mrb[0].mxu0
      %v1222 = vadd.f32 0.0, %v1221
      %v1223 = vpop.f32.mrb[0].mxu0
      %1224 = vdwg.mxu0
      %v1225 = vmul.f32 %v1219, 0.17677669
      %v1226 = vmul.f32 %v1222, 0.17677669
      %v1227 = vsel %vm858, %v1225, -inf
      %1228 = vmax.xlane.f32.xlu0 %v1227
      %v1229 = vpop.xlane.xlu0 %1228
      %v1230 = vsel %vm858, %v1226, -inf
      %1231 = vmax.xlane.f32.xlu0 %v1230
      %v1232 = vpop.xlane.xlu0 %1231
      %v1233 = vsub.f32 %v1225, %v1229
      %v1234 = vsub.f32 %v1226, %v1232
      %v1235 = vmul.f32 %v1233, 1.442695
      %v1236 = vpow.pop %v1235
      %v1237 = vmul.f32 %v1234, 1.442695
      %v1238 = vpow.pop %v1237
      %v1239 = vsel %vm858, %v1236, 0.0
      %1240 = vadd.xlane.f32.xlu0 %v1239
      %v1241 = vpop.xlane.xlu0 %1240
      %v1242 = vsel %vm858, %v1238, 0.0
      %1243 = vadd.xlane.f32.xlu0 %v1242
      %v1244 = vpop.xlane.xlu0 %1243
      %v1245 = vrcp.pop %v1241
      %v1246 = vrcp.pop %v1244
      %v1247 = vmul.f32 %v1236, %v1245
      %v1248 = vmul.f32 %v1238, %v1246
      %v1249 = vpack.c.bf16 %v1248, %v1247
      %1250 = vrot.lane.b32.xlu0 %v807, 64
      %v1251 = vpop.permute.xlu0 %1250
      %v1254 = vsel %vm858, %v1249, 0
      %1256 = vmatprep.subr.bf16.mxu0 0
      %1257 = vmatpush1.bf16.msra.mxu0 %v1251
      %1258 = vmatprep.subr.bf16.mxu0 0
      %1259 = vmatpush1.bf16.msra.mxu0 0
      %1260 = vmatprep.subr.bf16.mxu0 0
      %1261 = vmatpush1.bf16.msra.mxu0 0
      %1262 = vmatprep.subr.bf16.mxu0 0
      %1263 = vmatpush1.bf16.msra.mxu0 0
      %1264 = vmatprep.subr.bf16.mxu0 0
      %1265 = vmatpush1.bf16.msra.mxu0 0
      %1266 = vmatprep.subr.bf16.mxu0 0
      %1267 = vmatpush1.bf16.msra.mxu0 0
      %1268 = vmatprep.subr.bf16.mxu0 0
      %1269 = vmatpush1.bf16.msra.mxu0 0
      %1270 = vmatprep.subr.bf16.mxu0 0
      %1271 = vmatpush1.bf16.msra.mxu0 0
      %1272 = vmatprep.subr.bf16.mxu0 0
      %1273 = vmatpush1.bf16.msra.mxu0 0
      %1274 = vmatprep.subr.bf16.mxu0 0
      %1275 = vmatpush1.bf16.msra.mxu0 0
      %1276 = vmatprep.subr.bf16.mxu0 0
      %1277 = vmatpush1.bf16.msra.mxu0 0
      %1278 = vmatprep.subr.bf16.mxu0 0
      %1279 = vmatpush1.bf16.msra.mxu0 0
      %1280 = vmatprep.subr.bf16.mxu0 0
      %1281 = vmatpush1.bf16.msra.mxu0 0
      %1282 = vmatprep.subr.bf16.mxu0 0
      %1283 = vmatpush1.bf16.msra.mxu0 0
      %1284 = vmatprep.subr.bf16.mxu0 0
      %1285 = vmatpush1.bf16.msra.mxu0 0
      %1286 = vmatprep.subr.bf16.mxu0 0
      %1287 = vmatpush1.bf16.msra.mxu0 0
      %1288 = vmatprep.mubr.bf16.mxu0 0
      %1289 = vmatmul.mubr.bf16.gmra.mrb[0].mxu0 %v1254
      %v1290 = vpop.f32.mrb[0].mxu0
      %v1291 = vadd.f32 0.0, %v1290
      %v1292 = vpop.f32.mrb[0].mxu0
      %v1293 = vpop.f32.mrb[0].mxu0
      %v1294 = vadd.f32 0.0, %v1293
      %v1295 = vpop.f32.mrb[0].mxu0
      %1296 = vdwg.mxu0
      %v1297 = vpack.c.bf16 %v1294, %v1291
      %v1298 = vld [vmem:[%s7 + $0x20] sm:$0xf]
      %v1299 = vld [vmem:[%s7 + $0x24] sm:$0xf]
      %v1300 = vld [vmem:[%s7 + $0x28] sm:$0xf]
      %v1301 = vld [vmem:[%s7 + $0x2c] sm:$0xf]
      %v1306 = vunpack.c.l.b16 %v1298
      %v1307 = vunpack.c.l.b16 %v1299
      %v1308 = vunpack.c.l.b16 %v1300
      %v1309 = vunpack.c.l.b16 %v1301
      %v1310 = vpack.c.b16 %v1307, %v1306
      %v1311 = vpack.c.b16 %v1309, %v1308
      %v1315 = vsel %vm808, %v1297, 0
      %1317 = vmatprep.subr.bf16.mxu0 0
      %1318 = vmatpush1.bf16.msra.mxu0 %v1310
      %1319 = vmatprep.subr.bf16.mxu0 0
      %1320 = vmatpush1.bf16.msra.mxu0 %v1311
      %1321 = vmatprep.subr.bf16.mxu0 0
      %1322 = vmatpush1.bf16.msra.mxu0 0
      %1323 = vmatprep.subr.bf16.mxu0 0
      %1324 = vmatpush1.bf16.msra.mxu0 0
      %1325 = vmatprep.subr.bf16.mxu0 0
      %1326 = vmatpush1.bf16.msra.mxu0 0
      %1327 = vmatprep.subr.bf16.mxu0 0
      %1328 = vmatpush1.bf16.msra.mxu0 0
      %1329 = vmatprep.subr.bf16.mxu0 0
      %1330 = vmatpush1.bf16.msra.mxu0 0
      %1331 = vmatprep.subr.bf16.mxu0 0
      %1332 = vmatpush1.bf16.msra.mxu0 0
      %1333 = vmatprep.subr.bf16.mxu0 0
      %1334 = vmatpush1.bf16.msra.mxu0 0
      %1335 = vmatprep.subr.bf16.mxu0 0
      %1336 = vmatpush1.bf16.msra.mxu0 0
      %1337 = vmatprep.subr.bf16.mxu0 0
      %1338 = vmatpush1.bf16.msra.mxu0 0
      %1339 = vmatprep.subr.bf16.mxu0 0
      %1340 = vmatpush1.bf16.msra.mxu0 0
      %1341 = vmatprep.subr.bf16.mxu0 0
      %1342 = vmatpush1.bf16.msra.mxu0 0
      %1343 = vmatprep.subr.bf16.mxu0 0
      %1344 = vmatpush1.bf16.msra.mxu0 0
      %1345 = vmatprep.subr.bf16.mxu0 0
      %1346 = vmatpush1.bf16.msra.mxu0 0
      %1347 = vmatprep.subr.bf16.mxu0 0
      %1348 = vmatpush1.bf16.msra.mxu0 0
      %1349 = vmatprep.mubr.bf16.mxu0 0
      %1350 = vmatmul.mubr.bf16.gmra.mrb[0].mxu0 %v1315
      %v1351 = vpop.f32.mrb[0].mxu0
      %v1352 = vadd.f32 0.0, %v1351
      %v1353 = vpop.f32.mrb[0].mxu0
      %v1354 = vpop.f32.mrb[0].mxu0
      %v1355 = vadd.f32 0.0, %v1354
      %v1356 = vpop.f32.mrb[0].mxu0
      %1357 = vdwg.mxu0
      %v1358 = vadd.f32 %v1168, %v1352
      %v1359 = vadd.f32 %v1171, %v1355
      %1360 = vrot.lane.b32.xlu0 %v805, 32
      %v1361 = vpop.permute.xlu0 %1360
      %1362 = vrot.lane.b32.xlu0 %v806, 32
      %v1363 = vpop.permute.xlu0 %1362
      %v1365 = vsel %vm808, %v1361, 0
      %v1368 = vsel %vm808, %v1363, 0
      %1370 = vmatprep.subr.bf16.mxu0 0
      %1371 = vmatpush1.bf16.xpose.msra.mxu0 %v1368
      %1372 = vmatprep.subr.bf16.mxu0 0
      %1373 = vmatpush1.bf16.xpose.msra.mxu0 0
      %1374 = vmatprep.subr.bf16.mxu0 0
      %1375 = vmatpush1.bf16.xpose.msra.mxu0 0
      %1376 = vmatprep.subr.bf16.mxu0 0
      %1377 = vmatpush1.bf16.xpose.msra.mxu0 0
      %1378 = vmatprep.subr.bf16.mxu0 0
      %1379 = vmatpush1.bf16.xpose.msra.mxu0 0
      %1380 = vmatprep.subr.bf16.mxu0 0
      %1381 = vmatpush1.bf16.xpose.msra.mxu0 0
      %1382 = vmatprep.subr.bf16.mxu0 0
      %1383 = vmatpush1.bf16.xpose.msra.mxu0 0
      %1384 = vmatprep.subr.bf16.mxu0 0
      %1385 = vmatpush1.bf16.xpose.msra.mxu0 0
      %1386 = vmatprep.subr.bf16.mxu0 0
      %1387 = vmatpush1.bf16.xpose.msra.mxu0 0
      %1388 = vmatprep.subr.bf16.mxu0 0
      %1389 = vmatpush1.bf16.xpose.msra.mxu0 0
      %1390 = vmatprep.subr.bf16.mxu0 0
      %1391 = vmatpush1.bf16.xpose.msra.mxu0 0
      %1392 = vmatprep.subr.bf16.mxu0 0
      %1393 = vmatpush1.bf16.xpose.msra.mxu0 0
      %1394 = vmatprep.subr.bf16.mxu0 0
      %1395 = vmatpush1.bf16.xpose.msra.mxu0 0
      %1396 = vmatprep.subr.bf16.mxu0 0
      %1397 = vmatpush1.bf16.xpose.msra.mxu0 0
      %1398 = vmatprep.subr.bf16.mxu0 0
      %1399 = vmatpush1.bf16.xpose.msra.mxu0 0
      %1400 = vmatprep.subr.bf16.mxu0 0
      %1401 = vmatpush1.bf16.xpose.msra.mxu0 0
      %1402 = vmatprep.mubr.bf16.mxu0 0
      %1403 = vmatmul.mubr.bf16.gmra.mrb[0].mxu0 %v1365
      %v1404 = vpop.f32.mrb[0].mxu0
      %v1405 = vadd.f32 0.0, %v1404
      %v1406 = vpop.f32.mrb[0].mxu0
      %v1407 = vpop.f32.mrb[0].mxu0
      %v1408 = vadd.f32 0.0, %v1407
      %v1409 = vpop.f32.mrb[0].mxu0
      %1410 = vdwg.mxu0
      %v1411 = vmul.f32 %v1405, 0.17677669
      %v1412 = vmul.f32 %v1408, 0.17677669
      %v1413 = vsel %vm858, %v1411, -inf
      %1414 = vmax.xlane.f32.xlu0 %v1413
      %v1415 = vpop.xlane.xlu0 %1414
      %v1416 = vsel %vm858, %v1412, -inf
      %1417 = vmax.xlane.f32.xlu0 %v1416
      %v1418 = vpop.xlane.xlu0 %1417
      %v1419 = vsub.f32 %v1411, %v1415
      %v1420 = vsub.f32 %v1412, %v1418
      %v1421 = vmul.f32 %v1419, 1.442695
      %v1422 = vpow.pop %v1421
      %v1423 = vmul.f32 %v1420, 1.442695
      %v1424 = vpow.pop %v1423
      %v1425 = vsel %vm858, %v1422, 0.0
      %1426 = vadd.xlane.f32.xlu0 %v1425
      %v1427 = vpop.xlane.xlu0 %1426
      %v1428 = vsel %vm858, %v1424, 0.0
      %1429 = vadd.xlane.f32.xlu0 %v1428
      %v1430 = vpop.xlane.xlu0 %1429
      %v1431 = vrcp.pop %v1427
      %v1432 = vrcp.pop %v1430
      %v1433 = vmul.f32 %v1422, %v1431
      %v1434 = vmul.f32 %v1424, %v1432
      %v1435 = vpack.c.bf16 %v1434, %v1433
      %1436 = vrot.lane.b32.xlu0 %v807, 32
      %v1437 = vpop.permute.xlu0 %1436
      %v1440 = vsel %vm858, %v1435, 0
      %1442 = vmatprep.subr.bf16.mxu0 0
      %1443 = vmatpush1.bf16.msra.mxu0 %v1437
      %1444 = vmatprep.subr.bf16.mxu0 0
      %1445 = vmatpush1.bf16.msra.mxu0 0
      %1446 = vmatprep.subr.bf16.mxu0 0
      %1447 = vmatpush1.bf16.msra.mxu0 0
      %1448 = vmatprep.subr.bf16.mxu0 0
      %1449 = vmatpush1.bf16.msra.mxu0 0
      %1450 = vmatprep.subr.bf16.mxu0 0
      %1451 = vmatpush1.bf16.msra.mxu0 0
      %1452 = vmatprep.subr.bf16.mxu0 0
      %1453 = vmatpush1.bf16.msra.mxu0 0
      %1454 = vmatprep.subr.bf16.mxu0 0
      %1455 = vmatpush1.bf16.msra.mxu0 0
      %1456 = vmatprep.subr.bf16.mxu0 0
      %1457 = vmatpush1.bf16.msra.mxu0 0
      %1458 = vmatprep.subr.bf16.mxu0 0
      %1459 = vmatpush1.bf16.msra.mxu0 0
      %1460 = vmatprep.subr.bf16.mxu0 0
      %1461 = vmatpush1.bf16.msra.mxu0 0
      %1462 = vmatprep.subr.bf16.mxu0 0
      %1463 = vmatpush1.bf16.msra.mxu0 0
      %1464 = vmatprep.subr.bf16.mxu0 0
      %1465 = vmatpush1.bf16.msra.mxu0 0
      %1466 = vmatprep.subr.bf16.mxu0 0
      %1467 = vmatpush1.bf16.msra.mxu0 0
      %1468 = vmatprep.subr.bf16.mxu0 0
      %1469 = vmatpush1.bf16.msra.mxu0 0
      %1470 = vmatprep.subr.bf16.mxu0 0
      %1471 = vmatpush1.bf16.msra.mxu0 0
      %1472 = vmatprep.subr.bf16.mxu0 0
      %1473 = vmatpush1.bf16.msra.mxu0 0
      %1474 = vmatprep.mubr.bf16.mxu0 0
      %1475 = vmatmul.mubr.bf16.gmra.mrb[0].mxu0 %v1440
      %v1476 = vpop.f32.mrb[0].mxu0
      %v1477 = vadd.f32 0.0, %v1476
      %v1478 = vpop.f32.mrb[0].mxu0
      %v1479 = vpop.f32.mrb[0].mxu0
      %v1480 = vadd.f32 0.0, %v1479
      %v1481 = vpop.f32.mrb[0].mxu0
      %1482 = vdwg.mxu0
      %v1483 = vpack.c.bf16 %v1480, %v1477
      %v1484 = vld [vmem:[%s7 + $0x30] sm:$0xf]
      %v1485 = vld [vmem:[%s7 + $0x34] sm:$0xf]
      %v1486 = vld [vmem:[%s7 + $0x38] sm:$0xf]
      %v1487 = vld [vmem:[%s7 + $0x3c] sm:$0xf]
      %v1492 = vunpack.c.l.b16 %v1484
      %v1493 = vunpack.c.l.b16 %v1485
      %v1494 = vunpack.c.l.b16 %v1486
      %v1495 = vunpack.c.l.b16 %v1487
      %v1496 = vpack.c.b16 %v1493, %v1492
      %v1497 = vpack.c.b16 %v1495, %v1494
      %v1501 = vsel %vm808, %v1483, 0
      %1503 = vmatprep.subr.bf16.mxu0 0
      %1504 = vmatpush1.bf16.msra.mxu0 %v1496
      %1505 = vmatprep.subr.bf16.mxu0 0
      %1506 = vmatpush1.bf16.msra.mxu0 %v1497
      %1507 = vmatprep.subr.bf16.mxu0 0
      %1508 = vmatpush1.bf16.msra.mxu0 0
      %1509 = vmatprep.subr.bf16.mxu0 0
      %1510 = vmatpush1.bf16.msra.mxu0 0
      %1511 = vmatprep.subr.bf16.mxu0 0
      %1512 = vmatpush1.bf16.msra.mxu0 0
      %1513 = vmatprep.subr.bf16.mxu0 0
      %1514 = vmatpush1.bf16.msra.mxu0 0
      %1515 = vmatprep.subr.bf16.mxu0 0
      %1516 = vmatpush1.bf16.msra.mxu0 0
      %1517 = vmatprep.subr.bf16.mxu0 0
      %1518 = vmatpush1.bf16.msra.mxu0 0
      %1519 = vmatprep.subr.bf16.mxu0 0
      %1520 = vmatpush1.bf16.msra.mxu0 0
      %1521 = vmatprep.subr.bf16.mxu0 0
      %1522 = vmatpush1.bf16.msra.mxu0 0
      %1523 = vmatprep.subr.bf16.mxu0 0
      %1524 = vmatpush1.bf16.msra.mxu0 0
      %1525 = vmatprep.subr.bf16.mxu0 0
      %1526 = vmatpush1.bf16.msra.mxu0 0
      %1527 = vmatprep.subr.bf16.mxu0 0
      %1528 = vmatpush1.bf16.msra.mxu0 0
      %1529 = vmatprep.subr.bf16.mxu0 0
      %1530 = vmatpush1.bf16.msra.mxu0 0
      %1531 = vmatprep.subr.bf16.mxu0 0
      %1532 = vmatpush1.bf16.msra.mxu0 0
      %1533 = vmatprep.subr.bf16.mxu0 0
      %1534 = vmatpush1.bf16.msra.mxu0 0
      %1535 = vmatprep.mubr.bf16.mxu0 0
      %1536 = vmatmul.mubr.bf16.gmra.mrb[0].mxu0 %v1501
      %v1537 = vpop.f32.mrb[0].mxu0
      %v1538 = vadd.f32 0.0, %v1537
      %v1539 = vpop.f32.mrb[0].mxu0
      %v1540 = vpop.f32.mrb[0].mxu0
      %v1541 = vadd.f32 0.0, %v1540
      %v1542 = vpop.f32.mrb[0].mxu0
      %1543 = vdwg.mxu0
      %v1544 = vadd.f32 %v1358, %v1538
      %v1545 = vadd.f32 %v1359, %v1541
      %v1546 = vadd.f32 %v464, %v1544
      %v1547 = vadd.f32 %v465, %v1545
      %v1548 = vld [vmem:[%s8] sm:$0x1]
      %v1550 = vlaneseq
      %v1551 = vshrl.u32 %v1550, 7
      %v1552 = vsub.s32 0, %v1551
      %v1553 = vrot.slane %v1548, %v1552
      %v1555 = vadd.f32 %v1546, %v1553
      %v1556 = vadd.f32 %v1547, %v1553
      %1557 = vadd.xlane.f32.xlu0 %v1555
      %v1558 = vpop.xlane.xlu0 %1557
      %1559 = vadd.xlane.f32.xlu0 %v1556
      %v1560 = vpop.xlane.xlu0 %1559
      %v1561 = vmul.f32 %v1558, %v475
      %v1562 = vmul.f32 %v1560, %v475
      %v1563 = vsub.f32 %v1555, %v1561
      %v1564 = vsub.f32 %v1556, %v1562
      %v1565 = vmul.f32 %v1563, %v1563
      %v1566 = vmul.f32 %v1564, %v1564
      %1567 = vadd.xlane.f32.xlu0 %v1565
      %v1568 = vpop.xlane.xlu0 %1567
      %1569 = vadd.xlane.f32.xlu0 %v1566
      %v1570 = vpop.xlane.xlu0 %1569
      %v1571 = vmul.f32 %v1568, %v475
      %v1572 = vmul.f32 %v1570, %v475
      %v1573 = vadd.f32 %v1571, 1e-05
      %v1574 = vadd.f32 %v1572, 1e-05
      %v1575 = vrsqrt.pop %v1573
      %v1576 = vrsqrt.pop %v1574
      %v1577 = vmul.f32 %v1563, %v1575
      %v1578 = vmul.f32 %v1564, %v1576
      %v1579 = vlaneseq
      %v1580 = vshrl.u32 %v1579, 7
      %v1581 = vsub.s32 4, %v1580
      %v1582 = vrot.slane %v470, %v1581
      %v1583 = vmul.f32 %v1577, %v1582
      %v1584 = vmul.f32 %v1578, %v1582
      %v1585 = vlaneseq
      %v1586 = vshrl.u32 %v1585, 7
      %v1587 = vsub.s32 5, %v1586
      %v1588 = vrot.slane %v470, %v1587
      %v1589 = vadd.f32 %v1583, %v1588
      %v1590 = vadd.f32 %v1584, %v1588
      %v1591 = vpack.c.bf16 %v1590, %v1589
      %v1592 = vld [vmem:[%s9] sm:$0xff]
      %v1593 = vld [vmem:[%s9 + $0x8] sm:$0xff]
      %v1594 = vld [vmem:[%s9 + $0x10] sm:$0xff]
      %v1595 = vld [vmem:[%s9 + $0x18] sm:$0xff]
      %v1596 = vld [vmem:[%s9 + $0x20] sm:$0xff]
      %v1597 = vld [vmem:[%s9 + $0x28] sm:$0xff]
      %v1598 = vld [vmem:[%s9 + $0x30] sm:$0xff]
      %v1599 = vld [vmem:[%s9 + $0x38] sm:$0xff]
      %v1600 = vld [vmem:[%s9 + $0x40] sm:$0xff]
      %v1601 = vld [vmem:[%s9 + $0x48] sm:$0xff]
      %v1602 = vld [vmem:[%s9 + $0x50] sm:$0xff]
      %v1603 = vld [vmem:[%s9 + $0x58] sm:$0xff]
      %v1604 = vld [vmem:[%s9 + $0x60] sm:$0xff]
      %v1605 = vld [vmem:[%s9 + $0x68] sm:$0xff]
      %v1606 = vld [vmem:[%s9 + $0x70] sm:$0xff]
      %v1607 = vld [vmem:[%s9 + $0x78] sm:$0xff]
      %v1608 = vld [vmem:[%s10] sm:$0x3]
      %v1610 = vlaneseq
      %v1611 = vshrl.u32 %v1610, 7
      %v1612 = vsub.s32 0, %v1611
      %v1613 = vrot.slane %v1608, %v1612
      %v1614 = vlaneseq
      %v1615 = vshrl.u32 %v1614, 7
      %v1616 = vsub.s32 1, %v1615
      %v1617 = vrot.slane %v1608, %v1616
      %v1636 = vunpack.c.l.b16 %v1592
      %v1637 = vunpack.c.h.b16 %v1592
      %v1638 = vunpack.c.l.b16 %v1593
      %v1639 = vunpack.c.h.b16 %v1593
      %v1640 = vunpack.c.l.b16 %v1594
      %v1641 = vunpack.c.h.b16 %v1594
      %v1642 = vunpack.c.l.b16 %v1595
      %v1643 = vunpack.c.h.b16 %v1595
      %v1644 = vunpack.c.l.b16 %v1596
      %v1645 = vunpack.c.h.b16 %v1596
      %v1646 = vunpack.c.l.b16 %v1597
      %v1647 = vunpack.c.h.b16 %v1597
      %v1648 = vunpack.c.l.b16 %v1598
      %v1649 = vunpack.c.h.b16 %v1598
      %v1650 = vunpack.c.l.b16 %v1599
      %v1651 = vunpack.c.h.b16 %v1599
      %v1652 = vunpack.c.l.b16 %v1600
      %v1653 = vunpack.c.h.b16 %v1600
      %v1654 = vunpack.c.l.b16 %v1601
      %v1655 = vunpack.c.h.b16 %v1601
      %v1656 = vunpack.c.l.b16 %v1602
      %v1657 = vunpack.c.h.b16 %v1602
      %v1658 = vunpack.c.l.b16 %v1603
      %v1659 = vunpack.c.h.b16 %v1603
      %v1660 = vunpack.c.l.b16 %v1604
      %v1661 = vunpack.c.h.b16 %v1604
      %v1662 = vunpack.c.l.b16 %v1605
      %v1663 = vunpack.c.h.b16 %v1605
      %v1664 = vunpack.c.l.b16 %v1606
      %v1665 = vunpack.c.h.b16 %v1606
      %v1666 = vunpack.c.l.b16 %v1607
      %v1667 = vunpack.c.h.b16 %v1607
      %v1668 = vpack.c.b16 %v1638, %v1636
      %v1669 = vpack.c.b16 %v1639, %v1637
      %v1670 = vpack.c.b16 %v1642, %v1640
      %v1671 = vpack.c.b16 %v1643, %v1641
      %v1672 = vpack.c.b16 %v1646, %v1644
      %v1673 = vpack.c.b16 %v1647, %v1645
      %v1674 = vpack.c.b16 %v1650, %v1648
      %v1675 = vpack.c.b16 %v1651, %v1649
      %v1676 = vpack.c.b16 %v1654, %v1652
      %v1677 = vpack.c.b16 %v1655, %v1653
      %v1678 = vpack.c.b16 %v1658, %v1656
      %v1679 = vpack.c.b16 %v1659, %v1657
      %v1680 = vpack.c.b16 %v1662, %v1660
      %v1681 = vpack.c.b16 %v1663, %v1661
      %v1682 = vpack.c.b16 %v1666, %v1664
      %v1683 = vpack.c.b16 %v1667, %v1665
      %1700 = vmatprep.subr.bf16.mxu0 %v1669
      %1701 = vmatpush1.bf16.msra.mxu0 %v1668
      %1702 = vmatprep.subr.bf16.mxu0 %v1671
      %1703 = vmatpush1.bf16.msra.mxu0 %v1670
      %1704 = vmatprep.subr.bf16.mxu0 %v1673
      %1705 = vmatpush1.bf16.msra.mxu0 %v1672
      %1706 = vmatprep.subr.bf16.mxu0 %v1675
      %1707 = vmatpush1.bf16.msra.mxu0 %v1674
      %1708 = vmatprep.subr.bf16.mxu0 %v1677
      %1709 = vmatpush1.bf16.msra.mxu0 %v1676
      %1710 = vmatprep.subr.bf16.mxu0 %v1679
      %1711 = vmatpush1.bf16.msra.mxu0 %v1678
      %1712 = vmatprep.subr.bf16.mxu0 %v1681
      %1713 = vmatpush1.bf16.msra.mxu0 %v1680
      %1714 = vmatprep.subr.bf16.mxu0 %v1683
      %1715 = vmatpush1.bf16.msra.mxu0 %v1682
      %1716 = vmatprep.subr.bf16.mxu0 0
      %1717 = vmatpush1.bf16.msra.mxu0 0
      %1718 = vmatprep.subr.bf16.mxu0 0
      %1719 = vmatpush1.bf16.msra.mxu0 0
      %1720 = vmatprep.subr.bf16.mxu0 0
      %1721 = vmatpush1.bf16.msra.mxu0 0
      %1722 = vmatprep.subr.bf16.mxu0 0
      %1723 = vmatpush1.bf16.msra.mxu0 0
      %1724 = vmatprep.subr.bf16.mxu0 0
      %1725 = vmatpush1.bf16.msra.mxu0 0
      %1726 = vmatprep.subr.bf16.mxu0 0
      %1727 = vmatpush1.bf16.msra.mxu0 0
      %1728 = vmatprep.subr.bf16.mxu0 0
      %1729 = vmatpush1.bf16.msra.mxu0 0
      %1730 = vmatprep.subr.bf16.mxu0 0
      %1731 = vmatpush1.bf16.msra.mxu0 0
      %1732 = vmatprep.mubr.bf16.mxu0 0
      %1733 = vmatmul.mubr.bf16.gmra.mrb[0].mxu0 %v1591
      %v1734 = vpop.f32.mrb[0].mxu0
      %v1735 = vadd.f32 %v1613, %v1734
      %v1736 = vpop.f32.mrb[0].mxu0
      %v1737 = vadd.f32 %v1617, %v1736
      %v1738 = vpop.f32.mrb[0].mxu0
      %v1739 = vadd.f32 %v1613, %v1738
      %v1740 = vpop.f32.mrb[0].mxu0
      %v1741 = vadd.f32 %v1617, %v1740
      %1742 = vdwg.mxu0
      %v1743 = vmul.f32 %v1735, %v1735
      %v1744 = vmul.f32 %v1737, %v1737
      %v1745 = vmul.f32 %v1739, %v1739
      %v1746 = vmul.f32 %v1741, %v1741
      %v1747 = vmul.f32 %v1735, %v1743
      %v1748 = vmul.f32 %v1737, %v1744
      %v1749 = vmul.f32 %v1739, %v1745
      %v1750 = vmul.f32 %v1741, %v1746
      %v1751 = vmul.f32 %v1747, 0.044715
      %v1752 = vmul.f32 %v1748, 0.044715
      %v1753 = vmul.f32 %v1749, 0.044715
      %v1754 = vmul.f32 %v1750, 0.044715
      %v1755 = vadd.f32 %v1735, %v1751
      %v1756 = vadd.f32 %v1737, %v1752
      %v1757 = vadd.f32 %v1739, %v1753
      %v1758 = vadd.f32 %v1741, %v1754
      %v1759 = vmul.f32 %v1755, 0.7978846
      %v1760 = vmul.f32 %v1756, 0.7978846
      %v1761 = vmul.f32 %v1757, 0.7978846
      %v1762 = vmul.f32 %v1758, 0.7978846
      %v1763 = vtanh.pop %v1759
      %v1764 = vtanh.pop %v1760
      %v1765 = vtanh.pop %v1761
      %v1766 = vtanh.pop %v1762
      %v1767 = vadd.f32 %v1763, 1.0
      %v1768 = vadd.f32 %v1764, 1.0
      %v1769 = vadd.f32 %v1765, 1.0
      %v1770 = vadd.f32 %v1766, 1.0
      %v1771 = vmul.f32 %v1767, 0.5
      %v1772 = vmul.f32 %v1768, 0.5
      %v1773 = vmul.f32 %v1769, 0.5
      %v1774 = vmul.f32 %v1770, 0.5
      %v1775 = vmul.f32 %v1735, %v1771
      %v1776 = vmul.f32 %v1737, %v1772
      %v1777 = vmul.f32 %v1739, %v1773
      %v1778 = vmul.f32 %v1741, %v1774
      %v1779 = vpack.c.bf16 %v1777, %v1775
      %v1780 = vpack.c.bf16 %v1778, %v1776
      %v1781 = vld [vmem:[%s11] sm:$0xf]
      %v1782 = vld [vmem:[%s11 + $0x4] sm:$0xf]
      %v1783 = vld [vmem:[%s11 + $0x8] sm:$0xf]
      %v1784 = vld [vmem:[%s11 + $0xc] sm:$0xf]
      %v1785 = vld [vmem:[%s11 + $0x10] sm:$0xf]
      %v1786 = vld [vmem:[%s11 + $0x14] sm:$0xf]
      %v1787 = vld [vmem:[%s11 + $0x18] sm:$0xf]
      %v1788 = vld [vmem:[%s11 + $0x1c] sm:$0xf]
      %v1789 = vld [vmem:[%s11 + $0x20] sm:$0xf]
      %v1790 = vld [vmem:[%s11 + $0x24] sm:$0xf]
      %v1791 = vld [vmem:[%s11 + $0x28] sm:$0xf]
      %v1792 = vld [vmem:[%s11 + $0x2c] sm:$0xf]
      %v1793 = vld [vmem:[%s11 + $0x30] sm:$0xf]
      %v1794 = vld [vmem:[%s11 + $0x34] sm:$0xf]
      %v1795 = vld [vmem:[%s11 + $0x38] sm:$0xf]
      %v1796 = vld [vmem:[%s11 + $0x3c] sm:$0xf]
      %v1797 = vld [vmem:[%s11 + $0x40] sm:$0xf]
      %v1798 = vld [vmem:[%s11 + $0x44] sm:$0xf]
      %v1799 = vld [vmem:[%s11 + $0x48] sm:$0xf]
      %v1800 = vld [vmem:[%s11 + $0x4c] sm:$0xf]
      %v1801 = vld [vmem:[%s11 + $0x50] sm:$0xf]
      %v1802 = vld [vmem:[%s11 + $0x54] sm:$0xf]
      %v1803 = vld [vmem:[%s11 + $0x58] sm:$0xf]
      %v1804 = vld [vmem:[%s11 + $0x5c] sm:$0xf]
      %v1805 = vld [vmem:[%s11 + $0x60] sm:$0xf]
      %v1806 = vld [vmem:[%s11 + $0x64] sm:$0xf]
      %v1807 = vld [vmem:[%s11 + $0x68] sm:$0xf]
      %v1808 = vld [vmem:[%s11 + $0x6c] sm:$0xf]
      %v1809 = vld [vmem:[%s11 + $0x70] sm:$0xf]
      %v1810 = vld [vmem:[%s11 + $0x74] sm:$0xf]
      %v1811 = vld [vmem:[%s11 + $0x78] sm:$0xf]
      %v1812 = vld [vmem:[%s11 + $0x7c] sm:$0xf]
      %v1813 = vld [vmem:[%s12] sm:$0x1]
      %v1815 = vlaneseq
      %v1816 = vshrl.u32 %v1815, 7
      %v1817 = vsub.s32 0, %v1816
      %v1818 = vrot.slane %v1813, %v1817
      %v1852 = vunpack.c.l.b16 %v1781
      %v1853 = vunpack.c.l.b16 %v1782
      %v1854 = vunpack.c.l.b16 %v1783
      %v1855 = vunpack.c.l.b16 %v1784
      %v1856 = vunpack.c.l.b16 %v1785
      %v1857 = vunpack.c.l.b16 %v1786
      %v1858 = vunpack.c.l.b16 %v1787
      %v1859 = vunpack.c.l.b16 %v1788
      %v1860 = vunpack.c.l.b16 %v1789
      %v1861 = vunpack.c.l.b16 %v1790
      %v1862 = vunpack.c.l.b16 %v1791
      %v1863 = vunpack.c.l.b16 %v1792
      %v1864 = vunpack.c.l.b16 %v1793
      %v1865 = vunpack.c.l.b16 %v1794
      %v1866 = vunpack.c.l.b16 %v1795
      %v1867 = vunpack.c.l.b16 %v1796
      %v1868 = vunpack.c.l.b16 %v1797
      %v1869 = vunpack.c.l.b16 %v1798
      %v1870 = vunpack.c.l.b16 %v1799
      %v1871 = vunpack.c.l.b16 %v1800
      %v1872 = vunpack.c.l.b16 %v1801
      %v1873 = vunpack.c.l.b16 %v1802
      %v1874 = vunpack.c.l.b16 %v1803
      %v1875 = vunpack.c.l.b16 %v1804
      %v1876 = vunpack.c.l.b16 %v1805
      %v1877 = vunpack.c.l.b16 %v1806
      %v1878 = vunpack.c.l.b16 %v1807
      %v1879 = vunpack.c.l.b16 %v1808
      %v1880 = vunpack.c.l.b16 %v1809
      %v1881 = vunpack.c.l.b16 %v1810
      %v1882 = vunpack.c.l.b16 %v1811
      %v1883 = vunpack.c.l.b16 %v1812
      %v1884 = vpack.c.b16 %v1853, %v1852
      %v1885 = vpack.c.b16 %v1855, %v1854
      %v1886 = vpack.c.b16 %v1857, %v1856
      %v1887 = vpack.c.b16 %v1859, %v1858
      %v1888 = vpack.c.b16 %v1861, %v1860
      %v1889 = vpack.c.b16 %v1863, %v1862
      %v1890 = vpack.c.b16 %v1865, %v1864
      %v1891 = vpack.c.b16 %v1867, %v1866
      %v1892 = vpack.c.b16 %v1869, %v1868
      %v1893 = vpack.c.b16 %v1871, %v1870
      %v1894 = vpack.c.b16 %v1873, %v1872
      %v1895 = vpack.c.b16 %v1875, %v1874
      %v1896 = vpack.c.b16 %v1877, %v1876
      %v1897 = vpack.c.b16 %v1879, %v1878
      %v1898 = vpack.c.b16 %v1881, %v1880
      %v1899 = vpack.c.b16 %v1883, %v1882
      %1916 = vmatprep.subr.bf16.mxu0 0
      %1917 = vmatpush1.bf16.msra.mxu0 %v1884
      %1918 = vmatprep.subr.bf16.mxu0 0
      %1919 = vmatpush1.bf16.msra.mxu0 %v1885
      %1920 = vmatprep.subr.bf16.mxu0 0
      %1921 = vmatpush1.bf16.msra.mxu0 %v1886
      %1922 = vmatprep.subr.bf16.mxu0 0
      %1923 = vmatpush1.bf16.msra.mxu0 %v1887
      %1924 = vmatprep.subr.bf16.mxu0 0
      %1925 = vmatpush1.bf16.msra.mxu0 %v1888
      %1926 = vmatprep.subr.bf16.mxu0 0
      %1927 = vmatpush1.bf16.msra.mxu0 %v1889
      %1928 = vmatprep.subr.bf16.mxu0 0
      %1929 = vmatpush1.bf16.msra.mxu0 %v1890
      %1930 = vmatprep.subr.bf16.mxu0 0
      %1931 = vmatpush1.bf16.msra.mxu0 %v1891
      %1932 = vmatprep.subr.bf16.mxu0 0
      %1933 = vmatpush1.bf16.msra.mxu0 %v1892
      %1934 = vmatprep.subr.bf16.mxu0 0
      %1935 = vmatpush1.bf16.msra.mxu0 %v1893
      %1936 = vmatprep.subr.bf16.mxu0 0
      %1937 = vmatpush1.bf16.msra.mxu0 %v1894
      %1938 = vmatprep.subr.bf16.mxu0 0
      %1939 = vmatpush1.bf16.msra.mxu0 %v1895
      %1940 = vmatprep.subr.bf16.mxu0 0
      %1941 = vmatpush1.bf16.msra.mxu0 %v1896
      %1942 = vmatprep.subr.bf16.mxu0 0
      %1943 = vmatpush1.bf16.msra.mxu0 %v1897
      %1944 = vmatprep.subr.bf16.mxu0 0
      %1945 = vmatpush1.bf16.msra.mxu0 %v1898
      %1946 = vmatprep.subr.bf16.mxu0 0
      %1947 = vmatpush1.bf16.msra.mxu0 %v1899
      %1948 = vmatprep.mubr.bf16.mxu0 %v1780
      %1949 = vmatmul.mubr.bf16.gmra.mrb[0].mxu0 %v1779
      %v1950 = vpop.f32.mrb[0].mxu0
      %v1951 = vadd.f32 %v1818, %v1950
      %v1952 = vpop.f32.mrb[0].mxu0
      %v1953 = vpop.f32.mrb[0].mxu0
      %v1954 = vadd.f32 %v1818, %v1953
      %v1955 = vpop.f32.mrb[0].mxu0
      %1956 = vdwg.mxu0
      %v1957 = vadd.f32 %v1555, %v1951
      %v1958 = vadd.f32 %v1556, %v1954
      %v1959 = vpack.c.bf16 %v1958, %v1957
      %v1961 = vunpack.c.l.b16 %v1959
      %v1962 = vunpack.c.h.b16 %v1959
      %v1963 = vpack.c.b16 %v1961, %v1961
      %v1964 = vpack.c.b16 %v1962, %v1962
      %1967 = vst [vmem:[%s460] sm:$0xf] %v1963
      %1968 = vst [vmem:[%s460 + $0x4] sm:$0xf] %v1964
      %p1969 = scmp.lt.s32.totalorder %s24, 3
      %s1970 = scalar_select %p1969, %s24, 3
      %s1971 = smul.addr %s1970, 2
      %s1972 = smul.addr %s1971, 4
      %s1973 = scalar_lea.vmem %s13, %s1972
      // Predicated region
      $region73: #{speinet_forward.11} parent=71 // pred_check
        %p1974 = pneg %p325
      $region74: #{speinet_forward.11} parent=71 // pred_check_branch
        %1976 = sbr.rel (%p1974) target = $region76
      $region75: #{speinet_forward.11} parent=71 // pred_region
        _
      $region76: #{speinet_forward.11} parent=71 // pred_fallthru
        _
    $region72: #{speinet_forward.11} parent=5 // pred_fallthru
      _
    %p1977 = scmp.le.s32.totalorder 2, %s19
    // Predicated region
    $region77: #{speinet_forward.11} parent=5 // pred_check
      %p1978 = pneg %p1977
    $region78: #{speinet_forward.11} parent=5 // pred_check_branch
      %1980 = sbr.rel (%p1978) target = $region80
    $region79: #{speinet_forward.11} parent=5 // pred_region
      %s1981 = ssub.s32 %s19, 2
      // Predicated region
      $region81: #{speinet_forward.11} parent=79 // pred_check
        %p1982 = pneg %p331
      $region82: #{speinet_forward.11} parent=79 // pred_check_branch
        %1984 = sbr.rel (%p1982) target = $region84
      $region83: #{speinet_forward.11} parent=79 // pred_region
        %p1985 = scmp.lt.s32.totalorder %s25, 3
        %s1986 = scalar_select %p1985, %s25, 3
        %s1987 = smul.addr %s1986, 2
        %s1988 = smul.addr %s1987, 4
        %s1989 = scalar_lea.vmem %s13, %s1988
      $region84: #{speinet_forward.11} parent=79 // pred_fallthru
        _
    $region80: #{speinet_forward.11} parent=5 // pred_fallthru
      _
  $region6: #{speinet_forward.11} parent=0 // loop_footer
    %s23 = sadd.s32 1, %s19
  $region7: #{speinet_forward.11} parent=0 // loop_footer_branch
    %18 = sbr.rel target = $region3
  $region8: #{speinet_forward.11} parent=0 // loop_exit
    _

// kernel: tile.19
$region0: #{tile.19}
  %s0 = inlined_call_operand.vmem [shape: f32[4,32], index: 0, kind: input, shape index: {}]
  %s1 = inlined_call_operand.vmem [shape: f32[1,128], index: 1, kind: output, shape index: {}]
  $region1: #{tile.19} parent=0
    #allocation0 [shape = 'u8[4096]{0}', space=vmem, size = 0x1000, scoped, tag = 'scoped mem for output reshape']
    #allocation1 [shape = 'u8[4096]{0}', space=vmem, size = 0x1000, scoped, tag = 'scoped mem for input reshape']
    %s3 = sshllo.u32 0, 4
    %v4 = vld [vmem:[%s0] sm:%s3]
    %5 = vst [vmem:[#allocation1] sm:%s3] %v4
    %v6 = vld [vmem:[#allocation1] sm:$0x1]
    %vm7 = vcmask 261120
    %8 = vst.msk [vmem:[#allocation0] sm:$0x1] %vm7, %v6
    %s9 = scalar_lea.vmem [#allocation1], 3
    %v10 = vld [vmem:[%s9] sm:$0x1]
    %11 = vrot.lane.b32.xlu0 %v10, 96
    %v12 = vpop.permute.xlu0 %11
    %vm13 = vcmask 1048320
    %14 = vst.msk [vmem:[#allocation0] sm:$0x1] %vm13, %v12
    %s15 = scalar_lea.vmem [#allocation1], 2
    %v16 = vld [vmem:[%s15] sm:$0x1]
    %17 = vrot.lane.b32.xlu0 %v16, 64
    %v18 = vpop.permute.xlu0 %17
    %vm19 = vcmask 785920
    %20 = vst.msk [vmem:[#allocation0] sm:$0x1] %vm19, %v18
    %s21 = scalar_lea.vmem [#allocation1], 1
    %v22 = vld [vmem:[%s21] sm:$0x1]
    %23 = vrot.lane.b32.xlu0 %v22, 32
    %v24 = vpop.permute.xlu0 %23
    %vm25 = vcmask 523520
    %26 = vst.msk [vmem:[#allocation0] sm:$0x1] %vm25, %v24
    %s28 = sshllo.u32 0, 1
    %v30 = vld [vmem:[#allocation0] sm:%s28]
    %s31 = sshllo.u32 0, 1
    %32 = vst [vmem:[%s1] sm:%s31] %v30

// kernel: speinet_forward.14
$region0: #{speinet_forward.14}
  #allocation0 [shape = 'u32[]', space=smem, size = 0x4, offset = 0x4, fixed_abs, tag = 'smem constant byte address 0x4 - core index']
  #allocation1 [shape = 'u32[144,128]{1,0:T(1,128)}', space=vmem, size = 0x12000, scoped, tag = 'internal scratch']
  %s0 = inlined_call_operand.vmem [shape: bf16[128,64], index: 0, kind: input, shape index: {}]
  %s1 = inlined_call_operand.vmem [shape: bf16[64,128], index: 1, kind: input, shape index: {}]
  %s2 = inlined_call_operand.vmem [shape: f32[1,128], index: 2, kind: input, shape index: {}]
  %s3 = inlined_call_operand.vmem [shape: bf16[128,128], index: 3, kind: output, shape index: {}]
  %s4 = sld [smem:[#allocation0]]
  $region22: #{speinet_forward.14} parent=0
    _
  %s6 = ssub.s32 1, %s4
  %s7 = scalar_select 0, %s6, %s4
  // Predicated region
  $region2: #{speinet_forward.14} parent=0 // pred_check
    _
  $region3: #{speinet_forward.14} parent=0 // pred_check_branch
    %9 = sbr.rel (0) target = $region5
  $region4: #{speinet_forward.14} parent=0 // pred_region
    _
  $region5: #{speinet_forward.14} parent=0 // pred_fallthru
    _
  // Predicated region
  $region6: #{speinet_forward.14} parent=0 // pred_check
    _
  $region7: #{speinet_forward.14} parent=0 // pred_check_branch
    %11 = sbr.rel (0) target = $region9
  $region8: #{speinet_forward.14} parent=0 // pred_region
    _
  $region9: #{speinet_forward.14} parent=0 // pred_fallthru
    _
  // Predicated region
  $region10: #{speinet_forward.14} parent=0 // pred_check
    _
  $region11: #{speinet_forward.14} parent=0 // pred_check_branch
    %13 = sbr.rel (0) target = $region13
  $region12: #{speinet_forward.14} parent=0 // pred_region
    _
  $region13: #{speinet_forward.14} parent=0 // pred_fallthru
    _
  %v15 = vld [vmem:[%s0] sm:$0xf]
  %v16 = vld [vmem:[%s0 + $0x4] sm:$0xf]
  %v17 = vld [vmem:[%s0 + $0x8] sm:$0xf]
  %v18 = vld [vmem:[%s0 + $0xc] sm:$0xf]
  %v19 = vld [vmem:[%s0 + $0x10] sm:$0xf]
  %v20 = vld [vmem:[%s0 + $0x14] sm:$0xf]
  %v21 = vld [vmem:[%s0 + $0x18] sm:$0xf]
  %v22 = vld [vmem:[%s0 + $0x1c] sm:$0xf]
  %v23 = vld [vmem:[%s0 + $0x20] sm:$0xf]
  %v24 = vld [vmem:[%s0 + $0x24] sm:$0xf]
  %v25 = vld [vmem:[%s0 + $0x28] sm:$0xf]
  %v26 = vld [vmem:[%s0 + $0x2c] sm:$0xf]
  %v27 = vld [vmem:[%s0 + $0x30] sm:$0xf]
  %v28 = vld [vmem:[%s0 + $0x34] sm:$0xf]
  %v29 = vld [vmem:[%s0 + $0x38] sm:$0xf]
  %v30 = vld [vmem:[%s0 + $0x3c] sm:$0xf]
  %v31 = vld [vmem:[%s1] sm:$0xf]
  %v32 = vld [vmem:[%s1 + $0x4] sm:$0xf]
  %v33 = vld [vmem:[%s1 + $0x8] sm:$0xf]
  %v34 = vld [vmem:[%s1 + $0xc] sm:$0xf]
  %v35 = vld [vmem:[%s1 + $0x10] sm:$0xf]
  %v36 = vld [vmem:[%s1 + $0x14] sm:$0xf]
  %v37 = vld [vmem:[%s1 + $0x18] sm:$0xf]
  %v38 = vld [vmem:[%s1 + $0x1c] sm:$0xf]
  %v39 = vld [vmem:[%s2] sm:$0x1]
  %v41 = vlaneseq
  %v42 = vshrl.u32 %v41, 7
  %v43 = vsub.s32 0, %v42
  %v44 = vrot.slane %v39, %v43
  %v62 = vunpack.c.l.b16 %v15
  %v63 = vunpack.c.l.b16 %v16
  %v64 = vunpack.c.l.b16 %v17
  %v65 = vunpack.c.l.b16 %v18
  %v66 = vunpack.c.l.b16 %v19
  %v67 = vunpack.c.l.b16 %v20
  %v68 = vunpack.c.l.b16 %v21
  %v69 = vunpack.c.l.b16 %v22
  %v70 = vunpack.c.l.b16 %v23
  %v71 = vunpack.c.l.b16 %v24
  %v72 = vunpack.c.l.b16 %v25
  %v73 = vunpack.c.l.b16 %v26
  %v74 = vunpack.c.l.b16 %v27
  %v75 = vunpack.c.l.b16 %v28
  %v76 = vunpack.c.l.b16 %v29
  %v77 = vunpack.c.l.b16 %v30
  %v78 = vpack.c.b16 %v63, %v62
  %v79 = vpack.c.b16 %v65, %v64
  %v80 = vpack.c.b16 %v67, %v66
  %v81 = vpack.c.b16 %v69, %v68
  %v82 = vpack.c.b16 %v71, %v70
  %v83 = vpack.c.b16 %v73, %v72
  %v84 = vpack.c.b16 %v75, %v74
  %v85 = vpack.c.b16 %v77, %v76
  %v94 = vunpack.c.l.b16 %v31
  %v95 = vunpack.c.l.b16 %v32
  %v96 = vunpack.c.l.b16 %v33
  %v97 = vunpack.c.l.b16 %v34
  %v98 = vunpack.c.l.b16 %v35
  %v99 = vunpack.c.l.b16 %v36
  %v100 = vunpack.c.l.b16 %v37
  %v101 = vunpack.c.l.b16 %v38
  %v102 = vpack.c.b16 %v95, %v94
  %v103 = vpack.c.b16 %v97, %v96
  %v104 = vpack.c.b16 %v99, %v98
  %v105 = vpack.c.b16 %v101, %v100
  %vm110 = vcmask 523264
  %v112 = vsel %vm110, %v78, 0
  %v115 = vsel %vm110, %v79, 0
  %v118 = vsel %vm110, %v80, 0
  %v121 = vsel %vm110, %v81, 0
  %v124 = vsel %vm110, %v82, 0
  %v127 = vsel %vm110, %v83, 0
  %v130 = vsel %vm110, %v84, 0
  %v133 = vsel %vm110, %v85, 0
  %135 = vmatprep.subr.bf16.mxu0 0
  %136 = vmatpush1.bf16.msra.mxu0 %v102
  %137 = vmatprep.subr.bf16.mxu0 0
  %138 = vmatpush1.bf16.msra.mxu0 %v103
  %139 = vmatprep.subr.bf16.mxu0 0
  %140 = vmatpush1.bf16.msra.mxu0 %v104
  %141 = vmatprep.subr.bf16.mxu0 0
  %142 = vmatpush1.bf16.msra.mxu0 %v105
  %143 = vmatprep.subr.bf16.mxu0 0
  %144 = vmatpush1.bf16.msra.mxu0 0
  %145 = vmatprep.subr.bf16.mxu0 0
  %146 = vmatpush1.bf16.msra.mxu0 0
  %147 = vmatprep.subr.bf16.mxu0 0
  %148 = vmatpush1.bf16.msra.mxu0 0
  %149 = vmatprep.subr.bf16.mxu0 0
  %150 = vmatpush1.bf16.msra.mxu0 0
  %151 = vmatprep.subr.bf16.mxu0 0
  %152 = vmatpush1.bf16.msra.mxu0 0
  %153 = vmatprep.subr.bf16.mxu0 0
  %154 = vmatpush1.bf16.msra.mxu0 0
  %155 = vmatprep.subr.bf16.mxu0 0
  %156 = vmatpush1.bf16.msra.mxu0 0
  %157 = vmatprep.subr.bf16.mxu0 0
  %158 = vmatpush1.bf16.msra.mxu0 0
  %159 = vmatprep.subr.bf16.mxu0 0
  %160 = vmatpush1.bf16.msra.mxu0 0
  %161 = vmatprep.subr.bf16.mxu0 0
  %162 = vmatpush1.bf16.msra.mxu0 0
  %163 = vmatprep.subr.bf16.mxu0 0
  %164 = vmatpush1.bf16.msra.mxu0 0
  %165 = vmatprep.subr.bf16.mxu0 0
  %166 = vmatpush1.bf16.msra.mxu0 0
  %167 = vmatprep.mubr.bf16.mxu0 0
  %168 = vmatmul.mubr.bf16.gmra.mrb[0].mxu0 %v112
  %v169 = vpop.f32.mrb[0].mxu0
  %v170 = vadd.f32 %v44, %v169
  %v171 = vpop.f32.mrb[0].mxu0
  %v172 = vpop.f32.mrb[0].mxu0
  %v173 = vadd.f32 %v44, %v172
  %v174 = vpop.f32.mrb[0].mxu0
  %175 = vmatprep.mubr.bf16.mxu0 0
  %176 = vmatmul.mubr.bf16.gmra.mrb[0].mxu0 %v115
  %v177 = vpop.f32.mrb[0].mxu0
  %v178 = vadd.f32 %v44, %v177
  %v179 = vpop.f32.mrb[0].mxu0
  %v180 = vpop.f32.mrb[0].mxu0
  %v181 = vadd.f32 %v44, %v180
  %v182 = vpop.f32.mrb[0].mxu0
  %183 = vmatprep.mubr.bf16.mxu0 0
  %184 = vmatmul.mubr.bf16.gmra.mrb[0].mxu0 %v118
  %v185 = vpop.f32.mrb[0].mxu0
  %v186 = vadd.f32 %v44, %v185
  %v187 = vpop.f32.mrb[0].mxu0
  %v188 = vpop.f32.mrb[0].mxu0
  %v189 = vadd.f32 %v44, %v188
  %v190 = vpop.f32.mrb[0].mxu0
  %191 = vmatprep.mubr.bf16.mxu0 0
  %192 = vmatmul.mubr.bf16.gmra.mrb[0].mxu0 %v121
  %v193 = vpop.f32.mrb[0].mxu0
  %v194 = vadd.f32 %v44, %v193
  %v195 = vpop.f32.mrb[0].mxu0
  %v196 = vpop.f32.mrb[0].mxu0
  %v197 = vadd.f32 %v44, %v196
  %v198 = vpop.f32.mrb[0].mxu0
  %199 = vmatprep.mubr.bf16.mxu0 0
  %200 = vmatmul.mubr.bf16.gmra.mrb[0].mxu0 %v124
  %v201 = vpop.f32.mrb[0].mxu0
  %v202 = vadd.f32 %v44, %v201
  %v203 = vpop.f32.mrb[0].mxu0
  %v204 = vpop.f32.mrb[0].mxu0
  %v205 = vadd.f32 %v44, %v204
  %v206 = vpop.f32.mrb[0].mxu0
  %207 = vmatprep.mubr.bf16.mxu0 0
  %208 = vmatmul.mubr.bf16.gmra.mrb[0].mxu0 %v127
  %v209 = vpop.f32.mrb[0].mxu0
  %v210 = vadd.f32 %v44, %v209
  %v211 = vpop.f32.mrb[0].mxu0
  %v212 = vpop.f32.mrb[0].mxu0
  %v213 = vadd.f32 %v44, %v212
  %v214 = vpop.f32.mrb[0].mxu0
  %215 = vmatprep.mubr.bf16.mxu0 0
  %216 = vmatmul.mubr.bf16.gmra.mrb[0].mxu0 %v130
  %v217 = vpop.f32.mrb[0].mxu0
  %v218 = vadd.f32 %v44, %v217
  %v219 = vpop.f32.mrb[0].mxu0
  %v220 = vpop.f32.mrb[0].mxu0
  %v221 = vadd.f32 %v44, %v220
  %v222 = vpop.f32.mrb[0].mxu0
  %223 = vmatprep.mubr.bf16.mxu0 0
  %224 = vmatmul.mubr.bf16.gmra.mrb[0].mxu0 %v133
  %v225 = vpop.f32.mrb[0].mxu0
  %v226 = vadd.f32 %v44, %v225
  %v227 = vpop.f32.mrb[0].mxu0
  %v228 = vpop.f32.mrb[0].mxu0
  %v229 = vadd.f32 %v44, %v228
  %v230 = vpop.f32.mrb[0].mxu0
  %231 = vdwg.mxu0
  %v232 = vmax.f32 %v170, 0.0
  %v233 = vmax.f32 %v173, 0.0
  %v234 = vmax.f32 %v178, 0.0
  %v235 = vmax.f32 %v181, 0.0
  %v236 = vmax.f32 %v186, 0.0
  %v237 = vmax.f32 %v189, 0.0
  %v238 = vmax.f32 %v194, 0.0
  %v239 = vmax.f32 %v197, 0.0
  %v240 = vmax.f32 %v202, 0.0
  %v241 = vmax.f32 %v205, 0.0
  %v242 = vmax.f32 %v210, 0.0
  %v243 = vmax.f32 %v213, 0.0
  %v244 = vmax.f32 %v218, 0.0
  %v245 = vmax.f32 %v221, 0.0
  %v246 = vmax.f32 %v226, 0.0
  %v247 = vmax.f32 %v229, 0.0
  %v248 = vpack.c.bf16 %v233, %v232
  %v249 = vpack.c.bf16 %v235, %v234
  %v250 = vpack.c.bf16 %v237, %v236
  %v251 = vpack.c.bf16 %v239, %v238
  %v252 = vpack.c.bf16 %v241, %v240
  %v253 = vpack.c.bf16 %v243, %v242
  %v254 = vpack.c.bf16 %v245, %v244
  %v255 = vpack.c.bf16 %v247, %v246
  %v264 = vunpack.c.l.b16 %v248
  %v265 = vunpack.c.h.b16 %v248
  %v266 = vunpack.c.l.b16 %v249
  %v267 = vunpack.c.h.b16 %v249
  %v268 = vunpack.c.l.b16 %v250
  %v269 = vunpack.c.h.b16 %v250
  %v270 = vunpack.c.l.b16 %v251
  %v271 = vunpack.c.h.b16 %v251
  %v272 = vunpack.c.l.b16 %v252
  %v273 = vunpack.c.h.b16 %v252
  %v274 = vunpack.c.l.b16 %v253
  %v275 = vunpack.c.h.b16 %v253
  %v276 = vunpack.c.l.b16 %v254
  %v277 = vunpack.c.h.b16 %v254
  %v278 = vunpack.c.l.b16 %v255
  %v279 = vunpack.c.h.b16 %v255
  %v280 = vpack.c.b16 %v264, %v264
  %v281 = vpack.c.b16 %v265, %v265
  %v282 = vpack.c.b16 %v266, %v266
  %v283 = vpack.c.b16 %v267, %v267
  %v284 = vpack.c.b16 %v268, %v268
  %v285 = vpack.c.b16 %v269, %v269
  %v286 = vpack.c.b16 %v270, %v270
  %v287 = vpack.c.b16 %v271, %v271
  %v288 = vpack.c.b16 %v272, %v272
  %v289 = vpack.c.b16 %v273, %v273
  %v290 = vpack.c.b16 %v274, %v274
  %v291 = vpack.c.b16 %v275, %v275
  %v292 = vpack.c.b16 %v276, %v276
  %v293 = vpack.c.b16 %v277, %v277
  %v294 = vpack.c.b16 %v278, %v278
  %v295 = vpack.c.b16 %v279, %v279
  %312 = vst [vmem:[%s3] sm:$0xf] %v280
  %313 = vst [vmem:[%s3 + $0x4] sm:$0xf] %v281
  %314 = vst [vmem:[%s3 + $0x8] sm:$0xf] %v282
  %315 = vst [vmem:[%s3 + $0xc] sm:$0xf] %v283
  %316 = vst [vmem:[%s3 + $0x10] sm:$0xf] %v284
  %317 = vst [vmem:[%s3 + $0x14] sm:$0xf] %v285
  %318 = vst [vmem:[%s3 + $0x18] sm:$0xf] %v286
  %319 = vst [vmem:[%s3 + $0x1c] sm:$0xf] %v287
  %320 = vst [vmem:[%s3 + $0x20] sm:$0xf] %v288
  %321 = vst [vmem:[%s3 + $0x24] sm:$0xf] %v289
  %322 = vst [vmem:[%s3 + $0x28] sm:$0xf] %v290
  %323 = vst [vmem:[%s3 + $0x2c] sm:$0xf] %v291
  %324 = vst [vmem:[%s3 + $0x30] sm:$0xf] %v292
  %325 = vst [vmem:[%s3 + $0x34] sm:$0xf] %v293
  %326 = vst [vmem:[%s3 + $0x38] sm:$0xf] %v294
  %327 = vst [vmem:[%s3 + $0x3c] sm:$0xf] %v295
  // Predicated region
  $region14: #{speinet_forward.14} parent=0 // pred_check
    _
  $region15: #{speinet_forward.14} parent=0 // pred_check_branch
    %329 = sbr.rel (0) target = $region17
  $region16: #{speinet_forward.14} parent=0 // pred_region
    _
  $region17: #{speinet_forward.14} parent=0 // pred_fallthru
    _
  // Predicated region
  $region18: #{speinet_forward.14} parent=0 // pred_check
    _
  $region19: #{speinet_forward.14} parent=0 // pred_check_branch
    %331 = sbr.rel (0) target = $region21
  $region20: #{speinet_forward.14} parent=0 // pred_region
    _
  $region21: #{speinet_forward.14} parent=0 // pred_fallthru
    _

// kernel: speinet_forward.15
$region0: #{speinet_forward.15}
  #allocation0 [shape = 'u32[]', space=smem, size = 0x4, offset = 0x4, fixed_abs, tag = 'smem constant byte address 0x4 - core index']
  #allocation1 [shape = 'u32[144,128]{1,0:T(1,128)}', space=vmem, size = 0x12000, scoped, tag = 'internal scratch']
  %s0 = inlined_call_operand.vmem [shape: f32[2,18,18,32], index: 0, kind: input, shape index: {}]
  %s1 = inlined_call_operand.vmem [shape: bf16[9,32,3], index: 1, kind: input, shape index: {}]
  %s2 = inlined_call_operand.vmem [shape: f32[1,3], index: 2, kind: input, shape index: {}]
  %s3 = inlined_call_operand.vmem [shape: f32[2,16,16,3], index: 3, kind: output, shape index: {}]
  %s4 = sld [smem:[#allocation0]]
  $region45: #{speinet_forward.15} parent=0
    _
  %s6 = ssub.s32 1, %s4
  %s7 = scalar_select 0, %s6, %s4
  loop: start=0, step=1, limit=4
  $region2: #{speinet_forward.15} parent=0 // loop_pre_header
    _
  $region3: #{speinet_forward.15} parent=0 // loop_header
    %s9 = sphi 0, %s13
    %p10 = scmp.ge.s32.totalorder %s9, 4
    %s19 = sphi 0, %s21
    %s22 = sphi 0, %s19
    %s23 = sphi 0, %s22
    %s39 = sphi 0, %s23
    %s43 = sphi 0, %s43
    %s45 = sphi 0, %s43
    %s46 = sphi 0, %s45
    %s60 = sphi 0, %s46
    %s64 = sphi 0, %s64
    %s66 = sphi 0, %s64
    %s67 = sphi 0, %s66
    %s81 = sphi 0, %s67
    %s87 = sphi 0, %s89
    %s90 = sphi 0, %s87
    %s91 = sphi 0, %s90
    %s107 = sphi 0, %s91
  $region4: #{speinet_forward.15} parent=0 // loop_header_branch
    %12 = sbr.rel (%p10) target = $region8
  $region5: #{speinet_forward.15} parent=0 // loop_body
    %s14 = ssub.s32 %s9, 1
    %s15 = ssub.s32 %s9, 2
    %s16 = sadd.s32 %s9, 1
    %s17 = ssub.s32 %s9, %s16
    %p18 = scmp.eq.s32.totalorder %s17, 0
    %s20 = sadd.s32 %s19, 1
    %s21 = scalar_select %p18, %s19, %s20
    %p24 = pneg %p18
    %p25 = scmp.eq.s32.totalorder %s9, 1
    %p26 = por %p24, %p25
    %p27 = scmp.ne.s32.totalorder %s19, %s22
    %p28 = scmp.eq.s32.totalorder %s9, 0
    %p29 = por %p27, %p28
    %p30 = scmp.ne.s32.totalorder %s19, %s22
    %p31 = scmp.eq.s32.totalorder %s14, 1
    %p32 = por %p30, %p31
    %p33 = scmp.ne.s32.totalorder %s22, %s23
    %p34 = scmp.eq.s32.totalorder %s14, 0
    %p35 = por %p33, %p34
    %p36 = scmp.ne.s32.totalorder %s22, %s23
    %p37 = scmp.eq.s32.totalorder %s15, 1
    %p38 = por %p36, %p37
    %p40 = scmp.ne.s32.totalorder %s23, %s39
    %p41 = scmp.eq.s32.totalorder %s15, 0
    %p42 = por %p40, %p41
    %s44 = sadd.s32 %s43, 1
    %p47 = scmp.eq.s32.totalorder %s9, 1
    %p48 = scmp.ne.s32.totalorder %s43, %s45
    %p49 = scmp.eq.s32.totalorder %s9, 0
    %p50 = por %p48, %p49
    %p51 = scmp.ne.s32.totalorder %s43, %s45
    %p52 = scmp.eq.s32.totalorder %s14, 1
    %p53 = por %p51, %p52
    %p54 = scmp.ne.s32.totalorder %s45, %s46
    %p55 = scmp.eq.s32.totalorder %s14, 0
    %p56 = por %p54, %p55
    %p57 = scmp.ne.s32.totalorder %s45, %s46
    %p58 = scmp.eq.s32.totalorder %s15, 1
    %p59 = por %p57, %p58
    %p61 = scmp.ne.s32.totalorder %s46, %s60
    %p62 = scmp.eq.s32.totalorder %s15, 0
    %p63 = por %p61, %p62
    %s65 = sadd.s32 %s64, 1
    %p68 = scmp.eq.s32.totalorder %s9, 1
    %p69 = scmp.ne.s32.totalorder %s64, %s66
    %p70 = scmp.eq.s32.totalorder %s9, 0
    %p71 = por %p69, %p70
    %p72 = scmp.ne.s32.totalorder %s64, %s66
    %p73 = scmp.eq.s32.totalorder %s14, 1
    %p74 = por %p72, %p73
    %p75 = scmp.ne.s32.totalorder %s66, %s67
    %p76 = scmp.eq.s32.totalorder %s14, 0
    %p77 = por %p75, %p76
    %p78 = scmp.ne.s32.totalorder %s66, %s67
    %p79 = scmp.eq.s32.totalorder %s15, 1
    %p80 = por %p78, %p79
    %p82 = scmp.ne.s32.totalorder %s67, %s81
    %p83 = scmp.eq.s32.totalorder %s15, 0
    %p84 = por %p82, %p83
    %s85 = ssub.s32 %s9, %s16
    %p86 = scmp.eq.s32.totalorder %s85, 0
    %s88 = sadd.s32 %s87, 1
    %s89 = scalar_select %p86, %s87, %s88
    %p92 = pneg %p86
    %p93 = scmp.eq.s32.totalorder %s9, 1
    %p94 = por %p92, %p93
    %p95 = scmp.ne.s32.totalorder %s87, %s90
    %p96 = scmp.eq.s32.totalorder %s9, 0
    %p97 = por %p95, %p96
    %p98 = scmp.ne.s32.totalorder %s87, %s90
    %p99 = scmp.eq.s32.totalorder %s14, 1
    %p100 = por %p98, %p99
    %p101 = scmp.ne.s32.totalorder %s90, %s91
    %p102 = scmp.eq.s32.totalorder %s14, 0
    %p103 = por %p101, %p102
    %p104 = scmp.ne.s32.totalorder %s90, %s91
    %p105 = scmp.eq.s32.totalorder %s15, 1
    %p106 = por %p104, %p105
    %p108 = scmp.ne.s32.totalorder %s91, %s107
    %p109 = scmp.eq.s32.totalorder %s15, 0
    %p110 = por %p108, %p109
    %p111 = scmp.le.s32.totalorder 1, %s9
    %p112 = scmp.lt.s32.totalorder %s9, 3
    %p113 = pnand %p111, %p112
    %p114 = pneg %p113
    // Predicated region
    $region9: #{speinet_forward.15} parent=5 // pred_check
      _
    $region10: #{speinet_forward.15} parent=5 // pred_check_branch
      %116 = sbr.rel (%p113) target = $region12
    $region11: #{speinet_forward.15} parent=5 // pred_region
      %s117 = ssub.s32 %s9, 1
      // Predicated region
      $region13: #{speinet_forward.15} parent=11 // pred_check
        %p118 = pneg %p56
      $region14: #{speinet_forward.15} parent=11 // pred_check_branch
        %120 = sbr.rel (%p118) target = $region16
      $region15: #{speinet_forward.15} parent=11 // pred_region
        _
      $region16: #{speinet_forward.15} parent=11 // pred_fallthru
        _
      // Predicated region
      $region17: #{speinet_forward.15} parent=11 // pred_check
        %p121 = pneg %p77
      $region18: #{speinet_forward.15} parent=11 // pred_check_branch
        %123 = sbr.rel (%p121) target = $region20
      $region19: #{speinet_forward.15} parent=11 // pred_region
        _
      $region20: #{speinet_forward.15} parent=11 // pred_fallthru
        _
    $region12: #{speinet_forward.15} parent=5 // pred_fallthru
      _
    %p124 = scmp.lt.s32.totalorder %s9, 2
    // Predicated region
    $region21: #{speinet_forward.15} parent=5 // pred_check
      %p125 = pneg %p124
    $region22: #{speinet_forward.15} parent=5 // pred_check_branch
      %127 = sbr.rel (%p125) target = $region24
    $region23: #{speinet_forward.15} parent=5 // pred_region
      // Predicated region
      $region25: #{speinet_forward.15} parent=23 // pred_check
        %p128 = pneg %p29
      $region26: #{speinet_forward.15} parent=23 // pred_check_branch
        %130 = sbr.rel (%p128) target = $region28
      $region27: #{speinet_forward.15} parent=23 // pred_region
        %p131 = scmp.lt.s32.totalorder %s9, 1
        %s132 = scalar_select %p131, %s9, 1
        %s133 = smul.addr %s132, 54
        %s134 = smul.addr %s133, 8
        %s135 = scalar_lea.vmem %s0, %s134
      $region28: #{speinet_forward.15} parent=23 // pred_fallthru
        _
    $region24: #{speinet_forward.15} parent=5 // pred_fallthru
      _
    %p136 = scmp.le.s32.totalorder 1, %s9
    %p137 = scmp.lt.s32.totalorder %s9, 3
    %p138 = pnand %p136, %p137
    %p139 = pneg %p138
    // Predicated region
    $region29: #{speinet_forward.15} parent=5 // pred_check
      _
    $region30: #{speinet_forward.15} parent=5 // pred_check_branch
      %141 = sbr.rel (%p138) target = $region32
    $region31: #{speinet_forward.15} parent=5 // pred_region
      %s142 = ssub.s32 %s9, 1
      %p143 = scmp.lt.s32.totalorder %s14, 1
      %s144 = scalar_select %p143, %s14, 1
      %s145 = smul.addr %s144, 54
      %s146 = smul.addr %s145, 8
      %s147 = scalar_lea.vmem %s0, %s146
      %p148 = pneg %p35
      %p149 = pneg %p32
      %p150 = pneg %p56
      %p151 = pneg %p53
      %p152 = pneg %p77
      %p153 = pneg %p74
      %p154 = pneg %p103
      %p155 = pneg %p100
      %p156 = scmp.lt.s32.totalorder %s14, 1
      %s157 = scalar_select %p156, %s14, 1
      %s158 = smul.addr %s157, 32
      %s159 = smul.addr %s158, 8
      %s160 = scalar_lea.vmem %s3, %s159
      %p161 = scmp.lt.s32.totalorder %s14, 1
      %s162 = scalar_select %p161, %s14, 1
      %s163 = smul.addr %s162, 54
      %s164 = smul.addr %s163, 8
      %s165 = scalar_lea.vmem %s0, %s164
      %p166 = scmp.lt.s32.totalorder %s14, 1
      %s167 = scalar_select %p166, %s14, 1
      %s168 = smul.addr %s167, 32
      %s169 = smul.addr %s168, 8
      %s170 = scalar_lea.vmem %s3, %s169
      %v172 = vld [vmem:[%s165] sm:$0xff]
      %v173 = vld [vmem:[%s165 + $0x8] sm:$0xff]
      %v174 = vld [vmem:[%s165 + $0x10] sm:$0x3]
      %v175 = vld [vmem:[%s165 + $0x18] sm:$0xff]
      %v176 = vld [vmem:[%s165 + $0x20] sm:$0xff]
      %v177 = vld [vmem:[%s165 + $0x28] sm:$0x3]
      %v178 = vld [vmem:[%s165 + $0x30] sm:$0xff]
      %v179 = vld [vmem:[%s165 + $0x38] sm:$0xff]
      %v180 = vld [vmem:[%s165 + $0x40] sm:$0x3]
      %v181 = vld [vmem:[%s165 + $0x48] sm:$0xff]
      %v182 = vld [vmem:[%s165 + $0x50] sm:$0xff]
      %v183 = vld [vmem:[%s165 + $0x58] sm:$0x3]
      %v184 = vld [vmem:[%s165 + $0x60] sm:$0xff]
      %v185 = vld [vmem:[%s165 + $0x68] sm:$0xff]
      %v186 = vld [vmem:[%s165 + $0x70] sm:$0x3]
      %v187 = vld [vmem:[%s165 + $0x78] sm:$0xff]
      %v188 = vld [vmem:[%s165 + $0x80] sm:$0xff]
      %v189 = vld [vmem:[%s165 + $0x88] sm:$0x3]
      %v190 = vld [vmem:[%s165 + $0x90] sm:$0xff]
      %v191 = vld [vmem:[%s165 + $0x98] sm:$0xff]
      %v192 = vld [vmem:[%s165 + $0xa0] sm:$0x3]
      %v193 = vld [vmem:[%s165 + $0xa8] sm:$0xff]
      %v194 = vld [vmem:[%s165 + $0xb0] sm:$0xff]
      %v195 = vld [vmem:[%s165 + $0xb8] sm:$0x3]
      %v196 = vld [vmem:[%s165 + $0xc0] sm:$0xff]
      %v197 = vld [vmem:[%s165 + $0xc8] sm:$0xff]
      %v198 = vld [vmem:[%s165 + $0xd0] sm:$0x3]
      %v199 = vld [vmem:[%s165 + $0xd8] sm:$0xff]
      %v200 = vld [vmem:[%s165 + $0xe0] sm:$0xff]
      %v201 = vld [vmem:[%s165 + $0xe8] sm:$0x3]
      %v202 = vld [vmem:[%s165 + $0xf0] sm:$0xff]
      %v203 = vld [vmem:[%s165 + $0xf8] sm:$0xff]
      %v204 = vld [vmem:[%s165 + $0x100] sm:$0x3]
      %v205 = vld [vmem:[%s165 + $0x108] sm:$0xff]
      %v206 = vld [vmem:[%s165 + $0x110] sm:$0xff]
      %v207 = vld [vmem:[%s165 + $0x118] sm:$0x3]
      %v208 = vld [vmem:[%s165 + $0x120] sm:$0xff]
      %v209 = vld [vmem:[%s165 + $0x128] sm:$0xff]
      %v210 = vld [vmem:[%s165 + $0x130] sm:$0x3]
      %v211 = vld [vmem:[%s165 + $0x138] sm:$0xff]
      %v212 = vld [vmem:[%s165 + $0x140] sm:$0xff]
      %v213 = vld [vmem:[%s165 + $0x148] sm:$0x3]
      %v214 = vld [vmem:[%s165 + $0x150] sm:$0xff]
      %v215 = vld [vmem:[%s165 + $0x158] sm:$0xff]
      %v216 = vld [vmem:[%s165 + $0x160] sm:$0x3]
      %v217 = vld [vmem:[%s165 + $0x168] sm:$0xff]
      %v218 = vld [vmem:[%s165 + $0x170] sm:$0xff]
      %v219 = vld [vmem:[%s165 + $0x178] sm:$0x3]
      %v220 = vld [vmem:[%s165 + $0x180] sm:$0xff]
      %v221 = vld [vmem:[%s165 + $0x188] sm:$0xff]
      %v222 = vld [vmem:[%s165 + $0x190] sm:$0x3]
      %v223 = vld [vmem:[%s165 + $0x198] sm:$0xff]
      %v224 = vld [vmem:[%s165 + $0x1a0] sm:$0xff]
      %v225 = vld [vmem:[%s165 + $0x1a8] sm:$0x3]
      %v226 = vpack.c.bf16 %v173, %v172
      %v227 = vpack.c.bf16 %v176, %v175
      %v228 = vpack.c.bf16 %v179, %v178
      %v229 = vpack.c.bf16 %v182, %v181
      %v230 = vpack.c.bf16 %v185, %v184
      %v231 = vpack.c.bf16 %v188, %v187
      %v232 = vpack.c.bf16 %v191, %v190
      %v233 = vpack.c.bf16 %v194, %v193
      %v234 = vpack.c.bf16 %v197, %v196
      %v235 = vpack.c.bf16 %v200, %v199
      %v236 = vpack.c.bf16 %v203, %v202
      %v237 = vpack.c.bf16 %v206, %v205
      %v238 = vpack.c.bf16 %v209, %v208
      %v239 = vpack.c.bf16 %v212, %v211
      %v240 = vpack.c.bf16 %v215, %v214
      %v241 = vpack.c.bf16 %v218, %v217
      %v242 = vld [vmem:[%s1] sm:$0xf]
      %v243 = vld [vmem:[%s1 + $0x4] sm:$0xf]
      %v244 = vld [vmem:[%s1 + $0x8] sm:$0xf]
      %v245 = vld [vmem:[%s1 + $0xc] sm:$0xf]
      %vm294 = vcmask 1046528
      %v295 = vrot.slane %v172, 1
      %v296 = vrot.slane %v173, 1
      %v297 = vsel %vm294, %v295, %v296
      %v298 = vrot.slane %v174, 1
      %v299 = vsel %vm294, %v296, %v298
      %v300 = vrot.slane %v175, 1
      %v301 = vrot.slane %v176, 1
      %v302 = vsel %vm294, %v300, %v301
      %v303 = vrot.slane %v177, 1
      %v304 = vsel %vm294, %v301, %v303
      %v305 = vrot.slane %v178, 1
      %v306 = vrot.slane %v179, 1
      %v307 = vsel %vm294, %v305, %v306
      %v308 = vrot.slane %v180, 1
      %v309 = vsel %vm294, %v306, %v308
      %v310 = vrot.slane %v181, 1
      %v311 = vrot.slane %v182, 1
      %v312 = vsel %vm294, %v310, %v311
      %v313 = vrot.slane %v183, 1
      %v314 = vsel %vm294, %v311, %v313
      %v315 = vrot.slane %v184, 1
      %v316 = vrot.slane %v185, 1
      %v317 = vsel %vm294, %v315, %v316
      %v318 = vrot.slane %v186, 1
      %v319 = vsel %vm294, %v316, %v318
      %v320 = vrot.slane %v187, 1
      %v321 = vrot.slane %v188, 1
      %v322 = vsel %vm294, %v320, %v321
      %v323 = vrot.slane %v189, 1
      %v324 = vsel %vm294, %v321, %v323
      %v325 = vrot.slane %v190, 1
      %v326 = vrot.slane %v191, 1
      %v327 = vsel %vm294, %v325, %v326
      %v328 = vrot.slane %v192, 1
      %v329 = vsel %vm294, %v326, %v328
      %v330 = vrot.slane %v193, 1
      %v331 = vrot.slane %v194, 1
      %v332 = vsel %vm294, %v330, %v331
      %v333 = vrot.slane %v195, 1
      %v334 = vsel %vm294, %v331, %v333
      %v335 = vrot.slane %v196, 1
      %v336 = vrot.slane %v197, 1
      %v337 = vsel %vm294, %v335, %v336
      %v338 = vrot.slane %v198, 1
      %v339 = vsel %vm294, %v336, %v338
      %v340 = vrot.slane %v199, 1
      %v341 = vrot.slane %v200, 1
      %v342 = vsel %vm294, %v340, %v341
      %v343 = vrot.slane %v201, 1
      %v344 = vsel %vm294, %v341, %v343
      %v345 = vrot.slane %v202, 1
      %v346 = vrot.slane %v203, 1
      %v347 = vsel %vm294, %v345, %v346
      %v348 = vrot.slane %v204, 1
      %v349 = vsel %vm294, %v346, %v348
      %v350 = vrot.slane %v205, 1
      %v351 = vrot.slane %v206, 1
      %v352 = vsel %vm294, %v350, %v351
      %v353 = vrot.slane %v207, 1
      %v354 = vsel %vm294, %v351, %v353
      %v355 = vrot.slane %v208, 1
      %v356 = vrot.slane %v209, 1
      %v357 = vsel %vm294, %v355, %v356
      %v358 = vrot.slane %v210, 1
      %v359 = vsel %vm294, %v356, %v358
      %v360 = vrot.slane %v211, 1
      %v361 = vrot.slane %v212, 1
      %v362 = vsel %vm294, %v360, %v361
      %v363 = vrot.slane %v213, 1
      %v364 = vsel %vm294, %v361, %v363
      %v365 = vrot.slane %v214, 1
      %v366 = vrot.slane %v215, 1
      %v367 = vsel %vm294, %v365, %v366
      %v368 = vrot.slane %v216, 1
      %v369 = vsel %vm294, %v366, %v368
      %v370 = vrot.slane %v217, 1
      %v371 = vrot.slane %v218, 1
      %v372 = vsel %vm294, %v370, %v371
      %v373 = vrot.slane %v219, 1
      %v374 = vsel %vm294, %v371, %v373
      %v407 = vpack.c.bf16 %v299, %v297
      %v408 = vpack.c.bf16 %v304, %v302
      %v409 = vpack.c.bf16 %v309, %v307
      %v410 = vpack.c.bf16 %v314, %v312
      %v411 = vpack.c.bf16 %v319, %v317
      %v412 = vpack.c.bf16 %v324, %v322
      %v413 = vpack.c.bf16 %v329, %v327
      %v414 = vpack.c.bf16 %v334, %v332
      %v415 = vpack.c.bf16 %v339, %v337
      %v416 = vpack.c.bf16 %v344, %v342
      %v417 = vpack.c.bf16 %v349, %v347
      %v418 = vpack.c.bf16 %v354, %v352
      %v419 = vpack.c.bf16 %v359, %v357
      %v420 = vpack.c.bf16 %v364, %v362
      %v421 = vpack.c.bf16 %v369, %v367
      %v422 = vpack.c.bf16 %v374, %v372
      %s423 = scalar_lea.vmem %s1, 16
      %v424 = vld [vmem:[%s423] sm:$0xf]
      %v425 = vld [vmem:[%s423 + $0x4] sm:$0xf]
      %v426 = vld [vmem:[%s423 + $0x8] sm:$0xf]
      %v427 = vld [vmem:[%s423 + $0xc] sm:$0xf]
      %v432 = vunpack.c.l.b16 %v424
      %v433 = vunpack.c.l.b16 %v425
      %v434 = vunpack.c.l.b16 %v426
      %v435 = vunpack.c.l.b16 %v427
      %v436 = vpack.c.b16 %v433, %v432
      %v437 = vpack.c.b16 %v435, %v434
      %vm440 = vcmask 261120
      %v442 = vsel %vm440, %v407, 0
      %v445 = vsel %vm440, %v408, 0
      %v448 = vsel %vm440, %v409, 0
      %v451 = vsel %vm440, %v410, 0
      %v454 = vsel %vm440, %v411, 0
      %v457 = vsel %vm440, %v412, 0
      %v460 = vsel %vm440, %v413, 0
      %v463 = vsel %vm440, %v414, 0
      %v466 = vsel %vm440, %v415, 0
      %v469 = vsel %vm440, %v416, 0
      %v472 = vsel %vm440, %v417, 0
      %v475 = vsel %vm440, %v418, 0
      %v478 = vsel %vm440, %v419, 0
      %v481 = vsel %vm440, %v420, 0
      %v484 = vsel %vm440, %v421, 0
      %v487 = vsel %vm440, %v422, 0
      %489 = vmatprep.subr.bf16.mxu0 0
      %490 = vmatpush1.bf16.msra.mxu0 %v436
      %491 = vmatprep.subr.bf16.mxu0 0
      %492 = vmatpush1.bf16.msra.mxu0 %v437
      %493 = vmatprep.subr.bf16.mxu0 0
      %494 = vmatpush1.bf16.msra.mxu0 0
      %495 = vmatprep.subr.bf16.mxu0 0
      %496 = vmatpush1.bf16.msra.mxu0 0
      %497 = vmatprep.subr.bf16.mxu0 0
      %498 = vmatpush1.bf16.msra.mxu0 0
      %499 = vmatprep.subr.bf16.mxu0 0
      %500 = vmatpush1.bf16.msra.mxu0 0
      %501 = vmatprep.subr.bf16.mxu0 0
      %502 = vmatpush1.bf16.msra.mxu0 0
      %503 = vmatprep.subr.bf16.mxu0 0
      %504 = vmatpush1.bf16.msra.mxu0 0
      %505 = vmatprep.subr.bf16.mxu0 0
      %506 = vmatpush1.bf16.msra.mxu0 0
      %507 = vmatprep.subr.bf16.mxu0 0
      %508 = vmatpush1.bf16.msra.mxu0 0
      %509 = vmatprep.subr.bf16.mxu0 0
      %510 = vmatpush1.bf16.msra.mxu0 0
      %511 = vmatprep.subr.bf16.mxu0 0
      %512 = vmatpush1.bf16.msra.mxu0 0
      %513 = vmatprep.subr.bf16.mxu0 0
      %514 = vmatpush1.bf16.msra.mxu0 0
      %515 = vmatprep.subr.bf16.mxu0 0
      %516 = vmatpush1.bf16.msra.mxu0 0
      %517 = vmatprep.subr.bf16.mxu0 0
      %518 = vmatpush1.bf16.msra.mxu0 0
      %519 = vmatprep.subr.bf16.mxu0 0
      %520 = vmatpush1.bf16.msra.mxu0 0
      %521 = vmatprep.mubr.bf16.mxu0 0
      %522 = vmatmul.mubr.bf16.gmra.mrb[0].mxu0 %v442
      %v523 = vpop.f32.mrb[0].mxu0
      %v524 = vadd.f32 0.0, %v523
      %v525 = vpop.f32.mrb[0].mxu0
      %v526 = vpop.f32.mrb[0].mxu0
      %v527 = vadd.f32 0.0, %v526
      %v528 = vpop.f32.mrb[0].mxu0
      %529 = vmatprep.mubr.bf16.mxu0 0
      %530 = vmatmul.mubr.bf16.gmra.mrb[0].mxu0 %v445
      %v531 = vpop.f32.mrb[0].mxu0
      %v532 = vadd.f32 0.0, %v531
      %v533 = vpop.f32.mrb[0].mxu0
      %v534 = vpop.f32.mrb[0].mxu0
      %v535 = vadd.f32 0.0, %v534
      %v536 = vpop.f32.mrb[0].mxu0
      %537 = vmatprep.mubr.bf16.mxu0 0
      %538 = vmatmul.mubr.bf16.gmra.mrb[0].mxu0 %v448
      %v539 = vpop.f32.mrb[0].mxu0
      %v540 = vadd.f32 0.0, %v539
      %v541 = vpop.f32.mrb[0].mxu0
      %v542 = vpop.f32.mrb[0].mxu0
      %v543 = vadd.f32 0.0, %v542
      %v544 = vpop.f32.mrb[0].mxu0
      %545 = vmatprep.mubr.bf16.mxu0 0
      %546 = vmatmul.mubr.bf16.gmra.mrb[0].mxu0 %v451
      %v547 = vpop.f32.mrb[0].mxu0
      %v548 = vadd.f32 0.0, %v547
      %v549 = vpop.f32.mrb[0].mxu0
      %v550 = vpop.f32.mrb[0].mxu0
      %v551 = vadd.f32 0.0, %v550
      %v552 = vpop.f32.mrb[0].mxu0
      %553 = vmatprep.mubr.bf16.mxu0 0
      %554 = vmatmul.mubr.bf16.gmra.mrb[0].mxu0 %v454
      %v555 = vpop.f32.mrb[0].mxu0
      %v556 = vadd.f32 0.0, %v555
      %v557 = vpop.f32.mrb[0].mxu0
      %v558 = vpop.f32.mrb[0].mxu0
      %v559 = vadd.f32 0.0, %v558
      %v560 = vpop.f32.mrb[0].mxu0
      %561 = vmatprep.mubr.bf16.mxu0 0
      %562 = vmatmul.mubr.bf16.gmra.mrb[0].mxu0 %v457
      %v563 = vpop.f32.mrb[0].mxu0
      %v564 = vadd.f32 0.0, %v563
      %v565 = vpop.f32.mrb[0].mxu0
      %v566 = vpop.f32.mrb[0].mxu0
      %v567 = vadd.f32 0.0, %v566
      %v568 = vpop.f32.mrb[0].mxu0
      %569 = vmatprep.mubr.bf16.mxu0 0
      %570 = vmatmul.mubr.bf16.gmra.mrb[0].mxu0 %v460
      %v571 = vpop.f32.mrb[0].mxu0
      %v572 = vadd.f32 0.0, %v571
      %v573 = vpop.f32.mrb[0].mxu0
      %v574 = vpop.f32.mrb[0].mxu0
      %v575 = vadd.f32 0.0, %v574
      %v576 = vpop.f32.mrb[0].mxu0
      %577 = vmatprep.mubr.bf16.mxu0 0
      %578 = vmatmul.mubr.bf16.gmra.mrb[0].mxu0 %v463
      %v579 = vpop.f32.mrb[0].mxu0
      %v580 = vadd.f32 0.0, %v579
      %v581 = vpop.f32.mrb[0].mxu0
      %v582 = vpop.f32.mrb[0].mxu0
      %v583 = vadd.f32 0.0, %v582
      %v584 = vpop.f32.mrb[0].mxu0
      %585 = vmatprep.mubr.bf16.mxu0 0
      %586 = vmatmul.mubr.bf16.gmra.mrb[0].mxu0 %v466
      %v587 = vpop.f32.mrb[0].mxu0
      %v588 = vadd.f32 0.0, %v587
      %v589 = vpop.f32.mrb[0].mxu0
      %v590 = vpop.f32.mrb[0].mxu0
      %v591 = vadd.f32 0.0, %v590
      %v592 = vpop.f32.mrb[0].mxu0
      %593 = vmatprep.mubr.bf16.mxu0 0
      %594 = vmatmul.mubr.bf16.gmra.mrb[0].mxu0 %v469
      %v595 = vpop.f32.mrb[0].mxu0
      %v596 = vadd.f32 0.0, %v595
      %v597 = vpop.f32.mrb[0].mxu0
      %v598 = vpop.f32.mrb[0].mxu0
      %v599 = vadd.f32 0.0, %v598
      %v600 = vpop.f32.mrb[0].mxu0
      %601 = vmatprep.mubr.bf16.mxu0 0
      %602 = vmatmul.mubr.bf16.gmra.mrb[0].mxu0 %v472
      %v603 = vpop.f32.mrb[0].mxu0
      %v604 = vadd.f32 0.0, %v603
      %v605 = vpop.f32.mrb[0].mxu0
      %v606 = vpop.f32.mrb[0].mxu0
      %v607 = vadd.f32 0.0, %v606
      %v608 = vpop.f32.mrb[0].mxu0
      %609 = vmatprep.mubr.bf16.mxu0 0
      %610 = vmatmul.mubr.bf16.gmra.mrb[0].mxu0 %v475
      %v611 = vpop.f32.mrb[0].mxu0
      %v612 = vadd.f32 0.0, %v611
      %v613 = vpop.f32.mrb[0].mxu0
      %v614 = vpop.f32.mrb[0].mxu0
      %v615 = vadd.f32 0.0, %v614
      %v616 = vpop.f32.mrb[0].mxu0
      %617 = vmatprep.mubr.bf16.mxu0 0
      %618 = vmatmul.mubr.bf16.gmra.mrb[0].mxu0 %v478
      %v619 = vpop.f32.mrb[0].mxu0
      %v620 = vadd.f32 0.0, %v619
      %v621 = vpop.f32.mrb[0].mxu0
      %v622 = vpop.f32.mrb[0].mxu0
      %v623 = vadd.f32 0.0, %v622
      %v624 = vpop.f32.mrb[0].mxu0
      %625 = vmatprep.mubr.bf16.mxu0 0
      %626 = vmatmul.mubr.bf16.gmra.mrb[0].mxu0 %v481
      %v627 = vpop.f32.mrb[0].mxu0
      %v628 = vadd.f32 0.0, %v627
      %v629 = vpop.f32.mrb[0].mxu0
      %v630 = vpop.f32.mrb[0].mxu0
      %v631 = vadd.f32 0.0, %v630
      %v632 = vpop.f32.mrb[0].mxu0
      %633 = vmatprep.mubr.bf16.mxu0 0
      %634 = vmatmul.mubr.bf16.gmra.mrb[0].mxu0 %v484
      %v635 = vpop.f32.mrb[0].mxu0
      %v636 = vadd.f32 0.0, %v635
      %v637 = vpop.f32.mrb[0].mxu0
      %v638 = vpop.f32.mrb[0].mxu0
      %v639 = vadd.f32 0.0, %v638
      %v640 = vpop.f32.mrb[0].mxu0
      %641 = vmatprep.mubr.bf16.mxu0 0
      %642 = vmatmul.mubr.bf16.gmra.mrb[0].mxu0 %v487
      %v643 = vpop.f32.mrb[0].mxu0
      %v644 = vadd.f32 0.0, %v643
      %v645 = vpop.f32.mrb[0].mxu0
      %v646 = vpop.f32.mrb[0].mxu0
      %v647 = vadd.f32 0.0, %v646
      %v648 = vpop.f32.mrb[0].mxu0
      %649 = vdwg.mxu0
      %v654 = vunpack.c.l.b16 %v242
      %v655 = vunpack.c.l.b16 %v243
      %v656 = vunpack.c.l.b16 %v244
      %v657 = vunpack.c.l.b16 %v245
      %v658 = vpack.c.b16 %v655, %v654
      %v659 = vpack.c.b16 %v657, %v656
      %v663 = vsel %vm440, %v226, 0
      %v666 = vsel %vm440, %v227, 0
      %v669 = vsel %vm440, %v228, 0
      %v672 = vsel %vm440, %v229, 0
      %v675 = vsel %vm440, %v230, 0
      %v678 = vsel %vm440, %v231, 0
      %v681 = vsel %vm440, %v232, 0
      %v684 = vsel %vm440, %v233, 0
      %v687 = vsel %vm440, %v234, 0
      %v690 = vsel %vm440, %v235, 0
      %v693 = vsel %vm440, %v236, 0
      %v696 = vsel %vm440, %v237, 0
      %v699 = vsel %vm440, %v238, 0
      %v702 = vsel %vm440, %v239, 0
      %v705 = vsel %vm440, %v240, 0
      %v708 = vsel %vm440, %v241, 0
      %710 = vmatprep.subr.bf16.mxu0 0
      %711 = vmatpush1.bf16.msra.mxu0 %v658
      %712 = vmatprep.subr.bf16.mxu0 0
      %713 = vmatpush1.bf16.msra.mxu0 %v659
      %714 = vmatprep.subr.bf16.mxu0 0
      %715 = vmatpush1.bf16.msra.mxu0 0
      %716 = vmatprep.subr.bf16.mxu0 0
      %717 = vmatpush1.bf16.msra.mxu0 0
      %718 = vmatprep.subr.bf16.mxu0 0
      %719 = vmatpush1.bf16.msra.mxu0 0
      %720 = vmatprep.subr.bf16.mxu0 0
      %721 = vmatpush1.bf16.msra.mxu0 0
      %722 = vmatprep.subr.bf16.mxu0 0
      %723 = vmatpush1.bf16.msra.mxu0 0
      %724 = vmatprep.subr.bf16.mxu0 0
      %725 = vmatpush1.bf16.msra.mxu0 0
      %726 = vmatprep.subr.bf16.mxu0 0
      %727 = vmatpush1.bf16.msra.mxu0 0
      %728 = vmatprep.subr.bf16.mxu0 0
      %729 = vmatpush1.bf16.msra.mxu0 0
      %730 = vmatprep.subr.bf16.mxu0 0
      %731 = vmatpush1.bf16.msra.mxu0 0
      %732 = vmatprep.subr.bf16.mxu0 0
      %733 = vmatpush1.bf16.msra.mxu0 0
      %734 = vmatprep.subr.bf16.mxu0 0
      %735 = vmatpush1.bf16.msra.mxu0 0
      %736 = vmatprep.subr.bf16.mxu0 0
      %737 = vmatpush1.bf16.msra.mxu0 0
      %738 = vmatprep.subr.bf16.mxu0 0
      %739 = vmatpush1.bf16.msra.mxu0 0
      %740 = vmatprep.subr.bf16.mxu0 0
      %741 = vmatpush1.bf16.msra.mxu0 0
      %742 = vmatprep.mubr.bf16.mxu0 0
      %743 = vmatmul.mubr.bf16.gmra.mrb[0].mxu0 %v663
      %v744 = vpop.f32.mrb[0].mxu0
      %v745 = vadd.f32 %v524, %v744
      %v746 = vpop.f32.mrb[0].mxu0
      %v747 = vpop.f32.mrb[0].mxu0
      %v748 = vadd.f32 %v527, %v747
      %v749 = vpop.f32.mrb[0].mxu0
      %750 = vmatprep.mubr.bf16.mxu0 0
      %751 = vmatmul.mubr.bf16.gmra.mrb[0].mxu0 %v666
      %v752 = vpop.f32.mrb[0].mxu0
      %v753 = vadd.f32 %v532, %v752
      %v754 = vpop.f32.mrb[0].mxu0
      %v755 = vpop.f32.mrb[0].mxu0
      %v756 = vadd.f32 %v535, %v755
      %v757 = vpop.f32.mrb[0].mxu0
      %758 = vmatprep.mubr.bf16.mxu0 0
      %759 = vmatmul.mubr.bf16.gmra.mrb[0].mxu0 %v669
      %v760 = vpop.f32.mrb[0].mxu0
      %v761 = vadd.f32 %v540, %v760
      %v762 = vpop.f32.mrb[0].mxu0
      %v763 = vpop.f32.mrb[0].mxu0
      %v764 = vadd.f32 %v543, %v763
      %v765 = vpop.f32.mrb[0].mxu0
      %766 = vmatprep.mubr.bf16.mxu0 0
      %767 = vmatmul.mubr.bf16.gmra.mrb[0].mxu0 %v672
      %v768 = vpop.f32.mrb[0].mxu0
      %v769 = vadd.f32 %v548, %v768
      %v770 = vpop.f32.mrb[0].mxu0
      %v771 = vpop.f32.mrb[0].mxu0
      %v772 = vadd.f32 %v551, %v771
      %v773 = vpop.f32.mrb[0].mxu0
      %774 = vmatprep.mubr.bf16.mxu0 0
      %775 = vmatmul.mubr.bf16.gmra.mrb[0].mxu0 %v675
      %v776 = vpop.f32.mrb[0].mxu0
      %v777 = vadd.f32 %v556, %v776
      %v778 = vpop.f32.mrb[0].mxu0
      %v779 = vpop.f32.mrb[0].mxu0
      %v780 = vadd.f32 %v559, %v779
      %v781 = vpop.f32.mrb[0].mxu0
      %782 = vmatprep.mubr.bf16.mxu0 0
      %783 = vmatmul.mubr.bf16.gmra.mrb[0].mxu0 %v678
      %v784 = vpop.f32.mrb[0].mxu0
      %v785 = vadd.f32 %v564, %v784
      %v786 = vpop.f32.mrb[0].mxu0
      %v787 = vpop.f32.mrb[0].mxu0
      %v788 = vadd.f32 %v567, %v787
      %v789 = vpop.f32.mrb[0].mxu0
      %790 = vmatprep.mubr.bf16.mxu0 0
      %791 = vmatmul.mubr.bf16.gmra.mrb[0].mxu0 %v681
      %v792 = vpop.f32.mrb[0].mxu0
      %v793 = vadd.f32 %v572, %v792
      %v794 = vpop.f32.mrb[0].mxu0
      %v795 = vpop.f32.mrb[0].mxu0
      %v796 = vadd.f32 %v575, %v795
      %v797 = vpop.f32.mrb[0].mxu0
      %798 = vmatprep.mubr.bf16.mxu0 0
      %799 = vmatmul.mubr.bf16.gmra.mrb[0].mxu0 %v684
      %v800 = vpop.f32.mrb[0].mxu0
      %v801 = vadd.f32 %v580, %v800
      %v802 = vpop.f32.mrb[0].mxu0
      %v803 = vpop.f32.mrb[0].mxu0
      %v804 = vadd.f32 %v583, %v803
      %v805 = vpop.f32.mrb[0].mxu0
      %806 = vmatprep.mubr.bf16.mxu0 0
      %807 = vmatmul.mubr.bf16.gmra.mrb[0].mxu0 %v687
      %v808 = vpop.f32.mrb[0].mxu0
      %v809 = vadd.f32 %v588, %v808
      %v810 = vpop.f32.mrb[0].mxu0
      %v811 = vpop.f32.mrb[0].mxu0
      %v812 = vadd.f32 %v591, %v811
      %v813 = vpop.f32.mrb[0].mxu0
      %814 = vmatprep.mubr.bf16.mxu0 0
      %815 = vmatmul.mubr.bf16.gmra.mrb[0].mxu0 %v690
      %v816 = vpop.f32.mrb[0].mxu0
      %v817 = vadd.f32 %v596, %v816
      %v818 = vpop.f32.mrb[0].mxu0
      %v819 = vpop.f32.mrb[0].mxu0
      %v820 = vadd.f32 %v599, %v819
      %v821 = vpop.f32.mrb[0].mxu0
      %822 = vmatprep.mubr.bf16.mxu0 0
      %823 = vmatmul.mubr.bf16.gmra.mrb[0].mxu0 %v693
      %v824 = vpop.f32.mrb[0].mxu0
      %v825 = vadd.f32 %v604, %v824
      %v826 = vpop.f32.mrb[0].mxu0
      %v827 = vpop.f32.mrb[0].mxu0
      %v828 = vadd.f32 %v607, %v827
      %v829 = vpop.f32.mrb[0].mxu0
      %830 = vmatprep.mubr.bf16.mxu0 0
      %831 = vmatmul.mubr.bf16.gmra.mrb[0].mxu0 %v696
      %v832 = vpop.f32.mrb[0].mxu0
      %v833 = vadd.f32 %v612, %v832
      %v834 = vpop.f32.mrb[0].mxu0
      %v835 = vpop.f32.mrb[0].mxu0
      %v836 = vadd.f32 %v615, %v835
      %v837 = vpop.f32.mrb[0].mxu0
      %838 = vmatprep.mubr.bf16.mxu0 0
      %839 = vmatmul.mubr.bf16.gmra.mrb[0].mxu0 %v699
      %v840 = vpop.f32.mrb[0].mxu0
      %v841 = vadd.f32 %v620, %v840
      %v842 = vpop.f32.mrb[0].mxu0
      %v843 = vpop.f32.mrb[0].mxu0
      %v844 = vadd.f32 %v623, %v843
      %v845 = vpop.f32.mrb[0].mxu0
      %846 = vmatprep.mubr.bf16.mxu0 0
      %847 = vmatmul.mubr.bf16.gmra.mrb[0].mxu0 %v702
      %v848 = vpop.f32.mrb[0].mxu0
      %v849 = vadd.f32 %v628, %v848
      %v850 = vpop.f32.mrb[0].mxu0
      %v851 = vpop.f32.mrb[0].mxu0
      %v852 = vadd.f32 %v631, %v851
      %v853 = vpop.f32.mrb[0].mxu0
      %854 = vmatprep.mubr.bf16.mxu0 0
      %855 = vmatmul.mubr.bf16.gmra.mrb[0].mxu0 %v705
      %v856 = vpop.f32.mrb[0].mxu0
      %v857 = vadd.f32 %v636, %v856
      %v858 = vpop.f32.mrb[0].mxu0
      %v859 = vpop.f32.mrb[0].mxu0
      %v860 = vadd.f32 %v639, %v859
      %v861 = vpop.f32.mrb[0].mxu0
      %862 = vmatprep.mubr.bf16.mxu0 0
      %863 = vmatmul.mubr.bf16.gmra.mrb[0].mxu0 %v708
      %v864 = vpop.f32.mrb[0].mxu0
      %v865 = vadd.f32 %v644, %v864
      %v866 = vpop.f32.mrb[0].mxu0
      %v867 = vpop.f32.mrb[0].mxu0
      %v868 = vadd.f32 %v647, %v867
      %v869 = vpop.f32.mrb[0].mxu0
      %870 = vdwg.mxu0
      %vm871 = vcmask 1045504
      %v872 = vrot.slane %v172, 2
      %v873 = vrot.slane %v173, 2
      %v874 = vsel %vm871, %v872, %v873
      %v875 = vrot.slane %v174, 2
      %v876 = vsel %vm871, %v873, %v875
      %v877 = vrot.slane %v175, 2
      %v878 = vrot.slane %v176, 2
      %v879 = vsel %vm871, %v877, %v878
      %v880 = vrot.slane %v177, 2
      %v881 = vsel %vm871, %v878, %v880
      %v882 = vrot.slane %v178, 2
      %v883 = vrot.slane %v179, 2
      %v884 = vsel %vm871, %v882, %v883
      %v885 = vrot.slane %v180, 2
      %v886 = vsel %vm871, %v883, %v885
      %v887 = vrot.slane %v181, 2
      %v888 = vrot.slane %v182, 2
      %v889 = vsel %vm871, %v887, %v888
      %v890 = vrot.slane %v183, 2
      %v891 = vsel %vm871, %v888, %v890
      %v892 = vrot.slane %v184, 2
      %v893 = vrot.slane %v185, 2
      %v894 = vsel %vm871, %v892, %v893
      %v895 = vrot.slane %v186, 2
      %v896 = vsel %vm871, %v893, %v895
      %v897 = vrot.slane %v187, 2
      %v898 = vrot.slane %v188, 2
      %v899 = vsel %vm871, %v897, %v898
      %v900 = vrot.slane %v189, 2
      %v901 = vsel %vm871, %v898, %v900
      %v902 = vrot.slane %v190, 2
      %v903 = vrot.slane %v191, 2
      %v904 = vsel %vm871, %v902, %v903
      %v905 = vrot.slane %v192, 2
      %v906 = vsel %vm871, %v903, %v905
      %v907 = vrot.slane %v193, 2
      %v908 = vrot.slane %v194, 2
      %v909 = vsel %vm871, %v907, %v908
      %v910 = vrot.slane %v195, 2
      %v911 = vsel %vm871, %v908, %v910
      %v912 = vrot.slane %v196, 2
      %v913 = vrot.slane %v197, 2
      %v914 = vsel %vm871, %v912, %v913
      %v915 = vrot.slane %v198, 2
      %v916 = vsel %vm871, %v913, %v915
      %v917 = vrot.slane %v199, 2
      %v918 = vrot.slane %v200, 2
      %v919 = vsel %vm871, %v917, %v918
      %v920 = vrot.slane %v201, 2
      %v921 = vsel %vm871, %v918, %v920
      %v922 = vrot.slane %v202, 2
      %v923 = vrot.slane %v203, 2
      %v924 = vsel %vm871, %v922, %v923
      %v925 = vrot.slane %v204, 2
      %v926 = vsel %vm871, %v923, %v925
      %v927 = vrot.slane %v205, 2
      %v928 = vrot.slane %v206, 2
      %v929 = vsel %vm871, %v927, %v928
      %v930 = vrot.slane %v207, 2
      %v931 = vsel %vm871, %v928, %v930
      %v932 = vrot.slane %v208, 2
      %v933 = vrot.slane %v209, 2
      %v934 = vsel %vm871, %v932, %v933
      %v935 = vrot.slane %v210, 2
      %v936 = vsel %vm871, %v933, %v935
      %v937 = vrot.slane %v211, 2
      %v938 = vrot.slane %v212, 2
      %v939 = vsel %vm871, %v937, %v938
      %v940 = vrot.slane %v213, 2
      %v941 = vsel %vm871, %v938, %v940
      %v942 = vrot.slane %v214, 2
      %v943 = vrot.slane %v215, 2
      %v944 = vsel %vm871, %v942, %v943
      %v945 = vrot.slane %v216, 2
      %v946 = vsel %vm871, %v943, %v945
      %v947 = vrot.slane %v217, 2
      %v948 = vrot.slane %v218, 2
      %v949 = vsel %vm871, %v947, %v948
      %v950 = vrot.slane %v219, 2
      %v951 = vsel %vm871, %v948, %v950
      %v984 = vpack.c.bf16 %v876, %v874
      %v985 = vpack.c.bf16 %v881, %v879
      %v986 = vpack.c.bf16 %v886, %v884
      %v987 = vpack.c.bf16 %v891, %v889
      %v988 = vpack.c.bf16 %v896, %v894
      %v989 = vpack.c.bf16 %v901, %v899
      %v990 = vpack.c.bf16 %v906, %v904
      %v991 = vpack.c.bf16 %v911, %v909
      %v992 = vpack.c.bf16 %v916, %v914
      %v993 = vpack.c.bf16 %v921, %v919
      %v994 = vpack.c.bf16 %v926, %v924
      %v995 = vpack.c.bf16 %v931, %v929
      %v996 = vpack.c.bf16 %v936, %v934
      %v997 = vpack.c.bf16 %v941, %v939
      %v998 = vpack.c.bf16 %v946, %v944
      %v999 = vpack.c.bf16 %v951, %v949
      %s1000 = scalar_lea.vmem %s1, 32
      %v1001 = vld [vmem:[%s1000] sm:$0xf]
      %v1002 = vld [vmem:[%s1000 + $0x4] sm:$0xf]
      %v1003 = vld [vmem:[%s1000 + $0x8] sm:$0xf]
      %v1004 = vld [vmem:[%s1000 + $0xc] sm:$0xf]
      %v1009 = vunpack.c.l.b16 %v1001
      %v1010 = vunpack.c.l.b16 %v1002
      %v1011 = vunpack.c.l.b16 %v1003
      %v1012 = vunpack.c.l.b16 %v1004
      %v1013 = vpack.c.b16 %v1010, %v1009
      %v1014 = vpack.c.b16 %v1012, %v1011
      %v1018 = vsel %vm440, %v984, 0
      %v1021 = vsel %vm440, %v985, 0
      %v1024 = vsel %vm440, %v986, 0
      %v1027 = vsel %vm440, %v987, 0
      %v1030 = vsel %vm440, %v988, 0
      %v1033 = vsel %vm440, %v989, 0
      %v1036 = vsel %vm440, %v990, 0
      %v1039 = vsel %vm440, %v991, 0
      %v1042 = vsel %vm440, %v992, 0
      %v1045 = vsel %vm440, %v993, 0
      %v1048 = vsel %vm440, %v994, 0
      %v1051 = vsel %vm440, %v995, 0
      %v1054 = vsel %vm440, %v996, 0
      %v1057 = vsel %vm440, %v997, 0
      %v1060 = vsel %vm440, %v998, 0
      %v1063 = vsel %vm440, %v999, 0
      %1065 = vmatprep.subr.bf16.mxu0 0
      %1066 = vmatpush1.bf16.msra.mxu0 %v1013
      %1067 = vmatprep.subr.bf16.mxu0 0
      %1068 = vmatpush1.bf16.msra.mxu0 %v1014
      %1069 = vmatprep.subr.bf16.mxu0 0
      %1070 = vmatpush1.bf16.msra.mxu0 0
      %1071 = vmatprep.subr.bf16.mxu0 0
      %1072 = vmatpush1.bf16.msra.mxu0 0
      %1073 = vmatprep.subr.bf16.mxu0 0
      %1074 = vmatpush1.bf16.msra.mxu0 0
      %1075 = vmatprep.subr.bf16.mxu0 0
      %1076 = vmatpush1.bf16.msra.mxu0 0
      %1077 = vmatprep.subr.bf16.mxu0 0
      %1078 = vmatpush1.bf16.msra.mxu0 0
      %1079 = vmatprep.subr.bf16.mxu0 0
      %1080 = vmatpush1.bf16.msra.mxu0 0
      %1081 = vmatprep.subr.bf16.mxu0 0
      %1082 = vmatpush1.bf16.msra.mxu0 0
      %1083 = vmatprep.subr.bf16.mxu0 0
      %1084 = vmatpush1.bf16.msra.mxu0 0
      %1085 = vmatprep.subr.bf16.mxu0 0
      %1086 = vmatpush1.bf16.msra.mxu0 0
      %1087 = vmatprep.subr.bf16.mxu0 0
      %1088 = vmatpush1.bf16.msra.mxu0 0
      %1089 = vmatprep.subr.bf16.mxu0 0
      %1090 = vmatpush1.bf16.msra.mxu0 0
      %1091 = vmatprep.subr.bf16.mxu0 0
      %1092 = vmatpush1.bf16.msra.mxu0 0
      %1093 = vmatprep.subr.bf16.mxu0 0
      %1094 = vmatpush1.bf16.msra.mxu0 0
      %1095 = vmatprep.subr.bf16.mxu0 0
      %1096 = vmatpush1.bf16.msra.mxu0 0
      %1097 = vmatprep.mubr.bf16.mxu0 0
      %1098 = vmatmul.mubr.bf16.gmra.mrb[0].mxu0 %v1018
      %v1099 = vpop.f32.mrb[0].mxu0
      %v1100 = vadd.f32 0.0, %v1099
      %v1101 = vpop.f32.mrb[0].mxu0
      %v1102 = vpop.f32.mrb[0].mxu0
      %v1103 = vadd.f32 0.0, %v1102
      %v1104 = vpop.f32.mrb[0].mxu0
      %1105 = vmatprep.mubr.bf16.mxu0 0
      %1106 = vmatmul.mubr.bf16.gmra.mrb[0].mxu0 %v1021
      %v1107 = vpop.f32.mrb[0].mxu0
      %v1108 = vadd.f32 0.0, %v1107
      %v1109 = vpop.f32.mrb[0].mxu0
      %v1110 = vpop.f32.mrb[0].mxu0
      %v1111 = vadd.f32 0.0, %v1110
      %v1112 = vpop.f32.mrb[0].mxu0
      %1113 = vmatprep.mubr.bf16.mxu0 0
      %1114 = vmatmul.mubr.bf16.gmra.mrb[0].mxu0 %v1024
      %v1115 = vpop.f32.mrb[0].mxu0
      %v1116 = vadd.f32 0.0, %v1115
      %v1117 = vpop.f32.mrb[0].mxu0
      %v1118 = vpop.f32.mrb[0].mxu0
      %v1119 = vadd.f32 0.0, %v1118
      %v1120 = vpop.f32.mrb[0].mxu0
      %1121 = vmatprep.mubr.bf16.mxu0 0
      %1122 = vmatmul.mubr.bf16.gmra.mrb[0].mxu0 %v1027
      %v1123 = vpop.f32.mrb[0].mxu0
      %v1124 = vadd.f32 0.0, %v1123
      %v1125 = vpop.f32.mrb[0].mxu0
      %v1126 = vpop.f32.mrb[0].mxu0
      %v1127 = vadd.f32 0.0, %v1126
      %v1128 = vpop.f32.mrb[0].mxu0
      %1129 = vmatprep.mubr.bf16.mxu0 0
      %1130 = vmatmul.mubr.bf16.gmra.mrb[0].mxu0 %v1030
      %v1131 = vpop.f32.mrb[0].mxu0
      %v1132 = vadd.f32 0.0, %v1131
      %v1133 = vpop.f32.mrb[0].mxu0
      %v1134 = vpop.f32.mrb[0].mxu0
      %v1135 = vadd.f32 0.0, %v1134
      %v1136 = vpop.f32.mrb[0].mxu0
      %1137 = vmatprep.mubr.bf16.mxu0 0
      %1138 = vmatmul.mubr.bf16.gmra.mrb[0].mxu0 %v1033
      %v1139 = vpop.f32.mrb[0].mxu0
      %v1140 = vadd.f32 0.0, %v1139
      %v1141 = vpop.f32.mrb[0].mxu0
      %v1142 = vpop.f32.mrb[0].mxu0
      %v1143 = vadd.f32 0.0, %v1142
      %v1144 = vpop.f32.mrb[0].mxu0
      %1145 = vmatprep.mubr.bf16.mxu0 0
      %1146 = vmatmul.mubr.bf16.gmra.mrb[0].mxu0 %v1036
      %v1147 = vpop.f32.mrb[0].mxu0
      %v1148 = vadd.f32 0.0, %v1147
      %v1149 = vpop.f32.mrb[0].mxu0
      %v1150 = vpop.f32.mrb[0].mxu0
      %v1151 = vadd.f32 0.0, %v1150
      %v1152 = vpop.f32.mrb[0].mxu0
      %1153 = vmatprep.mubr.bf16.mxu0 0
      %1154 = vmatmul.mubr.bf16.gmra.mrb[0].mxu0 %v1039
      %v1155 = vpop.f32.mrb[0].mxu0
      %v1156 = vadd.f32 0.0, %v1155
      %v1157 = vpop.f32.mrb[0].mxu0
      %v1158 = vpop.f32.mrb[0].mxu0
      %v1159 = vadd.f32 0.0, %v1158
      %v1160 = vpop.f32.mrb[0].mxu0
      %1161 = vmatprep.mubr.bf16.mxu0 0
      %1162 = vmatmul.mubr.bf16.gmra.mrb[0].mxu0 %v1042
      %v1163 = vpop.f32.mrb[0].mxu0
      %v1164 = vadd.f32 0.0, %v1163
      %v1165 = vpop.f32.mrb[0].mxu0
      %v1166 = vpop.f32.mrb[0].mxu0
      %v1167 = vadd.f32 0.0, %v1166
      %v1168 = vpop.f32.mrb[0].mxu0
      %1169 = vmatprep.mubr.bf16.mxu0 0
      %1170 = vmatmul.mubr.bf16.gmra.mrb[0].mxu0 %v1045
      %v1171 = vpop.f32.mrb[0].mxu0
      %v1172 = vadd.f32 0.0, %v1171
      %v1173 = vpop.f32.mrb[0].mxu0
      %v1174 = vpop.f32.mrb[0].mxu0
      %v1175 = vadd.f32 0.0, %v1174
      %v1176 = vpop.f32.mrb[0].mxu0
      %1177 = vmatprep.mubr.bf16.mxu0 0
      %1178 = vmatmul.mubr.bf16.gmra.mrb[0].mxu0 %v1048
      %v1179 = vpop.f32.mrb[0].mxu0
      %v1180 = vadd.f32 0.0, %v1179
      %v1181 = vpop.f32.mrb[0].mxu0
      %v1182 = vpop.f32.mrb[0].mxu0
      %v1183 = vadd.f32 0.0, %v1182
      %v1184 = vpop.f32.mrb[0].mxu0
      %1185 = vmatprep.mubr.bf16.mxu0 0
      %1186 = vmatmul.mubr.bf16.gmra.mrb[0].mxu0 %v1051
      %v1187 = vpop.f32.mrb[0].mxu0
      %v1188 = vadd.f32 0.0, %v1187
      %v1189 = vpop.f32.mrb[0].mxu0
      %v1190 = vpop.f32.mrb[0].mxu0
      %v1191 = vadd.f32 0.0, %v1190
      %v1192 = vpop.f32.mrb[0].mxu0
      %1193 = vmatprep.mubr.bf16.mxu0 0
      %1194 = vmatmul.mubr.bf16.gmra.mrb[0].mxu0 %v1054
      %v1195 = vpop.f32.mrb[0].mxu0
      %v1196 = vadd.f32 0.0, %v1195
      %v1197 = vpop.f32.mrb[0].mxu0
      %v1198 = vpop.f32.mrb[0].mxu0
      %v1199 = vadd.f32 0.0, %v1198
      %v1200 = vpop.f32.mrb[0].mxu0
      %1201 = vmatprep.mubr.bf16.mxu0 0
      %1202 = vmatmul.mubr.bf16.gmra.mrb[0].mxu0 %v1057
      %v1203 = vpop.f32.mrb[0].mxu0
      %v1204 = vadd.f32 0.0, %v1203
      %v1205 = vpop.f32.mrb[0].mxu0
      %v1206 = vpop.f32.mrb[0].mxu0
      %v1207 = vadd.f32 0.0, %v1206
      %v1208 = vpop.f32.mrb[0].mxu0
      %1209 = vmatprep.mubr.bf16.mxu0 0
      %1210 = vmatmul.mubr.bf16.gmra.mrb[0].mxu0 %v1060
      %v1211 = vpop.f32.mrb[0].mxu0
      %v1212 = vadd.f32 0.0, %v1211
      %v1213 = vpop.f32.mrb[0].mxu0
      %v1214 = vpop.f32.mrb[0].mxu0
      %v1215 = vadd.f32 0.0, %v1214
      %v1216 = vpop.f32.mrb[0].mxu0
      %1217 = vmatprep.mubr.bf16.mxu0 0
      %1218 = vmatmul.mubr.bf16.gmra.mrb[0].mxu0 %v1063
      %v1219 = vpop.f32.mrb[0].mxu0
      %v1220 = vadd.f32 0.0, %v1219
      %v1221 = vpop.f32.mrb[0].mxu0
      %v1222 = vpop.f32.mrb[0].mxu0
      %v1223 = vadd.f32 0.0, %v1222
      %v1224 = vpop.f32.mrb[0].mxu0
      %1225 = vdwg.mxu0
      %v1226 = vadd.f32 %v745, %v1100
      %v1227 = vadd.f32 %v748, %v1103
      %v1228 = vadd.f32 %v753, %v1108
      %v1229 = vadd.f32 %v756, %v1111
      %v1230 = vadd.f32 %v761, %v1116
      %v1231 = vadd.f32 %v764, %v1119
      %v1232 = vadd.f32 %v769, %v1124
      %v1233 = vadd.f32 %v772, %v1127
      %v1234 = vadd.f32 %v777, %v1132
      %v1235 = vadd.f32 %v780, %v1135
      %v1236 = vadd.f32 %v785, %v1140
      %v1237 = vadd.f32 %v788, %v1143
      %v1238 = vadd.f32 %v793, %v1148
      %v1239 = vadd.f32 %v796, %v1151
      %v1240 = vadd.f32 %v801, %v1156
      %v1241 = vadd.f32 %v804, %v1159
      %v1242 = vadd.f32 %v809, %v1164
      %v1243 = vadd.f32 %v812, %v1167
      %v1244 = vadd.f32 %v817, %v1172
      %v1245 = vadd.f32 %v820, %v1175
      %v1246 = vadd.f32 %v825, %v1180
      %v1247 = vadd.f32 %v828, %v1183
      %v1248 = vadd.f32 %v833, %v1188
      %v1249 = vadd.f32 %v836, %v1191
      %v1250 = vadd.f32 %v841, %v1196
      %v1251 = vadd.f32 %v844, %v1199
      %v1252 = vadd.f32 %v849, %v1204
      %v1253 = vadd.f32 %v852, %v1207
      %v1254 = vadd.f32 %v857, %v1212
      %v1255 = vadd.f32 %v860, %v1215
      %v1256 = vadd.f32 %v865, %v1220
      %v1257 = vadd.f32 %v868, %v1223
      %v1258 = vpack.c.bf16 %v221, %v220
      %s1259 = scalar_lea.vmem %s1, 48
      %v1260 = vld [vmem:[%s1259] sm:$0xf]
      %v1261 = vld [vmem:[%s1259 + $0x4] sm:$0xf]
      %v1262 = vld [vmem:[%s1259 + $0x8] sm:$0xf]
      %v1263 = vld [vmem:[%s1259 + $0xc] sm:$0xf]
      %v1268 = vunpack.c.l.b16 %v1260
      %v1269 = vunpack.c.l.b16 %v1261
      %v1270 = vunpack.c.l.b16 %v1262
      %v1271 = vunpack.c.l.b16 %v1263
      %v1272 = vpack.c.b16 %v1269, %v1268
      %v1273 = vpack.c.b16 %v1271, %v1270
      %v1277 = vsel %vm440, %v1258, 0
      %1279 = vmatprep.subr.bf16.mxu0 0
      %1280 = vmatpush1.bf16.msra.mxu0 %v1272
      %1281 = vmatprep.subr.bf16.mxu0 0
      %1282 = vmatpush1.bf16.msra.mxu0 %v1273
      %1283 = vmatprep.subr.bf16.mxu0 0
      %1284 = vmatpush1.bf16.msra.mxu0 0
      %1285 = vmatprep.subr.bf16.mxu0 0
      %1286 = vmatpush1.bf16.msra.mxu0 0
      %1287 = vmatprep.subr.bf16.mxu0 0
      %1288 = vmatpush1.bf16.msra.mxu0 0
      %1289 = vmatprep.subr.bf16.mxu0 0
      %1290 = vmatpush1.bf16.msra.mxu0 0
      %1291 = vmatprep.subr.bf16.mxu0 0
      %1292 = vmatpush1.bf16.msra.mxu0 0
      %1293 = vmatprep.subr.bf16.mxu0 0
      %1294 = vmatpush1.bf16.msra.mxu0 0
      %1295 = vmatprep.subr.bf16.mxu0 0
      %1296 = vmatpush1.bf16.msra.mxu0 0
      %1297 = vmatprep.subr.bf16.mxu0 0
      %1298 = vmatpush1.bf16.msra.mxu0 0
      %1299 = vmatprep.subr.bf16.mxu0 0
      %1300 = vmatpush1.bf16.msra.mxu0 0
      %1301 = vmatprep.subr.bf16.mxu0 0
      %1302 = vmatpush1.bf16.msra.mxu0 0
      %1303 = vmatprep.subr.bf16.mxu0 0
      %1304 = vmatpush1.bf16.msra.mxu0 0
      %1305 = vmatprep.subr.bf16.mxu0 0
      %1306 = vmatpush1.bf16.msra.mxu0 0
      %1307 = vmatprep.subr.bf16.mxu0 0
      %1308 = vmatpush1.bf16.msra.mxu0 0
      %1309 = vmatprep.subr.bf16.mxu0 0
      %1310 = vmatpush1.bf16.msra.mxu0 0
      %1311 = vmatprep.mubr.bf16.mxu0 0
      %1312 = vmatmul.mubr.bf16.gmra.mrb[0].mxu0 %v666
      %v1313 = vpop.f32.mrb[0].mxu0
      %v1314 = vadd.f32 0.0, %v1313
      %v1315 = vpop.f32.mrb[0].mxu0
      %v1316 = vpop.f32.mrb[0].mxu0
      %v1317 = vadd.f32 0.0, %v1316
      %v1318 = vpop.f32.mrb[0].mxu0
      %1319 = vmatprep.mubr.bf16.mxu0 0
      %1320 = vmatmul.mubr.bf16.gmra.mrb[0].mxu0 %v669
      %v1321 = vpop.f32.mrb[0].mxu0
      %v1322 = vadd.f32 0.0, %v1321
      %v1323 = vpop.f32.mrb[0].mxu0
      %v1324 = vpop.f32.mrb[0].mxu0
      %v1325 = vadd.f32 0.0, %v1324
      %v1326 = vpop.f32.mrb[0].mxu0
      %1327 = vmatprep.mubr.bf16.mxu0 0
      %1328 = vmatmul.mubr.bf16.gmra.mrb[0].mxu0 %v672
      %v1329 = vpop.f32.mrb[0].mxu0
      %v1330 = vadd.f32 0.0, %v1329
      %v1331 = vpop.f32.mrb[0].mxu0
      %v1332 = vpop.f32.mrb[0].mxu0
      %v1333 = vadd.f32 0.0, %v1332
      %v1334 = vpop.f32.mrb[0].mxu0
      %1335 = vmatprep.mubr.bf16.mxu0 0
      %1336 = vmatmul.mubr.bf16.gmra.mrb[0].mxu0 %v675
      %v1337 = vpop.f32.mrb[0].mxu0
      %v1338 = vadd.f32 0.0, %v1337
      %v1339 = vpop.f32.mrb[0].mxu0
      %v1340 = vpop.f32.mrb[0].mxu0
      %v1341 = vadd.f32 0.0, %v1340
      %v1342 = vpop.f32.mrb[0].mxu0
      %1343 = vmatprep.mubr.bf16.mxu0 0
      %1344 = vmatmul.mubr.bf16.gmra.mrb[0].mxu0 %v678
      %v1345 = vpop.f32.mrb[0].mxu0
      %v1346 = vadd.f32 0.0, %v1345
      %v1347 = vpop.f32.mrb[0].mxu0
      %v1348 = vpop.f32.mrb[0].mxu0
      %v1349 = vadd.f32 0.0, %v1348
      %v1350 = vpop.f32.mrb[0].mxu0
      %1351 = vmatprep.mubr.bf16.mxu0 0
      %1352 = vmatmul.mubr.bf16.gmra.mrb[0].mxu0 %v681
      %v1353 = vpop.f32.mrb[0].mxu0
      %v1354 = vadd.f32 0.0, %v1353
      %v1355 = vpop.f32.mrb[0].mxu0
      %v1356 = vpop.f32.mrb[0].mxu0
      %v1357 = vadd.f32 0.0, %v1356
      %v1358 = vpop.f32.mrb[0].mxu0
      %1359 = vmatprep.mubr.bf16.mxu0 0
      %1360 = vmatmul.mubr.bf16.gmra.mrb[0].mxu0 %v684
      %v1361 = vpop.f32.mrb[0].mxu0
      %v1362 = vadd.f32 0.0, %v1361
      %v1363 = vpop.f32.mrb[0].mxu0
      %v1364 = vpop.f32.mrb[0].mxu0
      %v1365 = vadd.f32 0.0, %v1364
      %v1366 = vpop.f32.mrb[0].mxu0
      %1367 = vmatprep.mubr.bf16.mxu0 0
      %1368 = vmatmul.mubr.bf16.gmra.mrb[0].mxu0 %v687
      %v1369 = vpop.f32.mrb[0].mxu0
      %v1370 = vadd.f32 0.0, %v1369
      %v1371 = vpop.f32.mrb[0].mxu0
      %v1372 = vpop.f32.mrb[0].mxu0
      %v1373 = vadd.f32 0.0, %v1372
      %v1374 = vpop.f32.mrb[0].mxu0
      %1375 = vmatprep.mubr.bf16.mxu0 0
      %1376 = vmatmul.mubr.bf16.gmra.mrb[0].mxu0 %v690
      %v1377 = vpop.f32.mrb[0].mxu0
      %v1378 = vadd.f32 0.0, %v1377
      %v1379 = vpop.f32.mrb[0].mxu0
      %v1380 = vpop.f32.mrb[0].mxu0
      %v1381 = vadd.f32 0.0, %v1380
      %v1382 = vpop.f32.mrb[0].mxu0
      %1383 = vmatprep.mubr.bf16.mxu0 0
      %1384 = vmatmul.mubr.bf16.gmra.mrb[0].mxu0 %v693
      %v1385 = vpop.f32.mrb[0].mxu0
      %v1386 = vadd.f32 0.0, %v1385
      %v1387 = vpop.f32.mrb[0].mxu0
      %v1388 = vpop.f32.mrb[0].mxu0
      %v1389 = vadd.f32 0.0, %v1388
      %v1390 = vpop.f32.mrb[0].mxu0
      %1391 = vmatprep.mubr.bf16.mxu0 0
      %1392 = vmatmul.mubr.bf16.gmra.mrb[0].mxu0 %v696
      %v1393 = vpop.f32.mrb[0].mxu0
      %v1394 = vadd.f32 0.0, %v1393
      %v1395 = vpop.f32.mrb[0].mxu0
      %v1396 = vpop.f32.mrb[0].mxu0
      %v1397 = vadd.f32 0.0, %v1396
      %v1398 = vpop.f32.mrb[0].mxu0
      %1399 = vmatprep.mubr.bf16.mxu0 0
      %1400 = vmatmul.mubr.bf16.gmra.mrb[0].mxu0 %v699
      %v1401 = vpop.f32.mrb[0].mxu0
      %v1402 = vadd.f32 0.0, %v1401
      %v1403 = vpop.f32.mrb[0].mxu0
      %v1404 = vpop.f32.mrb[0].mxu0
      %v1405 = vadd.f32 0.0, %v1404
      %v1406 = vpop.f32.mrb[0].mxu0
      %1407 = vmatprep.mubr.bf16.mxu0 0
      %1408 = vmatmul.mubr.bf16.gmra.mrb[0].mxu0 %v702
      %v1409 = vpop.f32.mrb[0].mxu0
      %v1410 = vadd.f32 0.0, %v1409
      %v1411 = vpop.f32.mrb[0].mxu0
      %v1412 = vpop.f32.mrb[0].mxu0
      %v1413 = vadd.f32 0.0, %v1412
      %v1414 = vpop.f32.mrb[0].mxu0
      %1415 = vmatprep.mubr.bf16.mxu0 0
      %1416 = vmatmul.mubr.bf16.gmra.mrb[0].mxu0 %v705
      %v1417 = vpop.f32.mrb[0].mxu0
      %v1418 = vadd.f32 0.0, %v1417
      %v1419 = vpop.f32.mrb[0].mxu0
      %v1420 = vpop.f32.mrb[0].mxu0
      %v1421 = vadd.f32 0.0, %v1420
      %v1422 = vpop.f32.mrb[0].mxu0
      %1423 = vmatprep.mubr.bf16.mxu0 0
      %1424 = vmatmul.mubr.bf16.gmra.mrb[0].mxu0 %v708
      %v1425 = vpop.f32.mrb[0].mxu0
      %v1426 = vadd.f32 0.0, %v1425
      %v1427 = vpop.f32.mrb[0].mxu0
      %v1428 = vpop.f32.mrb[0].mxu0
      %v1429 = vadd.f32 0.0, %v1428
      %v1430 = vpop.f32.mrb[0].mxu0
      %1431 = vmatprep.mubr.bf16.mxu0 0
      %1432 = vmatmul.mubr.bf16.gmra.mrb[0].mxu0 %v1277
      %v1433 = vpop.f32.mrb[0].mxu0
      %v1434 = vadd.f32 0.0, %v1433
      %v1435 = vpop.f32.mrb[0].mxu0
      %v1436 = vpop.f32.mrb[0].mxu0
      %v1437 = vadd.f32 0.0, %v1436
      %v1438 = vpop.f32.mrb[0].mxu0
      %1439 = vdwg.mxu0
      %v1440 = vadd.f32 %v1226, %v1314
      %v1441 = vadd.f32 %v1227, %v1317
      %v1442 = vadd.f32 %v1228, %v1322
      %v1443 = vadd.f32 %v1229, %v1325
      %v1444 = vadd.f32 %v1230, %v1330
      %v1445 = vadd.f32 %v1231, %v1333
      %v1446 = vadd.f32 %v1232, %v1338
      %v1447 = vadd.f32 %v1233, %v1341
      %v1448 = vadd.f32 %v1234, %v1346
      %v1449 = vadd.f32 %v1235, %v1349
      %v1450 = vadd.f32 %v1236, %v1354
      %v1451 = vadd.f32 %v1237, %v1357
      %v1452 = vadd.f32 %v1238, %v1362
      %v1453 = vadd.f32 %v1239, %v1365
      %v1454 = vadd.f32 %v1240, %v1370
      %v1455 = vadd.f32 %v1241, %v1373
      %v1456 = vadd.f32 %v1242, %v1378
      %v1457 = vadd.f32 %v1243, %v1381
      %v1458 = vadd.f32 %v1244, %v1386
      %v1459 = vadd.f32 %v1245, %v1389
      %v1460 = vadd.f32 %v1246, %v1394
      %v1461 = vadd.f32 %v1247, %v1397
      %v1462 = vadd.f32 %v1248, %v1402
      %v1463 = vadd.f32 %v1249, %v1405
      %v1464 = vadd.f32 %v1250, %v1410
      %v1465 = vadd.f32 %v1251, %v1413
      %v1466 = vadd.f32 %v1252, %v1418
      %v1467 = vadd.f32 %v1253, %v1421
      %v1468 = vadd.f32 %v1254, %v1426
      %v1469 = vadd.f32 %v1255, %v1429
      %v1470 = vadd.f32 %v1256, %v1434
      %v1471 = vadd.f32 %v1257, %v1437
      %v1475 = vrot.slane %v220, 1
      %v1476 = vrot.slane %v221, 1
      %v1477 = vsel %vm294, %v1475, %v1476
      %v1478 = vrot.slane %v222, 1
      %v1479 = vsel %vm294, %v1476, %v1478
      %v1482 = vpack.c.bf16 %v1479, %v1477
      %s1483 = scalar_lea.vmem %s1, 64
      %v1484 = vld [vmem:[%s1483] sm:$0xf]
      %v1485 = vld [vmem:[%s1483 + $0x4] sm:$0xf]
      %v1486 = vld [vmem:[%s1483 + $0x8] sm:$0xf]
      %v1487 = vld [vmem:[%s1483 + $0xc] sm:$0xf]
      %v1492 = vunpack.c.l.b16 %v1484
      %v1493 = vunpack.c.l.b16 %v1485
      %v1494 = vunpack.c.l.b16 %v1486
      %v1495 = vunpack.c.l.b16 %v1487
      %v1496 = vpack.c.b16 %v1493, %v1492
      %v1497 = vpack.c.b16 %v1495, %v1494
      %v1501 = vsel %vm440, %v1482, 0
      %1503 = vmatprep.subr.bf16.mxu0 0
      %1504 = vmatpush1.bf16.msra.mxu0 %v1496
      %1505 = vmatprep.subr.bf16.mxu0 0
      %1506 = vmatpush1.bf16.msra.mxu0 %v1497
      %1507 = vmatprep.subr.bf16.mxu0 0
      %1508 = vmatpush1.bf16.msra.mxu0 0
      %1509 = vmatprep.subr.bf16.mxu0 0
      %1510 = vmatpush1.bf16.msra.mxu0 0
      %1511 = vmatprep.subr.bf16.mxu0 0
      %1512 = vmatpush1.bf16.msra.mxu0 0
      %1513 = vmatprep.subr.bf16.mxu0 0
      %1514 = vmatpush1.bf16.msra.mxu0 0
      %1515 = vmatprep.subr.bf16.mxu0 0
      %1516 = vmatpush1.bf16.msra.mxu0 0
      %1517 = vmatprep.subr.bf16.mxu0 0
      %1518 = vmatpush1.bf16.msra.mxu0 0
      %1519 = vmatprep.subr.bf16.mxu0 0
      %1520 = vmatpush1.bf16.msra.mxu0 0
      %1521 = vmatprep.subr.bf16.mxu0 0
      %1522 = vmatpush1.bf16.msra.mxu0 0
      %1523 = vmatprep.subr.bf16.mxu0 0
      %1524 = vmatpush1.bf16.msra.mxu0 0
      %1525 = vmatprep.subr.bf16.mxu0 0
      %1526 = vmatpush1.bf16.msra.mxu0 0
      %1527 = vmatprep.subr.bf16.mxu0 0
      %1528 = vmatpush1.bf16.msra.mxu0 0
      %1529 = vmatprep.subr.bf16.mxu0 0
      %1530 = vmatpush1.bf16.msra.mxu0 0
      %1531 = vmatprep.subr.bf16.mxu0 0
      %1532 = vmatpush1.bf16.msra.mxu0 0
      %1533 = vmatprep.subr.bf16.mxu0 0
      %1534 = vmatpush1.bf16.msra.mxu0 0
      %1535 = vmatprep.mubr.bf16.mxu0 0
      %1536 = vmatmul.mubr.bf16.gmra.mrb[0].mxu0 %v445
      %v1537 = vpop.f32.mrb[0].mxu0
      %v1538 = vadd.f32 0.0, %v1537
      %v1539 = vpop.f32.mrb[0].mxu0
      %v1540 = vpop.f32.mrb[0].mxu0
      %v1541 = vadd.f32 0.0, %v1540
      %v1542 = vpop.f32.mrb[0].mxu0
      %1543 = vmatprep.mubr.bf16.mxu0 0
      %1544 = vmatmul.mubr.bf16.gmra.mrb[0].mxu0 %v448
      %v1545 = vpop.f32.mrb[0].mxu0
      %v1546 = vadd.f32 0.0, %v1545
      %v1547 = vpop.f32.mrb[0].mxu0
      %v1548 = vpop.f32.mrb[0].mxu0
      %v1549 = vadd.f32 0.0, %v1548
      %v1550 = vpop.f32.mrb[0].mxu0
      %1551 = vmatprep.mubr.bf16.mxu0 0
      %1552 = vmatmul.mubr.bf16.gmra.mrb[0].mxu0 %v451
      %v1553 = vpop.f32.mrb[0].mxu0
      %v1554 = vadd.f32 0.0, %v1553
      %v1555 = vpop.f32.mrb[0].mxu0
      %v1556 = vpop.f32.mrb[0].mxu0
      %v1557 = vadd.f32 0.0, %v1556
      %v1558 = vpop.f32.mrb[0].mxu0
      %1559 = vmatprep.mubr.bf16.mxu0 0
      %1560 = vmatmul.mubr.bf16.gmra.mrb[0].mxu0 %v454
      %v1561 = vpop.f32.mrb[0].mxu0
      %v1562 = vadd.f32 0.0, %v1561
      %v1563 = vpop.f32.mrb[0].mxu0
      %v1564 = vpop.f32.mrb[0].mxu0
      %v1565 = vadd.f32 0.0, %v1564
      %v1566 = vpop.f32.mrb[0].mxu0
      %1567 = vmatprep.mubr.bf16.mxu0 0
      %1568 = vmatmul.mubr.bf16.gmra.mrb[0].mxu0 %v457
      %v1569 = vpop.f32.mrb[0].mxu0
      %v1570 = vadd.f32 0.0, %v1569
      %v1571 = vpop.f32.mrb[0].mxu0
      %v1572 = vpop.f32.mrb[0].mxu0
      %v1573 = vadd.f32 0.0, %v1572
      %v1574 = vpop.f32.mrb[0].mxu0
      %1575 = vmatprep.mubr.bf16.mxu0 0
      %1576 = vmatmul.mubr.bf16.gmra.mrb[0].mxu0 %v460
      %v1577 = vpop.f32.mrb[0].mxu0
      %v1578 = vadd.f32 0.0, %v1577
      %v1579 = vpop.f32.mrb[0].mxu0
      %v1580 = vpop.f32.mrb[0].mxu0
      %v1581 = vadd.f32 0.0, %v1580
      %v1582 = vpop.f32.mrb[0].mxu0
      %1583 = vmatprep.mubr.bf16.mxu0 0
      %1584 = vmatmul.mubr.bf16.gmra.mrb[0].mxu0 %v463
      %v1585 = vpop.f32.mrb[0].mxu0
      %v1586 = vadd.f32 0.0, %v1585
      %v1587 = vpop.f32.mrb[0].mxu0
      %v1588 = vpop.f32.mrb[0].mxu0
      %v1589 = vadd.f32 0.0, %v1588
      %v1590 = vpop.f32.mrb[0].mxu0
      %1591 = vmatprep.mubr.bf16.mxu0 0
      %1592 = vmatmul.mubr.bf16.gmra.mrb[0].mxu0 %v466
      %v1593 = vpop.f32.mrb[0].mxu0
      %v1594 = vadd.f32 0.0, %v1593
      %v1595 = vpop.f32.mrb[0].mxu0
      %v1596 = vpop.f32.mrb[0].mxu0
      %v1597 = vadd.f32 0.0, %v1596
      %v1598 = vpop.f32.mrb[0].mxu0
      %1599 = vmatprep.mubr.bf16.mxu0 0
      %1600 = vmatmul.mubr.bf16.gmra.mrb[0].mxu0 %v469
      %v1601 = vpop.f32.mrb[0].mxu0
      %v1602 = vadd.f32 0.0, %v1601
      %v1603 = vpop.f32.mrb[0].mxu0
      %v1604 = vpop.f32.mrb[0].mxu0
      %v1605 = vadd.f32 0.0, %v1604
      %v1606 = vpop.f32.mrb[0].mxu0
      %1607 = vmatprep.mubr.bf16.mxu0 0
      %1608 = vmatmul.mubr.bf16.gmra.mrb[0].mxu0 %v472
      %v1609 = vpop.f32.mrb[0].mxu0
      %v1610 = vadd.f32 0.0, %v1609
      %v1611 = vpop.f32.mrb[0].mxu0
      %v1612 = vpop.f32.mrb[0].mxu0
      %v1613 = vadd.f32 0.0, %v1612
      %v1614 = vpop.f32.mrb[0].mxu0
      %1615 = vmatprep.mubr.bf16.mxu0 0
      %1616 = vmatmul.mubr.bf16.gmra.mrb[0].mxu0 %v475
      %v1617 = vpop.f32.mrb[0].mxu0
      %v1618 = vadd.f32 0.0, %v1617
      %v1619 = vpop.f32.mrb[0].mxu0
      %v1620 = vpop.f32.mrb[0].mxu0
      %v1621 = vadd.f32 0.0, %v1620
      %v1622 = vpop.f32.mrb[0].mxu0
      %1623 = vmatprep.mubr.bf16.mxu0 0
      %1624 = vmatmul.mubr.bf16.gmra.mrb[0].mxu0 %v478
      %v1625 = vpop.f32.mrb[0].mxu0
      %v1626 = vadd.f32 0.0, %v1625
      %v1627 = vpop.f32.mrb[0].mxu0
      %v1628 = vpop.f32.mrb[0].mxu0
      %v1629 = vadd.f32 0.0, %v1628
      %v1630 = vpop.f32.mrb[0].mxu0
      %1631 = vmatprep.mubr.bf16.mxu0 0
      %1632 = vmatmul.mubr.bf16.gmra.mrb[0].mxu0 %v481
      %v1633 = vpop.f32.mrb[0].mxu0
      %v1634 = vadd.f32 0.0, %v1633
      %v1635 = vpop.f32.mrb[0].mxu0
      %v1636 = vpop.f32.mrb[0].mxu0
      %v1637 = vadd.f32 0.0, %v1636
      %v1638 = vpop.f32.mrb[0].mxu0
      %1639 = vmatprep.mubr.bf16.mxu0 0
      %1640 = vmatmul.mubr.bf16.gmra.mrb[0].mxu0 %v484
      %v1641 = vpop.f32.mrb[0].mxu0
      %v1642 = vadd.f32 0.0, %v1641
      %v1643 = vpop.f32.mrb[0].mxu0
      %v1644 = vpop.f32.mrb[0].mxu0
      %v1645 = vadd.f32 0.0, %v1644
      %v1646 = vpop.f32.mrb[0].mxu0
      %1647 = vmatprep.mubr.bf16.mxu0 0
      %1648 = vmatmul.mubr.bf16.gmra.mrb[0].mxu0 %v487
      %v1649 = vpop.f32.mrb[0].mxu0
      %v1650 = vadd.f32 0.0, %v1649
      %v1651 = vpop.f32.mrb[0].mxu0
      %v1652 = vpop.f32.mrb[0].mxu0
      %v1653 = vadd.f32 0.0, %v1652
      %v1654 = vpop.f32.mrb[0].mxu0
      %1655 = vmatprep.mubr.bf16.mxu0 0
      %1656 = vmatmul.mubr.bf16.gmra.mrb[0].mxu0 %v1501
      %v1657 = vpop.f32.mrb[0].mxu0
      %v1658 = vadd.f32 0.0, %v1657
      %v1659 = vpop.f32.mrb[0].mxu0
      %v1660 = vpop.f32.mrb[0].mxu0
      %v1661 = vadd.f32 0.0, %v1660
      %v1662 = vpop.f32.mrb[0].mxu0
      %1663 = vdwg.mxu0
      %v1664 = vadd.f32 %v1440, %v1538
      %v1665 = vadd.f32 %v1441, %v1541
      %v1666 = vadd.f32 %v1442, %v1546
      %v1667 = vadd.f32 %v1443, %v1549
      %v1668 = vadd.f32 %v1444, %v1554
      %v1669 = vadd.f32 %v1445, %v1557
      %v1670 = vadd.f32 %v1446, %v1562
      %v1671 = vadd.f32 %v1447, %v1565
      %v1672 = vadd.f32 %v1448, %v1570
      %v1673 = vadd.f32 %v1449, %v1573
      %v1674 = vadd.f32 %v1450, %v1578
      %v1675 = vadd.f32 %v1451, %v1581
      %v1676 = vadd.f32 %v1452, %v1586
      %v1677 = vadd.f32 %v1453, %v1589
      %v1678 = vadd.f32 %v1454, %v1594
      %v1679 = vadd.f32 %v1455, %v1597
      %v1680 = vadd.f32 %v1456, %v1602
      %v1681 = vadd.f32 %v1457, %v1605
      %v1682 = vadd.f32 %v1458, %v1610
      %v1683 = vadd.f32 %v1459, %v1613
      %v1684 = vadd.f32 %v1460, %v1618
      %v1685 = vadd.f32 %v1461, %v1621
      %v1686 = vadd.f32 %v1462, %v1626
      %v1687 = vadd.f32 %v1463, %v1629
      %v1688 = vadd.f32 %v1464, %v1634
      %v1689 = vadd.f32 %v1465, %v1637
      %v1690 = vadd.f32 %v1466, %v1642
      %v1691 = vadd.f32 %v1467, %v1645
      %v1692 = vadd.f32 %v1468, %v1650
      %v1693 = vadd.f32 %v1469, %v1653
      %v1694 = vadd.f32 %v1470, %v1658
      %v1695 = vadd.f32 %v1471, %v1661
      %v1696 = vrot.slane %v220, 2
      %v1697 = vrot.slane %v221, 2
      %v1698 = vsel %vm871, %v1696, %v1697
      %v1699 = vrot.slane %v222, 2
      %v1700 = vsel %vm871, %v1697, %v1699
      %v1703 = vpack.c.bf16 %v1700, %v1698
      %s1704 = scalar_lea.vmem %s1, 80
      %v1705 = vld [vmem:[%s1704] sm:$0xf]
      %v1706 = vld [vmem:[%s1704 + $0x4] sm:$0xf]
      %v1707 = vld [vmem:[%s1704 + $0x8] sm:$0xf]
      %v1708 = vld [vmem:[%s1704 + $0xc] sm:$0xf]
      %v1713 = vunpack.c.l.b16 %v1705
      %v1714 = vunpack.c.l.b16 %v1706
      %v1715 = vunpack.c.l.b16 %v1707
      %v1716 = vunpack.c.l.b16 %v1708
      %v1717 = vpack.c.b16 %v1714, %v1713
      %v1718 = vpack.c.b16 %v1716, %v1715
      %v1722 = vsel %vm440, %v1703, 0
      %1724 = vmatprep.subr.bf16.mxu0 0
      %1725 = vmatpush1.bf16.msra.mxu0 %v1717
      %1726 = vmatprep.subr.bf16.mxu0 0
      %1727 = vmatpush1.bf16.msra.mxu0 %v1718
      %1728 = vmatprep.subr.bf16.mxu0 0
      %1729 = vmatpush1.bf16.msra.mxu0 0
      %1730 = vmatprep.subr.bf16.mxu0 0
      %1731 = vmatpush1.bf16.msra.mxu0 0
      %1732 = vmatprep.subr.bf16.mxu0 0
      %1733 = vmatpush1.bf16.msra.mxu0 0
      %1734 = vmatprep.subr.bf16.mxu0 0
      %1735 = vmatpush1.bf16.msra.mxu0 0
      %1736 = vmatprep.subr.bf16.mxu0 0
      %1737 = vmatpush1.bf16.msra.mxu0 0
      %1738 = vmatprep.subr.bf16.mxu0 0
      %1739 = vmatpush1.bf16.msra.mxu0 0
      %1740 = vmatprep.subr.bf16.mxu0 0
      %1741 = vmatpush1.bf16.msra.mxu0 0
      %1742 = vmatprep.subr.bf16.mxu0 0
      %1743 = vmatpush1.bf16.msra.mxu0 0
      %1744 = vmatprep.subr.bf16.mxu0 0
      %1745 = vmatpush1.bf16.msra.mxu0 0
      %1746 = vmatprep.subr.bf16.mxu0 0
      %1747 = vmatpush1.bf16.msra.mxu0 0
      %1748 = vmatprep.subr.bf16.mxu0 0
      %1749 = vmatpush1.bf16.msra.mxu0 0
      %1750 = vmatprep.subr.bf16.mxu0 0
      %1751 = vmatpush1.bf16.msra.mxu0 0
      %1752 = vmatprep.subr.bf16.mxu0 0
      %1753 = vmatpush1.bf16.msra.mxu0 0
      %1754 = vmatprep.subr.bf16.mxu0 0
      %1755 = vmatpush1.bf16.msra.mxu0 0
      %1756 = vmatprep.mubr.bf16.mxu0 0
      %1757 = vmatmul.mubr.bf16.gmra.mrb[0].mxu0 %v1021
      %v1758 = vpop.f32.mrb[0].mxu0
      %v1759 = vadd.f32 0.0, %v1758
      %v1760 = vpop.f32.mrb[0].mxu0
      %v1761 = vpop.f32.mrb[0].mxu0
      %v1762 = vadd.f32 0.0, %v1761
      %v1763 = vpop.f32.mrb[0].mxu0
      %1764 = vmatprep.mubr.bf16.mxu0 0
      %1765 = vmatmul.mubr.bf16.gmra.mrb[0].mxu0 %v1024
      %v1766 = vpop.f32.mrb[0].mxu0
      %v1767 = vadd.f32 0.0, %v1766
      %v1768 = vpop.f32.mrb[0].mxu0
      %v1769 = vpop.f32.mrb[0].mxu0
      %v1770 = vadd.f32 0.0, %v1769
      %v1771 = vpop.f32.mrb[0].mxu0
      %1772 = vmatprep.mubr.bf16.mxu0 0
      %1773 = vmatmul.mubr.bf16.gmra.mrb[0].mxu0 %v1027
      %v1774 = vpop.f32.mrb[0].mxu0
      %v1775 = vadd.f32 0.0, %v1774
      %v1776 = vpop.f32.mrb[0].mxu0
      %v1777 = vpop.f32.mrb[0].mxu0
      %v1778 = vadd.f32 0.0, %v1777
      %v1779 = vpop.f32.mrb[0].mxu0
      %1780 = vmatprep.mubr.bf16.mxu0 0
      %1781 = vmatmul.mubr.bf16.gmra.mrb[0].mxu0 %v1030
      %v1782 = vpop.f32.mrb[0].mxu0
      %v1783 = vadd.f32 0.0, %v1782
      %v1784 = vpop.f32.mrb[0].mxu0
      %v1785 = vpop.f32.mrb[0].mxu0
      %v1786 = vadd.f32 0.0, %v1785
      %v1787 = vpop.f32.mrb[0].mxu0
      %1788 = vmatprep.mubr.bf16.mxu0 0
      %1789 = vmatmul.mubr.bf16.gmra.mrb[0].mxu0 %v1033
      %v1790 = vpop.f32.mrb[0].mxu0
      %v1791 = vadd.f32 0.0, %v1790
      %v1792 = vpop.f32.mrb[0].mxu0
      %v1793 = vpop.f32.mrb[0].mxu0
      %v1794 = vadd.f32 0.0, %v1793
      %v1795 = vpop.f32.mrb[0].mxu0
      %1796 = vmatprep.mubr.bf16.mxu0 0
      %1797 = vmatmul.mubr.bf16.gmra.mrb[0].mxu0 %v1036
      %v1798 = vpop.f32.mrb[0].mxu0
      %v1799 = vadd.f32 0.0, %v1798
      %v1800 = vpop.f32.mrb[0].mxu0
      %v1801 = vpop.f32.mrb[0].mxu0
      %v1802 = vadd.f32 0.0, %v1801
      %v1803 = vpop.f32.mrb[0].mxu0
      %1804 = vmatprep.mubr.bf16.mxu0 0
      %1805 = vmatmul.mubr.bf16.gmra.mrb[0].mxu0 %v1039
      %v1806 = vpop.f32.mrb[0].mxu0
      %v1807 = vadd.f32 0.0, %v1806
      %v1808 = vpop.f32.mrb[0].mxu0
      %v1809 = vpop.f32.mrb[0].mxu0
      %v1810 = vadd.f32 0.0, %v1809
      %v1811 = vpop.f32.mrb[0].mxu0
      %1812 = vmatprep.mubr.bf16.mxu0 0
      %1813 = vmatmul.mubr.bf16.gmra.mrb[0].mxu0 %v1042
      %v1814 = vpop.f32.mrb[0].mxu0
      %v1815 = vadd.f32 0.0, %v1814
      %v1816 = vpop.f32.mrb[0].mxu0
      %v1817 = vpop.f32.mrb[0].mxu0
      %v1818 = vadd.f32 0.0, %v1817
      %v1819 = vpop.f32.mrb[0].mxu0
      %1820 = vmatprep.mubr.bf16.mxu0 0
      %1821 = vmatmul.mubr.bf16.gmra.mrb[0].mxu0 %v1045
      %v1822 = vpop.f32.mrb[0].mxu0
      %v1823 = vadd.f32 0.0, %v1822
      %v1824 = vpop.f32.mrb[0].mxu0
      %v1825 = vpop.f32.mrb[0].mxu0
      %v1826 = vadd.f32 0.0, %v1825
      %v1827 = vpop.f32.mrb[0].mxu0
      %1828 = vmatprep.mubr.bf16.mxu0 0
      %1829 = vmatmul.mubr.bf16.gmra.mrb[0].mxu0 %v1048
      %v1830 = vpop.f32.mrb[0].mxu0
      %v1831 = vadd.f32 0.0, %v1830
      %v1832 = vpop.f32.mrb[0].mxu0
      %v1833 = vpop.f32.mrb[0].mxu0
      %v1834 = vadd.f32 0.0, %v1833
      %v1835 = vpop.f32.mrb[0].mxu0
      %1836 = vmatprep.mubr.bf16.mxu0 0
      %1837 = vmatmul.mubr.bf16.gmra.mrb[0].mxu0 %v1051
      %v1838 = vpop.f32.mrb[0].mxu0
      %v1839 = vadd.f32 0.0, %v1838
      %v1840 = vpop.f32.mrb[0].mxu0
      %v1841 = vpop.f32.mrb[0].mxu0
      %v1842 = vadd.f32 0.0, %v1841
      %v1843 = vpop.f32.mrb[0].mxu0
      %1844 = vmatprep.mubr.bf16.mxu0 0
      %1845 = vmatmul.mubr.bf16.gmra.mrb[0].mxu0 %v1054
      %v1846 = vpop.f32.mrb[0].mxu0
      %v1847 = vadd.f32 0.0, %v1846
      %v1848 = vpop.f32.mrb[0].mxu0
      %v1849 = vpop.f32.mrb[0].mxu0
      %v1850 = vadd.f32 0.0, %v1849
      %v1851 = vpop.f32.mrb[0].mxu0
      %1852 = vmatprep.mubr.bf16.mxu0 0
      %1853 = vmatmul.mubr.bf16.gmra.mrb[0].mxu0 %v1057
      %v1854 = vpop.f32.mrb[0].mxu0
      %v1855 = vadd.f32 0.0, %v1854
      %v1856 = vpop.f32.mrb[0].mxu0
      %v1857 = vpop.f32.mrb[0].mxu0
      %v1858 = vadd.f32 0.0, %v1857
      %v1859 = vpop.f32.mrb[0].mxu0
      %1860 = vmatprep.mubr.bf16.mxu0 0
      %1861 = vmatmul.mubr.bf16.gmra.mrb[0].mxu0 %v1060
      %v1862 = vpop.f32.mrb[0].mxu0
      %v1863 = vadd.f32 0.0, %v1862
      %v1864 = vpop.f32.mrb[0].mxu0
      %v1865 = vpop.f32.mrb[0].mxu0
      %v1866 = vadd.f32 0.0, %v1865
      %v1867 = vpop.f32.mrb[0].mxu0
      %1868 = vmatprep.mubr.bf16.mxu0 0
      %1869 = vmatmul.mubr.bf16.gmra.mrb[0].mxu0 %v1063
      %v1870 = vpop.f32.mrb[0].mxu0
      %v1871 = vadd.f32 0.0, %v1870
      %v1872 = vpop.f32.mrb[0].mxu0
      %v1873 = vpop.f32.mrb[0].mxu0
      %v1874 = vadd.f32 0.0, %v1873
      %v1875 = vpop.f32.mrb[0].mxu0
      %1876 = vmatprep.mubr.bf16.mxu0 0
      %1877 = vmatmul.mubr.bf16.gmra.mrb[0].mxu0 %v1722
      %v1878 = vpop.f32.mrb[0].mxu0
      %v1879 = vadd.f32 0.0, %v1878
      %v1880 = vpop.f32.mrb[0].mxu0
      %v1881 = vpop.f32.mrb[0].mxu0
      %v1882 = vadd.f32 0.0, %v1881
      %v1883 = vpop.f32.mrb[0].mxu0
      %1884 = vdwg.mxu0
      %v1885 = vadd.f32 %v1664, %v1759
      %v1886 = vadd.f32 %v1665, %v1762
      %v1887 = vadd.f32 %v1666, %v1767
      %v1888 = vadd.f32 %v1667, %v1770
      %v1889 = vadd.f32 %v1668, %v1775
      %v1890 = vadd.f32 %v1669, %v1778
      %v1891 = vadd.f32 %v1670, %v1783
      %v1892 = vadd.f32 %v1671, %v1786
      %v1893 = vadd.f32 %v1672, %v1791
      %v1894 = vadd.f32 %v1673, %v1794
      %v1895 = vadd.f32 %v1674, %v1799
      %v1896 = vadd.f32 %v1675, %v1802
      %v1897 = vadd.f32 %v1676, %v1807
      %v1898 = vadd.f32 %v1677, %v1810
      %v1899 = vadd.f32 %v1678, %v1815
      %v1900 = vadd.f32 %v1679, %v1818
      %v1901 = vadd.f32 %v1680, %v1823
      %v1902 = vadd.f32 %v1681, %v1826
      %v1903 = vadd.f32 %v1682, %v1831
      %v1904 = vadd.f32 %v1683, %v1834
      %v1905 = vadd.f32 %v1684, %v1839
      %v1906 = vadd.f32 %v1685, %v1842
      %v1907 = vadd.f32 %v1686, %v1847
      %v1908 = vadd.f32 %v1687, %v1850
      %v1909 = vadd.f32 %v1688, %v1855
      %v1910 = vadd.f32 %v1689, %v1858
      %v1911 = vadd.f32 %v1690, %v1863
      %v1912 = vadd.f32 %v1691, %v1866
      %v1913 = vadd.f32 %v1692, %v1871
      %v1914 = vadd.f32 %v1693, %v1874
      %v1915 = vadd.f32 %v1694, %v1879
      %v1916 = vadd.f32 %v1695, %v1882
      %v1917 = vpack.c.bf16 %v224, %v223
      %s1918 = scalar_lea.vmem %s1, 96
      %v1919 = vld [vmem:[%s1918] sm:$0xf]
      %v1920 = vld [vmem:[%s1918 + $0x4] sm:$0xf]
      %v1921 = vld [vmem:[%s1918 + $0x8] sm:$0xf]
      %v1922 = vld [vmem:[%s1918 + $0xc] sm:$0xf]
      %v1927 = vunpack.c.l.b16 %v1919
      %v1928 = vunpack.c.l.b16 %v1920
      %v1929 = vunpack.c.l.b16 %v1921
      %v1930 = vunpack.c.l.b16 %v1922
      %v1931 = vpack.c.b16 %v1928, %v1927
      %v1932 = vpack.c.b16 %v1930, %v1929
      %v1936 = vsel %vm440, %v1917, 0
      %1938 = vmatprep.subr.bf16.mxu0 0
      %1939 = vmatpush1.bf16.msra.mxu0 %v1931
      %1940 = vmatprep.subr.bf16.mxu0 0
      %1941 = vmatpush1.bf16.msra.mxu0 %v1932
      %1942 = vmatprep.subr.bf16.mxu0 0
      %1943 = vmatpush1.bf16.msra.mxu0 0
      %1944 = vmatprep.subr.bf16.mxu0 0
      %1945 = vmatpush1.bf16.msra.mxu0 0
      %1946 = vmatprep.subr.bf16.mxu0 0
      %1947 = vmatpush1.bf16.msra.mxu0 0
      %1948 = vmatprep.subr.bf16.mxu0 0
      %1949 = vmatpush1.bf16.msra.mxu0 0
      %1950 = vmatprep.subr.bf16.mxu0 0
      %1951 = vmatpush1.bf16.msra.mxu0 0
      %1952 = vmatprep.subr.bf16.mxu0 0
      %1953 = vmatpush1.bf16.msra.mxu0 0
      %1954 = vmatprep.subr.bf16.mxu0 0
      %1955 = vmatpush1.bf16.msra.mxu0 0
      %1956 = vmatprep.subr.bf16.mxu0 0
      %1957 = vmatpush1.bf16.msra.mxu0 0
      %1958 = vmatprep.subr.bf16.mxu0 0
      %1959 = vmatpush1.bf16.msra.mxu0 0
      %1960 = vmatprep.subr.bf16.mxu0 0
      %1961 = vmatpush1.bf16.msra.mxu0 0
      %1962 = vmatprep.subr.bf16.mxu0 0
      %1963 = vmatpush1.bf16.msra.mxu0 0
      %1964 = vmatprep.subr.bf16.mxu0 0
      %1965 = vmatpush1.bf16.msra.mxu0 0
      %1966 = vmatprep.subr.bf16.mxu0 0
      %1967 = vmatpush1.bf16.msra.mxu0 0
      %1968 = vmatprep.subr.bf16.mxu0 0
      %1969 = vmatpush1.bf16.msra.mxu0 0
      %1970 = vmatprep.mubr.bf16.mxu0 0
      %1971 = vmatmul.mubr.bf16.gmra.mrb[0].mxu0 %v669
      %v1972 = vpop.f32.mrb[0].mxu0
      %v1973 = vadd.f32 0.0, %v1972
      %v1974 = vpop.f32.mrb[0].mxu0
      %v1975 = vpop.f32.mrb[0].mxu0
      %v1976 = vadd.f32 0.0, %v1975
      %v1977 = vpop.f32.mrb[0].mxu0
      %1978 = vmatprep.mubr.bf16.mxu0 0
      %1979 = vmatmul.mubr.bf16.gmra.mrb[0].mxu0 %v672
      %v1980 = vpop.f32.mrb[0].mxu0
      %v1981 = vadd.f32 0.0, %v1980
      %v1982 = vpop.f32.mrb[0].mxu0
      %v1983 = vpop.f32.mrb[0].mxu0
      %v1984 = vadd.f32 0.0, %v1983
      %v1985 = vpop.f32.mrb[0].mxu0
      %1986 = vmatprep.mubr.bf16.mxu0 0
      %1987 = vmatmul.mubr.bf16.gmra.mrb[0].mxu0 %v675
      %v1988 = vpop.f32.mrb[0].mxu0
      %v1989 = vadd.f32 0.0, %v1988
      %v1990 = vpop.f32.mrb[0].mxu0
      %v1991 = vpop.f32.mrb[0].mxu0
      %v1992 = vadd.f32 0.0, %v1991
      %v1993 = vpop.f32.mrb[0].mxu0
      %1994 = vmatprep.mubr.bf16.mxu0 0
      %1995 = vmatmul.mubr.bf16.gmra.mrb[0].mxu0 %v678
      %v1996 = vpop.f32.mrb[0].mxu0
      %v1997 = vadd.f32 0.0, %v1996
      %v1998 = vpop.f32.mrb[0].mxu0
      %v1999 = vpop.f32.mrb[0].mxu0
      %v2000 = vadd.f32 0.0, %v1999
      %v2001 = vpop.f32.mrb[0].mxu0
      %2002 = vmatprep.mubr.bf16.mxu0 0
      %2003 = vmatmul.mubr.bf16.gmra.mrb[0].mxu0 %v681
      %v2004 = vpop.f32.mrb[0].mxu0
      %v2005 = vadd.f32 0.0, %v2004
      %v2006 = vpop.f32.mrb[0].mxu0
      %v2007 = vpop.f32.mrb[0].mxu0
      %v2008 = vadd.f32 0.0, %v2007
      %v2009 = vpop.f32.mrb[0].mxu0
      %2010 = vmatprep.mubr.bf16.mxu0 0
      %2011 = vmatmul.mubr.bf16.gmra.mrb[0].mxu0 %v684
      %v2012 = vpop.f32.mrb[0].mxu0
      %v2013 = vadd.f32 0.0, %v2012
      %v2014 = vpop.f32.mrb[0].mxu0
      %v2015 = vpop.f32.mrb[0].mxu0
      %v2016 = vadd.f32 0.0, %v2015
      %v2017 = vpop.f32.mrb[0].mxu0
      %2018 = vmatprep.mubr.bf16.mxu0 0
      %2019 = vmatmul.mubr.bf16.gmra.mrb[0].mxu0 %v687
      %v2020 = vpop.f32.mrb[0].mxu0
      %v2021 = vadd.f32 0.0, %v2020
      %v2022 = vpop.f32.mrb[0].mxu0
      %v2023 = vpop.f32.mrb[0].mxu0
      %v2024 = vadd.f32 0.0, %v2023
      %v2025 = vpop.f32.mrb[0].mxu0
      %2026 = vmatprep.mubr.bf16.mxu0 0
      %2027 = vmatmul.mubr.bf16.gmra.mrb[0].mxu0 %v690
      %v2028 = vpop.f32.mrb[0].mxu0
      %v2029 = vadd.f32 0.0, %v2028
      %v2030 = vpop.f32.mrb[0].mxu0
      %v2031 = vpop.f32.mrb[0].mxu0
      %v2032 = vadd.f32 0.0, %v2031
      %v2033 = vpop.f32.mrb[0].mxu0
      %2034 = vmatprep.mubr.bf16.mxu0 0
      %2035 = vmatmul.mubr.bf16.gmra.mrb[0].mxu0 %v693
      %v2036 = vpop.f32.mrb[0].mxu0
      %v2037 = vadd.f32 0.0, %v2036
      %v2038 = vpop.f32.mrb[0].mxu0
      %v2039 = vpop.f32.mrb[0].mxu0
      %v2040 = vadd.f32 0.0, %v2039
      %v2041 = vpop.f32.mrb[0].mxu0
      %2042 = vmatprep.mubr.bf16.mxu0 0
      %2043 = vmatmul.mubr.bf16.gmra.mrb[0].mxu0 %v696
      %v2044 = vpop.f32.mrb[0].mxu0
      %v2045 = vadd.f32 0.0, %v2044
      %v2046 = vpop.f32.mrb[0].mxu0
      %v2047 = vpop.f32.mrb[0].mxu0
      %v2048 = vadd.f32 0.0, %v2047
      %v2049 = vpop.f32.mrb[0].mxu0
      %2050 = vmatprep.mubr.bf16.mxu0 0
      %2051 = vmatmul.mubr.bf16.gmra.mrb[0].mxu0 %v699
      %v2052 = vpop.f32.mrb[0].mxu0
      %v2053 = vadd.f32 0.0, %v2052
      %v2054 = vpop.f32.mrb[0].mxu0
      %v2055 = vpop.f32.mrb[0].mxu0
      %v2056 = vadd.f32 0.0, %v2055
      %v2057 = vpop.f32.mrb[0].mxu0
      %2058 = vmatprep.mubr.bf16.mxu0 0
      %2059 = vmatmul.mubr.bf16.gmra.mrb[0].mxu0 %v702
      %v2060 = vpop.f32.mrb[0].mxu0
      %v2061 = vadd.f32 0.0, %v2060
      %v2062 = vpop.f32.mrb[0].mxu0
      %v2063 = vpop.f32.mrb[0].mxu0
      %v2064 = vadd.f32 0.0, %v2063
      %v2065 = vpop.f32.mrb[0].mxu0
      %2066 = vmatprep.mubr.bf16.mxu0 0
      %2067 = vmatmul.mubr.bf16.gmra.mrb[0].mxu0 %v705
      %v2068 = vpop.f32.mrb[0].mxu0
      %v2069 = vadd.f32 0.0, %v2068
      %v2070 = vpop.f32.mrb[0].mxu0
      %v2071 = vpop.f32.mrb[0].mxu0
      %v2072 = vadd.f32 0.0, %v2071
      %v2073 = vpop.f32.mrb[0].mxu0
      %2074 = vmatprep.mubr.bf16.mxu0 0
      %2075 = vmatmul.mubr.bf16.gmra.mrb[0].mxu0 %v708
      %v2076 = vpop.f32.mrb[0].mxu0
      %v2077 = vadd.f32 0.0, %v2076
      %v2078 = vpop.f32.mrb[0].mxu0
      %v2079 = vpop.f32.mrb[0].mxu0
      %v2080 = vadd.f32 0.0, %v2079
      %v2081 = vpop.f32.mrb[0].mxu0
      %2082 = vmatprep.mubr.bf16.mxu0 0
      %2083 = vmatmul.mubr.bf16.gmra.mrb[0].mxu0 %v1277
      %v2084 = vpop.f32.mrb[0].mxu0
      %v2085 = vadd.f32 0.0, %v2084
      %v2086 = vpop.f32.mrb[0].mxu0
      %v2087 = vpop.f32.mrb[0].mxu0
      %v2088 = vadd.f32 0.0, %v2087
      %v2089 = vpop.f32.mrb[0].mxu0
      %2090 = vmatprep.mubr.bf16.mxu0 0
      %2091 = vmatmul.mubr.bf16.gmra.mrb[0].mxu0 %v1936
      %v2092 = vpop.f32.mrb[0].mxu0
      %v2093 = vadd.f32 0.0, %v2092
      %v2094 = vpop.f32.mrb[0].mxu0
      %v2095 = vpop.f32.mrb[0].mxu0
      %v2096 = vadd.f32 0.0, %v2095
      %v2097 = vpop.f32.mrb[0].mxu0
      %2098 = vdwg.mxu0
      %v2099 = vadd.f32 %v1885, %v1973
      %v2100 = vadd.f32 %v1886, %v1976
      %v2101 = vadd.f32 %v1887, %v1981
      %v2102 = vadd.f32 %v1888, %v1984
      %v2103 = vadd.f32 %v1889, %v1989
      %v2104 = vadd.f32 %v1890, %v1992
      %v2105 = vadd.f32 %v1891, %v1997
      %v2106 = vadd.f32 %v1892, %v2000
      %v2107 = vadd.f32 %v1893, %v2005
      %v2108 = vadd.f32 %v1894, %v2008
      %v2109 = vadd.f32 %v1895, %v2013
      %v2110 = vadd.f32 %v1896, %v2016
      %v2111 = vadd.f32 %v1897, %v2021
      %v2112 = vadd.f32 %v1898, %v2024
      %v2113 = vadd.f32 %v1899, %v2029
      %v2114 = vadd.f32 %v1900, %v2032
      %v2115 = vadd.f32 %v1901, %v2037
      %v2116 = vadd.f32 %v1902, %v2040
      %v2117 = vadd.f32 %v1903, %v2045
      %v2118 = vadd.f32 %v1904, %v2048
      %v2119 = vadd.f32 %v1905, %v2053
      %v2120 = vadd.f32 %v1906, %v2056
      %v2121 = vadd.f32 %v1907, %v2061
      %v2122 = vadd.f32 %v1908, %v2064
      %v2123 = vadd.f32 %v1909, %v2069
      %v2124 = vadd.f32 %v1910, %v2072
      %v2125 = vadd.f32 %v1911, %v2077
      %v2126 = vadd.f32 %v1912, %v2080
      %v2127 = vadd.f32 %v1913, %v2085
      %v2128 = vadd.f32 %v1914, %v2088
      %v2129 = vadd.f32 %v1915, %v2093
      %v2130 = vadd.f32 %v1916, %v2096
      %v2134 = vrot.slane %v223, 1
      %v2135 = vrot.slane %v224, 1
      %v2136 = vsel %vm294, %v2134, %v2135
      %v2137 = vrot.slane %v225, 1
      %v2138 = vsel %vm294, %v2135, %v2137
      %v2141 = vpack.c.bf16 %v2138, %v2136
      %s2142 = scalar_lea.vmem %s1, 112
      %v2143 = vld [vmem:[%s2142] sm:$0xf]
      %v2144 = vld [vmem:[%s2142 + $0x4] sm:$0xf]
      %v2145 = vld [vmem:[%s2142 + $0x8] sm:$0xf]
      %v2146 = vld [vmem:[%s2142 + $0xc] sm:$0xf]
      %v2151 = vunpack.c.l.b16 %v2143
      %v2152 = vunpack.c.l.b16 %v2144
      %v2153 = vunpack.c.l.b16 %v2145
      %v2154 = vunpack.c.l.b16 %v2146
      %v2155 = vpack.c.b16 %v2152, %v2151
      %v2156 = vpack.c.b16 %v2154, %v2153
      %v2160 = vsel %vm440, %v2141, 0
      %2162 = vmatprep.subr.bf16.mxu0 0
      %2163 = vmatpush1.bf16.msra.mxu0 %v2155
      %2164 = vmatprep.subr.bf16.mxu0 0
      %2165 = vmatpush1.bf16.msra.mxu0 %v2156
      %2166 = vmatprep.subr.bf16.mxu0 0
      %2167 = vmatpush1.bf16.msra.mxu0 0
      %2168 = vmatprep.subr.bf16.mxu0 0
      %2169 = vmatpush1.bf16.msra.mxu0 0
      %2170 = vmatprep.subr.bf16.mxu0 0
      %2171 = vmatpush1.bf16.msra.mxu0 0
      %2172 = vmatprep.subr.bf16.mxu0 0
      %2173 = vmatpush1.bf16.msra.mxu0 0
      %2174 = vmatprep.subr.bf16.mxu0 0
      %2175 = vmatpush1.bf16.msra.mxu0 0
      %2176 = vmatprep.subr.bf16.mxu0 0
      %2177 = vmatpush1.bf16.msra.mxu0 0
      %2178 = vmatprep.subr.bf16.mxu0 0
      %2179 = vmatpush1.bf16.msra.mxu0 0
      %2180 = vmatprep.subr.bf16.mxu0 0
      %2181 = vmatpush1.bf16.msra.mxu0 0
      %2182 = vmatprep.subr.bf16.mxu0 0
      %2183 = vmatpush1.bf16.msra.mxu0 0
      %2184 = vmatprep.subr.bf16.mxu0 0
      %2185 = vmatpush1.bf16.msra.mxu0 0
      %2186 = vmatprep.subr.bf16.mxu0 0
      %2187 = vmatpush1.bf16.msra.mxu0 0
      %2188 = vmatprep.subr.bf16.mxu0 0
      %2189 = vmatpush1.bf16.msra.mxu0 0
      %2190 = vmatprep.subr.bf16.mxu0 0
      %2191 = vmatpush1.bf16.msra.mxu0 0
      %2192 = vmatprep.subr.bf16.mxu0 0
      %2193 = vmatpush1.bf16.msra.mxu0 0
      %2194 = vmatprep.mubr.bf16.mxu0 0
      %2195 = vmatmul.mubr.bf16.gmra.mrb[0].mxu0 %v448
      %v2196 = vpop.f32.mrb[0].mxu0
      %v2197 = vadd.f32 0.0, %v2196
      %v2198 = vpop.f32.mrb[0].mxu0
      %v2199 = vpop.f32.mrb[0].mxu0
      %v2200 = vadd.f32 0.0, %v2199
      %v2201 = vpop.f32.mrb[0].mxu0
      %2202 = vmatprep.mubr.bf16.mxu0 0
      %2203 = vmatmul.mubr.bf16.gmra.mrb[0].mxu0 %v451
      %v2204 = vpop.f32.mrb[0].mxu0
      %v2205 = vadd.f32 0.0, %v2204
      %v2206 = vpop.f32.mrb[0].mxu0
      %v2207 = vpop.f32.mrb[0].mxu0
      %v2208 = vadd.f32 0.0, %v2207
      %v2209 = vpop.f32.mrb[0].mxu0
      %2210 = vmatprep.mubr.bf16.mxu0 0
      %2211 = vmatmul.mubr.bf16.gmra.mrb[0].mxu0 %v454
      %v2212 = vpop.f32.mrb[0].mxu0
      %v2213 = vadd.f32 0.0, %v2212
      %v2214 = vpop.f32.mrb[0].mxu0
      %v2215 = vpop.f32.mrb[0].mxu0
      %v2216 = vadd.f32 0.0, %v2215
      %v2217 = vpop.f32.mrb[0].mxu0
      %2218 = vmatprep.mubr.bf16.mxu0 0
      %2219 = vmatmul.mubr.bf16.gmra.mrb[0].mxu0 %v457
      %v2220 = vpop.f32.mrb[0].mxu0
      %v2221 = vadd.f32 0.0, %v2220
      %v2222 = vpop.f32.mrb[0].mxu0
      %v2223 = vpop.f32.mrb[0].mxu0
      %v2224 = vadd.f32 0.0, %v2223
      %v2225 = vpop.f32.mrb[0].mxu0
      %2226 = vmatprep.mubr.bf16.mxu0 0
      %2227 = vmatmul.mubr.bf16.gmra.mrb[0].mxu0 %v460
      %v2228 = vpop.f32.mrb[0].mxu0
      %v2229 = vadd.f32 0.0, %v2228
      %v2230 = vpop.f32.mrb[0].mxu0
      %v2231 = vpop.f32.mrb[0].mxu0
      %v2232 = vadd.f32 0.0, %v2231
      %v2233 = vpop.f32.mrb[0].mxu0
      %2234 = vmatprep.mubr.bf16.mxu0 0
      %2235 = vmatmul.mubr.bf16.gmra.mrb[0].mxu0 %v463
      %v2236 = vpop.f32.mrb[0].mxu0
      %v2237 = vadd.f32 0.0, %v2236
      %v2238 = vpop.f32.mrb[0].mxu0
      %v2239 = vpop.f32.mrb[0].mxu0
      %v2240 = vadd.f32 0.0, %v2239
      %v2241 = vpop.f32.mrb[0].mxu0
      %2242 = vmatprep.mubr.bf16.mxu0 0
      %2243 = vmatmul.mubr.bf16.gmra.mrb[0].mxu0 %v466
      %v2244 = vpop.f32.mrb[0].mxu0
      %v2245 = vadd.f32 0.0, %v2244
      %v2246 = vpop.f32.mrb[0].mxu0
      %v2247 = vpop.f32.mrb[0].mxu0
      %v2248 = vadd.f32 0.0, %v2247
      %v2249 = vpop.f32.mrb[0].mxu0
      %2250 = vmatprep.mubr.bf16.mxu0 0
      %2251 = vmatmul.mubr.bf16.gmra.mrb[0].mxu0 %v469
      %v2252 = vpop.f32.mrb[0].mxu0
      %v2253 = vadd.f32 0.0, %v2252
      %v2254 = vpop.f32.mrb[0].mxu0
      %v2255 = vpop.f32.mrb[0].mxu0
      %v2256 = vadd.f32 0.0, %v2255
      %v2257 = vpop.f32.mrb[0].mxu0
      %2258 = vmatprep.mubr.bf16.mxu0 0
      %2259 = vmatmul.mubr.bf16.gmra.mrb[0].mxu0 %v472
      %v2260 = vpop.f32.mrb[0].mxu0
      %v2261 = vadd.f32 0.0, %v2260
      %v2262 = vpop.f32.mrb[0].mxu0
      %v2263 = vpop.f32.mrb[0].mxu0
      %v2264 = vadd.f32 0.0, %v2263
      %v2265 = vpop.f32.mrb[0].mxu0
      %2266 = vmatprep.mubr.bf16.mxu0 0
      %2267 = vmatmul.mubr.bf16.gmra.mrb[0].mxu0 %v475
      %v2268 = vpop.f32.mrb[0].mxu0
      %v2269 = vadd.f32 0.0, %v2268
      %v2270 = vpop.f32.mrb[0].mxu0
      %v2271 = vpop.f32.mrb[0].mxu0
      %v2272 = vadd.f32 0.0, %v2271
      %v2273 = vpop.f32.mrb[0].mxu0
      %2274 = vmatprep.mubr.bf16.mxu0 0
      %2275 = vmatmul.mubr.bf16.gmra.mrb[0].mxu0 %v478
      %v2276 = vpop.f32.mrb[0].mxu0
      %v2277 = vadd.f32 0.0, %v2276
      %v2278 = vpop.f32.mrb[0].mxu0
      %v2279 = vpop.f32.mrb[0].mxu0
      %v2280 = vadd.f32 0.0, %v2279
      %v2281 = vpop.f32.mrb[0].mxu0
      %2282 = vmatprep.mubr.bf16.mxu0 0
      %2283 = vmatmul.mubr.bf16.gmra.mrb[0].mxu0 %v481
      %v2284 = vpop.f32.mrb[0].mxu0
      %v2285 = vadd.f32 0.0, %v2284
      %v2286 = vpop.f32.mrb[0].mxu0
      %v2287 = vpop.f32.mrb[0].mxu0
      %v2288 = vadd.f32 0.0, %v2287
      %v2289 = vpop.f32.mrb[0].mxu0
      %2290 = vmatprep.mubr.bf16.mxu0 0
      %2291 = vmatmul.mubr.bf16.gmra.mrb[0].mxu0 %v484
      %v2292 = vpop.f32.mrb[0].mxu0
      %v2293 = vadd.f32 0.0, %v2292
      %v2294 = vpop.f32.mrb[0].mxu0
      %v2295 = vpop.f32.mrb[0].mxu0
      %v2296 = vadd.f32 0.0, %v2295
      %v2297 = vpop.f32.mrb[0].mxu0
      %2298 = vmatprep.mubr.bf16.mxu0 0
      %2299 = vmatmul.mubr.bf16.gmra.mrb[0].mxu0 %v487
      %v2300 = vpop.f32.mrb[0].mxu0
      %v2301 = vadd.f32 0.0, %v2300
      %v2302 = vpop.f32.mrb[0].mxu0
      %v2303 = vpop.f32.mrb[0].mxu0
      %v2304 = vadd.f32 0.0, %v2303
      %v2305 = vpop.f32.mrb[0].mxu0
      %2306 = vmatprep.mubr.bf16.mxu0 0
      %2307 = vmatmul.mubr.bf16.gmra.mrb[0].mxu0 %v1501
      %v2308 = vpop.f32.mrb[0].mxu0
      %v2309 = vadd.f32 0.0, %v2308
      %v2310 = vpop.f32.mrb[0].mxu0
      %v2311 = vpop.f32.mrb[0].mxu0
      %v2312 = vadd.f32 0.0, %v2311
      %v2313 = vpop.f32.mrb[0].mxu0
      %2314 = vmatprep.mubr.bf16.mxu0 0
      %2315 = vmatmul.mubr.bf16.gmra.mrb[0].mxu0 %v2160
      %v2316 = vpop.f32.mrb[0].mxu0
      %v2317 = vadd.f32 0.0, %v2316
      %v2318 = vpop.f32.mrb[0].mxu0
      %v2319 = vpop.f32.mrb[0].mxu0
      %v2320 = vadd.f32 0.0, %v2319
      %v2321 = vpop.f32.mrb[0].mxu0
      %2322 = vdwg.mxu0
      %v2323 = vadd.f32 %v2099, %v2197
      %v2324 = vadd.f32 %v2100, %v2200
      %v2325 = vadd.f32 %v2101, %v2205
      %v2326 = vadd.f32 %v2102, %v2208
      %v2327 = vadd.f32 %v2103, %v2213
      %v2328 = vadd.f32 %v2104, %v2216
      %v2329 = vadd.f32 %v2105, %v2221
      %v2330 = vadd.f32 %v2106, %v2224
      %v2331 = vadd.f32 %v2107, %v2229
      %v2332 = vadd.f32 %v2108, %v2232
      %v2333 = vadd.f32 %v2109, %v2237
      %v2334 = vadd.f32 %v2110, %v2240
      %v2335 = vadd.f32 %v2111, %v2245
      %v2336 = vadd.f32 %v2112, %v2248
      %v2337 = vadd.f32 %v2113, %v2253
      %v2338 = vadd.f32 %v2114, %v2256
      %v2339 = vadd.f32 %v2115, %v2261
      %v2340 = vadd.f32 %v2116, %v2264
      %v2341 = vadd.f32 %v2117, %v2269
      %v2342 = vadd.f32 %v2118, %v2272
      %v2343 = vadd.f32 %v2119, %v2277
      %v2344 = vadd.f32 %v2120, %v2280
      %v2345 = vadd.f32 %v2121, %v2285
      %v2346 = vadd.f32 %v2122, %v2288
      %v2347 = vadd.f32 %v2123, %v2293
      %v2348 = vadd.f32 %v2124, %v2296
      %v2349 = vadd.f32 %v2125, %v2301
      %v2350 = vadd.f32 %v2126, %v2304
      %v2351 = vadd.f32 %v2127, %v2309
      %v2352 = vadd.f32 %v2128, %v2312
      %v2353 = vadd.f32 %v2129, %v2317
      %v2354 = vadd.f32 %v2130, %v2320
      %v2355 = vrot.slane %v223, 2
      %v2356 = vrot.slane %v224, 2
      %v2357 = vsel %vm871, %v2355, %v2356
      %v2358 = vrot.slane %v225, 2
      %v2359 = vsel %vm871, %v2356, %v2358
      %v2362 = vpack.c.bf16 %v2359, %v2357
      %s2363 = scalar_lea.vmem %s1, 128
      %v2364 = vld [vmem:[%s2363] sm:$0xf]
      %v2365 = vld [vmem:[%s2363 + $0x4] sm:$0xf]
      %v2366 = vld [vmem:[%s2363 + $0x8] sm:$0xf]
      %v2367 = vld [vmem:[%s2363 + $0xc] sm:$0xf]
      %v2372 = vunpack.c.l.b16 %v2364
      %v2373 = vunpack.c.l.b16 %v2365
      %v2374 = vunpack.c.l.b16 %v2366
      %v2375 = vunpack.c.l.b16 %v2367
      %v2376 = vpack.c.b16 %v2373, %v2372
      %v2377 = vpack.c.b16 %v2375, %v2374
      %v2381 = vsel %vm440, %v2362, 0
      %2383 = vmatprep.subr.bf16.mxu0 0
      %2384 = vmatpush1.bf16.msra.mxu0 %v2376
      %2385 = vmatprep.subr.bf16.mxu0 0
      %2386 = vmatpush1.bf16.msra.mxu0 %v2377
      %2387 = vmatprep.subr.bf16.mxu0 0
      %2388 = vmatpush1.bf16.msra.mxu0 0
      %2389 = vmatprep.subr.bf16.mxu0 0
      %2390 = vmatpush1.bf16.msra.mxu0 0
      %2391 = vmatprep.subr.bf16.mxu0 0
      %2392 = vmatpush1.bf16.msra.mxu0 0
      %2393 = vmatprep.subr.bf16.mxu0 0
      %2394 = vmatpush1.bf16.msra.mxu0 0
      %2395 = vmatprep.subr.bf16.mxu0 0
      %2396 = vmatpush1.bf16.msra.mxu0 0
      %2397 = vmatprep.subr.bf16.mxu0 0
      %2398 = vmatpush1.bf16.msra.mxu0 0
      %2399 = vmatprep.subr.bf16.mxu0 0
      %2400 = vmatpush1.bf16.msra.mxu0 0
      %2401 = vmatprep.subr.bf16.mxu0 0
      %2402 = vmatpush1.bf16.msra.mxu0 0
      %2403 = vmatprep.subr.bf16.mxu0 0
      %2404 = vmatpush1.bf16.msra.mxu0 0
      %2405 = vmatprep.subr.bf16.mxu0 0
      %2406 = vmatpush1.bf16.msra.mxu0 0
      %2407 = vmatprep.subr.bf16.mxu0 0
      %2408 = vmatpush1.bf16.msra.mxu0 0
      %2409 = vmatprep.subr.bf16.mxu0 0
      %2410 = vmatpush1.bf16.msra.mxu0 0
      %2411 = vmatprep.subr.bf16.mxu0 0
      %2412 = vmatpush1.bf16.msra.mxu0 0
      %2413 = vmatprep.subr.bf16.mxu0 0
      %2414 = vmatpush1.bf16.msra.mxu0 0
      %2415 = vmatprep.mubr.bf16.mxu0 0
      %2416 = vmatmul.mubr.bf16.gmra.mrb[0].mxu0 %v1024
      %v2417 = vpop.f32.mrb[0].mxu0
      %v2418 = vadd.f32 0.0, %v2417
      %v2419 = vpop.f32.mrb[0].mxu0
      %v2420 = vpop.f32.mrb[0].mxu0
      %v2421 = vadd.f32 0.0, %v2420
      %v2422 = vpop.f32.mrb[0].mxu0
      %2423 = vmatprep.mubr.bf16.mxu0 0
      %2424 = vmatmul.mubr.bf16.gmra.mrb[0].mxu0 %v1027
      %v2425 = vpop.f32.mrb[0].mxu0
      %v2426 = vadd.f32 0.0, %v2425
      %v2427 = vpop.f32.mrb[0].mxu0
      %v2428 = vpop.f32.mrb[0].mxu0
      %v2429 = vadd.f32 0.0, %v2428
      %v2430 = vpop.f32.mrb[0].mxu0
      %2431 = vmatprep.mubr.bf16.mxu0 0
      %2432 = vmatmul.mubr.bf16.gmra.mrb[0].mxu0 %v1030
      %v2433 = vpop.f32.mrb[0].mxu0
      %v2434 = vadd.f32 0.0, %v2433
      %v2435 = vpop.f32.mrb[0].mxu0
      %v2436 = vpop.f32.mrb[0].mxu0
      %v2437 = vadd.f32 0.0, %v2436
      %v2438 = vpop.f32.mrb[0].mxu0
      %2439 = vmatprep.mubr.bf16.mxu0 0
      %2440 = vmatmul.mubr.bf16.gmra.mrb[0].mxu0 %v1033
      %v2441 = vpop.f32.mrb[0].mxu0
      %v2442 = vadd.f32 0.0, %v2441
      %v2443 = vpop.f32.mrb[0].mxu0
      %v2444 = vpop.f32.mrb[0].mxu0
      %v2445 = vadd.f32 0.0, %v2444
      %v2446 = vpop.f32.mrb[0].mxu0
      %2447 = vmatprep.mubr.bf16.mxu0 0
      %2448 = vmatmul.mubr.bf16.gmra.mrb[0].mxu0 %v1036
      %v2449 = vpop.f32.mrb[0].mxu0
      %v2450 = vadd.f32 0.0, %v2449
      %v2451 = vpop.f32.mrb[0].mxu0
      %v2452 = vpop.f32.mrb[0].mxu0
      %v2453 = vadd.f32 0.0, %v2452
      %v2454 = vpop.f32.mrb[0].mxu0
      %2455 = vmatprep.mubr.bf16.mxu0 0
      %2456 = vmatmul.mubr.bf16.gmra.mrb[0].mxu0 %v1039
      %v2457 = vpop.f32.mrb[0].mxu0
      %v2458 = vadd.f32 0.0, %v2457
      %v2459 = vpop.f32.mrb[0].mxu0
      %v2460 = vpop.f32.mrb[0].mxu0
      %v2461 = vadd.f32 0.0, %v2460
      %v2462 = vpop.f32.mrb[0].mxu0
      %2463 = vmatprep.mubr.bf16.mxu0 0
      %2464 = vmatmul.mubr.bf16.gmra.mrb[0].mxu0 %v1042
      %v2465 = vpop.f32.mrb[0].mxu0
      %v2466 = vadd.f32 0.0, %v2465
      %v2467 = vpop.f32.mrb[0].mxu0
      %v2468 = vpop.f32.mrb[0].mxu0
      %v2469 = vadd.f32 0.0, %v2468
      %v2470 = vpop.f32.mrb[0].mxu0
      %2471 = vmatprep.mubr.bf16.mxu0 0
      %2472 = vmatmul.mubr.bf16.gmra.mrb[0].mxu0 %v1045
      %v2473 = vpop.f32.mrb[0].mxu0
      %v2474 = vadd.f32 0.0, %v2473
      %v2475 = vpop.f32.mrb[0].mxu0
      %v2476 = vpop.f32.mrb[0].mxu0
      %v2477 = vadd.f32 0.0, %v2476
      %v2478 = vpop.f32.mrb[0].mxu0
      %2479 = vmatprep.mubr.bf16.mxu0 0
      %2480 = vmatmul.mubr.bf16.gmra.mrb[0].mxu0 %v1048
      %v2481 = vpop.f32.mrb[0].mxu0
      %v2482 = vadd.f32 0.0, %v2481
      %v2483 = vpop.f32.mrb[0].mxu0
      %v2484 = vpop.f32.mrb[0].mxu0
      %v2485 = vadd.f32 0.0, %v2484
      %v2486 = vpop.f32.mrb[0].mxu0
      %2487 = vmatprep.mubr.bf16.mxu0 0
      %2488 = vmatmul.mubr.bf16.gmra.mrb[0].mxu0 %v1051
      %v2489 = vpop.f32.mrb[0].mxu0
      %v2490 = vadd.f32 0.0, %v2489
      %v2491 = vpop.f32.mrb[0].mxu0
      %v2492 = vpop.f32.mrb[0].mxu0
      %v2493 = vadd.f32 0.0, %v2492
      %v2494 = vpop.f32.mrb[0].mxu0
      %2495 = vmatprep.mubr.bf16.mxu0 0
      %2496 = vmatmul.mubr.bf16.gmra.mrb[0].mxu0 %v1054
      %v2497 = vpop.f32.mrb[0].mxu0
      %v2498 = vadd.f32 0.0, %v2497
      %v2499 = vpop.f32.mrb[0].mxu0
      %v2500 = vpop.f32.mrb[0].mxu0
      %v2501 = vadd.f32 0.0, %v2500
      %v2502 = vpop.f32.mrb[0].mxu0
      %2503 = vmatprep.mubr.bf16.mxu0 0
      %2504 = vmatmul.mubr.bf16.gmra.mrb[0].mxu0 %v1057
      %v2505 = vpop.f32.mrb[0].mxu0
      %v2506 = vadd.f32 0.0, %v2505
      %v2507 = vpop.f32.mrb[0].mxu0
      %v2508 = vpop.f32.mrb[0].mxu0
      %v2509 = vadd.f32 0.0, %v2508
      %v2510 = vpop.f32.mrb[0].mxu0
      %2511 = vmatprep.mubr.bf16.mxu0 0
      %2512 = vmatmul.mubr.bf16.gmra.mrb[0].mxu0 %v1060
      %v2513 = vpop.f32.mrb[0].mxu0
      %v2514 = vadd.f32 0.0, %v2513
      %v2515 = vpop.f32.mrb[0].mxu0
      %v2516 = vpop.f32.mrb[0].mxu0
      %v2517 = vadd.f32 0.0, %v2516
      %v2518 = vpop.f32.mrb[0].mxu0
      %2519 = vmatprep.mubr.bf16.mxu0 0
      %2520 = vmatmul.mubr.bf16.gmra.mrb[0].mxu0 %v1063
      %v2521 = vpop.f32.mrb[0].mxu0
      %v2522 = vadd.f32 0.0, %v2521
      %v2523 = vpop.f32.mrb[0].mxu0
      %v2524 = vpop.f32.mrb[0].mxu0
      %v2525 = vadd.f32 0.0, %v2524
      %v2526 = vpop.f32.mrb[0].mxu0
      %2527 = vmatprep.mubr.bf16.mxu0 0
      %2528 = vmatmul.mubr.bf16.gmra.mrb[0].mxu0 %v1722
      %v2529 = vpop.f32.mrb[0].mxu0
      %v2530 = vadd.f32 0.0, %v2529
      %v2531 = vpop.f32.mrb[0].mxu0
      %v2532 = vpop.f32.mrb[0].mxu0
      %v2533 = vadd.f32 0.0, %v2532
      %v2534 = vpop.f32.mrb[0].mxu0
      %2535 = vmatprep.mubr.bf16.mxu0 0
      %2536 = vmatmul.mubr.bf16.gmra.mrb[0].mxu0 %v2381
      %v2537 = vpop.f32.mrb[0].mxu0
      %v2538 = vadd.f32 0.0, %v2537
      %v2539 = vpop.f32.mrb[0].mxu0
      %v2540 = vpop.f32.mrb[0].mxu0
      %v2541 = vadd.f32 0.0, %v2540
      %v2542 = vpop.f32.mrb[0].mxu0
      %2543 = vdwg.mxu0
      %v2544 = vadd.f32 %v2323, %v2418
      %v2545 = vadd.f32 %v2324, %v2421
      %v2546 = vadd.f32 %v2325, %v2426
      %v2547 = vadd.f32 %v2326, %v2429
      %v2548 = vadd.f32 %v2327, %v2434
      %v2549 = vadd.f32 %v2328, %v2437
      %v2550 = vadd.f32 %v2329, %v2442
      %v2551 = vadd.f32 %v2330, %v2445
      %v2552 = vadd.f32 %v2331, %v2450
      %v2553 = vadd.f32 %v2332, %v2453
      %v2554 = vadd.f32 %v2333, %v2458
      %v2555 = vadd.f32 %v2334, %v2461
      %v2556 = vadd.f32 %v2335, %v2466
      %v2557 = vadd.f32 %v2336, %v2469
      %v2558 = vadd.f32 %v2337, %v2474
      %v2559 = vadd.f32 %v2338, %v2477
      %v2560 = vadd.f32 %v2339, %v2482
      %v2561 = vadd.f32 %v2340, %v2485
      %v2562 = vadd.f32 %v2341, %v2490
      %v2563 = vadd.f32 %v2342, %v2493
      %v2564 = vadd.f32 %v2343, %v2498
      %v2565 = vadd.f32 %v2344, %v2501
      %v2566 = vadd.f32 %v2345, %v2506
      %v2567 = vadd.f32 %v2346, %v2509
      %v2568 = vadd.f32 %v2347, %v2514
      %v2569 = vadd.f32 %v2348, %v2517
      %v2570 = vadd.f32 %v2349, %v2522
      %v2571 = vadd.f32 %v2350, %v2525
      %v2572 = vadd.f32 %v2351, %v2530
      %v2573 = vadd.f32 %v2352, %v2533
      %v2574 = vadd.f32 %v2353, %v2538
      %v2575 = vadd.f32 %v2354, %v2541
      %v2576 = vld [vmem:[%s2] sm:$0x1]
      %v2578 = vlaneseq
      %v2579 = vshrl.u32 %v2578, 7
      %v2580 = vsub.s32 0, %v2579
      %v2581 = vrot.slane %v2576, %v2580
      %v2583 = vadd.f32 %v2544, %v2581
      %v2584 = vadd.f32 %v2545, %v2581
      %v2585 = vadd.f32 %v2546, %v2581
      %v2586 = vadd.f32 %v2547, %v2581
      %v2587 = vadd.f32 %v2548, %v2581
      %v2588 = vadd.f32 %v2549, %v2581
      %v2589 = vadd.f32 %v2550, %v2581
      %v2590 = vadd.f32 %v2551, %v2581
      %v2591 = vadd.f32 %v2552, %v2581
      %v2592 = vadd.f32 %v2553, %v2581
      %v2593 = vadd.f32 %v2554, %v2581
      %v2594 = vadd.f32 %v2555, %v2581
      %v2595 = vadd.f32 %v2556, %v2581
      %v2596 = vadd.f32 %v2557, %v2581
      %v2597 = vadd.f32 %v2558, %v2581
      %v2598 = vadd.f32 %v2559, %v2581
      %v2599 = vadd.f32 %v2560, %v2581
      %v2600 = vadd.f32 %v2561, %v2581
      %v2601 = vadd.f32 %v2562, %v2581
      %v2602 = vadd.f32 %v2563, %v2581
      %v2603 = vadd.f32 %v2564, %v2581
      %v2604 = vadd.f32 %v2565, %v2581
      %v2605 = vadd.f32 %v2566, %v2581
      %v2606 = vadd.f32 %v2567, %v2581
      %v2607 = vadd.f32 %v2568, %v2581
      %v2608 = vadd.f32 %v2569, %v2581
      %v2609 = vadd.f32 %v2570, %v2581
      %v2610 = vadd.f32 %v2571, %v2581
      %v2611 = vadd.f32 %v2572, %v2581
      %v2612 = vadd.f32 %v2573, %v2581
      %v2613 = vadd.f32 %v2574, %v2581
      %v2614 = vadd.f32 %v2575, %v2581
      %vm2615 = vcmask 23552
      %2616 = vst.msk [vmem:[%s170] sm:$0xff] %vm2615, %v2583
      %2617 = vst.msk [vmem:[%s170 + $0x8] sm:$0xff] %vm2615, %v2584
      %2618 = vst.msk [vmem:[%s170 + $0x10] sm:$0xff] %vm2615, %v2585
      %2619 = vst.msk [vmem:[%s170 + $0x18] sm:$0xff] %vm2615, %v2586
      %2620 = vst.msk [vmem:[%s170 + $0x20] sm:$0xff] %vm2615, %v2587
      %2621 = vst.msk [vmem:[%s170 + $0x28] sm:$0xff] %vm2615, %v2588
      %2622 = vst.msk [vmem:[%s170 + $0x30] sm:$0xff] %vm2615, %v2589
      %2623 = vst.msk [vmem:[%s170 + $0x38] sm:$0xff] %vm2615, %v2590
      %2624 = vst.msk [vmem:[%s170 + $0x40] sm:$0xff] %vm2615, %v2591
      %2625 = vst.msk [vmem:[%s170 + $0x48] sm:$0xff] %vm2615, %v2592
      %2626 = vst.msk [vmem:[%s170 + $0x50] sm:$0xff] %vm2615, %v2593
      %2627 = vst.msk [vmem:[%s170 + $0x58] sm:$0xff] %vm2615, %v2594
      %2628 = vst.msk [vmem:[%s170 + $0x60] sm:$0xff] %vm2615, %v2595
      %2629 = vst.msk [vmem:[%s170 + $0x68] sm:$0xff] %vm2615, %v2596
      %2630 = vst.msk [vmem:[%s170 + $0x70] sm:$0xff] %vm2615, %v2597
      %2631 = vst.msk [vmem:[%s170 + $0x78] sm:$0xff] %vm2615, %v2598
      %2632 = vst.msk [vmem:[%s170 + $0x80] sm:$0xff] %vm2615, %v2599
      %2633 = vst.msk [vmem:[%s170 + $0x88] sm:$0xff] %vm2615, %v2600
      %2634 = vst.msk [vmem:[%s170 + $0x90] sm:$0xff] %vm2615, %v2601
      %2635 = vst.msk [vmem:[%s170 + $0x98] sm:$0xff] %vm2615, %v2602
      %2636 = vst.msk [vmem:[%s170 + $0xa0] sm:$0xff] %vm2615, %v2603
      %2637 = vst.msk [vmem:[%s170 + $0xa8] sm:$0xff] %vm2615, %v2604
      %2638 = vst.msk [vmem:[%s170 + $0xb0] sm:$0xff] %vm2615, %v2605
      %2639 = vst.msk [vmem:[%s170 + $0xb8] sm:$0xff] %vm2615, %v2606
      %2640 = vst.msk [vmem:[%s170 + $0xc0] sm:$0xff] %vm2615, %v2607
      %2641 = vst.msk [vmem:[%s170 + $0xc8] sm:$0xff] %vm2615, %v2608
      %2642 = vst.msk [vmem:[%s170 + $0xd0] sm:$0xff] %vm2615, %v2609
      %2643 = vst.msk [vmem:[%s170 + $0xd8] sm:$0xff] %vm2615, %v2610
      %2644 = vst.msk [vmem:[%s170 + $0xe0] sm:$0xff] %vm2615, %v2611
      %2645 = vst.msk [vmem:[%s170 + $0xe8] sm:$0xff] %vm2615, %v2612
      %2646 = vst.msk [vmem:[%s170 + $0xf0] sm:$0xff] %vm2615, %v2613
      %2647 = vst.msk [vmem:[%s170 + $0xf8] sm:$0xff] %vm2615, %v2614
      %p2648 = scmp.lt.s32.totalorder %s14, 1
      %s2649 = scalar_select %p2648, %s14, 1
      %s2650 = smul.addr %s2649, 32
      %s2651 = smul.addr %s2650, 8
      %s2652 = scalar_lea.vmem %s3, %s2651
      // Predicated region
      $region33: #{speinet_forward.15} parent=31 // pred_check
        %p2653 = pneg %p100
      $region34: #{speinet_forward.15} parent=31 // pred_check_branch
        %2655 = sbr.rel (%p2653) target = $region36
      $region35: #{speinet_forward.15} parent=31 // pred_region
        _
      $region36: #{speinet_forward.15} parent=31 // pred_fallthru
        _
    $region32: #{speinet_forward.15} parent=5 // pred_fallthru
      _
    %p2656 = scmp.le.s32.totalorder 2, %s9
    // Predicated region
    $region37: #{speinet_forward.15} parent=5 // pred_check
      %p2657 = pneg %p2656
    $region38: #{speinet_forward.15} parent=5 // pred_check_branch
      %2659 = sbr.rel (%p2657) target = $region40
    $region39: #{speinet_forward.15} parent=5 // pred_region
      %s2660 = ssub.s32 %s9, 2
      // Predicated region
      $region41: #{speinet_forward.15} parent=39 // pred_check
        %p2661 = pneg %p106
      $region42: #{speinet_forward.15} parent=39 // pred_check_branch
        %2663 = sbr.rel (%p2661) target = $region44
      $region43: #{speinet_forward.15} parent=39 // pred_region
        %p2664 = scmp.lt.s32.totalorder %s15, 1
        %s2665 = scalar_select %p2664, %s15, 1
        %s2666 = smul.addr %s2665, 32
        %s2667 = smul.addr %s2666, 8
        %s2668 = scalar_lea.vmem %s3, %s2667
      $region44: #{speinet_forward.15} parent=39 // pred_fallthru
        _
    $region40: #{speinet_forward.15} parent=5 // pred_fallthru
      _
  $region6: #{speinet_forward.15} parent=0 // loop_footer
    %s13 = sadd.s32 1, %s9
  $region7: #{speinet_forward.15} parent=0 // loop_footer_branch
    %8 = sbr.rel target = $region3
  $region8: #{speinet_forward.15} parent=0 // loop_exit
    _

</llo_original>
